<compile_context>
chip_gen: v7x
topology: tpu7x:2x2x1
jax: 0.10.0
libtpu: 0.0.40
codegen_flags: <defaults>
</compile_context>

<pallas_src>
import functools

import jax
import jax.numpy as jnp
from jax import lax
from jax.experimental import pallas as pl
from jax.experimental.pallas import tpu as pltpu


# Scoped-VMEM request: <= physical on every generation (v7x: 64 MiB), >= the
# v5e default (16 MiB) so the larger tiles are legal everywhere.
_VMEM_LIMIT = 32 * 1024 * 1024
# Budget for the streamed (double-buffered) tiles of one kernel; half the
# scoped limit so weights / spills / compiler scratch always fit.
_STREAM_BUDGET = 16 * 1024 * 1024


def _pad8(n):
    return ((n + 7) // 8) * 8


def _pick_spatial_tile(S, bytes_per_lane, budget=_STREAM_BUDGET, min_grid=1):
    """Largest multiple-of-128 tile dividing S whose streamed VMEM fits budget,
    keeping at least `min_grid` spatial grid steps (v7x megacore)."""
    if S % 128 != 0:
        return S  # full extent is always a legal block
    cap = min(S,
              max(128, (budget // max(1, bytes_per_lane)) // 128 * 128),
              max(128, (S // max(1, min_grid)) // 128 * 128))
    best = 128
    for st in range(128, cap + 1, 128):
        if S % st == 0:
            best = st
    return best


def _pick_lane_tile(M, cap=512):
    """Largest multiple-of-128 divisor of M (<= cap); full M if not tileable."""
    if M % 128 != 0:
        return M
    best = 128
    for t in range(128, min(M, cap) + 1, 128):
        if M % t == 0:
            best = t
    return best


# ----------------------------------------------------------------------------
# Pallas kernels (channel-first, lane-dense: lanes = flattened spatial axis)
# ----------------------------------------------------------------------------

def _fc0_kernel(x_ref, w_ref, b_ref, o_ref):
    # x_ref: (st, Cin0) spatial-major tile (transpose folded into the GEMM);
    # w_ref: (W, Cin0); b_ref: (W, 1); o_ref: (W, st) lane-dense.
    y = lax.dot_general(w_ref[...], x_ref[...],
                        dimension_numbers=(((1,), (1,)), ((), ())),
                        preferred_element_type=jnp.float32)
    o_ref[...] = (y + b_ref[...]).astype(o_ref.dtype)


def _cf_linear_res_kernel(x_ref, w_ref, b_ref, res_ref, o_ref, *, relu):
    # out = res + (wT @ x + b)   [optionally relu]  -- fuses x1 + w_l(x) [+relu]
    y = jnp.dot(w_ref[...], x_ref[...], preferred_element_type=jnp.float32)
    y = y + b_ref[...] + res_ref[...]
    if relu:
        y = jnp.maximum(y, 0.0)
    o_ref[...] = y.astype(o_ref.dtype)


def _head_kernel(x_ref, w1_ref, b1_ref, w2_ref, b2_ref, o_ref):
    # Fused fc1 + relu + fc2: the (128, st) intermediate stays on-chip and is
    # carried in bf16 into the second dot (f32 accumulation) to halve its
    # vreg/VMEM footprint.
    h = jnp.dot(w1_ref[...], x_ref[...], preferred_element_type=jnp.float32)
    h = jnp.maximum(h + b1_ref[...], 0.0).astype(jnp.bfloat16)
    y = jnp.dot(w2_ref[...], h, preferred_element_type=jnp.float32)
    o_ref[...] = y + b2_ref[...]


def _spectral_kernel(xr_ref, xi_ref, wr_ref, wi_ref, or_ref, oi_ref, *, bsz, cin):
    # Modes-on-lanes complex contraction (VPU):
    #   out[b, o, :] = sum_i x[b, i, :] * w[i, o, :]   (complex)
    # xr/xi: (B, Cin, mt); wr/wi: (Cin, Cout, mt); or/oi: (B, Cout, mt)
    for b in range(bsz):
        acc_r = jnp.zeros(or_ref.shape[1:], jnp.float32)   # (Cout, mt)
        acc_i = jnp.zeros(oi_ref.shape[1:], jnp.float32)
        for i in range(cin):
            xr_i = xr_ref[b, i:i + 1, :]                    # (1, mt)
            xi_i = xi_ref[b, i:i + 1, :]
            wr_i = wr_ref[i]                                # (Cout, mt)
            wi_i = wi_ref[i]
            acc_r = acc_r + xr_i * wr_i - xi_i * wi_i
            acc_i = acc_i + xr_i * wi_i + xi_i * wr_i
        or_ref[b] = acc_r
        oi_ref[b] = acc_i


# ----------------------------------------------------------------------------
# Pallas wrappers
# ----------------------------------------------------------------------------

def _min_grid_for(B):
    return -(-2 // B)   # keep B * (S // st) >= 2 grid steps (v7x: 2 TCs)


def pallas_fc0(x_flat, wT, b, out_dtype=jnp.float32):
    """x_flat: (B, S, Cin0) channel-last; wT: (W, Cin0); b: (W,1) -> (B, W, S)."""
    B, S, Cin0 = x_flat.shape
    W = wT.shape[0]
    # streamed bytes per spatial element: x tile is lane-padded to 128 lanes.
    bytes_per = 2 * (128 * 4) + 2 * (_pad8(W) * jnp.dtype(out_dtype).itemsize)
    st = _pick_spatial_tile(S, bytes_per, min_grid=_min_grid_for(B))
    assert S % st == 0, (S, st)
    grid = (B, S // st)
    return pl.pallas_call(
        _fc0_kernel,
        out_shape=jax.ShapeDtypeStruct((B, W, S), out_dtype),
        grid=grid,
        in_specs=[
            pl.BlockSpec((None, st, Cin0), lambda bi, si: (bi, si, 0)),
            pl.BlockSpec((W, Cin0), lambda bi, si: (0, 0)),
            pl.BlockSpec((W, 1), lambda bi, si: (0, 0)),
        ],
        out_specs=pl.BlockSpec((None, W, st), lambda bi, si: (bi, 0, si)),
        compiler_params=pltpu.CompilerParams(
            dimension_semantics=("parallel", "parallel"),
            vmem_limit_bytes=_VMEM_LIMIT),
    )(x_flat, wT, b)


def pallas_cf_linear_res(x, wT, b, res, relu, out_dtype=jnp.float32):
    """x: (B, Cin, S); wT: (Cout, Cin); b: (Cout, 1); res: (B, Cout, S)."""
    B, Cin, S = x.shape
    Cout = wT.shape[0]
    bytes_per = 2 * (_pad8(Cin) * x.dtype.itemsize
                     + _pad8(Cout) * res.dtype.itemsize
                     + _pad8(Cout) * jnp.dtype(out_dtype).itemsize)
    st = _pick_spatial_tile(S, bytes_per, min_grid=_min_grid_for(B))
    assert S % st == 0, (S, st)
    grid = (B, S // st)
    kernel = functools.partial(_cf_linear_res_kernel, relu=relu)
    return pl.pallas_call(
        kernel,
        out_shape=jax.ShapeDtypeStruct((B, Cout, S), out_dtype),
        grid=grid,
        in_specs=[
            pl.BlockSpec((None, Cin, st), lambda bi, si: (bi, 0, si)),
            pl.BlockSpec((Cout, Cin), lambda bi, si: (0, 0)),
            pl.BlockSpec((Cout, 1), lambda bi, si: (0, 0)),
            pl.BlockSpec((None, Cout, st), lambda bi, si: (bi, 0, si)),
        ],
        out_specs=pl.BlockSpec((None, Cout, st), lambda bi, si: (bi, 0, si)),
        compiler_params=pltpu.CompilerParams(
            dimension_semantics=("parallel", "parallel"),
            vmem_limit_bytes=_VMEM_LIMIT),
    )(x, wT, b, res)


def pallas_head(x, w1T, b1, w2T, b2):
    """Fused fc1(+relu)+fc2. x: (B, Cin, S) (bf16) -> (B, 1, S) f32."""
    B, Cin, S = x.shape
    H = w1T.shape[0]
    bytes_per = (2 * _pad8(Cin) * x.dtype.itemsize   # x stream (dbuf)
                 + 2 * _pad8(1) * 4                  # out stream (dbuf)
                 + _pad8(H) * (4 + 2))               # f32 intermediate + bf16 copy
    st = _pick_spatial_tile(S, bytes_per, min_grid=_min_grid_for(B))
    assert S % st == 0, (S, st)
    grid = (B, S // st)
    return pl.pallas_call(
        _head_kernel,
        out_shape=jax.ShapeDtypeStruct((B, 1, S), jnp.float32),
        grid=grid,
        in_specs=[
            pl.BlockSpec((None, Cin, st), lambda bi, si: (bi, 0, si)),
            pl.BlockSpec((H, Cin), lambda bi, si: (0, 0)),
            pl.BlockSpec((H, 1), lambda bi, si: (0, 0)),
            pl.BlockSpec((1, H), lambda bi, si: (0, 0)),
            pl.BlockSpec((1, 1), lambda bi, si: (0, 0)),
        ],
        out_specs=pl.BlockSpec((None, 1, st), lambda bi, si: (bi, 0, si)),
        compiler_params=pltpu.CompilerParams(
            dimension_semantics=("parallel", "parallel"),
            vmem_limit_bytes=_VMEM_LIMIT),
    )(x, w1T, b1, w2T, b2)


def pallas_spectral_mul(xr, xi, wr, wi):
    """Modes-on-lanes complex channel mixing.
    xr/xi: (B, Cin, M) f32; wr/wi: (Cin, Cout, M) f32 -> (out_r, out_i)."""
    B, Cin, M = xr.shape
    Cout = wr.shape[1]
    mt = _pick_lane_tile(M, cap=512)
    assert M % mt == 0, (M, mt)
    grid = (M // mt,)
    kernel = functools.partial(_spectral_kernel, bsz=B, cin=Cin)
    return pl.pallas_call(
        kernel,
        out_shape=(jax.ShapeDtypeStruct((B, Cout, M), jnp.float32),
                   jax.ShapeDtypeStruct((B, Cout, M), jnp.float32)),
        grid=grid,
        in_specs=[
            pl.BlockSpec((B, Cin, mt), lambda g: (0, 0, g)),
            pl.BlockSpec((B, Cin, mt), lambda g: (0, 0, g)),
            pl.BlockSpec((Cin, Cout, mt), lambda g: (0, 0, g)),
            pl.BlockSpec((Cin, Cout, mt), lambda g: (0, 0, g)),
        ],
        out_specs=(pl.BlockSpec((B, Cout, mt), lambda g: (0, 0, g)),
                   pl.BlockSpec((B, Cout, mt), lambda g: (0, 0, g))),
        compiler_params=pltpu.CompilerParams(
            dimension_semantics=("parallel",),
            vmem_limit_bytes=_VMEM_LIMIT),
    )(xr, xi, wr, wi)


# ----------------------------------------------------------------------------
# SpectralConv3d (FFT in plain JAX, modes-on-lanes channel mixing in Pallas)
# ----------------------------------------------------------------------------

def spectral_conv3d(h, wr, wi, m1, m2, m3, X, Y, Z):
    """h: (B, C, S) f32; wr/wi: (C, Cout, 4*m1*m2*m3) f32.  Returns (B, Cout, S)."""
    B, C, S = h.shape
    Cout = wr.shape[1]
    Nm = m1 * m2 * m3
    Zr = Z // 2 + 1

    x = h.reshape(B, C, X, Y, Z)
    x_ft = jnp.fft.rfftn(x, axes=(-3, -2, -1))          # (B, C, X, Y, Zr) c64

    # Corner extraction: plain slices + reshapes (modes -> last axis), no 5-D
    # transposes; same corner order as the reference (weights1..weights4).
    corners = [
        x_ft[:, :, :m1, :m2, :m3],
        x_ft[:, :, X - m1:, :m2, :m3],
        x_ft[:, :, :m1, Y - m2:, :m3],
        x_ft[:, :, X - m1:, Y - m2:, :m3],
    ]
    xc = jnp.concatenate([c.reshape(B, C, Nm) for c in corners], axis=-1)
    xr = jnp.real(xc).astype(jnp.float32)                # (B, C, 4Nm)
    xi = jnp.imag(xc).astype(jnp.float32)

    out_r, out_i = pallas_spectral_mul(xr, xi, wr, wi)   # (B, Cout, 4Nm) each
    oc = lax.complex(out_r, out_i)                       # (B, Cout, 4Nm) c64
    o1, o2, o3, o4 = [o.reshape(B, Cout, m1, m2, m3)
                      for o in jnp.split(oc, 4, axis=-1)]

    out_ft = jnp.zeros((B, Cout, X, Y, Zr), dtype=jnp.complex64)
    out_ft = out_ft.at[:, :, :m1, :m2, :m3].set(o1)
    out_ft = out_ft.at[:, :, X - m1:, :m2, :m3].set(o2)
    out_ft = out_ft.at[:, :, :m1, Y - m2:, :m3].set(o3)
    out_ft = out_ft.at[:, :, X - m1:, Y - m2:, :m3].set(o4)

    y = jnp.fft.irfftn(out_ft, s=(X, Y, Z), axes=(-3, -2, -1))  # (B,Cout,X,Y,Z) f32
    return y.reshape(B, Cout, S).astype(jnp.float32)


# ----------------------------------------------------------------------------
# FNO3d forward
# ----------------------------------------------------------------------------

def fno3d_forward(x, params, width, m1, m2, m3):
    """x: (B, X, Y, Z, 13) float32 -> (B, X, Y, Z, 1)."""
    B, X, Y, Z, Cin0 = x.shape
    S = X * Y * Z

    # fc0: lift 13 -> width.  The channel-last -> channel-first transpose is
    # folded into the kernel (input tiles are (st, 13), output is lane-dense).
    x_flat = x.reshape(B, S, Cin0)
    h = pallas_fc0(x_flat, params["fc0_wT"], params["fc0_b"])      # (B, W, S) f32

    for l in range(4):
        x1 = spectral_conv3d(h, params[f"conv{l}_wr"], params[f"conv{l}_wi"],
                             m1, m2, m3, X, Y, Z)
        # Layers 0-2 feed the next FFT -> keep f32; layer 3 only feeds the
        # bf16 head -> emit bf16 to halve the last activation round trip.
        out_dtype = jnp.float32 if l < 3 else jnp.bfloat16
        h = pallas_cf_linear_res(h, params[f"w{l}_wT"], params[f"w{l}_b"],
                                 res=x1, relu=(l < 3), out_dtype=out_dtype)

    out = pallas_head(h, params["fc1_wT"], params["fc1_b"],
                      params["fc2_wT"], params["fc2_b"])            # (B, 1, S) f32
    return out.reshape(B, X, Y, Z, 1)


# ----------------------------------------------------------------------------
# Deterministic parameter init (synthetic, matching module __init__ shapes).
# Spectral weights are pre-laid-out once here (modes flattened onto last axis).
# ----------------------------------------------------------------------------

def init_params(key, width, m1, m2, m3, in_ch=13):
    params = {}
    keys = iter(jax.random.split(key, 64))
    Nm = m1 * m2 * m3

    def lin(cin, cout):
        wT = jax.random.normal(next(keys), (cout, cin), jnp.float32) / jnp.sqrt(cin)
        b = jax.random.normal(next(keys), (cout, 1), jnp.float32) * 0.01
        return wT, b

    params["fc0_wT"], params["fc0_b"] = lin(in_ch, width)
    scale = 1.0 / (width * width)
    for l in range(4):
        wr_list, wi_list = [], []
        for _ in range(4):  # weights1..weights4: complex (Cin, Cout, m1, m2, m3)
            re = jax.random.uniform(next(keys), (width, width, m1, m2, m3), jnp.float32)
            im = jax.random.uniform(next(keys), (width, width, m1, m2, m3), jnp.float32)
            wr_list.append((scale * re).reshape(width, width, Nm))
            wi_list.append((scale * im).reshape(width, width, Nm))
        params[f"conv{l}_wr"] = jnp.concatenate(wr_list, axis=-1)   # (C, C, 4Nm)
        params[f"conv{l}_wi"] = jnp.concatenate(wi_list, axis=-1)
        params[f"w{l}_wT"], params[f"w{l}_b"] = lin(width, width)
    w1T, b1 = lin(width, 128)
    w2T, b2 = lin(128, 1)
    params["fc1_wT"], params["fc1_b"] = w1T.astype(jnp.bfloat16), b1
    params["fc2_wT"], params["fc2_b"] = w2T.astype(jnp.bfloat16), b2
    return params


if __name__ == "__main__":
    WIDTH = 20
    M1, M2, M3 = 4, 4, 3
    B, X, Y, Z, C_IN = 2, 8, 8, 8, 13

    key = jax.random.PRNGKey(0)
    k_x, k_p = jax.random.split(key)
    x = jax.random.normal(k_x, (B, X, Y, Z, C_IN), jnp.float32)
    params = init_params(k_p, WIDTH, M1, M2, M3, in_ch=C_IN)

    fwd = jax.jit(functools.partial(fno3d_forward, width=WIDTH, m1=M1, m2=M2, m3=M3))
    out = fwd(x, params)
    jax.block_until_ready(out)
    assert out.shape == (B, X, Y, Z, 1), out.shape
    print("KERNEL_OK")
</pallas_src>

<mosaic_0001>
module attributes {stable_mosaic.version = 11 : i64} {
  func.func @_fc0_kernel(%arg0: i32, %arg1: i32, %arg2: memref<1x512x13xf32, #tpu.memory_space<vmem>>, %arg3: memref<20x13xf32, #tpu.memory_space<vmem>>, %arg4: memref<20x1xf32, #tpu.memory_space<vmem>>, %arg5: memref<1x20x512xf32, #tpu.memory_space<vmem>>) attributes {dimension_semantics = [#tpu.dimension_semantics<parallel>, #tpu.dimension_semantics<parallel>], iteration_bounds = array<i64: 2, 1>, scalar_prefetch = 0 : i64, scratch_operands = 0 : i64, tpu.core_type = #tpu.core_type<tc>, window_params = [{transform_indices = @transform_0, window_bounds = array<i64: 1, 512, 13>}, {pipeline_mode = #tpu.pipeline_mode<synchronous>, transform_indices = @transform_1, window_bounds = array<i64: 20, 13>}, {pipeline_mode = #tpu.pipeline_mode<synchronous>, transform_indices = @transform_2, window_bounds = array<i64: 20, 1>}, {transform_indices = @transform_3, window_bounds = array<i64: 1, 20, 512>}]} {
    %c0 = arith.constant 0 : index
    %c0_0 = arith.constant 0 : index
    %0 = vector.load %arg3[%c0, %c0_0] : memref<20x13xf32, #tpu.memory_space<vmem>>, vector<20x13xf32>
    %c0_1 = arith.constant 0 : index
    %c0_2 = arith.constant 0 : index
    %c0_3 = arith.constant 0 : index
    %1 = vector.load %arg2[%c0_1, %c0_2, %c0_3] : memref<1x512x13xf32, #tpu.memory_space<vmem>>, vector<1x512x13xf32>
    %2 = vector.shape_cast %1 : vector<1x512x13xf32> to vector<512x13xf32>
    %cst = arith.constant dense<0.000000e+00> : vector<20x512xf32>
    %3 = tpu.matmul %0, %2, %cst {dimension_numbers = #tpu.dot_dimension_numbers<[1], [1], [0], [0], [0, 0, 1, 0], [], []>} : vector<20x13xf32>, vector<512x13xf32>, vector<20x512xf32> -> vector<20x512xf32>
    %c0_4 = arith.constant 0 : index
    %c0_5 = arith.constant 0 : index
    %4 = vector.load %arg4[%c0_4, %c0_5] : memref<20x1xf32, #tpu.memory_space<vmem>>, vector<20x1xf32>
    %5 = vector.broadcast %4 : vector<20x1xf32> to vector<20x512xf32>
    %6 = arith.addf %3, %5 : vector<20x512xf32>
    %c0_6 = arith.constant 0 : index
    %c0_7 = arith.constant 0 : index
    %c0_8 = arith.constant 0 : index
    %7 = vector.load %arg5[%c0_6, %c0_7, %c0_8] : memref<1x20x512xf32, #tpu.memory_space<vmem>>, vector<1x20x512xf32>
    %8 = vector.shape_cast %7 : vector<1x20x512xf32> to vector<20x512xf32>
    %9 = vector.shape_cast %6 : vector<20x512xf32> to vector<1x20x512xf32>
    tpu.vector_store %arg5[%c0_6, %c0_7, %c0_8], %9 {strides = array<i32>} : memref<1x20x512xf32, #tpu.memory_space<vmem>>, vector<1x20x512xf32>,
    return
  }
  func.func @transform_0(%arg0: i32, %arg1: i32) -> (i32, i32, i32) {
    %c0_i32 = arith.constant 0 : i32
    %c0_i32_0 = arith.constant 0 : i32
    return %arg0, %arg1, %c0_i32 : i32, i32, i32
  }
  func.func @transform_1(%arg0: i32, %arg1: i32) -> (i32, i32) {
    %c0_i32 = arith.constant 0 : i32
    %c0_i32_0 = arith.constant 0 : i32
    %c0_i32_1 = arith.constant 0 : i32
    return %c0_i32, %c0_i32_0 : i32, i32
  }
  func.func @transform_2(%arg0: i32, %arg1: i32) -> (i32, i32) {
    %c0_i32 = arith.constant 0 : i32
    %c0_i32_0 = arith.constant 0 : i32
    %c0_i32_1 = arith.constant 0 : i32
    return %c0_i32, %c0_i32_0 : i32, i32
  }
  func.func @transform_3(%arg0: i32, %arg1: i32) -> (i32, i32, i32) {
    %c0_i32 = arith.constant 0 : i32
    %c0_i32_0 = arith.constant 0 : i32
    return %arg0, %c0_i32, %arg1 : i32, i32, i32
  }
}

module attributes {stable_mosaic.version = 11 : i64} {
  func.func @_spectral_kernel(%arg0: i32, %arg1: memref<2x20x192xf32, #tpu.memory_space<vmem>>, %arg2: memref<2x20x192xf32, #tpu.memory_space<vmem>>, %arg3: memref<20x20x192xf32, #tpu.memory_space<vmem>>, %arg4: memref<20x20x192xf32, #tpu.memory_space<vmem>>, %arg5: memref<2x20x192xf32, #tpu.memory_space<vmem>>, %arg6: memref<2x20x192xf32, #tpu.memory_space<vmem>>) attributes {dimension_semantics = [#tpu.dimension_semantics<parallel>], iteration_bounds = array<i64: 1>, scalar_prefetch = 0 : i64, scratch_operands = 0 : i64, tpu.core_type = #tpu.core_type<tc>, window_params = [{transform_indices = @transform_0, window_bounds = array<i64: 2, 20, 192>}, {transform_indices = @transform_1, window_bounds = array<i64: 2, 20, 192>}, {transform_indices = @transform_2, window_bounds = array<i64: 20, 20, 192>}, {transform_indices = @transform_3, window_bounds = array<i64: 20, 20, 192>}, {transform_indices = @transform_4, window_bounds = array<i64: 2, 20, 192>}, {transform_indices = @transform_5, window_bounds = array<i64: 2, 20, 192>}]} {
    %cst = arith.constant 0.000000e+00 : f32
    %0 = vector.broadcast %cst : f32 to vector<20x192xf32>
    %cst_0 = arith.constant 0.000000e+00 : f32
    %1 = vector.broadcast %cst_0 : f32 to vector<20x192xf32>
    %c0 = arith.constant 0 : index
    %c0_1 = arith.constant 0 : index
    %c0_2 = arith.constant 0 : index
    %2 = vector.load %arg1[%c0, %c0_1, %c0_2] : memref<2x20x192xf32, #tpu.memory_space<vmem>>, vector<1x1x192xf32>
    %3 = vector.shape_cast %2 : vector<1x1x192xf32> to vector<1x192xf32>
    %c0_3 = arith.constant 0 : index
    %c0_4 = arith.constant 0 : index
    %c0_5 = arith.constant 0 : index
    %4 = vector.load %arg2[%c0_3, %c0_4, %c0_5] : memref<2x20x192xf32, #tpu.memory_space<vmem>>, vector<1x1x192xf32>
    %5 = vector.shape_cast %4 : vector<1x1x192xf32> to vector<1x192xf32>
    %c0_6 = arith.constant 0 : index
    %c0_7 = arith.constant 0 : index
    %c0_8 = arith.constant 0 : index
    %6 = vector.load %arg3[%c0_6, %c0_7, %c0_8] : memref<20x20x192xf32, #tpu.memory_space<vmem>>, vector<1x20x192xf32>
    %7 = vector.shape_cast %6 : vector<1x20x192xf32> to vector<20x192xf32>
    %c0_9 = arith.constant 0 : index
    %c0_10 = arith.constant 0 : index
    %c0_11 = arith.constant 0 : index
    %8 = vector.load %arg4[%c0_9, %c0_10, %c0_11] : memref<20x20x192xf32, #tpu.memory_space<vmem>>, vector<1x20x192xf32>
    %9 = vector.shape_cast %8 : vector<1x20x192xf32> to vector<20x192xf32>
    %10 = vector.broadcast %3 : vector<1x192xf32> to vector<20x192xf32>
    %11 = arith.mulf %10, %7 : vector<20x192xf32>
    %12 = arith.addf %0, %11 : vector<20x192xf32>
    %13 = vector.broadcast %5 : vector<1x192xf32> to vector<20x192xf32>
    %14 = arith.mulf %13, %9 : vector<20x192xf32>
    %15 = arith.subf %12, %14 : vector<20x192xf32>
    %16 = vector.broadcast %3 : vector<1x192xf32> to vector<20x192xf32>
    %17 = arith.mulf %16, %9 : vector<20x192xf32>
    %18 = arith.addf %1, %17 : vector<20x192xf32>
    %19 = vector.broadcast %5 : vector<1x192xf32> to vector<20x192xf32>
    %20 = arith.mulf %19, %7 : vector<20x192xf32>
    %21 = arith.addf %18, %20 : vector<20x192xf32>
    %c0_12 = arith.constant 0 : index
    %c1 = arith.constant 1 : index
    %c0_13 = arith.constant 0 : index
    %22 = vector.load %arg1[%c0_12, %c1, %c0_13] : memref<2x20x192xf32, #tpu.memory_space<vmem>>, vector<1x1x192xf32>
    %23 = vector.shape_cast %22 : vector<1x1x192xf32> to vector<1x192xf32>
    %c0_14 = arith.constant 0 : index
    %c1_15 = arith.constant 1 : index
    %c0_16 = arith.constant 0 : index
    %24 = vector.load %arg2[%c0_14, %c1_15, %c0_16] : memref<2x20x192xf32, #tpu.memory_space<vmem>>, vector<1x1x192xf32>
    %25 = vector.shape_cast %24 : vector<1x1x192xf32> to vector<1x192xf32>
    %c1_17 = arith.constant 1 : index
    %c0_18 = arith.constant 0 : index
    %c0_19 = arith.constant 0 : index
    %26 = vector.load %arg3[%c1_17, %c0_18, %c0_19] : memref<20x20x192xf32, #tpu.memory_space<vmem>>, vector<1x20x192xf32>
    %27 = vector.shape_cast %26 : vector<1x20x192xf32> to vector<20x192xf32>
    %c1_20 = arith.constant 1 : index
    %c0_21 = arith.constant 0 : index
    %c0_22 = arith.constant 0 : index
    %28 = vector.load %arg4[%c1_20, %c0_21, %c0_22] : memref<20x20x192xf32, #tpu.memory_space<vmem>>, vector<1x20x192xf32>
    %29 = vector.shape_cast %28 : vector<1x20x192xf32> to vector<20x192xf32>
    %30 = vector.broadcast %23 : vector<1x192xf32> to vector<20x192xf32>
    %31 = arith.mulf %30, %27 : vector<20x192xf32>
    %32 = arith.addf %15, %31 : vector<20x192xf32>
    %33 = vector.broadcast %25 : vector<1x192xf32> to vector<20x192xf32>
    %34 = arith.mulf %33, %29 : vector<20x192xf32>
    %35 = arith.subf %32, %34 : vector<20x192xf32>
    %36 = vector.broadcast %23 : vector<1x192xf32> to vector<20x192xf32>
    %37 = arith.mulf %36, %29 : vector<20x192xf32>
    %38 = arith.addf %21, %37 : vector<20x192xf32>
    %39 = vector.broadcast %25 : vector<1x192xf32> to vector<20x192xf32>
    %40 = arith.mulf %39, %27 : vector<20x192xf32>
    %41 = arith.addf %38, %40 : vector<20x192xf32>
    %c0_23 = arith.constant 0 : index
    %c2 = arith.constant 2 : index
    %c0_24 = arith.constant 0 : index
    %42 = vector.load %arg1[%c0_23, %c2, %c0_24] : memref<2x20x192xf32, #tpu.memory_space<vmem>>, vector<1x1x192xf32>
    %43 = vector.shape_cast %42 : vector<1x1x192xf32> to vector<1x192xf32>
    %c0_25 = arith.constant 0 : index
    %c2_26 = arith.constant 2 : index
    %c0_27 = arith.constant 0 : index
    %44 = vector.load %arg2[%c0_25, %c2_26, %c0_27] : memref<2x20x192xf32, #tpu.memory_space<vmem>>, vector<1x1x192xf32>
    %45 = vector.shape_cast %44 : vector<1x1x192xf32> to vector<1x192xf32>
    %c2_28 = arith.constant 2 : index
    %c0_29 = arith.constant 0 : index
    %c0_30 = arith.constant 0 : index
    %46 = vector.load %arg3[%c2_28, %c0_29, %c0_30] : memref<20x20x192xf32, #tpu.memory_space<vmem>>, vector<1x20x192xf32>
    %47 = vector.shape_cast %46 : vector<1x20x192xf32> to vector<20x192xf32>
    %c2_31 = arith.constant 2 : index
    %c0_32 = arith.constant 0 : index
    %c0_33 = arith.constant 0 : index
    %48 = vector.load %arg4[%c2_31, %c0_32, %c0_33] : memref<20x20x192xf32, #tpu.memory_space<vmem>>, vector<1x20x192xf32>
    %49 = vector.shape_cast %48 : vector<1x20x192xf32> to vector<20x192xf32>
    %50 = vector.broadcast %43 : vector<1x192xf32> to vector<20x192xf32>
    %51 = arith.mulf %50, %47 : vector<20x192xf32>
    %52 = arith.addf %35, %51 : vector<20x192xf32>
    %53 = vector.broadcast %45 : vector<1x192xf32> to vector<20x192xf32>
    %54 = arith.mulf %53, %49 : vector<20x192xf32>
    %55 = arith.subf %52, %54 : vector<20x192xf32>
    %56 = vector.broadcast %43 : vector<1x192xf32> to vector<20x192xf32>
    %57 = arith.mulf %56, %49 : vector<20x192xf32>
    %58 = arith.addf %41, %57 : vector<20x192xf32>
    %59 = vector.broadcast %45 : vector<1x192xf32> to vector<20x192xf32>
    %60 = arith.mulf %59, %47 : vector<20x192xf32>
    %61 = arith.addf %58, %60 : vector<20x192xf32>
    %c0_34 = arith.constant 0 : index
    %c3 = arith.constant 3 : index
    %c0_35 = arith.constant 0 : index
    %62 = vector.load %arg1[%c0_34, %c3, %c0_35] : memref<2x20x192xf32, #tpu.memory_space<vmem>>, vector<1x1x192xf32>
    %63 = vector.shape_cast %62 : vector<1x1x192xf32> to vector<1x192xf32>
    %c0_36 = arith.constant 0 : index
    %c3_37 = arith.constant 3 : index
    %c0_38 = arith.constant 0 : index
    %64 = vector.load %arg2[%c0_36, %c3_37, %c0_38] : memref<2x20x192xf32, #tpu.memory_space<vmem>>, vector<1x1x192xf32>
    %65 = vector.shape_cast %64 : vector<1x1x192xf32> to vector<1x192xf32>
    %c3_39 = arith.constant 3 : index
    %c0_40 = arith.constant 0 : index
    %c0_41 = arith.constant 0 : index
    %66 = vector.load %arg3[%c3_39, %c0_40, %c0_41] : memref<20x20x192xf32, #tpu.memory_space<vmem>>, vector<1x20x192xf32>
    %67 = vector.shape_cast %66 : vector<1x20x192xf32> to vector<20x192xf32>
    %c3_42 = arith.constant 3 : index
    %c0_43 = arith.constant 0 : index
    %c0_44 = arith.constant 0 : index
    %68 = vector.load %arg4[%c3_42, %c0_43, %c0_44] : memref<20x20x192xf32, #tpu.memory_space<vmem>>, vector<1x20x192xf32>
    %69 = vector.shape_cast %68 : vector<1x20x192xf32> to vector<20x192xf32>
    %70 = vector.broadcast %63 : vector<1x192xf32> to vector<20x192xf32>
    %71 = arith.mulf %70, %67 : vector<20x192xf32>
    %72 = arith.addf %55, %71 : vector<20x192xf32>
    %73 = vector.broadcast %65 : vector<1x192xf32> to vector<20x192xf32>
    %74 = arith.mulf %73, %69 : vector<20x192xf32>
    %75 = arith.subf %72, %74 : vector<20x192xf32>
    %76 = vector.broadcast %63 : vector<1x192xf32> to vector<20x192xf32>
    %77 = arith.mulf %76, %69 : vector<20x192xf32>
    %78 = arith.addf %61, %77 : vector<20x192xf32>
    %79 = vector.broadcast %65 : vector<1x192xf32> to vector<20x192xf32>
    %80 = arith.mulf %79, %67 : vector<20x192xf32>
    %81 = arith.addf %78, %80 : vector<20x192xf32>
    %c0_45 = arith.constant 0 : index
    %c4 = arith.constant 4 : index
    %c0_46 = arith.constant 0 : index
    %82 = vector.load %arg1[%c0_45, %c4, %c0_46] : memref<2x20x192xf32, #tpu.memory_space<vmem>>, vector<1x1x192xf32>
    %83 = vector.shape_cast %82 : vector<1x1x192xf32> to vector<1x192xf32>
    %c0_47 = arith.constant 0 : index
    %c4_48 = arith.constant 4 : index
    %c0_49 = arith.constant 0 : index
    %84 = vector.load %arg2[%c0_47, %c4_48, %c0_49] : memref<2x20x192xf32, #tpu.memory_space<vmem>>, vector<1x1x192xf32>
    %85 = vector.shape_cast %84 : vector<1x1x192xf32> to vector<1x192xf32>
    %c4_50 = arith.constant 4 : index
    %c0_51 = arith.constant 0 : index
    %c0_52 = arith.constant 0 : index
    %86 = vector.load %arg3[%c4_50, %c0_51, %c0_52] : memref<20x20x192xf32, #tpu.memory_space<vmem>>, vector<1x20x192xf32>
    %87 = vector.shape_cast %86 : vector<1x20x192xf32> to vector<20x192xf32>
    %c4_53 = arith.constant 4 : index
    %c0_54 = arith.constant 0 : index
    %c0_55 = arith.constant 0 : index
    %88 = vector.load %arg4[%c4_53, %c0_54, %c0_55] : memref<20x20x192xf32, #tpu.memory_space<vmem>>, vector<1x20x192xf32>
    %89 = vector.shape_cast %88 : vector<1x20x192xf32> to vector<20x192xf32>
    %90 = vector.broadcast %83 : vector<1x192xf32> to vector<20x192xf32>
    %91 = arith.mulf %90, %87 : vector<20x192xf32>
    %92 = arith.addf %75, %91 : vector<20x192xf32>
    %93 = vector.broadcast %85 : vector<1x192xf32> to vector<20x192xf32>
    %94 = arith.mulf %93, %89 : vector<20x192xf32>
    %95 = arith.subf %92, %94 : vector<20x192xf32>
    %96 = vector.broadcast %83 : vector<1x192xf32> to vector<20x192xf32>
    %97 = arith.mulf %96, %89 : vector<20x192xf32>
    %98 = arith.addf %81, %97 : vector<20x192xf32>
    %99 = vector.broadcast %85 : vector<1x192xf32> to vector<20x192xf32>
    %100 = arith.mulf %99, %87 : vector<20x192xf32>
    %101 = arith.addf %98, %100 : vector<20x192xf32>
    %c0_56 = arith.constant 0 : index
    %c5 = arith.constant 5 : index
    %c0_57 = arith.constant 0 : index
    %102 = vector.load %arg1[%c0_56, %c5, %c0_57] : memref<2x20x192xf32, #tpu.memory_space<vmem>>, vector<1x1x192xf32>
    %103 = vector.shape_cast %102 : vector<1x1x192xf32> to vector<1x192xf32>
    %c0_58 = arith.constant 0 : index
    %c5_59 = arith.constant 5 : index
    %c0_60 = arith.constant 0 : index
    %104 = vector.load %arg2[%c0_58, %c5_59, %c0_60] : memref<2x20x192xf32, #tpu.memory_space<vmem>>, vector<1x1x192xf32>
    %105 = vector.shape_cast %104 : vector<1x1x192xf32> to vector<1x192xf32>
    %c5_61 = arith.constant 5 : index
    %c0_62 = arith.constant 0 : index
    %c0_63 = arith.constant 0 : index
    %106 = vector.load %arg3[%c5_61, %c0_62, %c0_63] : memref<20x20x192xf32, #tpu.memory_space<vmem>>, vector<1x20x192xf32>
    %107 = vector.shape_cast %106 : vector<1x20x192xf32> to vector<20x192xf32>
    %c5_64 = arith.constant 5 : index
    %c0_65 = arith.constant 0 : index
    %c0_66 = arith.constant 0 : index
    %108 = vector.load %arg4[%c5_64, %c0_65, %c0_66] : memref<20x20x192xf32, #tpu.memory_space<vmem>>, vector<1x20x192xf32>
    %109 = vector.shape_cast %108 : vector<1x20x192xf32> to vector<20x192xf32>
    %110 = vector.broadcast %103 : vector<1x192xf32> to vector<20x192xf32>
    %111 = arith.mulf %110, %107 : vector<20x192xf32>
    %112 = arith.addf %95, %111 : vector<20x192xf32>
    %113 = vector.broadcast %105 : vector<1x192xf32> to vector<20x192xf32>
    %114 = arith.mulf %113, %109 : vector<20x192xf32>
    %115 = arith.subf %112, %114 : vector<20x192xf32>
    %116 = vector.broadcast %103 : vector<1x192xf32> to vector<20x192xf32>
    %117 = arith.mulf %116, %109 : vector<20x192xf32>
    %118 = arith.addf %101, %117 : vector<20x192xf32>
    %119 = vector.broadcast %105 : vector<1x192xf32> to vector<20x192xf32>
    %120 = arith.mulf %119, %107 : vector<20x192xf32>
    %121 = arith.addf %118, %120 : vector<20x192xf32>
    %c0_67 = arith.constant 0 : index
    %c6 = arith.constant 6 : index
    %c0_68 = arith.constant 0 : index
    %122 = vector.load %arg1[%c0_67, %c6, %c0_68] : memref<2x20x192xf32, #tpu.memory_space<vmem>>, vector<1x1x192xf32>
    %123 = vector.shape_cast %122 : vector<1x1x192xf32> to vector<1x192xf32>
    %c0_69 = arith.constant 0 : index
    %c6_70 = arith.constant 6 : index
    %c0_71 = arith.constant 0 : index
    %124 = vector.load %arg2[%c0_69, %c6_70, %c0_71] : memref<2x20x192xf32, #tpu.memory_space<vmem>>, vector<1x1x192xf32>
    %125 = vector.shape_cast %124 : vector<1x1x192xf32> to vector<1x192xf32>
    %c6_72 = arith.constant 6 : index
    %c0_73 = arith.constant 0 : index
    %c0_74 = arith.constant 0 : index
    %126 = vector.load %arg3[%c6_72, %c0_73, %c0_74] : memref<20x20x192xf32, #tpu.memory_space<vmem>>, vector<1x20x192xf32>
    %127 = vector.shape_cast %126 : vector<1x20x192xf32> to vector<20x192xf32>
    %c6_75 = arith.constant 6 : index
    %c0_76 = arith.constant 0 : index
    %c0_77 = arith.constant 0 : index
    %128 = vector.load %arg4[%c6_75, %c0_76, %c0_77] : memref<20x20x192xf32, #tpu.memory_space<vmem>>, vector<1x20x192xf32>
    %129 = vector.shape_cast %128 : vector<1x20x192xf32> to vector<20x192xf32>
    %130 = vector.broadcast %123 : vector<1x192xf32> to vector<20x192xf32>
    %131 = arith.mulf %130, %127 : vector<20x192xf32>
    %132 = arith.addf %115, %131 : vector<20x192xf32>
    %133 = vector.broadcast %125 : vector<1x192xf32> to vector<20x192xf32>
    %134 = arith.mulf %133, %129 : vector<20x192xf32>
    %135 = arith.subf %132, %134 : vector<20x192xf32>
    %136 = vector.broadcast %123 : vector<1x192xf32> to vector<20x192xf32>
    %137 = arith.mulf %136, %129 : vector<20x192xf32>
    %138 = arith.addf %121, %137 : vector<20x192xf32>
    %139 = vector.broadcast %125 : vector<1x192xf32> to vector<20x192xf32>
    %140 = arith.mulf %139, %127 : vector<20x192xf32>
    %141 = arith.addf %138, %140 : vector<20x192xf32>
    %c0_78 = arith.constant 0 : index
    %c7 = arith.constant 7 : index
    %c0_79 = arith.constant 0 : index
    %142 = vector.load %arg1[%c0_78, %c7, %c0_79] : memref<2x20x192xf32, #tpu.memory_space<vmem>>, vector<1x1x192xf32>
    %143 = vector.shape_cast %142 : vector<1x1x192xf32> to vector<1x192xf32>
    %c0_80 = arith.constant 0 : index
    %c7_81 = arith.constant 7 : index
    %c0_82 = arith.constant 0 : index
    %144 = vector.load %arg2[%c0_80, %c7_81, %c0_82] : memref<2x20x192xf32, #tpu.memory_space<vmem>>, vector<1x1x192xf32>
    %145 = vector.shape_cast %144 : vector<1x1x192xf32> to vector<1x192xf32>
    %c7_83 = arith.constant 7 : index
    %c0_84 = arith.constant 0 : index
    %c0_85 = arith.constant 0 : index
    %146 = vector.load %arg3[%c7_83, %c0_84, %c0_85] : memref<20x20x192xf32, #tpu.memory_space<vmem>>, vector<1x20x192xf32>
    %147 = vector.shape_cast %146 : vector<1x20x192xf32> to vector<20x192xf32>
    %c7_86 = arith.constant 7 : index
    %c0_87 = arith.constant 0 : index
    %c0_88 = arith.constant 0 : index
    %148 = vector.load %arg4[%c7_86, %c0_87, %c0_88] : memref<20x20x192xf32, #tpu.memory_space<vmem>>, vector<1x20x192xf32>
    %149 = vector.shape_cast %148 : vector<1x20x192xf32> to vector<20x192xf32>
    %150 = vector.broadcast %143 : vector<1x192xf32> to vector<20x192xf32>
    %151 = arith.mulf %150, %147 : vector<20x192xf32>
    %152 = arith.addf %135, %151 : vector<20x192xf32>
    %153 = vector.broadcast %145 : vector<1x192xf32> to vector<20x192xf32>
    %154 = arith.mulf %153, %149 : vector<20x192xf32>
    %155 = arith.subf %152, %154 : vector<20x192xf32>
    %156 = vector.broadcast %143 : vector<1x192xf32> to vector<20x192xf32>
    %157 = arith.mulf %156, %149 : vector<20x192xf32>
    %158 = arith.addf %141, %157 : vector<20x192xf32>
    %159 = vector.broadcast %145 : vector<1x192xf32> to vector<20x192xf32>
    %160 = arith.mulf %159, %147 : vector<20x192xf32>
    %161 = arith.addf %158, %160 : vector<20x192xf32>
    %c0_89 = arith.constant 0 : index
    %c8 = arith.constant 8 : index
    %c0_90 = arith.constant 0 : index
    %162 = vector.load %arg1[%c0_89, %c8, %c0_90] : memref<2x20x192xf32, #tpu.memory_space<vmem>>, vector<1x1x192xf32>
    %163 = vector.shape_cast %162 : vector<1x1x192xf32> to vector<1x192xf32>
    %c0_91 = arith.constant 0 : index
    %c8_92 = arith.constant 8 : index
    %c0_93 = arith.constant 0 : index
    %164 = vector.load %arg2[%c0_91, %c8_92, %c0_93] : memref<2x20x192xf32, #tpu.memory_space<vmem>>, vector<1x1x192xf32>
    %165 = vector.shape_cast %164 : vector<1x1x192xf32> to vector<1x192xf32>
    %c8_94 = arith.constant 8 : index
    %c0_95 = arith.constant 0 : index
    %c0_96 = arith.constant 0 : index
    %166 = vector.load %arg3[%c8_94, %c0_95, %c0_96] : memref<20x20x192xf32, #tpu.memory_space<vmem>>, vector<1x20x192xf32>
    %167 = vector.shape_cast %166 : vector<1x20x192xf32> to vector<20x192xf32>
    %c8_97 = arith.constant 8 : index
    %c0_98 = arith.constant 0 : index
    %c0_99 = arith.constant 0 : index
    %168 = vector.load %arg4[%c8_97, %c0_98, %c0_99] : memref<20x20x192xf32, #tpu.memory_space<vmem>>, vector<1x20x192xf32>
    %169 = vector.shape_cast %168 : vector<1x20x192xf32> to vector<20x192xf32>
    %170 = vector.broadcast %163 : vector<1x192xf32> to vector<20x192xf32>
    %171 = arith.mulf %170, %167 : vector<20x192xf32>
    %172 = arith.addf %155, %171 : vector<20x192xf32>
    %173 = vector.broadcast %165 : vector<1x192xf32> to vector<20x192xf32>
    %174 = arith.mulf %173, %169 : vector<20x192xf32>
    %175 = arith.subf %172, %174 : vector<20x192xf32>
    %176 = vector.broadcast %163 : vector<1x192xf32> to vector<20x192xf32>
    %177 = arith.mulf %176, %169 : vector<20x192xf32>
    %178 = arith.addf %161, %177 : vector<20x192xf32>
    %179 = vector.broadcast %165 : vector<1x192xf32> to vector<20x192xf32>
    %180 = arith.mulf %179, %167 : vector<20x192xf32>
    %181 = arith.addf %178, %180 : vector<20x192xf32>
    %c0_100 = arith.constant 0 : index
    %c9 = arith.constant 9 : index
    %c0_101 = arith.constant 0 : index
    %182 = vector.load %arg1[%c0_100, %c9, %c0_101] : memref<2x20x192xf32, #tpu.memory_space<vmem>>, vector<1x1x192xf32>
    %183 = vector.shape_cast %182 : vector<1x1x192xf32> to vector<1x192xf32>
    %c0_102 = arith.constant 0 : index
    %c9_103 = arith.constant 9 : index
    %c0_104 = arith.constant 0 : index
    %184 = vector.load %arg2[%c0_102, %c9_103, %c0_104] : memref<2x20x192xf32, #tpu.memory_space<vmem>>, vector<1x1x192xf32>
    %185 = vector.shape_cast %184 : vector<1x1x192xf32> to vector<1x192xf32>
    %c9_105 = arith.constant 9 : index
    %c0_106 = arith.constant 0 : index
    %c0_107 = arith.constant 0 : index
    %186 = vector.load %arg3[%c9_105, %c0_106, %c0_107] : memref<20x20x192xf32, #tpu.memory_space<vmem>>, vector<1x20x192xf32>
    %187 = vector.shape_cast %186 : vector<1x20x192xf32> to vector<20x192xf32>
    %c9_108 = arith.constant 9 : index
    %c0_109 = arith.constant 0 : index
    %c0_110 = arith.constant 0 : index
    %188 = vector.load %arg4[%c9_108, %c0_109, %c0_110] : memref<20x20x192xf32, #tpu.memory_space<vmem>>, vector<1x20x192xf32>
    %189 = vector.shape_cast %188 : vector<1x20x192xf32> to vector<20x192xf32>
    %190 = vector.broadcast %183 : vector<1x192xf32> to vector<20x192xf32>
    %191 = arith.mulf %190, %187 : vector<20x192xf32>
    %192 = arith.addf %175, %191 : vector<20x192xf32>
    %193 = vector.broadcast %185 : vector<1x192xf32> to vector<20x192xf32>
    %194 = arith.mulf %193, %189 : vector<20x192xf32>
    %195 = arith.subf %192, %194 : vector<20x192xf32>
    %196 = vector.broadcast %183 : vector<1x192xf32> to vector<20x192xf32>
    %197 = arith.mulf %196, %189 : vector<20x192xf32>
    %198 = arith.addf %181, %197 : vector<20x192xf32>
    %199 = vector.broadcast %185 : vector<1x192xf32> to vector<20x192xf32>
    %200 = arith.mulf %199, %187 : vector<20x192xf32>
    %201 = arith.addf %198, %200 : vector<20x192xf32>
    %c0_111 = arith.constant 0 : index
    %c10 = arith.constant 10 : index
    %c0_112 = arith.constant 0 : index
    %202 = vector.load %arg1[%c0_111, %c10, %c0_112] : memref<2x20x192xf32, #tpu.memory_space<vmem>>, vector<1x1x192xf32>
    %203 = vector.shape_cast %202 : vector<1x1x192xf32> to vector<1x192xf32>
    %c0_113 = arith.constant 0 : index
    %c10_114 = arith.constant 10 : index
    %c0_115 = arith.constant 0 : index
    %204 = vector.load %arg2[%c0_113, %c10_114, %c0_115] : memref<2x20x192xf32, #tpu.memory_space<vmem>>, vector<1x1x192xf32>
    %205 = vector.shape_cast %204 : vector<1x1x192xf32> to vector<1x192xf32>
    %c10_116 = arith.constant 10 : index
    %c0_117 = arith.constant 0 : index
    %c0_118 = arith.constant 0 : index
    %206 = vector.load %arg3[%c10_116, %c0_117, %c0_118] : memref<20x20x192xf32, #tpu.memory_space<vmem>>, vector<1x20x192xf32>
    %207 = vector.shape_cast %206 : vector<1x20x192xf32> to vector<20x192xf32>
    %c10_119 = arith.constant 10 : index
    %c0_120 = arith.constant 0 : index
    %c0_121 = arith.constant 0 : index
    %208 = vector.load %arg4[%c10_119, %c0_120, %c0_121] : memref<20x20x192xf32, #tpu.memory_space<vmem>>, vector<1x20x192xf32>
    %209 = vector.shape_cast %208 : vector<1x20x192xf32> to vector<20x192xf32>
    %210 = vector.broadcast %203 : vector<1x192xf32> to vector<20x192xf32>
    %211 = arith.mulf %210, %207 : vector<20x192xf32>
    %212 = arith.addf %195, %211 : vector<20x192xf32>
    %213 = vector.broadcast %205 : vector<1x192xf32> to vector<20x192xf32>
    %214 = arith.mulf %213, %209 : vector<20x192xf32>
    %215 = arith.subf %212, %214 : vector<20x192xf32>
    %216 = vector.broadcast %203 : vector<1x192xf32> to vector<20x192xf32>
    %217 = arith.mulf %216, %209 : vector<20x192xf32>
    %218 = arith.addf %201, %217 : vector<20x192xf32>
    %219 = vector.broadcast %205 : vector<1x192xf32> to vector<20x192xf32>
    %220 = arith.mulf %219, %207 : vector<20x192xf32>
    %221 = arith.addf %218, %220 : vector<20x192xf32>
    %c0_122 = arith.constant 0 : index
    %c11 = arith.constant 11 : index
    %c0_123 = arith.constant 0 : index
    %222 = vector.load %arg1[%c0_122, %c11, %c0_123] : memref<2x20x192xf32, #tpu.memory_space<vmem>>, vector<1x1x192xf32>
    %223 = vector.shape_cast %222 : vector<1x1x192xf32> to vector<1x192xf32>
    %c0_124 = arith.constant 0 : index
    %c11_125 = arith.constant 11 : index
    %c0_126 = arith.constant 0 : index
    %224 = vector.load %arg2[%c0_124, %c11_125, %c0_126] : memref<2x20x192xf32, #tpu.memory_space<vmem>>, vector<1x1x192xf32>
    %225 = vector.shape_cast %224 : vector<1x1x192xf32> to vector<1x192xf32>
    %c11_127 = arith.constant 11 : index
    %c0_128 = arith.constant 0 : index
    %c0_129 = arith.constant 0 : index
    %226 = vector.load %arg3[%c11_127, %c0_128, %c0_129] : memref<20x20x192xf32, #tpu.memory_space<vmem>>, vector<1x20x192xf32>
    %227 = vector.shape_cast %226 : vector<1x20x192xf32> to vector<20x192xf32>
    %c11_130 = arith.constant 11 : index
    %c0_131 = arith.constant 0 : index
    %c0_132 = arith.constant 0 : index
    %228 = vector.load %arg4[%c11_130, %c0_131, %c0_132] : memref<20x20x192xf32, #tpu.memory_space<vmem>>, vector<1x20x192xf32>
    %229 = vector.shape_cast %228 : vector<1x20x192xf32> to vector<20x192xf32>
    %230 = vector.broadcast %223 : vector<1x192xf32> to vector<20x192xf32>
    %231 = arith.mulf %230, %227 : vector<20x192xf32>
    %232 = arith.addf %215, %231 : vector<20x192xf32>
    %233 = vector.broadcast %225 : vector<1x192xf32> to vector<20x192xf32>
    %234 = arith.mulf %233, %229 : vector<20x192xf32>
    %235 = arith.subf %232, %234 : vector<20x192xf32>
    %236 = vector.broadcast %223 : vector<1x192xf32> to vector<20x192xf32>
    %237 = arith.mulf %236, %229 : vector<20x192xf32>
    %238 = arith.addf %221, %237 : vector<20x192xf32>
    %239 = vector.broadcast %225 : vector<1x192xf32> to vector<20x192xf32>
    %240 = arith.mulf %239, %227 : vector<20x192xf32>
    %241 = arith.addf %238, %240 : vector<20x192xf32>
    %c0_133 = arith.constant 0 : index
    %c12 = arith.constant 12 : index
    %c0_134 = arith.constant 0 : index
    %242 = vector.load %arg1[%c0_133, %c12, %c0_134] : memref<2x20x192xf32, #tpu.memory_space<vmem>>, vector<1x1x192xf32>
    %243 = vector.shape_cast %242 : vector<1x1x192xf32> to vector<1x192xf32>
    %c0_135 = arith.constant 0 : index
    %c12_136 = arith.constant 12 : index
    %c0_137 = arith.constant 0 : index
    %244 = vector.load %arg2[%c0_135, %c12_136, %c0_137] : memref<2x20x192xf32, #tpu.memory_space<vmem>>, vector<1x1x192xf32>
    %245 = vector.shape_cast %244 : vector<1x1x192xf32> to vector<1x192xf32>
    %c12_138 = arith.constant 12 : index
    %c0_139 = arith.constant 0 : index
    %c0_140 = arith.constant 0 : index
    %246 = vector.load %arg3[%c12_138, %c0_139, %c0_140] : memref<20x20x192xf32, #tpu.memory_space<vmem>>, vector<1x20x192xf32>
    %247 = vector.shape_cast %246 : vector<1x20x192xf32> to vector<20x192xf32>
    %c12_141 = arith.constant 12 : index
    %c0_142 = arith.constant 0 : index
    %c0_143 = arith.constant 0 : index
    %248 = vector.load %arg4[%c12_141, %c0_142, %c0_143] : memref<20x20x192xf32, #tpu.memory_space<vmem>>, vector<1x20x192xf32>
    %249 = vector.shape_cast %248 : vector<1x20x192xf32> to vector<20x192xf32>
    %250 = vector.broadcast %243 : vector<1x192xf32> to vector<20x192xf32>
    %251 = arith.mulf %250, %247 : vector<20x192xf32>
    %252 = arith.addf %235, %251 : vector<20x192xf32>
    %253 = vector.broadcast %245 : vector<1x192xf32> to vector<20x192xf32>
    %254 = arith.mulf %253, %249 : vector<20x192xf32>
    %255 = arith.subf %252, %254 : vector<20x192xf32>
    %256 = vector.broadcast %243 : vector<1x192xf32> to vector<20x192xf32>
    %257 = arith.mulf %256, %249 : vector<20x192xf32>
    %258 = arith.addf %241, %257 : vector<20x192xf32>
    %259 = vector.broadcast %245 : vector<1x192xf32> to vector<20x192xf32>
    %260 = arith.mulf %259, %247 : vector<20x192xf32>
    %261 = arith.addf %258, %260 : vector<20x192xf32>
    %c0_144 = arith.constant 0 : index
    %c13 = arith.constant 13 : index
    %c0_145 = arith.constant 0 : index
    %262 = vector.load %arg1[%c0_144, %c13, %c0_145] : memref<2x20x192xf32, #tpu.memory_space<vmem>>, vector<1x1x192xf32>
    %263 = vector.shape_cast %262 : vector<1x1x192xf32> to vector<1x192xf32>
    %c0_146 = arith.constant 0 : index
    %c13_147 = arith.constant 13 : index
    %c0_148 = arith.constant 0 : index
    %264 = vector.load %arg2[%c0_146, %c13_147, %c0_148] : memref<2x20x192xf32, #tpu.memory_space<vmem>>, vector<1x1x192xf32>
    %265 = vector.shape_cast %264 : vector<1x1x192xf32> to vector<1x192xf32>
    %c13_149 = arith.constant 13 : index
    %c0_150 = arith.constant 0 : index
    %c0_151 = arith.constant 0 : index
    %266 = vector.load %arg3[%c13_149, %c0_150, %c0_151] : memref<20x20x192xf32, #tpu.memory_space<vmem>>, vector<1x20x192xf32>
    %267 = vector.shape_cast %266 : vector<1x20x192xf32> to vector<20x192xf32>
    %c13_152 = arith.constant 13 : index
    %c0_153 = arith.constant 0 : index
    %c0_154 = arith.constant 0 : index
    %268 = vector.load %arg4[%c13_152, %c0_153, %c0_154] : memref<20x20x192xf32, #tpu.memory_space<vmem>>, vector<1x20x192xf32>
    %269 = vector.shape_cast %268 : vector<1x20x192xf32> to vector<20x192xf32>
    %270 = vector.broadcast %263 : vector<1x192xf32> to vector<20x192xf32>
    %271 = arith.mulf %270, %267 : vector<20x192xf32>
    %272 = arith.addf %255, %271 : vector<20x192xf32>
    %273 = vector.broadcast %265 : vector<1x192xf32> to vector<20x192xf32>
    %274 = arith.mulf %273, %269 : vector<20x192xf32>
    %275 = arith.subf %272, %274 : vector<20x192xf32>
    %276 = vector.broadcast %263 : vector<1x192xf32> to vector<20x192xf32>
    %277 = arith.mulf %276, %269 : vector<20x192xf32>
    %278 = arith.addf %261, %277 : vector<20x192xf32>
    %279 = vector.broadcast %265 : vector<1x192xf32> to vector<20x192xf32>
    %280 = arith.mulf %279, %267 : vector<20x192xf32>
    %281 = arith.addf %278, %280 : vector<20x192xf32>
    %c0_155 = arith.constant 0 : index
    %c14 = arith.constant 14 : index
    %c0_156 = arith.constant 0 : index
    %282 = vector.load %arg1[%c0_155, %c14, %c0_156] : memref<2x20x192xf32, #tpu.memory_space<vmem>>, vector<1x1x192xf32>
    %283 = vector.shape_cast %282 : vector<1x1x192xf32> to vector<1x192xf32>
    %c0_157 = arith.constant 0 : index
    %c14_158 = arith.constant 14 : index
    %c0_159 = arith.constant 0 : index
    %284 = vector.load %arg2[%c0_157, %c14_158, %c0_159] : memref<2x20x192xf32, #tpu.memory_space<vmem>>, vector<1x1x192xf32>
    %285 = vector.shape_cast %284 : vector<1x1x192xf32> to vector<1x192xf32>
    %c14_160 = arith.constant 14 : index
    %c0_161 = arith.constant 0 : index
    %c0_162 = arith.constant 0 : index
    %286 = vector.load %arg3[%c14_160, %c0_161, %c0_162] : memref<20x20x192xf32, #tpu.memory_space<vmem>>, vector<1x20x192xf32>
    %287 = vector.shape_cast %286 : vector<1x20x192xf32> to vector<20x192xf32>
    %c14_163 = arith.constant 14 : index
    %c0_164 = arith.constant 0 : index
    %c0_165 = arith.constant 0 : index
    %288 = vector.load %arg4[%c14_163, %c0_164, %c0_165] : memref<20x20x192xf32, #tpu.memory_space<vmem>>, vector<1x20x192xf32>
    %289 = vector.shape_cast %288 : vector<1x20x192xf32> to vector<20x192xf32>
    %290 = vector.broadcast %283 : vector<1x192xf32> to vector<20x192xf32>
    %291 = arith.mulf %290, %287 : vector<20x192xf32>
    %292 = arith.addf %275, %291 : vector<20x192xf32>
    %293 = vector.broadcast %285 : vector<1x192xf32> to vector<20x192xf32>
    %294 = arith.mulf %293, %289 : vector<20x192xf32>
    %295 = arith.subf %292, %294 : vector<20x192xf32>
    %296 = vector.broadcast %283 : vector<1x192xf32> to vector<20x192xf32>
    %297 = arith.mulf %296, %289 : vector<20x192xf32>
    %298 = arith.addf %281, %297 : vector<20x192xf32>
    %299 = vector.broadcast %285 : vector<1x192xf32> to vector<20x192xf32>
    %300 = arith.mulf %299, %287 : vector<20x192xf32>
    %301 = arith.addf %298, %300 : vector<20x192xf32>
    %c0_166 = arith.constant 0 : index
    %c15 = arith.constant 15 : index
    %c0_167 = arith.constant 0 : index
    %302 = vector.load %arg1[%c0_166, %c15, %c0_167] : memref<2x20x192xf32, #tpu.memory_space<vmem>>, vector<1x1x192xf32>
    %303 = vector.shape_cast %302 : vector<1x1x192xf32> to vector<1x192xf32>
    %c0_168 = arith.constant 0 : index
    %c15_169 = arith.constant 15 : index
    %c0_170 = arith.constant 0 : index
    %304 = vector.load %arg2[%c0_168, %c15_169, %c0_170] : memref<2x20x192xf32, #tpu.memory_space<vmem>>, vector<1x1x192xf32>
    %305 = vector.shape_cast %304 : vector<1x1x192xf32> to vector<1x192xf32>
    %c15_171 = arith.constant 15 : index
    %c0_172 = arith.constant 0 : index
    %c0_173 = arith.constant 0 : index
    %306 = vector.load %arg3[%c15_171, %c0_172, %c0_173] : memref<20x20x192xf32, #tpu.memory_space<vmem>>, vector<1x20x192xf32>
    %307 = vector.shape_cast %306 : vector<1x20x192xf32> to vector<20x192xf32>
    %c15_174 = arith.constant 15 : index
    %c0_175 = arith.constant 0 : index
    %c0_176 = arith.constant 0 : index
    %308 = vector.load %arg4[%c15_174, %c0_175, %c0_176] : memref<20x20x192xf32, #tpu.memory_space<vmem>>, vector<1x20x192xf32>
    %309 = vector.shape_cast %308 : vector<1x20x192xf32> to vector<20x192xf32>
    %310 = vector.broadcast %303 : vector<1x192xf32> to vector<20x192xf32>
    %311 = arith.mulf %310, %307 : vector<20x192xf32>
    %312 = arith.addf %295, %311 : vector<20x192xf32>
    %313 = vector.broadcast %305 : vector<1x192xf32> to vector<20x192xf32>
    %314 = arith.mulf %313, %309 : vector<20x192xf32>
    %315 = arith.subf %312, %314 : vector<20x192xf32>
    %316 = vector.broadcast %303 : vector<1x192xf32> to vector<20x192xf32>
    %317 = arith.mulf %316, %309 : vector<20x192xf32>
    %318 = arith.addf %301, %317 : vector<20x192xf32>
    %319 = vector.broadcast %305 : vector<1x192xf32> to vector<20x192xf32>
    %320 = arith.mulf %319, %307 : vector<20x192xf32>
    %321 = arith.addf %318, %320 : vector<20x192xf32>
    %c0_177 = arith.constant 0 : index
    %c16 = arith.constant 16 : index
    %c0_178 = arith.constant 0 : index
    %322 = vector.load %arg1[%c0_177, %c16, %c0_178] : memref<2x20x192xf32, #tpu.memory_space<vmem>>, vector<1x1x192xf32>
    %323 = vector.shape_cast %322 : vector<1x1x192xf32> to vector<1x192xf32>
    %c0_179 = arith.constant 0 : index
    %c16_180 = arith.constant 16 : index
    %c0_181 = arith.constant 0 : index
    %324 = vector.load %arg2[%c0_179, %c16_180, %c0_181] : memref<2x20x192xf32, #tpu.memory_space<vmem>>, vector<1x1x192xf32>
    %325 = vector.shape_cast %324 : vector<1x1x192xf32> to vector<1x192xf32>
    %c16_182 = arith.constant 16 : index
    %c0_183 = arith.constant 0 : index
    %c0_184 = arith.constant 0 : index
    %326 = vector.load %arg3[%c16_182, %c0_183, %c0_184] : memref<20x20x192xf32, #tpu.memory_space<vmem>>, vector<1x20x192xf32>
    %327 = vector.shape_cast %326 : vector<1x20x192xf32> to vector<20x192xf32>
    %c16_185 = arith.constant 16 : index
    %c0_186 = arith.constant 0 : index
    %c0_187 = arith.constant 0 : index
    %328 = vector.load %arg4[%c16_185, %c0_186, %c0_187] : memref<20x20x192xf32, #tpu.memory_space<vmem>>, vector<1x20x192xf32>
    %329 = vector.shape_cast %328 : vector<1x20x192xf32> to vector<20x192xf32>
    %330 = vector.broadcast %323 : vector<1x192xf32> to vector<20x192xf32>
    %331 = arith.mulf %330, %327 : vector<20x192xf32>
    %332 = arith.addf %315, %331 : vector<20x192xf32>
    %333 = vector.broadcast %325 : vector<1x192xf32> to vector<20x192xf32>
    %334 = arith.mulf %333, %329 : vector<20x192xf32>
    %335 = arith.subf %332, %334 : vector<20x192xf32>
    %336 = vector.broadcast %323 : vector<1x192xf32> to vector<20x192xf32>
    %337 = arith.mulf %336, %329 : vector<20x192xf32>
    %338 = arith.addf %321, %337 : vector<20x192xf32>
    %339 = vector.broadcast %325 : vector<1x192xf32> to vector<20x192xf32>
    %340 = arith.mulf %339, %327 : vector<20x192xf32>
    %341 = arith.addf %338, %340 : vector<20x192xf32>
    %c0_188 = arith.constant 0 : index
    %c17 = arith.constant 17 : index
    %c0_189 = arith.constant 0 : index
    %342 = vector.load %arg1[%c0_188, %c17, %c0_189] : memref<2x20x192xf32, #tpu.memory_space<vmem>>, vector<1x1x192xf32>
    %343 = vector.shape_cast %342 : vector<1x1x192xf32> to vector<1x192xf32>
    %c0_190 = arith.constant 0 : index
    %c17_191 = arith.constant 17 : index
    %c0_192 = arith.constant 0 : index
    %344 = vector.load %arg2[%c0_190, %c17_191, %c0_192] : memref<2x20x192xf32, #tpu.memory_space<vmem>>, vector<1x1x192xf32>
    %345 = vector.shape_cast %344 : vector<1x1x192xf32> to vector<1x192xf32>
    %c17_193 = arith.constant 17 : index
    %c0_194 = arith.constant 0 : index
    %c0_195 = arith.constant 0 : index
    %346 = vector.load %arg3[%c17_193, %c0_194, %c0_195] : memref<20x20x192xf32, #tpu.memory_space<vmem>>, vector<1x20x192xf32>
    %347 = vector.shape_cast %346 : vector<1x20x192xf32> to vector<20x192xf32>
    %c17_196 = arith.constant 17 : index
    %c0_197 = arith.constant 0 : index
    %c0_198 = arith.constant 0 : index
    %348 = vector.load %arg4[%c17_196, %c0_197, %c0_198] : memref<20x20x192xf32, #tpu.memory_space<vmem>>, vector<1x20x192xf32>
    %349 = vector.shape_cast %348 : vector<1x20x192xf32> to vector<20x192xf32>
    %350 = vector.broadcast %343 : vector<1x192xf32> to vector<20x192xf32>
    %351 = arith.mulf %350, %347 : vector<20x192xf32>
    %352 = arith.addf %335, %351 : vector<20x192xf32>
    %353 = vector.broadcast %345 : vector<1x192xf32> to vector<20x192xf32>
    %354 = arith.mulf %353, %349 : vector<20x192xf32>
    %355 = arith.subf %352, %354 : vector<20x192xf32>
    %356 = vector.broadcast %343 : vector<1x192xf32> to vector<20x192xf32>
    %357 = arith.mulf %356, %349 : vector<20x192xf32>
    %358 = arith.addf %341, %357 : vector<20x192xf32>
    %359 = vector.broadcast %345 : vector<1x192xf32> to vector<20x192xf32>
    %360 = arith.mulf %359, %347 : vector<20x192xf32>
    %361 = arith.addf %358, %360 : vector<20x192xf32>
    %c0_199 = arith.constant 0 : index
    %c18 = arith.constant 18 : index
    %c0_200 = arith.constant 0 : index
    %362 = vector.load %arg1[%c0_199, %c18, %c0_200] : memref<2x20x192xf32, #tpu.memory_space<vmem>>, vector<1x1x192xf32>
    %363 = vector.shape_cast %362 : vector<1x1x192xf32> to vector<1x192xf32>
    %c0_201 = arith.constant 0 : index
    %c18_202 = arith.constant 18 : index
    %c0_203 = arith.constant 0 : index
    %364 = vector.load %arg2[%c0_201, %c18_202, %c0_203] : memref<2x20x192xf32, #tpu.memory_space<vmem>>, vector<1x1x192xf32>
    %365 = vector.shape_cast %364 : vector<1x1x192xf32> to vector<1x192xf32>
    %c18_204 = arith.constant 18 : index
    %c0_205 = arith.constant 0 : index
    %c0_206 = arith.constant 0 : index
    %366 = vector.load %arg3[%c18_204, %c0_205, %c0_206] : memref<20x20x192xf32, #tpu.memory_space<vmem>>, vector<1x20x192xf32>
    %367 = vector.shape_cast %366 : vector<1x20x192xf32> to vector<20x192xf32>
    %c18_207 = arith.constant 18 : index
    %c0_208 = arith.constant 0 : index
    %c0_209 = arith.constant 0 : index
    %368 = vector.load %arg4[%c18_207, %c0_208, %c0_209] : memref<20x20x192xf32, #tpu.memory_space<vmem>>, vector<1x20x192xf32>
    %369 = vector.shape_cast %368 : vector<1x20x192xf32> to vector<20x192xf32>
    %370 = vector.broadcast %363 : vector<1x192xf32> to vector<20x192xf32>
    %371 = arith.mulf %370, %367 : vector<20x192xf32>
    %372 = arith.addf %355, %371 : vector<20x192xf32>
    %373 = vector.broadcast %365 : vector<1x192xf32> to vector<20x192xf32>
    %374 = arith.mulf %373, %369 : vector<20x192xf32>
    %375 = arith.subf %372, %374 : vector<20x192xf32>
    %376 = vector.broadcast %363 : vector<1x192xf32> to vector<20x192xf32>
    %377 = arith.mulf %376, %369 : vector<20x192xf32>
    %378 = arith.addf %361, %377 : vector<20x192xf32>
    %379 = vector.broadcast %365 : vector<1x192xf32> to vector<20x192xf32>
    %380 = arith.mulf %379, %367 : vector<20x192xf32>
    %381 = arith.addf %378, %380 : vector<20x192xf32>
    %c0_210 = arith.constant 0 : index
    %c19 = arith.constant 19 : index
    %c0_211 = arith.constant 0 : index
    %382 = vector.load %arg1[%c0_210, %c19, %c0_211] : memref<2x20x192xf32, #tpu.memory_space<vmem>>, vector<1x1x192xf32>
    %383 = vector.shape_cast %382 : vector<1x1x192xf32> to vector<1x192xf32>
    %c0_212 = arith.constant 0 : index
    %c19_213 = arith.constant 19 : index
    %c0_214 = arith.constant 0 : index
    %384 = vector.load %arg2[%c0_212, %c19_213, %c0_214] : memref<2x20x192xf32, #tpu.memory_space<vmem>>, vector<1x1x192xf32>
    %385 = vector.shape_cast %384 : vector<1x1x192xf32> to vector<1x192xf32>
    %c19_215 = arith.constant 19 : index
    %c0_216 = arith.constant 0 : index
    %c0_217 = arith.constant 0 : index
    %386 = vector.load %arg3[%c19_215, %c0_216, %c0_217] : memref<20x20x192xf32, #tpu.memory_space<vmem>>, vector<1x20x192xf32>
    %387 = vector.shape_cast %386 : vector<1x20x192xf32> to vector<20x192xf32>
    %c19_218 = arith.constant 19 : index
    %c0_219 = arith.constant 0 : index
    %c0_220 = arith.constant 0 : index
    %388 = vector.load %arg4[%c19_218, %c0_219, %c0_220] : memref<20x20x192xf32, #tpu.memory_space<vmem>>, vector<1x20x192xf32>
    %389 = vector.shape_cast %388 : vector<1x20x192xf32> to vector<20x192xf32>
    %390 = vector.broadcast %383 : vector<1x192xf32> to vector<20x192xf32>
    %391 = arith.mulf %390, %387 : vector<20x192xf32>
    %392 = arith.addf %375, %391 : vector<20x192xf32>
    %393 = vector.broadcast %385 : vector<1x192xf32> to vector<20x192xf32>
    %394 = arith.mulf %393, %389 : vector<20x192xf32>
    %395 = arith.subf %392, %394 : vector<20x192xf32>
    %396 = vector.broadcast %383 : vector<1x192xf32> to vector<20x192xf32>
    %397 = arith.mulf %396, %389 : vector<20x192xf32>
    %398 = arith.addf %381, %397 : vector<20x192xf32>
    %399 = vector.broadcast %385 : vector<1x192xf32> to vector<20x192xf32>
    %400 = arith.mulf %399, %387 : vector<20x192xf32>
    %401 = arith.addf %398, %400 : vector<20x192xf32>
    %c0_221 = arith.constant 0 : index
    %c0_222 = arith.constant 0 : index
    %c0_223 = arith.constant 0 : index
    %402 = vector.load %arg5[%c0_221, %c0_222, %c0_223] : memref<2x20x192xf32, #tpu.memory_space<vmem>>, vector<1x20x192xf32>
    %403 = vector.shape_cast %402 : vector<1x20x192xf32> to vector<20x192xf32>
    %404 = vector.shape_cast %395 : vector<20x192xf32> to vector<1x20x192xf32>
    tpu.vector_store %arg5[%c0_221, %c0_222, %c0_223], %404 {strides = array<i32>} : memref<2x20x192xf32, #tpu.memory_space<vmem>>, vector<1x20x192xf32>,
    %c0_224 = arith.constant 0 : index
    %c0_225 = arith.constant 0 : index
    %c0_226 = arith.constant 0 : index
    %405 = vector.load %arg6[%c0_224, %c0_225, %c0_226] : memref<2x20x192xf32, #tpu.memory_space<vmem>>, vector<1x20x192xf32>
    %406 = vector.shape_cast %405 : vector<1x20x192xf32> to vector<20x192xf32>
    %407 = vector.shape_cast %401 : vector<20x192xf32> to vector<1x20x192xf32>
    tpu.vector_store %arg6[%c0_224, %c0_225, %c0_226], %407 {strides = array<i32>} : memref<2x20x192xf32, #tpu.memory_space<vmem>>, vector<1x20x192xf32>,
    %cst_227 = arith.constant 0.000000e+00 : f32
    %408 = vector.broadcast %cst_227 : f32 to vector<20x192xf32>
    %cst_228 = arith.constant 0.000000e+00 : f32
    %409 = vector.broadcast %cst_228 : f32 to vector<20x192xf32>
    %c1_229 = arith.constant 1 : index
    %c0_230 = arith.constant 0 : index
    %c0_231 = arith.constant 0 : index
    %410 = vector.load %arg1[%c1_229, %c0_230, %c0_231] : memref<2x20x192xf32, #tpu.memory_space<vmem>>, vector<1x1x192xf32>
    %411 = vector.shape_cast %410 : vector<1x1x192xf32> to vector<1x192xf32>
    %c1_232 = arith.constant 1 : index
    %c0_233 = arith.constant 0 : index
    %c0_234 = arith.constant 0 : index
    %412 = vector.load %arg2[%c1_232, %c0_233, %c0_234] : memref<2x20x192xf32, #tpu.memory_space<vmem>>, vector<1x1x192xf32>
    %413 = vector.shape_cast %412 : vector<1x1x192xf32> to vector<1x192xf32>
    %c0_235 = arith.constant 0 : index
    %c0_236 = arith.constant 0 : index
    %c0_237 = arith.constant 0 : index
    %414 = vector.load %arg3[%c0_235, %c0_236, %c0_237] : memref<20x20x192xf32, #tpu.memory_space<vmem>>, vector<1x20x192xf32>
    %415 = vector.shape_cast %414 : vector<1x20x192xf32> to vector<20x192xf32>
    %c0_238 = arith.constant 0 : index
    %c0_239 = arith.constant 0 : index
    %c0_240 = arith.constant 0 : index
    %416 = vector.load %arg4[%c0_238, %c0_239, %c0_240] : memref<20x20x192xf32, #tpu.memory_space<vmem>>, vector<1x20x192xf32>
    %417 = vector.shape_cast %416 : vector<1x20x192xf32> to vector<20x192xf32>
    %418 = vector.broadcast %411 : vector<1x192xf32> to vector<20x192xf32>
    %419 = arith.mulf %418, %415 : vector<20x192xf32>
    %420 = arith.addf %408, %419 : vector<20x192xf32>
    %421 = vector.broadcast %413 : vector<1x192xf32> to vector<20x192xf32>
    %422 = arith.mulf %421, %417 : vector<20x192xf32>
    %423 = arith.subf %420, %422 : vector<20x192xf32>
    %424 = vector.broadcast %411 : vector<1x192xf32> to vector<20x192xf32>
    %425 = arith.mulf %424, %417 : vector<20x192xf32>
    %426 = arith.addf %409, %425 : vector<20x192xf32>
    %427 = vector.broadcast %413 : vector<1x192xf32> to vector<20x192xf32>
    %428 = arith.mulf %427, %415 : vector<20x192xf32>
    %429 = arith.addf %426, %428 : vector<20x192xf32>
    %c1_241 = arith.constant 1 : index
    %c1_242 = arith.constant 1 : index
    %c0_243 = arith.constant 0 : index
    %430 = vector.load %arg1[%c1_241, %c1_242, %c0_243] : memref<2x20x192xf32, #tpu.memory_space<vmem>>, vector<1x1x192xf32>
    %431 = vector.shape_cast %430 : vector<1x1x192xf32> to vector<1x192xf32>
    %c1_244 = arith.constant 1 : index
    %c1_245 = arith.constant 1 : index
    %c0_246 = arith.constant 0 : index
    %432 = vector.load %arg2[%c1_244, %c1_245, %c0_246] : memref<2x20x192xf32, #tpu.memory_space<vmem>>, vector<1x1x192xf32>
    %433 = vector.shape_cast %432 : vector<1x1x192xf32> to vector<1x192xf32>
    %c1_247 = arith.constant 1 : index
    %c0_248 = arith.constant 0 : index
    %c0_249 = arith.constant 0 : index
    %434 = vector.load %arg3[%c1_247, %c0_248, %c0_249] : memref<20x20x192xf32, #tpu.memory_space<vmem>>, vector<1x20x192xf32>
    %435 = vector.shape_cast %434 : vector<1x20x192xf32> to vector<20x192xf32>
    %c1_250 = arith.constant 1 : index
    %c0_251 = arith.constant 0 : index
    %c0_252 = arith.constant 0 : index
    %436 = vector.load %arg4[%c1_250, %c0_251, %c0_252] : memref<20x20x192xf32, #tpu.memory_space<vmem>>, vector<1x20x192xf32>
    %437 = vector.shape_cast %436 : vector<1x20x192xf32> to vector<20x192xf32>
    %438 = vector.broadcast %431 : vector<1x192xf32> to vector<20x192xf32>
    %439 = arith.mulf %438, %435 : vector<20x192xf32>
    %440 = arith.addf %423, %439 : vector<20x192xf32>
    %441 = vector.broadcast %433 : vector<1x192xf32> to vector<20x192xf32>
    %442 = arith.mulf %441, %437 : vector<20x192xf32>
    %443 = arith.subf %440, %442 : vector<20x192xf32>
    %444 = vector.broadcast %431 : vector<1x192xf32> to vector<20x192xf32>
    %445 = arith.mulf %444, %437 : vector<20x192xf32>
    %446 = arith.addf %429, %445 : vector<20x192xf32>
    %447 = vector.broadcast %433 : vector<1x192xf32> to vector<20x192xf32>
    %448 = arith.mulf %447, %435 : vector<20x192xf32>
    %449 = arith.addf %446, %448 : vector<20x192xf32>
    %c1_253 = arith.constant 1 : index
    %c2_254 = arith.constant 2 : index
    %c0_255 = arith.constant 0 : index
    %450 = vector.load %arg1[%c1_253, %c2_254, %c0_255] : memref<2x20x192xf32, #tpu.memory_space<vmem>>, vector<1x1x192xf32>
    %451 = vector.shape_cast %450 : vector<1x1x192xf32> to vector<1x192xf32>
    %c1_256 = arith.constant 1 : index
    %c2_257 = arith.constant 2 : index
    %c0_258 = arith.constant 0 : index
    %452 = vector.load %arg2[%c1_256, %c2_257, %c0_258] : memref<2x20x192xf32, #tpu.memory_space<vmem>>, vector<1x1x192xf32>
    %453 = vector.shape_cast %452 : vector<1x1x192xf32> to vector<1x192xf32>
    %c2_259 = arith.constant 2 : index
    %c0_260 = arith.constant 0 : index
    %c0_261 = arith.constant 0 : index
    %454 = vector.load %arg3[%c2_259, %c0_260, %c0_261] : memref<20x20x192xf32, #tpu.memory_space<vmem>>, vector<1x20x192xf32>
    %455 = vector.shape_cast %454 : vector<1x20x192xf32> to vector<20x192xf32>
    %c2_262 = arith.constant 2 : index
    %c0_263 = arith.constant 0 : index
    %c0_264 = arith.constant 0 : index
    %456 = vector.load %arg4[%c2_262, %c0_263, %c0_264] : memref<20x20x192xf32, #tpu.memory_space<vmem>>, vector<1x20x192xf32>
    %457 = vector.shape_cast %456 : vector<1x20x192xf32> to vector<20x192xf32>
    %458 = vector.broadcast %451 : vector<1x192xf32> to vector<20x192xf32>
    %459 = arith.mulf %458, %455 : vector<20x192xf32>
    %460 = arith.addf %443, %459 : vector<20x192xf32>
    %461 = vector.broadcast %453 : vector<1x192xf32> to vector<20x192xf32>
    %462 = arith.mulf %461, %457 : vector<20x192xf32>
    %463 = arith.subf %460, %462 : vector<20x192xf32>
    %464 = vector.broadcast %451 : vector<1x192xf32> to vector<20x192xf32>
    %465 = arith.mulf %464, %457 : vector<20x192xf32>
    %466 = arith.addf %449, %465 : vector<20x192xf32>
    %467 = vector.broadcast %453 : vector<1x192xf32> to vector<20x192xf32>
    %468 = arith.mulf %467, %455 : vector<20x192xf32>
    %469 = arith.addf %466, %468 : vector<20x192xf32>
    %c1_265 = arith.constant 1 : index
    %c3_266 = arith.constant 3 : index
    %c0_267 = arith.constant 0 : index
    %470 = vector.load %arg1[%c1_265, %c3_266, %c0_267] : memref<2x20x192xf32, #tpu.memory_space<vmem>>, vector<1x1x192xf32>
    %471 = vector.shape_cast %470 : vector<1x1x192xf32> to vector<1x192xf32>
    %c1_268 = arith.constant 1 : index
    %c3_269 = arith.constant 3 : index
    %c0_270 = arith.constant 0 : index
    %472 = vector.load %arg2[%c1_268, %c3_269, %c0_270] : memref<2x20x192xf32, #tpu.memory_space<vmem>>, vector<1x1x192xf32>
    %473 = vector.shape_cast %472 : vector<1x1x192xf32> to vector<1x192xf32>
    %c3_271 = arith.constant 3 : index
    %c0_272 = arith.constant 0 : index
    %c0_273 = arith.constant 0 : index
    %474 = vector.load %arg3[%c3_271, %c0_272, %c0_273] : memref<20x20x192xf32, #tpu.memory_space<vmem>>, vector<1x20x192xf32>
    %475 = vector.shape_cast %474 : vector<1x20x192xf32> to vector<20x192xf32>
    %c3_274 = arith.constant 3 : index
    %c0_275 = arith.constant 0 : index
    %c0_276 = arith.constant 0 : index
    %476 = vector.load %arg4[%c3_274, %c0_275, %c0_276] : memref<20x20x192xf32, #tpu.memory_space<vmem>>, vector<1x20x192xf32>
    %477 = vector.shape_cast %476 : vector<1x20x192xf32> to vector<20x192xf32>
    %478 = vector.broadcast %471 : vector<1x192xf32> to vector<20x192xf32>
    %479 = arith.mulf %478, %475 : vector<20x192xf32>
    %480 = arith.addf %463, %479 : vector<20x192xf32>
    %481 = vector.broadcast %473 : vector<1x192xf32> to vector<20x192xf32>
    %482 = arith.mulf %481, %477 : vector<20x192xf32>
    %483 = arith.subf %480, %482 : vector<20x192xf32>
    %484 = vector.broadcast %471 : vector<1x192xf32> to vector<20x192xf32>
    %485 = arith.mulf %484, %477 : vector<20x192xf32>
    %486 = arith.addf %469, %485 : vector<20x192xf32>
    %487 = vector.broadcast %473 : vector<1x192xf32> to vector<20x192xf32>
    %488 = arith.mulf %487, %475 : vector<20x192xf32>
    %489 = arith.addf %486, %488 : vector<20x192xf32>
    %c1_277 = arith.constant 1 : index
    %c4_278 = arith.constant 4 : index
    %c0_279 = arith.constant 0 : index
    %490 = vector.load %arg1[%c1_277, %c4_278, %c0_279] : memref<2x20x192xf32, #tpu.memory_space<vmem>>, vector<1x1x192xf32>
    %491 = vector.shape_cast %490 : vector<1x1x192xf32> to vector<1x192xf32>
    %c1_280 = arith.constant 1 : index
    %c4_281 = arith.constant 4 : index
    %c0_282 = arith.constant 0 : index
    %492 = vector.load %arg2[%c1_280, %c4_281, %c0_282] : memref<2x20x192xf32, #tpu.memory_space<vmem>>, vector<1x1x192xf32>
    %493 = vector.shape_cast %492 : vector<1x1x192xf32> to vector<1x192xf32>
    %c4_283 = arith.constant 4 : index
    %c0_284 = arith.constant 0 : index
    %c0_285 = arith.constant 0 : index
    %494 = vector.load %arg3[%c4_283, %c0_284, %c0_285] : memref<20x20x192xf32, #tpu.memory_space<vmem>>, vector<1x20x192xf32>
    %495 = vector.shape_cast %494 : vector<1x20x192xf32> to vector<20x192xf32>
    %c4_286 = arith.constant 4 : index
    %c0_287 = arith.constant 0 : index
    %c0_288 = arith.constant 0 : index
    %496 = vector.load %arg4[%c4_286, %c0_287, %c0_288] : memref<20x20x192xf32, #tpu.memory_space<vmem>>, vector<1x20x192xf32>
    %497 = vector.shape_cast %496 : vector<1x20x192xf32> to vector<20x192xf32>
    %498 = vector.broadcast %491 : vector<1x192xf32> to vector<20x192xf32>
    %499 = arith.mulf %498, %495 : vector<20x192xf32>
    %500 = arith.addf %483, %499 : vector<20x192xf32>
    %501 = vector.broadcast %493 : vector<1x192xf32> to vector<20x192xf32>
    %502 = arith.mulf %501, %497 : vector<20x192xf32>
    %503 = arith.subf %500, %502 : vector<20x192xf32>
    %504 = vector.broadcast %491 : vector<1x192xf32> to vector<20x192xf32>
    %505 = arith.mulf %504, %497 : vector<20x192xf32>
    %506 = arith.addf %489, %505 : vector<20x192xf32>
    %507 = vector.broadcast %493 : vector<1x192xf32> to vector<20x192xf32>
    %508 = arith.mulf %507, %495 : vector<20x192xf32>
    %509 = arith.addf %506, %508 : vector<20x192xf32>
    %c1_289 = arith.constant 1 : index
    %c5_290 = arith.constant 5 : index
    %c0_291 = arith.constant 0 : index
    %510 = vector.load %arg1[%c1_289, %c5_290, %c0_291] : memref<2x20x192xf32, #tpu.memory_space<vmem>>, vector<1x1x192xf32>
    %511 = vector.shape_cast %510 : vector<1x1x192xf32> to vector<1x192xf32>
    %c1_292 = arith.constant 1 : index
    %c5_293 = arith.constant 5 : index
    %c0_294 = arith.constant 0 : index
    %512 = vector.load %arg2[%c1_292, %c5_293, %c0_294] : memref<2x20x192xf32, #tpu.memory_space<vmem>>, vector<1x1x192xf32>
    %513 = vector.shape_cast %512 : vector<1x1x192xf32> to vector<1x192xf32>
    %c5_295 = arith.constant 5 : index
    %c0_296 = arith.constant 0 : index
    %c0_297 = arith.constant 0 : index
    %514 = vector.load %arg3[%c5_295, %c0_296, %c0_297] : memref<20x20x192xf32, #tpu.memory_space<vmem>>, vector<1x20x192xf32>
    %515 = vector.shape_cast %514 : vector<1x20x192xf32> to vector<20x192xf32>
    %c5_298 = arith.constant 5 : index
    %c0_299 = arith.constant 0 : index
    %c0_300 = arith.constant 0 : index
    %516 = vector.load %arg4[%c5_298, %c0_299, %c0_300] : memref<20x20x192xf32, #tpu.memory_space<vmem>>, vector<1x20x192xf32>
    %517 = vector.shape_cast %516 : vector<1x20x192xf32> to vector<20x192xf32>
    %518 = vector.broadcast %511 : vector<1x192xf32> to vector<20x192xf32>
    %519 = arith.mulf %518, %515 : vector<20x192xf32>
    %520 = arith.addf %503, %519 : vector<20x192xf32>
    %521 = vector.broadcast %513 : vector<1x192xf32> to vector<20x192xf32>
    %522 = arith.mulf %521, %517 : vector<20x192xf32>
    %523 = arith.subf %520, %522 : vector<20x192xf32>
    %524 = vector.broadcast %511 : vector<1x192xf32> to vector<20x192xf32>
    %525 = arith.mulf %524, %517 : vector<20x192xf32>
    %526 = arith.addf %509, %525 : vector<20x192xf32>
    %527 = vector.broadcast %513 : vector<1x192xf32> to vector<20x192xf32>
    %528 = arith.mulf %527, %515 : vector<20x192xf32>
    %529 = arith.addf %526, %528 : vector<20x192xf32>
    %c1_301 = arith.constant 1 : index
    %c6_302 = arith.constant 6 : index
    %c0_303 = arith.constant 0 : index
    %530 = vector.load %arg1[%c1_301, %c6_302, %c0_303] : memref<2x20x192xf32, #tpu.memory_space<vmem>>, vector<1x1x192xf32>
    %531 = vector.shape_cast %530 : vector<1x1x192xf32> to vector<1x192xf32>
    %c1_304 = arith.constant 1 : index
    %c6_305 = arith.constant 6 : index
    %c0_306 = arith.constant 0 : index
    %532 = vector.load %arg2[%c1_304, %c6_305, %c0_306] : memref<2x20x192xf32, #tpu.memory_space<vmem>>, vector<1x1x192xf32>
    %533 = vector.shape_cast %532 : vector<1x1x192xf32> to vector<1x192xf32>
    %c6_307 = arith.constant 6 : index
    %c0_308 = arith.constant 0 : index
    %c0_309 = arith.constant 0 : index
    %534 = vector.load %arg3[%c6_307, %c0_308, %c0_309] : memref<20x20x192xf32, #tpu.memory_space<vmem>>, vector<1x20x192xf32>
    %535 = vector.shape_cast %534 : vector<1x20x192xf32> to vector<20x192xf32>
    %c6_310 = arith.constant 6 : index
    %c0_311 = arith.constant 0 : index
    %c0_312 = arith.constant 0 : index
    %536 = vector.load %arg4[%c6_310, %c0_311, %c0_312] : memref<20x20x192xf32, #tpu.memory_space<vmem>>, vector<1x20x192xf32>
    %537 = vector.shape_cast %536 : vector<1x20x192xf32> to vector<20x192xf32>
    %538 = vector.broadcast %531 : vector<1x192xf32> to vector<20x192xf32>
    %539 = arith.mulf %538, %535 : vector<20x192xf32>
    %540 = arith.addf %523, %539 : vector<20x192xf32>
    %541 = vector.broadcast %533 : vector<1x192xf32> to vector<20x192xf32>
    %542 = arith.mulf %541, %537 : vector<20x192xf32>
    %543 = arith.subf %540, %542 : vector<20x192xf32>
    %544 = vector.broadcast %531 : vector<1x192xf32> to vector<20x192xf32>
    %545 = arith.mulf %544, %537 : vector<20x192xf32>
    %546 = arith.addf %529, %545 : vector<20x192xf32>
    %547 = vector.broadcast %533 : vector<1x192xf32> to vector<20x192xf32>
    %548 = arith.mulf %547, %535 : vector<20x192xf32>
    %549 = arith.addf %546, %548 : vector<20x192xf32>
    %c1_313 = arith.constant 1 : index
    %c7_314 = arith.constant 7 : index
    %c0_315 = arith.constant 0 : index
    %550 = vector.load %arg1[%c1_313, %c7_314, %c0_315] : memref<2x20x192xf32, #tpu.memory_space<vmem>>, vector<1x1x192xf32>
    %551 = vector.shape_cast %550 : vector<1x1x192xf32> to vector<1x192xf32>
    %c1_316 = arith.constant 1 : index
    %c7_317 = arith.constant 7 : index
    %c0_318 = arith.constant 0 : index
    %552 = vector.load %arg2[%c1_316, %c7_317, %c0_318] : memref<2x20x192xf32, #tpu.memory_space<vmem>>, vector<1x1x192xf32>
    %553 = vector.shape_cast %552 : vector<1x1x192xf32> to vector<1x192xf32>
    %c7_319 = arith.constant 7 : index
    %c0_320 = arith.constant 0 : index
    %c0_321 = arith.constant 0 : index
    %554 = vector.load %arg3[%c7_319, %c0_320, %c0_321] : memref<20x20x192xf32, #tpu.memory_space<vmem>>, vector<1x20x192xf32>
    %555 = vector.shape_cast %554 : vector<1x20x192xf32> to vector<20x192xf32>
    %c7_322 = arith.constant 7 : index
    %c0_323 = arith.constant 0 : index
    %c0_324 = arith.constant 0 : index
    %556 = vector.load %arg4[%c7_322, %c0_323, %c0_324] : memref<20x20x192xf32, #tpu.memory_space<vmem>>, vector<1x20x192xf32>
    %557 = vector.shape_cast %556 : vector<1x20x192xf32> to vector<20x192xf32>
    %558 = vector.broadcast %551 : vector<1x192xf32> to vector<20x192xf32>
    %559 = arith.mulf %558, %555 : vector<20x192xf32>
    %560 = arith.addf %543, %559 : vector<20x192xf32>
    %561 = vector.broadcast %553 : vector<1x192xf32> to vector<20x192xf32>
    %562 = arith.mulf %561, %557 : vector<20x192xf32>
    %563 = arith.subf %560, %562 : vector<20x192xf32>
    %564 = vector.broadcast %551 : vector<1x192xf32> to vector<20x192xf32>
    %565 = arith.mulf %564, %557 : vector<20x192xf32>
    %566 = arith.addf %549, %565 : vector<20x192xf32>
    %567 = vector.broadcast %553 : vector<1x192xf32> to vector<20x192xf32>
    %568 = arith.mulf %567, %555 : vector<20x192xf32>
    %569 = arith.addf %566, %568 : vector<20x192xf32>
    %c1_325 = arith.constant 1 : index
    %c8_326 = arith.constant 8 : index
    %c0_327 = arith.constant 0 : index
    %570 = vector.load %arg1[%c1_325, %c8_326, %c0_327] : memref<2x20x192xf32, #tpu.memory_space<vmem>>, vector<1x1x192xf32>
    %571 = vector.shape_cast %570 : vector<1x1x192xf32> to vector<1x192xf32>
    %c1_328 = arith.constant 1 : index
    %c8_329 = arith.constant 8 : index
    %c0_330 = arith.constant 0 : index
    %572 = vector.load %arg2[%c1_328, %c8_329, %c0_330] : memref<2x20x192xf32, #tpu.memory_space<vmem>>, vector<1x1x192xf32>
    %573 = vector.shape_cast %572 : vector<1x1x192xf32> to vector<1x192xf32>
    %c8_331 = arith.constant 8 : index
    %c0_332 = arith.constant 0 : index
    %c0_333 = arith.constant 0 : index
    %574 = vector.load %arg3[%c8_331, %c0_332, %c0_333] : memref<20x20x192xf32, #tpu.memory_space<vmem>>, vector<1x20x192xf32>
    %575 = vector.shape_cast %574 : vector<1x20x192xf32> to vector<20x192xf32>
    %c8_334 = arith.constant 8 : index
    %c0_335 = arith.constant 0 : index
    %c0_336 = arith.constant 0 : index
    %576 = vector.load %arg4[%c8_334, %c0_335, %c0_336] : memref<20x20x192xf32, #tpu.memory_space<vmem>>, vector<1x20x192xf32>
    %577 = vector.shape_cast %576 : vector<1x20x192xf32> to vector<20x192xf32>
    %578 = vector.broadcast %571 : vector<1x192xf32> to vector<20x192xf32>
    %579 = arith.mulf %578, %575 : vector<20x192xf32>
    %580 = arith.addf %563, %579 : vector<20x192xf32>
    %581 = vector.broadcast %573 : vector<1x192xf32> to vector<20x192xf32>
    %582 = arith.mulf %581, %577 : vector<20x192xf32>
    %583 = arith.subf %580, %582 : vector<20x192xf32>
    %584 = vector.broadcast %571 : vector<1x192xf32> to vector<20x192xf32>
    %585 = arith.mulf %584, %577 : vector<20x192xf32>
    %586 = arith.addf %569, %585 : vector<20x192xf32>
    %587 = vector.broadcast %573 : vector<1x192xf32> to vector<20x192xf32>
    %588 = arith.mulf %587, %575 : vector<20x192xf32>
    %589 = arith.addf %586, %588 : vector<20x192xf32>
    %c1_337 = arith.constant 1 : index
    %c9_338 = arith.constant 9 : index
    %c0_339 = arith.constant 0 : index
    %590 = vector.load %arg1[%c1_337, %c9_338, %c0_339] : memref<2x20x192xf32, #tpu.memory_space<vmem>>, vector<1x1x192xf32>
    %591 = vector.shape_cast %590 : vector<1x1x192xf32> to vector<1x192xf32>
    %c1_340 = arith.constant 1 : index
    %c9_341 = arith.constant 9 : index
    %c0_342 = arith.constant 0 : index
    %592 = vector.load %arg2[%c1_340, %c9_341, %c0_342] : memref<2x20x192xf32, #tpu.memory_space<vmem>>, vector<1x1x192xf32>
    %593 = vector.shape_cast %592 : vector<1x1x192xf32> to vector<1x192xf32>
    %c9_343 = arith.constant 9 : index
    %c0_344 = arith.constant 0 : index
    %c0_345 = arith.constant 0 : index
    %594 = vector.load %arg3[%c9_343, %c0_344, %c0_345] : memref<20x20x192xf32, #tpu.memory_space<vmem>>, vector<1x20x192xf32>
    %595 = vector.shape_cast %594 : vector<1x20x192xf32> to vector<20x192xf32>
    %c9_346 = arith.constant 9 : index
    %c0_347 = arith.constant 0 : index
    %c0_348 = arith.constant 0 : index
    %596 = vector.load %arg4[%c9_346, %c0_347, %c0_348] : memref<20x20x192xf32, #tpu.memory_space<vmem>>, vector<1x20x192xf32>
    %597 = vector.shape_cast %596 : vector<1x20x192xf32> to vector<20x192xf32>
    %598 = vector.broadcast %591 : vector<1x192xf32> to vector<20x192xf32>
    %599 = arith.mulf %598, %595 : vector<20x192xf32>
    %600 = arith.addf %583, %599 : vector<20x192xf32>
    %601 = vector.broadcast %593 : vector<1x192xf32> to vector<20x192xf32>
    %602 = arith.mulf %601, %597 : vector<20x192xf32>
    %603 = arith.subf %600, %602 : vector<20x192xf32>
    %604 = vector.broadcast %591 : vector<1x192xf32> to vector<20x192xf32>
    %605 = arith.mulf %604, %597 : vector<20x192xf32>
    %606 = arith.addf %589, %605 : vector<20x192xf32>
    %607 = vector.broadcast %593 : vector<1x192xf32> to vector<20x192xf32>
    %608 = arith.mulf %607, %595 : vector<20x192xf32>
    %609 = arith.addf %606, %608 : vector<20x192xf32>
    %c1_349 = arith.constant 1 : index
    %c10_350 = arith.constant 10 : index
    %c0_351 = arith.constant 0 : index
    %610 = vector.load %arg1[%c1_349, %c10_350, %c0_351] : memref<2x20x192xf32, #tpu.memory_space<vmem>>, vector<1x1x192xf32>
    %611 = vector.shape_cast %610 : vector<1x1x192xf32> to vector<1x192xf32>
    %c1_352 = arith.constant 1 : index
    %c10_353 = arith.constant 10 : index
    %c0_354 = arith.constant 0 : index
    %612 = vector.load %arg2[%c1_352, %c10_353, %c0_354] : memref<2x20x192xf32, #tpu.memory_space<vmem>>, vector<1x1x192xf32>
    %613 = vector.shape_cast %612 : vector<1x1x192xf32> to vector<1x192xf32>
    %c10_355 = arith.constant 10 : index
    %c0_356 = arith.constant 0 : index
    %c0_357 = arith.constant 0 : index
    %614 = vector.load %arg3[%c10_355, %c0_356, %c0_357] : memref<20x20x192xf32, #tpu.memory_space<vmem>>, vector<1x20x192xf32>
    %615 = vector.shape_cast %614 : vector<1x20x192xf32> to vector<20x192xf32>
    %c10_358 = arith.constant 10 : index
    %c0_359 = arith.constant 0 : index
    %c0_360 = arith.constant 0 : index
    %616 = vector.load %arg4[%c10_358, %c0_359, %c0_360] : memref<20x20x192xf32, #tpu.memory_space<vmem>>, vector<1x20x192xf32>
    %617 = vector.shape_cast %616 : vector<1x20x192xf32> to vector<20x192xf32>
    %618 = vector.broadcast %611 : vector<1x192xf32> to vector<20x192xf32>
    %619 = arith.mulf %618, %615 : vector<20x192xf32>
    %620 = arith.addf %603, %619 : vector<20x192xf32>
    %621 = vector.broadcast %613 : vector<1x192xf32> to vector<20x192xf32>
    %622 = arith.mulf %621, %617 : vector<20x192xf32>
    %623 = arith.subf %620, %622 : vector<20x192xf32>
    %624 = vector.broadcast %611 : vector<1x192xf32> to vector<20x192xf32>
    %625 = arith.mulf %624, %617 : vector<20x192xf32>
    %626 = arith.addf %609, %625 : vector<20x192xf32>
    %627 = vector.broadcast %613 : vector<1x192xf32> to vector<20x192xf32>
    %628 = arith.mulf %627, %615 : vector<20x192xf32>
    %629 = arith.addf %626, %628 : vector<20x192xf32>
    %c1_361 = arith.constant 1 : index
    %c11_362 = arith.constant 11 : index
    %c0_363 = arith.constant 0 : index
    %630 = vector.load %arg1[%c1_361, %c11_362, %c0_363] : memref<2x20x192xf32, #tpu.memory_space<vmem>>, vector<1x1x192xf32>
    %631 = vector.shape_cast %630 : vector<1x1x192xf32> to vector<1x192xf32>
    %c1_364 = arith.constant 1 : index
    %c11_365 = arith.constant 11 : index
    %c0_366 = arith.constant 0 : index
    %632 = vector.load %arg2[%c1_364, %c11_365, %c0_366] : memref<2x20x192xf32, #tpu.memory_space<vmem>>, vector<1x1x192xf32>
    %633 = vector.shape_cast %632 : vector<1x1x192xf32> to vector<1x192xf32>
    %c11_367 = arith.constant 11 : index
    %c0_368 = arith.constant 0 : index
    %c0_369 = arith.constant 0 : index
    %634 = vector.load %arg3[%c11_367, %c0_368, %c0_369] : memref<20x20x192xf32, #tpu.memory_space<vmem>>, vector<1x20x192xf32>
    %635 = vector.shape_cast %634 : vector<1x20x192xf32> to vector<20x192xf32>
    %c11_370 = arith.constant 11 : index
    %c0_371 = arith.constant 0 : index
    %c0_372 = arith.constant 0 : index
    %636 = vector.load %arg4[%c11_370, %c0_371, %c0_372] : memref<20x20x192xf32, #tpu.memory_space<vmem>>, vector<1x20x192xf32>
    %637 = vector.shape_cast %636 : vector<1x20x192xf32> to vector<20x192xf32>
    %638 = vector.broadcast %631 : vector<1x192xf32> to vector<20x192xf32>
    %639 = arith.mulf %638, %635 : vector<20x192xf32>
    %640 = arith.addf %623, %639 : vector<20x192xf32>
    %641 = vector.broadcast %633 : vector<1x192xf32> to vector<20x192xf32>
    %642 = arith.mulf %641, %637 : vector<20x192xf32>
    %643 = arith.subf %640, %642 : vector<20x192xf32>
    %644 = vector.broadcast %631 : vector<1x192xf32> to vector<20x192xf32>
    %645 = arith.mulf %644, %637 : vector<20x192xf32>
    %646 = arith.addf %629, %645 : vector<20x192xf32>
    %647 = vector.broadcast %633 : vector<1x192xf32> to vector<20x192xf32>
    %648 = arith.mulf %647, %635 : vector<20x192xf32>
    %649 = arith.addf %646, %648 : vector<20x192xf32>
    %c1_373 = arith.constant 1 : index
    %c12_374 = arith.constant 12 : index
    %c0_375 = arith.constant 0 : index
    %650 = vector.load %arg1[%c1_373, %c12_374, %c0_375] : memref<2x20x192xf32, #tpu.memory_space<vmem>>, vector<1x1x192xf32>
    %651 = vector.shape_cast %650 : vector<1x1x192xf32> to vector<1x192xf32>
    %c1_376 = arith.constant 1 : index
    %c12_377 = arith.constant 12 : index
    %c0_378 = arith.constant 0 : index
    %652 = vector.load %arg2[%c1_376, %c12_377, %c0_378] : memref<2x20x192xf32, #tpu.memory_space<vmem>>, vector<1x1x192xf32>
    %653 = vector.shape_cast %652 : vector<1x1x192xf32> to vector<1x192xf32>
    %c12_379 = arith.constant 12 : index
    %c0_380 = arith.constant 0 : index
    %c0_381 = arith.constant 0 : index
    %654 = vector.load %arg3[%c12_379, %c0_380, %c0_381] : memref<20x20x192xf32, #tpu.memory_space<vmem>>, vector<1x20x192xf32>
    %655 = vector.shape_cast %654 : vector<1x20x192xf32> to vector<20x192xf32>
    %c12_382 = arith.constant 12 : index
    %c0_383 = arith.constant 0 : index
    %c0_384 = arith.constant 0 : index
    %656 = vector.load %arg4[%c12_382, %c0_383, %c0_384] : memref<20x20x192xf32, #tpu.memory_space<vmem>>, vector<1x20x192xf32>
    %657 = vector.shape_cast %656 : vector<1x20x192xf32> to vector<20x192xf32>
    %658 = vector.broadcast %651 : vector<1x192xf32> to vector<20x192xf32>
    %659 = arith.mulf %658, %655 : vector<20x192xf32>
    %660 = arith.addf %643, %659 : vector<20x192xf32>
    %661 = vector.broadcast %653 : vector<1x192xf32> to vector<20x192xf32>
    %662 = arith.mulf %661, %657 : vector<20x192xf32>
    %663 = arith.subf %660, %662 : vector<20x192xf32>
    %664 = vector.broadcast %651 : vector<1x192xf32> to vector<20x192xf32>
    %665 = arith.mulf %664, %657 : vector<20x192xf32>
    %666 = arith.addf %649, %665 : vector<20x192xf32>
    %667 = vector.broadcast %653 : vector<1x192xf32> to vector<20x192xf32>
    %668 = arith.mulf %667, %655 : vector<20x192xf32>
    %669 = arith.addf %666, %668 : vector<20x192xf32>
    %c1_385 = arith.constant 1 : index
    %c13_386 = arith.constant 13 : index
    %c0_387 = arith.constant 0 : index
    %670 = vector.load %arg1[%c1_385, %c13_386, %c0_387] : memref<2x20x192xf32, #tpu.memory_space<vmem>>, vector<1x1x192xf32>
    %671 = vector.shape_cast %670 : vector<1x1x192xf32> to vector<1x192xf32>
    %c1_388 = arith.constant 1 : index
    %c13_389 = arith.constant 13 : index
    %c0_390 = arith.constant 0 : index
    %672 = vector.load %arg2[%c1_388, %c13_389, %c0_390] : memref<2x20x192xf32, #tpu.memory_space<vmem>>, vector<1x1x192xf32>
    %673 = vector.shape_cast %672 : vector<1x1x192xf32> to vector<1x192xf32>
    %c13_391 = arith.constant 13 : index
    %c0_392 = arith.constant 0 : index
    %c0_393 = arith.constant 0 : index
    %674 = vector.load %arg3[%c13_391, %c0_392, %c0_393] : memref<20x20x192xf32, #tpu.memory_space<vmem>>, vector<1x20x192xf32>
    %675 = vector.shape_cast %674 : vector<1x20x192xf32> to vector<20x192xf32>
    %c13_394 = arith.constant 13 : index
    %c0_395 = arith.constant 0 : index
    %c0_396 = arith.constant 0 : index
    %676 = vector.load %arg4[%c13_394, %c0_395, %c0_396] : memref<20x20x192xf32, #tpu.memory_space<vmem>>, vector<1x20x192xf32>
    %677 = vector.shape_cast %676 : vector<1x20x192xf32> to vector<20x192xf32>
    %678 = vector.broadcast %671 : vector<1x192xf32> to vector<20x192xf32>
    %679 = arith.mulf %678, %675 : vector<20x192xf32>
    %680 = arith.addf %663, %679 : vector<20x192xf32>
    %681 = vector.broadcast %673 : vector<1x192xf32> to vector<20x192xf32>
    %682 = arith.mulf %681, %677 : vector<20x192xf32>
    %683 = arith.subf %680, %682 : vector<20x192xf32>
    %684 = vector.broadcast %671 : vector<1x192xf32> to vector<20x192xf32>
    %685 = arith.mulf %684, %677 : vector<20x192xf32>
    %686 = arith.addf %669, %685 : vector<20x192xf32>
    %687 = vector.broadcast %673 : vector<1x192xf32> to vector<20x192xf32>
    %688 = arith.mulf %687, %675 : vector<20x192xf32>
    %689 = arith.addf %686, %688 : vector<20x192xf32>
    %c1_397 = arith.constant 1 : index
    %c14_398 = arith.constant 14 : index
    %c0_399 = arith.constant 0 : index
    %690 = vector.load %arg1[%c1_397, %c14_398, %c0_399] : memref<2x20x192xf32, #tpu.memory_space<vmem>>, vector<1x1x192xf32>
    %691 = vector.shape_cast %690 : vector<1x1x192xf32> to vector<1x192xf32>
    %c1_400 = arith.constant 1 : index
    %c14_401 = arith.constant 14 : index
    %c0_402 = arith.constant 0 : index
    %692 = vector.load %arg2[%c1_400, %c14_401, %c0_402] : memref<2x20x192xf32, #tpu.memory_space<vmem>>, vector<1x1x192xf32>
    %693 = vector.shape_cast %692 : vector<1x1x192xf32> to vector<1x192xf32>
    %c14_403 = arith.constant 14 : index
    %c0_404 = arith.constant 0 : index
    %c0_405 = arith.constant 0 : index
    %694 = vector.load %arg3[%c14_403, %c0_404, %c0_405] : memref<20x20x192xf32, #tpu.memory_space<vmem>>, vector<1x20x192xf32>
    %695 = vector.shape_cast %694 : vector<1x20x192xf32> to vector<20x192xf32>
    %c14_406 = arith.constant 14 : index
    %c0_407 = arith.constant 0 : index
    %c0_408 = arith.constant 0 : index
    %696 = vector.load %arg4[%c14_406, %c0_407, %c0_408] : memref<20x20x192xf32, #tpu.memory_space<vmem>>, vector<1x20x192xf32>
    %697 = vector.shape_cast %696 : vector<1x20x192xf32> to vector<20x192xf32>
    %698 = vector.broadcast %691 : vector<1x192xf32> to vector<20x192xf32>
    %699 = arith.mulf %698, %695 : vector<20x192xf32>
    %700 = arith.addf %683, %699 : vector<20x192xf32>
    %701 = vector.broadcast %693 : vector<1x192xf32> to vector<20x192xf32>
    %702 = arith.mulf %701, %697 : vector<20x192xf32>
    %703 = arith.subf %700, %702 : vector<20x192xf32>
    %704 = vector.broadcast %691 : vector<1x192xf32> to vector<20x192xf32>
    %705 = arith.mulf %704, %697 : vector<20x192xf32>
    %706 = arith.addf %689, %705 : vector<20x192xf32>
    %707 = vector.broadcast %693 : vector<1x192xf32> to vector<20x192xf32>
    %708 = arith.mulf %707, %695 : vector<20x192xf32>
    %709 = arith.addf %706, %708 : vector<20x192xf32>
    %c1_409 = arith.constant 1 : index
    %c15_410 = arith.constant 15 : index
    %c0_411 = arith.constant 0 : index
    %710 = vector.load %arg1[%c1_409, %c15_410, %c0_411] : memref<2x20x192xf32, #tpu.memory_space<vmem>>, vector<1x1x192xf32>
    %711 = vector.shape_cast %710 : vector<1x1x192xf32> to vector<1x192xf32>
    %c1_412 = arith.constant 1 : index
    %c15_413 = arith.constant 15 : index
    %c0_414 = arith.constant 0 : index
    %712 = vector.load %arg2[%c1_412, %c15_413, %c0_414] : memref<2x20x192xf32, #tpu.memory_space<vmem>>, vector<1x1x192xf32>
    %713 = vector.shape_cast %712 : vector<1x1x192xf32> to vector<1x192xf32>
    %c15_415 = arith.constant 15 : index
    %c0_416 = arith.constant 0 : index
    %c0_417 = arith.constant 0 : index
    %714 = vector.load %arg3[%c15_415, %c0_416, %c0_417] : memref<20x20x192xf32, #tpu.memory_space<vmem>>, vector<1x20x192xf32>
    %715 = vector.shape_cast %714 : vector<1x20x192xf32> to vector<20x192xf32>
    %c15_418 = arith.constant 15 : index
    %c0_419 = arith.constant 0 : index
    %c0_420 = arith.constant 0 : index
    %716 = vector.load %arg4[%c15_418, %c0_419, %c0_420] : memref<20x20x192xf32, #tpu.memory_space<vmem>>, vector<1x20x192xf32>
    %717 = vector.shape_cast %716 : vector<1x20x192xf32> to vector<20x192xf32>
    %718 = vector.broadcast %711 : vector<1x192xf32> to vector<20x192xf32>
    %719 = arith.mulf %718, %715 : vector<20x192xf32>
    %720 = arith.addf %703, %719 : vector<20x192xf32>
    %721 = vector.broadcast %713 : vector<1x192xf32> to vector<20x192xf32>
    %722 = arith.mulf %721, %717 : vector<20x192xf32>
    %723 = arith.subf %720, %722 : vector<20x192xf32>
    %724 = vector.broadcast %711 : vector<1x192xf32> to vector<20x192xf32>
    %725 = arith.mulf %724, %717 : vector<20x192xf32>
    %726 = arith.addf %709, %725 : vector<20x192xf32>
    %727 = vector.broadcast %713 : vector<1x192xf32> to vector<20x192xf32>
    %728 = arith.mulf %727, %715 : vector<20x192xf32>
    %729 = arith.addf %726, %728 : vector<20x192xf32>
    %c1_421 = arith.constant 1 : index
    %c16_422 = arith.constant 16 : index
    %c0_423 = arith.constant 0 : index
    %730 = vector.load %arg1[%c1_421, %c16_422, %c0_423] : memref<2x20x192xf32, #tpu.memory_space<vmem>>, vector<1x1x192xf32>
    %731 = vector.shape_cast %730 : vector<1x1x192xf32> to vector<1x192xf32>
    %c1_424 = arith.constant 1 : index
    %c16_425 = arith.constant 16 : index
    %c0_426 = arith.constant 0 : index
    %732 = vector.load %arg2[%c1_424, %c16_425, %c0_426] : memref<2x20x192xf32, #tpu.memory_space<vmem>>, vector<1x1x192xf32>
    %733 = vector.shape_cast %732 : vector<1x1x192xf32> to vector<1x192xf32>
    %c16_427 = arith.constant 16 : index
    %c0_428 = arith.constant 0 : index
    %c0_429 = arith.constant 0 : index
    %734 = vector.load %arg3[%c16_427, %c0_428, %c0_429] : memref<20x20x192xf32, #tpu.memory_space<vmem>>, vector<1x20x192xf32>
    %735 = vector.shape_cast %734 : vector<1x20x192xf32> to vector<20x192xf32>
    %c16_430 = arith.constant 16 : index
    %c0_431 = arith.constant 0 : index
    %c0_432 = arith.constant 0 : index
    %736 = vector.load %arg4[%c16_430, %c0_431, %c0_432] : memref<20x20x192xf32, #tpu.memory_space<vmem>>, vector<1x20x192xf32>
    %737 = vector.shape_cast %736 : vector<1x20x192xf32> to vector<20x192xf32>
    %738 = vector.broadcast %731 : vector<1x192xf32> to vector<20x192xf32>
    %739 = arith.mulf %738, %735 : vector<20x192xf32>
    %740 = arith.addf %723, %739 : vector<20x192xf32>
    %741 = vector.broadcast %733 : vector<1x192xf32> to vector<20x192xf32>
    %742 = arith.mulf %741, %737 : vector<20x192xf32>
    %743 = arith.subf %740, %742 : vector<20x192xf32>
    %744 = vector.broadcast %731 : vector<1x192xf32> to vector<20x192xf32>
    %745 = arith.mulf %744, %737 : vector<20x192xf32>
    %746 = arith.addf %729, %745 : vector<20x192xf32>
    %747 = vector.broadcast %733 : vector<1x192xf32> to vector<20x192xf32>
    %748 = arith.mulf %747, %735 : vector<20x192xf32>
    %749 = arith.addf %746, %748 : vector<20x192xf32>
    %c1_433 = arith.constant 1 : index
    %c17_434 = arith.constant 17 : index
    %c0_435 = arith.constant 0 : index
    %750 = vector.load %arg1[%c1_433, %c17_434, %c0_435] : memref<2x20x192xf32, #tpu.memory_space<vmem>>, vector<1x1x192xf32>
    %751 = vector.shape_cast %750 : vector<1x1x192xf32> to vector<1x192xf32>
    %c1_436 = arith.constant 1 : index
    %c17_437 = arith.constant 17 : index
    %c0_438 = arith.constant 0 : index
    %752 = vector.load %arg2[%c1_436, %c17_437, %c0_438] : memref<2x20x192xf32, #tpu.memory_space<vmem>>, vector<1x1x192xf32>
    %753 = vector.shape_cast %752 : vector<1x1x192xf32> to vector<1x192xf32>
    %c17_439 = arith.constant 17 : index
    %c0_440 = arith.constant 0 : index
    %c0_441 = arith.constant 0 : index
    %754 = vector.load %arg3[%c17_439, %c0_440, %c0_441] : memref<20x20x192xf32, #tpu.memory_space<vmem>>, vector<1x20x192xf32>
    %755 = vector.shape_cast %754 : vector<1x20x192xf32> to vector<20x192xf32>
    %c17_442 = arith.constant 17 : index
    %c0_443 = arith.constant 0 : index
    %c0_444 = arith.constant 0 : index
    %756 = vector.load %arg4[%c17_442, %c0_443, %c0_444] : memref<20x20x192xf32, #tpu.memory_space<vmem>>, vector<1x20x192xf32>
    %757 = vector.shape_cast %756 : vector<1x20x192xf32> to vector<20x192xf32>
    %758 = vector.broadcast %751 : vector<1x192xf32> to vector<20x192xf32>
    %759 = arith.mulf %758, %755 : vector<20x192xf32>
    %760 = arith.addf %743, %759 : vector<20x192xf32>
    %761 = vector.broadcast %753 : vector<1x192xf32> to vector<20x192xf32>
    %762 = arith.mulf %761, %757 : vector<20x192xf32>
    %763 = arith.subf %760, %762 : vector<20x192xf32>
    %764 = vector.broadcast %751 : vector<1x192xf32> to vector<20x192xf32>
    %765 = arith.mulf %764, %757 : vector<20x192xf32>
    %766 = arith.addf %749, %765 : vector<20x192xf32>
    %767 = vector.broadcast %753 : vector<1x192xf32> to vector<20x192xf32>
    %768 = arith.mulf %767, %755 : vector<20x192xf32>
    %769 = arith.addf %766, %768 : vector<20x192xf32>
    %c1_445 = arith.constant 1 : index
    %c18_446 = arith.constant 18 : index
    %c0_447 = arith.constant 0 : index
    %770 = vector.load %arg1[%c1_445, %c18_446, %c0_447] : memref<2x20x192xf32, #tpu.memory_space<vmem>>, vector<1x1x192xf32>
    %771 = vector.shape_cast %770 : vector<1x1x192xf32> to vector<1x192xf32>
    %c1_448 = arith.constant 1 : index
    %c18_449 = arith.constant 18 : index
    %c0_450 = arith.constant 0 : index
    %772 = vector.load %arg2[%c1_448, %c18_449, %c0_450] : memref<2x20x192xf32, #tpu.memory_space<vmem>>, vector<1x1x192xf32>
    %773 = vector.shape_cast %772 : vector<1x1x192xf32> to vector<1x192xf32>
    %c18_451 = arith.constant 18 : index
    %c0_452 = arith.constant 0 : index
    %c0_453 = arith.constant 0 : index
    %774 = vector.load %arg3[%c18_451, %c0_452, %c0_453] : memref<20x20x192xf32, #tpu.memory_space<vmem>>, vector<1x20x192xf32>
    %775 = vector.shape_cast %774 : vector<1x20x192xf32> to vector<20x192xf32>
    %c18_454 = arith.constant 18 : index
    %c0_455 = arith.constant 0 : index
    %c0_456 = arith.constant 0 : index
    %776 = vector.load %arg4[%c18_454, %c0_455, %c0_456] : memref<20x20x192xf32, #tpu.memory_space<vmem>>, vector<1x20x192xf32>
    %777 = vector.shape_cast %776 : vector<1x20x192xf32> to vector<20x192xf32>
    %778 = vector.broadcast %771 : vector<1x192xf32> to vector<20x192xf32>
    %779 = arith.mulf %778, %775 : vector<20x192xf32>
    %780 = arith.addf %763, %779 : vector<20x192xf32>
    %781 = vector.broadcast %773 : vector<1x192xf32> to vector<20x192xf32>
    %782 = arith.mulf %781, %777 : vector<20x192xf32>
    %783 = arith.subf %780, %782 : vector<20x192xf32>
    %784 = vector.broadcast %771 : vector<1x192xf32> to vector<20x192xf32>
    %785 = arith.mulf %784, %777 : vector<20x192xf32>
    %786 = arith.addf %769, %785 : vector<20x192xf32>
    %787 = vector.broadcast %773 : vector<1x192xf32> to vector<20x192xf32>
    %788 = arith.mulf %787, %775 : vector<20x192xf32>
    %789 = arith.addf %786, %788 : vector<20x192xf32>
    %c1_457 = arith.constant 1 : index
    %c19_458 = arith.constant 19 : index
    %c0_459 = arith.constant 0 : index
    %790 = vector.load %arg1[%c1_457, %c19_458, %c0_459] : memref<2x20x192xf32, #tpu.memory_space<vmem>>, vector<1x1x192xf32>
    %791 = vector.shape_cast %790 : vector<1x1x192xf32> to vector<1x192xf32>
    %c1_460 = arith.constant 1 : index
    %c19_461 = arith.constant 19 : index
    %c0_462 = arith.constant 0 : index
    %792 = vector.load %arg2[%c1_460, %c19_461, %c0_462] : memref<2x20x192xf32, #tpu.memory_space<vmem>>, vector<1x1x192xf32>
    %793 = vector.shape_cast %792 : vector<1x1x192xf32> to vector<1x192xf32>
    %c19_463 = arith.constant 19 : index
    %c0_464 = arith.constant 0 : index
    %c0_465 = arith.constant 0 : index
    %794 = vector.load %arg3[%c19_463, %c0_464, %c0_465] : memref<20x20x192xf32, #tpu.memory_space<vmem>>, vector<1x20x192xf32>
    %795 = vector.shape_cast %794 : vector<1x20x192xf32> to vector<20x192xf32>
    %c19_466 = arith.constant 19 : index
    %c0_467 = arith.constant 0 : index
    %c0_468 = arith.constant 0 : index
    %796 = vector.load %arg4[%c19_466, %c0_467, %c0_468] : memref<20x20x192xf32, #tpu.memory_space<vmem>>, vector<1x20x192xf32>
    %797 = vector.shape_cast %796 : vector<1x20x192xf32> to vector<20x192xf32>
    %798 = vector.broadcast %791 : vector<1x192xf32> to vector<20x192xf32>
    %799 = arith.mulf %798, %795 : vector<20x192xf32>
    %800 = arith.addf %783, %799 : vector<20x192xf32>
    %801 = vector.broadcast %793 : vector<1x192xf32> to vector<20x192xf32>
    %802 = arith.mulf %801, %797 : vector<20x192xf32>
    %803 = arith.subf %800, %802 : vector<20x192xf32>
    %804 = vector.broadcast %791 : vector<1x192xf32> to vector<20x192xf32>
    %805 = arith.mulf %804, %797 : vector<20x192xf32>
    %806 = arith.addf %789, %805 : vector<20x192xf32>
    %807 = vector.broadcast %793 : vector<1x192xf32> to vector<20x192xf32>
    %808 = arith.mulf %807, %795 : vector<20x192xf32>
    %809 = arith.addf %806, %808 : vector<20x192xf32>
    %c1_469 = arith.constant 1 : index
    %c0_470 = arith.constant 0 : index
    %c0_471 = arith.constant 0 : index
    %810 = vector.load %arg5[%c1_469, %c0_470, %c0_471] : memref<2x20x192xf32, #tpu.memory_space<vmem>>, vector<1x20x192xf32>
    %811 = vector.shape_cast %810 : vector<1x20x192xf32> to vector<20x192xf32>
    %812 = vector.shape_cast %803 : vector<20x192xf32> to vector<1x20x192xf32>
    tpu.vector_store %arg5[%c1_469, %c0_470, %c0_471], %812 {strides = array<i32>} : memref<2x20x192xf32, #tpu.memory_space<vmem>>, vector<1x20x192xf32>,
    %c1_472 = arith.constant 1 : index
    %c0_473 = arith.constant 0 : index
    %c0_474 = arith.constant 0 : index
    %813 = vector.load %arg6[%c1_472, %c0_473, %c0_474] : memref<2x20x192xf32, #tpu.memory_space<vmem>>, vector<1x20x192xf32>
    %814 = vector.shape_cast %813 : vector<1x20x192xf32> to vector<20x192xf32>
    %815 = vector.shape_cast %809 : vector<20x192xf32> to vector<1x20x192xf32>
    tpu.vector_store %arg6[%c1_472, %c0_473, %c0_474], %815 {strides = array<i32>} : memref<2x20x192xf32, #tpu.memory_space<vmem>>, vector<1x20x192xf32>,
    return
  }
  func.func @transform_0(%arg0: i32) -> (i32, i32, i32) {
    %c0_i32 = arith.constant 0 : i32
    %c0_i32_0 = arith.constant 0 : i32
    %c0_i32_1 = arith.constant 0 : i32
    return %c0_i32, %c0_i32_0, %arg0 : i32, i32, i32
  }
  func.func @transform_1(%arg0: i32) -> (i32, i32, i32) {
    %c0_i32 = arith.constant 0 : i32
    %c0_i32_0 = arith.constant 0 : i32
    %c0_i32_1 = arith.constant 0 : i32
    return %c0_i32, %c0_i32_0, %arg0 : i32, i32, i32
  }
  func.func @transform_2(%arg0: i32) -> (i32, i32, i32) {
    %c0_i32 = arith.constant 0 : i32
    %c0_i32_0 = arith.constant 0 : i32
    %c0_i32_1 = arith.constant 0 : i32
    return %c0_i32, %c0_i32_0, %arg0 : i32, i32, i32
  }
  func.func @transform_3(%arg0: i32) -> (i32, i32, i32) {
    %c0_i32 = arith.constant 0 : i32
    %c0_i32_0 = arith.constant 0 : i32
    %c0_i32_1 = arith.constant 0 : i32
    return %c0_i32, %c0_i32_0, %arg0 : i32, i32, i32
  }
  func.func @transform_4(%arg0: i32) -> (i32, i32, i32) {
    %c0_i32 = arith.constant 0 : i32
    %c0_i32_0 = arith.constant 0 : i32
    %c0_i32_1 = arith.constant 0 : i32
    return %c0_i32, %c0_i32_0, %arg0 : i32, i32, i32
  }
  func.func @transform_5(%arg0: i32) -> (i32, i32, i32) {
    %c0_i32 = arith.constant 0 : i32
    %c0_i32_0 = arith.constant 0 : i32
    %c0_i32_1 = arith.constant 0 : i32
    return %c0_i32, %c0_i32_0, %arg0 : i32, i32, i32
  }
}

module attributes {stable_mosaic.version = 11 : i64} {
  func.func @_cf_linear_res_kernel(%arg0: i32, %arg1: i32, %arg2: memref<1x20x512xf32, #tpu.memory_space<vmem>>, %arg3: memref<20x20xf32, #tpu.memory_space<vmem>>, %arg4: memref<20x1xf32, #tpu.memory_space<vmem>>, %arg5: memref<1x20x512xf32, #tpu.memory_space<vmem>>, %arg6: memref<1x20x512xf32, #tpu.memory_space<vmem>>) attributes {dimension_semantics = [#tpu.dimension_semantics<parallel>, #tpu.dimension_semantics<parallel>], iteration_bounds = array<i64: 2, 1>, scalar_prefetch = 0 : i64, scratch_operands = 0 : i64, tpu.core_type = #tpu.core_type<tc>, window_params = [{transform_indices = @transform_0, window_bounds = array<i64: 1, 20, 512>}, {pipeline_mode = #tpu.pipeline_mode<synchronous>, transform_indices = @transform_1, window_bounds = array<i64: 20, 20>}, {pipeline_mode = #tpu.pipeline_mode<synchronous>, transform_indices = @transform_2, window_bounds = array<i64: 20, 1>}, {transform_indices = @transform_3, window_bounds = array<i64: 1, 20, 512>}, {transform_indices = @transform_4, window_bounds = array<i64: 1, 20, 512>}]} {
    %c0 = arith.constant 0 : index
    %c0_0 = arith.constant 0 : index
    %0 = vector.load %arg3[%c0, %c0_0] : memref<20x20xf32, #tpu.memory_space<vmem>>, vector<20x20xf32>
    %c0_1 = arith.constant 0 : index
    %c0_2 = arith.constant 0 : index
    %c0_3 = arith.constant 0 : index
    %1 = vector.load %arg2[%c0_1, %c0_2, %c0_3] : memref<1x20x512xf32, #tpu.memory_space<vmem>>, vector<1x20x512xf32>
    %2 = vector.shape_cast %1 : vector<1x20x512xf32> to vector<20x512xf32>
    %cst = arith.constant dense<0.000000e+00> : vector<20x512xf32>
    %3 = tpu.matmul %0, %2, %cst {dimension_numbers = #tpu.dot_dimension_numbers<[1], [0], [0], [1], [0, 0, 1, 1], [], []>} : vector<20x20xf32>, vector<20x512xf32>, vector<20x512xf32> -> vector<20x512xf32>
    %c0_4 = arith.constant 0 : index
    %c0_5 = arith.constant 0 : index
    %4 = vector.load %arg4[%c0_4, %c0_5] : memref<20x1xf32, #tpu.memory_space<vmem>>, vector<20x1xf32>
    %5 = vector.broadcast %4 : vector<20x1xf32> to vector<20x512xf32>
    %6 = arith.addf %3, %5 : vector<20x512xf32>
    %c0_6 = arith.constant 0 : index
    %c0_7 = arith.constant 0 : index
    %c0_8 = arith.constant 0 : index
    %7 = vector.load %arg5[%c0_6, %c0_7, %c0_8] : memref<1x20x512xf32, #tpu.memory_space<vmem>>, vector<1x20x512xf32>
    %8 = vector.shape_cast %7 : vector<1x20x512xf32> to vector<20x512xf32>
    %9 = arith.addf %6, %8 : vector<20x512xf32>
    %cst_9 = arith.constant 0.000000e+00 : f32
    %10 = vector.broadcast %cst_9 : f32 to vector<20x512xf32>
    %11 = arith.maximumf %9, %10 : vector<20x512xf32>
    %c0_10 = arith.constant 0 : index
    %c0_11 = arith.constant 0 : index
    %c0_12 = arith.constant 0 : index
    %12 = vector.load %arg6[%c0_10, %c0_11, %c0_12] : memref<1x20x512xf32, #tpu.memory_space<vmem>>, vector<1x20x512xf32>
    %13 = vector.shape_cast %12 : vector<1x20x512xf32> to vector<20x512xf32>
    %14 = vector.shape_cast %11 : vector<20x512xf32> to vector<1x20x512xf32>
    tpu.vector_store %arg6[%c0_10, %c0_11, %c0_12], %14 {strides = array<i32>} : memref<1x20x512xf32, #tpu.memory_space<vmem>>, vector<1x20x512xf32>,
    return
  }
  func.func @transform_0(%arg0: i32, %arg1: i32) -> (i32, i32, i32) {
    %c0_i32 = arith.constant 0 : i32
    %c0_i32_0 = arith.constant 0 : i32
    return %arg0, %c0_i32, %arg1 : i32, i32, i32
  }
  func.func @transform_1(%arg0: i32, %arg1: i32) -> (i32, i32) {
    %c0_i32 = arith.constant 0 : i32
    %c0_i32_0 = arith.constant 0 : i32
    %c0_i32_1 = arith.constant 0 : i32
    return %c0_i32, %c0_i32_0 : i32, i32
  }
  func.func @transform_2(%arg0: i32, %arg1: i32) -> (i32, i32) {
    %c0_i32 = arith.constant 0 : i32
    %c0_i32_0 = arith.constant 0 : i32
    %c0_i32_1 = arith.constant 0 : i32
    return %c0_i32, %c0_i32_0 : i32, i32
  }
  func.func @transform_3(%arg0: i32, %arg1: i32) -> (i32, i32, i32) {
    %c0_i32 = arith.constant 0 : i32
    %c0_i32_0 = arith.constant 0 : i32
    return %arg0, %c0_i32, %arg1 : i32, i32, i32
  }
  func.func @transform_4(%arg0: i32, %arg1: i32) -> (i32, i32, i32) {
    %c0_i32 = arith.constant 0 : i32
    %c0_i32_0 = arith.constant 0 : i32
    return %arg0, %c0_i32, %arg1 : i32, i32, i32
  }
}

module attributes {stable_mosaic.version = 11 : i64} {
  func.func @_cf_linear_res_kernel(%arg0: i32, %arg1: i32, %arg2: memref<1x20x512xf32, #tpu.memory_space<vmem>>, %arg3: memref<20x20xf32, #tpu.memory_space<vmem>>, %arg4: memref<20x1xf32, #tpu.memory_space<vmem>>, %arg5: memref<1x20x512xf32, #tpu.memory_space<vmem>>, %arg6: memref<1x20x512xbf16, #tpu.memory_space<vmem>>) attributes {dimension_semantics = [#tpu.dimension_semantics<parallel>, #tpu.dimension_semantics<parallel>], iteration_bounds = array<i64: 2, 1>, scalar_prefetch = 0 : i64, scratch_operands = 0 : i64, tpu.core_type = #tpu.core_type<tc>, window_params = [{transform_indices = @transform_0, window_bounds = array<i64: 1, 20, 512>}, {pipeline_mode = #tpu.pipeline_mode<synchronous>, transform_indices = @transform_1, window_bounds = array<i64: 20, 20>}, {pipeline_mode = #tpu.pipeline_mode<synchronous>, transform_indices = @transform_2, window_bounds = array<i64: 20, 1>}, {transform_indices = @transform_3, window_bounds = array<i64: 1, 20, 512>}, {transform_indices = @transform_4, window_bounds = array<i64: 1, 20, 512>}]} {
    %c0 = arith.constant 0 : index
    %c0_0 = arith.constant 0 : index
    %0 = vector.load %arg3[%c0, %c0_0] : memref<20x20xf32, #tpu.memory_space<vmem>>, vector<20x20xf32>
    %c0_1 = arith.constant 0 : index
    %c0_2 = arith.constant 0 : index
    %c0_3 = arith.constant 0 : index
    %1 = vector.load %arg2[%c0_1, %c0_2, %c0_3] : memref<1x20x512xf32, #tpu.memory_space<vmem>>, vector<1x20x512xf32>
    %2 = vector.shape_cast %1 : vector<1x20x512xf32> to vector<20x512xf32>
    %cst = arith.constant dense<0.000000e+00> : vector<20x512xf32>
    %3 = tpu.matmul %0, %2, %cst {dimension_numbers = #tpu.dot_dimension_numbers<[1], [0], [0], [1], [0, 0, 1, 1], [], []>} : vector<20x20xf32>, vector<20x512xf32>, vector<20x512xf32> -> vector<20x512xf32>
    %c0_4 = arith.constant 0 : index
    %c0_5 = arith.constant 0 : index
    %4 = vector.load %arg4[%c0_4, %c0_5] : memref<20x1xf32, #tpu.memory_space<vmem>>, vector<20x1xf32>
    %5 = vector.broadcast %4 : vector<20x1xf32> to vector<20x512xf32>
    %6 = arith.addf %3, %5 : vector<20x512xf32>
    %c0_6 = arith.constant 0 : index
    %c0_7 = arith.constant 0 : index
    %c0_8 = arith.constant 0 : index
    %7 = vector.load %arg5[%c0_6, %c0_7, %c0_8] : memref<1x20x512xf32, #tpu.memory_space<vmem>>, vector<1x20x512xf32>
    %8 = vector.shape_cast %7 : vector<1x20x512xf32> to vector<20x512xf32>
    %9 = arith.addf %6, %8 : vector<20x512xf32>
    %10 = arith.truncf %9 : vector<20x512xf32> to vector<20x512xbf16>
    %c0_9 = arith.constant 0 : index
    %c0_10 = arith.constant 0 : index
    %c0_11 = arith.constant 0 : index
    %11 = vector.load %arg6[%c0_9, %c0_10, %c0_11] : memref<1x20x512xbf16, #tpu.memory_space<vmem>>, vector<1x20x512xbf16>
    %12 = vector.shape_cast %11 : vector<1x20x512xbf16> to vector<20x512xbf16>
    %13 = vector.shape_cast %10 : vector<20x512xbf16> to vector<1x20x512xbf16>
    tpu.vector_store %arg6[%c0_9, %c0_10, %c0_11], %13 {strides = array<i32>} : memref<1x20x512xbf16, #tpu.memory_space<vmem>>, vector<1x20x512xbf16>,
    return
  }
  func.func @transform_0(%arg0: i32, %arg1: i32) -> (i32, i32, i32) {
    %c0_i32 = arith.constant 0 : i32
    %c0_i32_0 = arith.constant 0 : i32
    return %arg0, %c0_i32, %arg1 : i32, i32, i32
  }
  func.func @transform_1(%arg0: i32, %arg1: i32) -> (i32, i32) {
    %c0_i32 = arith.constant 0 : i32
    %c0_i32_0 = arith.constant 0 : i32
    %c0_i32_1 = arith.constant 0 : i32
    return %c0_i32, %c0_i32_0 : i32, i32
  }
  func.func @transform_2(%arg0: i32, %arg1: i32) -> (i32, i32) {
    %c0_i32 = arith.constant 0 : i32
    %c0_i32_0 = arith.constant 0 : i32
    %c0_i32_1 = arith.constant 0 : i32
    return %c0_i32, %c0_i32_0 : i32, i32
  }
  func.func @transform_3(%arg0: i32, %arg1: i32) -> (i32, i32, i32) {
    %c0_i32 = arith.constant 0 : i32
    %c0_i32_0 = arith.constant 0 : i32
    return %arg0, %c0_i32, %arg1 : i32, i32, i32
  }
  func.func @transform_4(%arg0: i32, %arg1: i32) -> (i32, i32, i32) {
    %c0_i32 = arith.constant 0 : i32
    %c0_i32_0 = arith.constant 0 : i32
    return %arg0, %c0_i32, %arg1 : i32, i32, i32
  }
}

module attributes {stable_mosaic.version = 11 : i64} {
  func.func @_head_kernel(%arg0: i32, %arg1: i32, %arg2: memref<1x20x512xbf16, #tpu.memory_space<vmem>>, %arg3: memref<128x20xbf16, #tpu.memory_space<vmem>>, %arg4: memref<128x1xf32, #tpu.memory_space<vmem>>, %arg5: memref<1x128xbf16, #tpu.memory_space<vmem>>, %arg6: memref<1x1xf32, #tpu.memory_space<vmem>>, %arg7: memref<1x1x512xf32, #tpu.memory_space<vmem>>) attributes {dimension_semantics = [#tpu.dimension_semantics<parallel>, #tpu.dimension_semantics<parallel>], iteration_bounds = array<i64: 2, 1>, scalar_prefetch = 0 : i64, scratch_operands = 0 : i64, tpu.core_type = #tpu.core_type<tc>, window_params = [{transform_indices = @transform_0, window_bounds = array<i64: 1, 20, 512>}, {pipeline_mode = #tpu.pipeline_mode<synchronous>, transform_indices = @transform_1, window_bounds = array<i64: 128, 20>}, {pipeline_mode = #tpu.pipeline_mode<synchronous>, transform_indices = @transform_2, window_bounds = array<i64: 128, 1>}, {pipeline_mode = #tpu.pipeline_mode<synchronous>, transform_indices = @transform_3, window_bounds = array<i64: 1, 128>}, {pipeline_mode = #tpu.pipeline_mode<synchronous>, transform_indices = @transform_4, window_bounds = array<i64: 1, 1>}, {transform_indices = @transform_5, window_bounds = array<i64: 1, 1, 512>}]} {
    %c0 = arith.constant 0 : index
    %c0_0 = arith.constant 0 : index
    %0 = vector.load %arg3[%c0, %c0_0] : memref<128x20xbf16, #tpu.memory_space<vmem>>, vector<128x20xbf16>
    %c0_1 = arith.constant 0 : index
    %c0_2 = arith.constant 0 : index
    %c0_3 = arith.constant 0 : index
    %1 = vector.load %arg2[%c0_1, %c0_2, %c0_3] : memref<1x20x512xbf16, #tpu.memory_space<vmem>>, vector<1x20x512xbf16>
    %2 = vector.shape_cast %1 : vector<1x20x512xbf16> to vector<20x512xbf16>
    %cst = arith.constant dense<0.000000e+00> : vector<128x512xf32>
    %3 = tpu.matmul %0, %2, %cst {dimension_numbers = #tpu.dot_dimension_numbers<[1], [0], [0], [1], [0, 0, 1, 1], [], []>} : vector<128x20xbf16>, vector<20x512xbf16>, vector<128x512xf32> -> vector<128x512xf32>
    %c0_4 = arith.constant 0 : index
    %c0_5 = arith.constant 0 : index
    %4 = vector.load %arg4[%c0_4, %c0_5] : memref<128x1xf32, #tpu.memory_space<vmem>>, vector<128x1xf32>
    %5 = vector.broadcast %4 : vector<128x1xf32> to vector<128x512xf32>
    %6 = arith.addf %3, %5 : vector<128x512xf32>
    %cst_6 = arith.constant 0.000000e+00 : f32
    %7 = vector.broadcast %cst_6 : f32 to vector<128x512xf32>
    %8 = arith.maximumf %6, %7 : vector<128x512xf32>
    %9 = arith.truncf %8 : vector<128x512xf32> to vector<128x512xbf16>
    %c0_7 = arith.constant 0 : index
    %c0_8 = arith.constant 0 : index
    %10 = vector.load %arg5[%c0_7, %c0_8] : memref<1x128xbf16, #tpu.memory_space<vmem>>, vector<1x128xbf16>
    %cst_9 = arith.constant dense<0.000000e+00> : vector<1x512xf32>
    %11 = tpu.matmul %10, %9, %cst_9 {dimension_numbers = #tpu.dot_dimension_numbers<[1], [0], [0], [1], [0, 0, 1, 1], [], []>} : vector<1x128xbf16>, vector<128x512xbf16>, vector<1x512xf32> -> vector<1x512xf32>
    %c0_10 = arith.constant 0 : index
    %c0_11 = arith.constant 0 : index
    %12 = vector.load %arg6[%c0_10, %c0_11] : memref<1x1xf32, #tpu.memory_space<vmem>>, vector<1x1xf32>
    %13 = vector.broadcast %12 : vector<1x1xf32> to vector<1x512xf32>
    %14 = arith.addf %11, %13 : vector<1x512xf32>
    %c0_12 = arith.constant 0 : index
    %c0_13 = arith.constant 0 : index
    %c0_14 = arith.constant 0 : index
    %15 = vector.load %arg7[%c0_12, %c0_13, %c0_14] : memref<1x1x512xf32, #tpu.memory_space<vmem>>, vector<1x1x512xf32>
    %16 = vector.shape_cast %15 : vector<1x1x512xf32> to vector<1x512xf32>
    %17 = vector.shape_cast %14 : vector<1x512xf32> to vector<1x1x512xf32>
    tpu.vector_store %arg7[%c0_12, %c0_13, %c0_14], %17 {strides = array<i32>} : memref<1x1x512xf32, #tpu.memory_space<vmem>>, vector<1x1x512xf32>,
    return
  }
  func.func @transform_0(%arg0: i32, %arg1: i32) -> (i32, i32, i32) {
    %c0_i32 = arith.constant 0 : i32
    %c0_i32_0 = arith.constant 0 : i32
    return %arg0, %c0_i32, %arg1 : i32, i32, i32
  }
  func.func @transform_1(%arg0: i32, %arg1: i32) -> (i32, i32) {
    %c0_i32 = arith.constant 0 : i32
    %c0_i32_0 = arith.constant 0 : i32
    %c0_i32_1 = arith.constant 0 : i32
    return %c0_i32, %c0_i32_0 : i32, i32
  }
  func.func @transform_2(%arg0: i32, %arg1: i32) -> (i32, i32) {
    %c0_i32 = arith.constant 0 : i32
    %c0_i32_0 = arith.constant 0 : i32
    %c0_i32_1 = arith.constant 0 : i32
    return %c0_i32, %c0_i32_0 : i32, i32
  }
  func.func @transform_3(%arg0: i32, %arg1: i32) -> (i32, i32) {
    %c0_i32 = arith.constant 0 : i32
    %c0_i32_0 = arith.constant 0 : i32
    %c0_i32_1 = arith.constant 0 : i32
    return %c0_i32, %c0_i32_0 : i32, i32
  }
  func.func @transform_4(%arg0: i32, %arg1: i32) -> (i32, i32) {
    %c0_i32 = arith.constant 0 : i32
    %c0_i32_0 = arith.constant 0 : i32
    %c0_i32_1 = arith.constant 0 : i32
    return %c0_i32, %c0_i32_0 : i32, i32
  }
  func.func @transform_5(%arg0: i32, %arg1: i32) -> (i32, i32, i32) {
    %c0_i32 = arith.constant 0 : i32
    %c0_i32_0 = arith.constant 0 : i32
    return %arg0, %c0_i32, %arg1 : i32, i32, i32
  }
}

</mosaic_0001>

<llo_original>
// kernel: fno3d_forward.10
$region0: #{fno3d_forward.10}
  #allocation0 [shape = 'u32[]', space=smem, size = 0x4, offset = 0x4, fixed_abs, tag = 'smem constant byte address 0x4 - core index']
  #allocation1 [shape = 'u32[144,128]{1,0:T(1,128)}', space=vmem, size = 0x12000, scoped, tag = 'internal scratch']
  %s0 = inlined_call_operand.vmem [shape: f32[2,512,13], index: 0, kind: input, shape index: {}]
  %s1 = inlined_call_operand.vmem [shape: f32[20,13], index: 1, kind: input, shape index: {}]
  %s2 = inlined_call_operand.vmem [shape: f32[20,1], index: 2, kind: input, shape index: {}]
  %s3 = inlined_call_operand.vmem [shape: f32[2,20,512], index: 3, kind: output, shape index: {}]
  %s4 = sld [smem:[#allocation0]]
  $region45: #{fno3d_forward.10} parent=0
    _
  %s6 = ssub.s32 1, %s4
  %s7 = scalar_select 0, %s6, %s4
  loop: start=0, step=1, limit=4
  $region2: #{fno3d_forward.10} parent=0 // loop_pre_header
    _
  $region3: #{fno3d_forward.10} parent=0 // loop_header
    %s9 = sphi 0, %s13
    %p10 = scmp.ge.s32.totalorder %s9, 4
    %s16 = sphi 0, %s28
    %s17 = sphi 0, %s24
    %s18 = sphi 0, %s16
    %s19 = sphi 0, %s17
    %s20 = sphi 0, %s18
    %s21 = sphi 0, %s19
    %s33 = sphi 0, %s35
    %s36 = sphi 0, %s33
    %s37 = sphi 0, %s36
    %s53 = sphi 0, %s37
    %s57 = sphi 0, %s57
    %s59 = sphi 0, %s57
    %s60 = sphi 0, %s59
    %s74 = sphi 0, %s60
    %s78 = sphi 0, %s78
    %s80 = sphi 0, %s78
    %s81 = sphi 0, %s80
    %s95 = sphi 0, %s81
    %s103 = sphi 0, %s105
    %s106 = sphi 0, %s103
    %s107 = sphi 0, %s106
    %s123 = sphi 0, %s107
  $region4: #{fno3d_forward.10} parent=0 // loop_header_branch
    %12 = sbr.rel (%p10) target = $region8
  $region5: #{fno3d_forward.10} parent=0 // loop_body
    %s14 = ssub.s32 %s9, 1
    %s15 = ssub.s32 %s9, 2
    %s22 = sadd.s32 1, %s17
    %p23 = scmp.ge.s32.totalorder %s22, 1
    %s24 = scalar_select %p23, 0, %s22
    %s25 = sadd.s32 1, %s16
    %s26 = scalar_select %p23, %s25, %s16
    %p27 = scmp.ge.s32.totalorder %s26, 2
    %s28 = scalar_select %p27, 0, %s26
    %s29 = ssub.s32 %s16, %s28
    %s30 = ssub.s32 %s17, %s24
    %s31 = sor.u32 %s29, %s30
    %p32 = scmp.eq.s32.totalorder %s31, 0
    %s34 = sadd.s32 %s33, 1
    %s35 = scalar_select %p32, %s33, %s34
    %p38 = pneg %p32
    %p39 = scmp.eq.s32.totalorder %s9, 1
    %p40 = por %p38, %p39
    %p41 = scmp.ne.s32.totalorder %s33, %s36
    %p42 = scmp.eq.s32.totalorder %s9, 0
    %p43 = por %p41, %p42
    %p44 = scmp.ne.s32.totalorder %s33, %s36
    %p45 = scmp.eq.s32.totalorder %s14, 1
    %p46 = por %p44, %p45
    %p47 = scmp.ne.s32.totalorder %s36, %s37
    %p48 = scmp.eq.s32.totalorder %s14, 0
    %p49 = por %p47, %p48
    %p50 = scmp.ne.s32.totalorder %s36, %s37
    %p51 = scmp.eq.s32.totalorder %s15, 1
    %p52 = por %p50, %p51
    %p54 = scmp.ne.s32.totalorder %s37, %s53
    %p55 = scmp.eq.s32.totalorder %s15, 0
    %p56 = por %p54, %p55
    %s58 = sadd.s32 %s57, 1
    %p61 = scmp.eq.s32.totalorder %s9, 1
    %p62 = scmp.ne.s32.totalorder %s57, %s59
    %p63 = scmp.eq.s32.totalorder %s9, 0
    %p64 = por %p62, %p63
    %p65 = scmp.ne.s32.totalorder %s57, %s59
    %p66 = scmp.eq.s32.totalorder %s14, 1
    %p67 = por %p65, %p66
    %p68 = scmp.ne.s32.totalorder %s59, %s60
    %p69 = scmp.eq.s32.totalorder %s14, 0
    %p70 = por %p68, %p69
    %p71 = scmp.ne.s32.totalorder %s59, %s60
    %p72 = scmp.eq.s32.totalorder %s15, 1
    %p73 = por %p71, %p72
    %p75 = scmp.ne.s32.totalorder %s60, %s74
    %p76 = scmp.eq.s32.totalorder %s15, 0
    %p77 = por %p75, %p76
    %s79 = sadd.s32 %s78, 1
    %p82 = scmp.eq.s32.totalorder %s9, 1
    %p83 = scmp.ne.s32.totalorder %s78, %s80
    %p84 = scmp.eq.s32.totalorder %s9, 0
    %p85 = por %p83, %p84
    %p86 = scmp.ne.s32.totalorder %s78, %s80
    %p87 = scmp.eq.s32.totalorder %s14, 1
    %p88 = por %p86, %p87
    %p89 = scmp.ne.s32.totalorder %s80, %s81
    %p90 = scmp.eq.s32.totalorder %s14, 0
    %p91 = por %p89, %p90
    %p92 = scmp.ne.s32.totalorder %s80, %s81
    %p93 = scmp.eq.s32.totalorder %s15, 1
    %p94 = por %p92, %p93
    %p96 = scmp.ne.s32.totalorder %s81, %s95
    %p97 = scmp.eq.s32.totalorder %s15, 0
    %p98 = por %p96, %p97
    %s99 = ssub.s32 %s16, %s28
    %s100 = ssub.s32 %s17, %s24
    %s101 = sor.u32 %s99, %s100
    %p102 = scmp.eq.s32.totalorder %s101, 0
    %s104 = sadd.s32 %s103, 1
    %s105 = scalar_select %p102, %s103, %s104
    %p108 = pneg %p102
    %p109 = scmp.eq.s32.totalorder %s9, 1
    %p110 = por %p108, %p109
    %p111 = scmp.ne.s32.totalorder %s103, %s106
    %p112 = scmp.eq.s32.totalorder %s9, 0
    %p113 = por %p111, %p112
    %p114 = scmp.ne.s32.totalorder %s103, %s106
    %p115 = scmp.eq.s32.totalorder %s14, 1
    %p116 = por %p114, %p115
    %p117 = scmp.ne.s32.totalorder %s106, %s107
    %p118 = scmp.eq.s32.totalorder %s14, 0
    %p119 = por %p117, %p118
    %p120 = scmp.ne.s32.totalorder %s106, %s107
    %p121 = scmp.eq.s32.totalorder %s15, 1
    %p122 = por %p120, %p121
    %p124 = scmp.ne.s32.totalorder %s107, %s123
    %p125 = scmp.eq.s32.totalorder %s15, 0
    %p126 = por %p124, %p125
    %p127 = scmp.le.s32.totalorder 1, %s9
    %p128 = scmp.lt.s32.totalorder %s9, 3
    %p129 = pnand %p127, %p128
    %p130 = pneg %p129
    // Predicated region
    $region9: #{fno3d_forward.10} parent=5 // pred_check
      _
    $region10: #{fno3d_forward.10} parent=5 // pred_check_branch
      %132 = sbr.rel (%p129) target = $region12
    $region11: #{fno3d_forward.10} parent=5 // pred_region
      %s133 = ssub.s32 %s9, 1
      // Predicated region
      $region13: #{fno3d_forward.10} parent=11 // pred_check
        %p134 = pneg %p70
      $region14: #{fno3d_forward.10} parent=11 // pred_check_branch
        %136 = sbr.rel (%p134) target = $region16
      $region15: #{fno3d_forward.10} parent=11 // pred_region
        _
      $region16: #{fno3d_forward.10} parent=11 // pred_fallthru
        _
      // Predicated region
      $region17: #{fno3d_forward.10} parent=11 // pred_check
        %p137 = pneg %p91
      $region18: #{fno3d_forward.10} parent=11 // pred_check_branch
        %139 = sbr.rel (%p137) target = $region20
      $region19: #{fno3d_forward.10} parent=11 // pred_region
        _
      $region20: #{fno3d_forward.10} parent=11 // pred_fallthru
        _
    $region12: #{fno3d_forward.10} parent=5 // pred_fallthru
      _
    %p140 = scmp.lt.s32.totalorder %s9, 2
    // Predicated region
    $region21: #{fno3d_forward.10} parent=5 // pred_check
      %p141 = pneg %p140
    $region22: #{fno3d_forward.10} parent=5 // pred_check_branch
      %143 = sbr.rel (%p141) target = $region24
    $region23: #{fno3d_forward.10} parent=5 // pred_region
      // Predicated region
      $region25: #{fno3d_forward.10} parent=23 // pred_check
        %p144 = pneg %p43
      $region26: #{fno3d_forward.10} parent=23 // pred_check_branch
        %146 = sbr.rel (%p144) target = $region28
      $region27: #{fno3d_forward.10} parent=23 // pred_region
        %s147 = smul.u32 64, %s17
        %p148 = scmp.lt.s32.totalorder %s16, 1
        %s149 = scalar_select %p148, %s16, 1
        %p150 = scmp.lt.s32.totalorder %s147, 63
        %s151 = scalar_select %p150, %s147, 63
        %s152 = smul.addr %s149, 64
        %s153 = sadd.s32 %s151, %s152
        %s154 = smul.addr %s153, 8
        %s155 = scalar_lea.vmem %s0, %s154
        %s156 = smul.u32 64, %s17
      $region28: #{fno3d_forward.10} parent=23 // pred_fallthru
        _
    $region24: #{fno3d_forward.10} parent=5 // pred_fallthru
      _
    %p157 = scmp.le.s32.totalorder 1, %s9
    %p158 = scmp.lt.s32.totalorder %s9, 3
    %p159 = pnand %p157, %p158
    %p160 = pneg %p159
    // Predicated region
    $region29: #{fno3d_forward.10} parent=5 // pred_check
      _
    $region30: #{fno3d_forward.10} parent=5 // pred_check_branch
      %162 = sbr.rel (%p159) target = $region32
    $region31: #{fno3d_forward.10} parent=5 // pred_region
      %s163 = ssub.s32 %s9, 1
      %s164 = smul.u32 64, %s19
      %p165 = scmp.lt.s32.totalorder %s18, 1
      %s166 = scalar_select %p165, %s18, 1
      %p167 = scmp.lt.s32.totalorder %s164, 63
      %s168 = scalar_select %p167, %s164, 63
      %s169 = smul.addr %s166, 64
      %s170 = sadd.s32 %s168, %s169
      %s171 = smul.addr %s170, 8
      %s172 = scalar_lea.vmem %s0, %s171
      %p173 = pneg %p49
      %p174 = pneg %p46
      %p175 = pneg %p70
      %p176 = pneg %p67
      %p177 = pneg %p91
      %p178 = pneg %p88
      %p179 = pneg %p119
      %p180 = pneg %p116
      %s181 = smul.u32 4, %s19
      %p182 = scmp.lt.s32.totalorder %s18, 1
      %s183 = scalar_select %p182, %s18, 1
      %p184 = scmp.lt.s32.totalorder %s181, 3
      %s185 = scalar_select %p184, %s181, 3
      %s186 = smul.addr %s183, 12
      %s187 = sadd.s32 %s185, %s186
      %s188 = smul.addr %s187, 8
      %s189 = scalar_lea.vmem %s3, %s188
      %s190 = smul.u32 64, %s19
      %p191 = scmp.lt.s32.totalorder %s18, 1
      %s192 = scalar_select %p191, %s18, 1
      %p193 = scmp.lt.s32.totalorder %s190, 63
      %s194 = scalar_select %p193, %s190, 63
      %s195 = smul.addr %s192, 64
      %s196 = sadd.s32 %s194, %s195
      %s197 = smul.addr %s196, 8
      %s198 = scalar_lea.vmem %s0, %s197
      %s199 = smul.u32 64, %s19
      %s200 = smul.u32 4, %s19
      %p201 = scmp.lt.s32.totalorder %s18, 1
      %s202 = scalar_select %p201, %s18, 1
      %p203 = scmp.lt.s32.totalorder %s200, 3
      %s204 = scalar_select %p203, %s200, 3
      %s205 = smul.addr %s202, 12
      %s206 = sadd.s32 %s204, %s205
      %s207 = smul.addr %s206, 8
      %s208 = scalar_lea.vmem %s3, %s207
      %s209 = smul.u32 4, %s19
      %v210 = vld [vmem:[%s1] sm:$0xff]
      %v211 = vld [vmem:[%s1 + $0x8] sm:$0xff]
      %v212 = vld [vmem:[%s1 + $0x10] sm:$0xf]
      %v213 = vld [vmem:[%s198] sm:$0xff]
      %v214 = vld [vmem:[%s198 + $0x8] sm:$0xff]
      %v215 = vld [vmem:[%s198 + $0x10] sm:$0xff]
      %v216 = vld [vmem:[%s198 + $0x18] sm:$0xff]
      %v217 = vld [vmem:[%s198 + $0x20] sm:$0xff]
      %v218 = vld [vmem:[%s198 + $0x28] sm:$0xff]
      %v219 = vld [vmem:[%s198 + $0x30] sm:$0xff]
      %v220 = vld [vmem:[%s198 + $0x38] sm:$0xff]
      %v221 = vld [vmem:[%s198 + $0x40] sm:$0xff]
      %v222 = vld [vmem:[%s198 + $0x48] sm:$0xff]
      %v223 = vld [vmem:[%s198 + $0x50] sm:$0xff]
      %v224 = vld [vmem:[%s198 + $0x58] sm:$0xff]
      %v225 = vld [vmem:[%s198 + $0x60] sm:$0xff]
      %v226 = vld [vmem:[%s198 + $0x68] sm:$0xff]
      %v227 = vld [vmem:[%s198 + $0x70] sm:$0xff]
      %v228 = vld [vmem:[%s198 + $0x78] sm:$0xff]
      %v229 = vld [vmem:[%s198 + $0x80] sm:$0xff]
      %v230 = vld [vmem:[%s198 + $0x88] sm:$0xff]
      %v231 = vld [vmem:[%s198 + $0x90] sm:$0xff]
      %v232 = vld [vmem:[%s198 + $0x98] sm:$0xff]
      %v233 = vld [vmem:[%s198 + $0xa0] sm:$0xff]
      %v234 = vld [vmem:[%s198 + $0xa8] sm:$0xff]
      %v235 = vld [vmem:[%s198 + $0xb0] sm:$0xff]
      %v236 = vld [vmem:[%s198 + $0xb8] sm:$0xff]
      %v237 = vld [vmem:[%s198 + $0xc0] sm:$0xff]
      %v238 = vld [vmem:[%s198 + $0xc8] sm:$0xff]
      %v239 = vld [vmem:[%s198 + $0xd0] sm:$0xff]
      %v240 = vld [vmem:[%s198 + $0xd8] sm:$0xff]
      %v241 = vld [vmem:[%s198 + $0xe0] sm:$0xff]
      %v242 = vld [vmem:[%s198 + $0xe8] sm:$0xff]
      %v243 = vld [vmem:[%s198 + $0xf0] sm:$0xff]
      %v244 = vld [vmem:[%s198 + $0xf8] sm:$0xff]
      %v245 = vld [vmem:[%s198 + $0x100] sm:$0xff]
      %v246 = vld [vmem:[%s198 + $0x108] sm:$0xff]
      %v247 = vld [vmem:[%s198 + $0x110] sm:$0xff]
      %v248 = vld [vmem:[%s198 + $0x118] sm:$0xff]
      %v249 = vld [vmem:[%s198 + $0x120] sm:$0xff]
      %v250 = vld [vmem:[%s198 + $0x128] sm:$0xff]
      %v251 = vld [vmem:[%s198 + $0x130] sm:$0xff]
      %v252 = vld [vmem:[%s198 + $0x138] sm:$0xff]
      %v253 = vld [vmem:[%s198 + $0x140] sm:$0xff]
      %v254 = vld [vmem:[%s198 + $0x148] sm:$0xff]
      %v255 = vld [vmem:[%s198 + $0x150] sm:$0xff]
      %v256 = vld [vmem:[%s198 + $0x158] sm:$0xff]
      %v257 = vld [vmem:[%s198 + $0x160] sm:$0xff]
      %v258 = vld [vmem:[%s198 + $0x168] sm:$0xff]
      %v259 = vld [vmem:[%s198 + $0x170] sm:$0xff]
      %v260 = vld [vmem:[%s198 + $0x178] sm:$0xff]
      %v261 = vld [vmem:[%s198 + $0x180] sm:$0xff]
      %v262 = vld [vmem:[%s198 + $0x188] sm:$0xff]
      %v263 = vld [vmem:[%s198 + $0x190] sm:$0xff]
      %v264 = vld [vmem:[%s198 + $0x198] sm:$0xff]
      %v265 = vld [vmem:[%s198 + $0x1a0] sm:$0xff]
      %v266 = vld [vmem:[%s198 + $0x1a8] sm:$0xff]
      %v267 = vld [vmem:[%s198 + $0x1b0] sm:$0xff]
      %v268 = vld [vmem:[%s198 + $0x1b8] sm:$0xff]
      %v269 = vld [vmem:[%s198 + $0x1c0] sm:$0xff]
      %v270 = vld [vmem:[%s198 + $0x1c8] sm:$0xff]
      %v271 = vld [vmem:[%s198 + $0x1d0] sm:$0xff]
      %v272 = vld [vmem:[%s198 + $0x1d8] sm:$0xff]
      %v273 = vld [vmem:[%s198 + $0x1e0] sm:$0xff]
      %v274 = vld [vmem:[%s198 + $0x1e8] sm:$0xff]
      %v275 = vld [vmem:[%s198 + $0x1f0] sm:$0xff]
      %v276 = vld [vmem:[%s198 + $0x1f8] sm:$0xff]
      %v277 = vld [vmem:[%s2] sm:$0xff]
      %v278 = vld [vmem:[%s2 + $0x8] sm:$0xff]
      %v279 = vld [vmem:[%s2 + $0x10] sm:$0xf]
      %281 = vset.pattern.permute.xlu0 0
      %282 = vperm.xlu0 %281, %v277
      %v283 = vpop.permute.xlu0 %282
      %286 = vset.pattern.permute.xlu0 0
      %287 = vperm.xlu0 %286, %v278
      %v288 = vpop.permute.xlu0 %287
      %291 = vset.pattern.permute.xlu0 0
      %292 = vperm.xlu0 %291, %v279
      %v293 = vpop.permute.xlu0 %292
      %vm295 = vcmask 105472
      %v297 = vsel %vm295, %v210, 0
      %v300 = vsel %vm295, %v211, 0
      %v303 = vsel %vm295, %v212, 0
      %v306 = vsel %vm295, %v213, 0
      %v309 = vsel %vm295, %v214, 0
      %v312 = vsel %vm295, %v215, 0
      %v315 = vsel %vm295, %v216, 0
      %v318 = vsel %vm295, %v217, 0
      %v321 = vsel %vm295, %v218, 0
      %v324 = vsel %vm295, %v219, 0
      %v327 = vsel %vm295, %v220, 0
      %v330 = vsel %vm295, %v221, 0
      %v333 = vsel %vm295, %v222, 0
      %v336 = vsel %vm295, %v223, 0
      %v339 = vsel %vm295, %v224, 0
      %v342 = vsel %vm295, %v225, 0
      %v345 = vsel %vm295, %v226, 0
      %v348 = vsel %vm295, %v227, 0
      %v351 = vsel %vm295, %v228, 0
      %v354 = vsel %vm295, %v229, 0
      %v357 = vsel %vm295, %v230, 0
      %v360 = vsel %vm295, %v231, 0
      %v363 = vsel %vm295, %v232, 0
      %v366 = vsel %vm295, %v233, 0
      %v369 = vsel %vm295, %v234, 0
      %v372 = vsel %vm295, %v235, 0
      %v375 = vsel %vm295, %v236, 0
      %v378 = vsel %vm295, %v237, 0
      %v381 = vsel %vm295, %v238, 0
      %v384 = vsel %vm295, %v239, 0
      %v387 = vsel %vm295, %v240, 0
      %v390 = vsel %vm295, %v241, 0
      %v393 = vsel %vm295, %v242, 0
      %v396 = vsel %vm295, %v243, 0
      %v399 = vsel %vm295, %v244, 0
      %v402 = vsel %vm295, %v245, 0
      %v405 = vsel %vm295, %v246, 0
      %v408 = vsel %vm295, %v247, 0
      %v411 = vsel %vm295, %v248, 0
      %v414 = vsel %vm295, %v249, 0
      %v417 = vsel %vm295, %v250, 0
      %v420 = vsel %vm295, %v251, 0
      %v423 = vsel %vm295, %v252, 0
      %v426 = vsel %vm295, %v253, 0
      %v429 = vsel %vm295, %v254, 0
      %v432 = vsel %vm295, %v255, 0
      %v435 = vsel %vm295, %v256, 0
      %v438 = vsel %vm295, %v257, 0
      %v441 = vsel %vm295, %v258, 0
      %v444 = vsel %vm295, %v259, 0
      %v447 = vsel %vm295, %v260, 0
      %v450 = vsel %vm295, %v261, 0
      %v453 = vsel %vm295, %v262, 0
      %v456 = vsel %vm295, %v263, 0
      %v459 = vsel %vm295, %v264, 0
      %v462 = vsel %vm295, %v265, 0
      %v465 = vsel %vm295, %v266, 0
      %v468 = vsel %vm295, %v267, 0
      %v471 = vsel %vm295, %v268, 0
      %v474 = vsel %vm295, %v269, 0
      %v477 = vsel %vm295, %v270, 0
      %v480 = vsel %vm295, %v271, 0
      %v483 = vsel %vm295, %v272, 0
      %v486 = vsel %vm295, %v273, 0
      %v489 = vsel %vm295, %v274, 0
      %v492 = vsel %vm295, %v275, 0
      %v495 = vsel %vm295, %v276, 0
      %497 = vmatprep.subr.mxu0 0.0
      %498 = vmatpush1.xpose.msra.mxu0 %v306
      %499 = vmatprep.subr.mxu0 0.0
      %500 = vmatpush1.xpose.msra.mxu0 %v309
      %501 = vmatprep.subr.mxu0 0.0
      %502 = vmatpush1.xpose.msra.mxu0 %v312
      %503 = vmatprep.subr.mxu0 0.0
      %504 = vmatpush1.xpose.msra.mxu0 %v315
      %505 = vmatprep.subr.mxu0 0.0
      %506 = vmatpush1.xpose.msra.mxu0 %v318
      %507 = vmatprep.subr.mxu0 0.0
      %508 = vmatpush1.xpose.msra.mxu0 %v321
      %509 = vmatprep.subr.mxu0 0.0
      %510 = vmatpush1.xpose.msra.mxu0 %v324
      %511 = vmatprep.subr.mxu0 0.0
      %512 = vmatpush1.xpose.msra.mxu0 %v327
      %513 = vmatprep.subr.mxu0 0.0
      %514 = vmatpush1.xpose.msra.mxu0 %v330
      %515 = vmatprep.subr.mxu0 0.0
      %516 = vmatpush1.xpose.msra.mxu0 %v333
      %517 = vmatprep.subr.mxu0 0.0
      %518 = vmatpush1.xpose.msra.mxu0 %v336
      %519 = vmatprep.subr.mxu0 0.0
      %520 = vmatpush1.xpose.msra.mxu0 %v339
      %521 = vmatprep.subr.mxu0 0.0
      %522 = vmatpush1.xpose.msra.mxu0 %v342
      %523 = vmatprep.subr.mxu0 0.0
      %524 = vmatpush1.xpose.msra.mxu0 %v345
      %525 = vmatprep.subr.mxu0 0.0
      %526 = vmatpush1.xpose.msra.mxu0 %v348
      %527 = vmatprep.subr.mxu0 0.0
      %528 = vmatpush1.xpose.msra.mxu0 %v351
      %529 = vmatprep.subr.mxu0 0.0
      %530 = vmatpush1.xpose.msra.mxu0 %v354
      %531 = vmatprep.subr.mxu0 0.0
      %532 = vmatpush1.xpose.msra.mxu0 %v357
      %533 = vmatprep.subr.mxu0 0.0
      %534 = vmatpush1.xpose.msra.mxu0 %v360
      %535 = vmatprep.subr.mxu0 0.0
      %536 = vmatpush1.xpose.msra.mxu0 %v363
      %537 = vmatprep.subr.mxu0 0.0
      %538 = vmatpush1.xpose.msra.mxu0 %v366
      %539 = vmatprep.subr.mxu0 0.0
      %540 = vmatpush1.xpose.msra.mxu0 %v369
      %541 = vmatprep.subr.mxu0 0.0
      %542 = vmatpush1.xpose.msra.mxu0 %v372
      %543 = vmatprep.subr.mxu0 0.0
      %544 = vmatpush1.xpose.msra.mxu0 %v375
      %545 = vmatprep.subr.mxu0 0.0
      %546 = vmatpush1.xpose.msra.mxu0 %v378
      %547 = vmatprep.subr.mxu0 0.0
      %548 = vmatpush1.xpose.msra.mxu0 %v381
      %549 = vmatprep.subr.mxu0 0.0
      %550 = vmatpush1.xpose.msra.mxu0 %v384
      %551 = vmatprep.subr.mxu0 0.0
      %552 = vmatpush1.xpose.msra.mxu0 %v387
      %553 = vmatprep.subr.mxu0 0.0
      %554 = vmatpush1.xpose.msra.mxu0 %v390
      %555 = vmatprep.subr.mxu0 0.0
      %556 = vmatpush1.xpose.msra.mxu0 %v393
      %557 = vmatprep.subr.mxu0 0.0
      %558 = vmatpush1.xpose.msra.mxu0 %v396
      %559 = vmatprep.subr.mxu0 0.0
      %560 = vmatpush1.xpose.msra.mxu0 %v399
      %561 = vmatprep.mubr.f32.mxu0 0.0
      %562 = vmatmul.mubr.f32.gmra.mrb[0].mxu0 %v297
      %v563 = vpop.f32.mrb[0].mxu0
      %v564 = vadd.f32 %v283, %v563
      %v565 = vpop.f32.mrb[0].mxu0
      %v566 = vadd.f32 %v283, %v565
      %567 = vmatprep.mubr.f32.mxu0 0.0
      %568 = vmatmul.mubr.f32.gmra.mrb[0].mxu0 %v300
      %v569 = vpop.f32.mrb[0].mxu0
      %v570 = vadd.f32 %v288, %v569
      %v571 = vpop.f32.mrb[0].mxu0
      %v572 = vadd.f32 %v288, %v571
      %573 = vmatprep.mubr.f32.mxu0 0.0
      %574 = vmatmul.mubr.f32.gmra.mrb[0].mxu0 %v303
      %v575 = vpop.f32.mrb[0].mxu0
      %v576 = vadd.f32 %v293, %v575
      %v577 = vpop.f32.mrb[0].mxu0
      %v578 = vadd.f32 %v293, %v577
      %579 = vdwg.mxu0
      %580 = vmatprep.subr.mxu0 0.0
      %581 = vmatpush1.xpose.msra.mxu0 %v402
      %582 = vmatprep.subr.mxu0 0.0
      %583 = vmatpush1.xpose.msra.mxu0 %v405
      %584 = vmatprep.subr.mxu0 0.0
      %585 = vmatpush1.xpose.msra.mxu0 %v408
      %586 = vmatprep.subr.mxu0 0.0
      %587 = vmatpush1.xpose.msra.mxu0 %v411
      %588 = vmatprep.subr.mxu0 0.0
      %589 = vmatpush1.xpose.msra.mxu0 %v414
      %590 = vmatprep.subr.mxu0 0.0
      %591 = vmatpush1.xpose.msra.mxu0 %v417
      %592 = vmatprep.subr.mxu0 0.0
      %593 = vmatpush1.xpose.msra.mxu0 %v420
      %594 = vmatprep.subr.mxu0 0.0
      %595 = vmatpush1.xpose.msra.mxu0 %v423
      %596 = vmatprep.subr.mxu0 0.0
      %597 = vmatpush1.xpose.msra.mxu0 %v426
      %598 = vmatprep.subr.mxu0 0.0
      %599 = vmatpush1.xpose.msra.mxu0 %v429
      %600 = vmatprep.subr.mxu0 0.0
      %601 = vmatpush1.xpose.msra.mxu0 %v432
      %602 = vmatprep.subr.mxu0 0.0
      %603 = vmatpush1.xpose.msra.mxu0 %v435
      %604 = vmatprep.subr.mxu0 0.0
      %605 = vmatpush1.xpose.msra.mxu0 %v438
      %606 = vmatprep.subr.mxu0 0.0
      %607 = vmatpush1.xpose.msra.mxu0 %v441
      %608 = vmatprep.subr.mxu0 0.0
      %609 = vmatpush1.xpose.msra.mxu0 %v444
      %610 = vmatprep.subr.mxu0 0.0
      %611 = vmatpush1.xpose.msra.mxu0 %v447
      %612 = vmatprep.subr.mxu0 0.0
      %613 = vmatpush1.xpose.msra.mxu0 %v450
      %614 = vmatprep.subr.mxu0 0.0
      %615 = vmatpush1.xpose.msra.mxu0 %v453
      %616 = vmatprep.subr.mxu0 0.0
      %617 = vmatpush1.xpose.msra.mxu0 %v456
      %618 = vmatprep.subr.mxu0 0.0
      %619 = vmatpush1.xpose.msra.mxu0 %v459
      %620 = vmatprep.subr.mxu0 0.0
      %621 = vmatpush1.xpose.msra.mxu0 %v462
      %622 = vmatprep.subr.mxu0 0.0
      %623 = vmatpush1.xpose.msra.mxu0 %v465
      %624 = vmatprep.subr.mxu0 0.0
      %625 = vmatpush1.xpose.msra.mxu0 %v468
      %626 = vmatprep.subr.mxu0 0.0
      %627 = vmatpush1.xpose.msra.mxu0 %v471
      %628 = vmatprep.subr.mxu0 0.0
      %629 = vmatpush1.xpose.msra.mxu0 %v474
      %630 = vmatprep.subr.mxu0 0.0
      %631 = vmatpush1.xpose.msra.mxu0 %v477
      %632 = vmatprep.subr.mxu0 0.0
      %633 = vmatpush1.xpose.msra.mxu0 %v480
      %634 = vmatprep.subr.mxu0 0.0
      %635 = vmatpush1.xpose.msra.mxu0 %v483
      %636 = vmatprep.subr.mxu0 0.0
      %637 = vmatpush1.xpose.msra.mxu0 %v486
      %638 = vmatprep.subr.mxu0 0.0
      %639 = vmatpush1.xpose.msra.mxu0 %v489
      %640 = vmatprep.subr.mxu0 0.0
      %641 = vmatpush1.xpose.msra.mxu0 %v492
      %642 = vmatprep.subr.mxu0 0.0
      %643 = vmatpush1.xpose.msra.mxu0 %v495
      %644 = vmatprep.mubr.f32.mxu0 0.0
      %645 = vmatmul.mubr.f32.gmra.mrb[0].mxu0 %v297
      %v646 = vpop.f32.mrb[0].mxu0
      %v647 = vadd.f32 %v283, %v646
      %v648 = vpop.f32.mrb[0].mxu0
      %v649 = vadd.f32 %v283, %v648
      %650 = vmatprep.mubr.f32.mxu0 0.0
      %651 = vmatmul.mubr.f32.gmra.mrb[0].mxu0 %v300
      %v652 = vpop.f32.mrb[0].mxu0
      %v653 = vadd.f32 %v288, %v652
      %v654 = vpop.f32.mrb[0].mxu0
      %v655 = vadd.f32 %v288, %v654
      %656 = vmatprep.mubr.f32.mxu0 0.0
      %657 = vmatmul.mubr.f32.gmra.mrb[0].mxu0 %v303
      %v658 = vpop.f32.mrb[0].mxu0
      %v659 = vadd.f32 %v293, %v658
      %v660 = vpop.f32.mrb[0].mxu0
      %v661 = vadd.f32 %v293, %v660
      %662 = vdwg.mxu0
      %663 = vst [vmem:[%s208] sm:$0xff] %v564
      %664 = vst [vmem:[%s208 + $0x8] sm:$0xff] %v566
      %665 = vst [vmem:[%s208 + $0x10] sm:$0xff] %v647
      %666 = vst [vmem:[%s208 + $0x18] sm:$0xff] %v649
      %667 = vst [vmem:[%s208 + $0x20] sm:$0xff] %v570
      %668 = vst [vmem:[%s208 + $0x28] sm:$0xff] %v572
      %669 = vst [vmem:[%s208 + $0x30] sm:$0xff] %v653
      %670 = vst [vmem:[%s208 + $0x38] sm:$0xff] %v655
      %671 = vst [vmem:[%s208 + $0x40] sm:$0xf] %v576
      %672 = vst [vmem:[%s208 + $0x48] sm:$0xf] %v578
      %673 = vst [vmem:[%s208 + $0x50] sm:$0xf] %v659
      %674 = vst [vmem:[%s208 + $0x58] sm:$0xf] %v661
      %s675 = smul.u32 4, %s19
      %p676 = scmp.lt.s32.totalorder %s18, 1
      %s677 = scalar_select %p676, %s18, 1
      %p678 = scmp.lt.s32.totalorder %s675, 3
      %s679 = scalar_select %p678, %s675, 3
      %s680 = smul.addr %s677, 12
      %s681 = sadd.s32 %s679, %s680
      %s682 = smul.addr %s681, 8
      %s683 = scalar_lea.vmem %s3, %s682
      // Predicated region
      $region33: #{fno3d_forward.10} parent=31 // pred_check
        %p684 = pneg %p116
      $region34: #{fno3d_forward.10} parent=31 // pred_check_branch
        %686 = sbr.rel (%p684) target = $region36
      $region35: #{fno3d_forward.10} parent=31 // pred_region
        %s687 = smul.u32 4, %s19
      $region36: #{fno3d_forward.10} parent=31 // pred_fallthru
        _
    $region32: #{fno3d_forward.10} parent=5 // pred_fallthru
      _
    %p688 = scmp.le.s32.totalorder 2, %s9
    // Predicated region
    $region37: #{fno3d_forward.10} parent=5 // pred_check
      %p689 = pneg %p688
    $region38: #{fno3d_forward.10} parent=5 // pred_check_branch
      %691 = sbr.rel (%p689) target = $region40
    $region39: #{fno3d_forward.10} parent=5 // pred_region
      %s692 = ssub.s32 %s9, 2
      // Predicated region
      $region41: #{fno3d_forward.10} parent=39 // pred_check
        %p693 = pneg %p122
      $region42: #{fno3d_forward.10} parent=39 // pred_check_branch
        %695 = sbr.rel (%p693) target = $region44
      $region43: #{fno3d_forward.10} parent=39 // pred_region
        %s696 = smul.u32 4, %s21
        %p697 = scmp.lt.s32.totalorder %s20, 1
        %s698 = scalar_select %p697, %s20, 1
        %p699 = scmp.lt.s32.totalorder %s696, 3
        %s700 = scalar_select %p699, %s696, 3
        %s701 = smul.addr %s698, 12
        %s702 = sadd.s32 %s700, %s701
        %s703 = smul.addr %s702, 8
        %s704 = scalar_lea.vmem %s3, %s703
      $region44: #{fno3d_forward.10} parent=39 // pred_fallthru
        _
    $region40: #{fno3d_forward.10} parent=5 // pred_fallthru
      _
  $region6: #{fno3d_forward.10} parent=0 // loop_footer
    %s13 = sadd.s32 1, %s9
  $region7: #{fno3d_forward.10} parent=0 // loop_footer_branch
    %8 = sbr.rel target = $region3
  $region8: #{fno3d_forward.10} parent=0 // loop_exit
    _

// kernel: fno3d_forward.11
$region0: #{fno3d_forward.11}
  #allocation0 [shape = 'u32[]', space=smem, size = 0x4, offset = 0x4, fixed_abs, tag = 'smem constant byte address 0x4 - core index']
  #allocation1 [shape = 'u32[144,128]{1,0:T(1,128)}', space=vmem, size = 0x12000, scoped, tag = 'internal scratch']
  %s0 = inlined_call_operand.vmem [shape: f32[2,20,192], index: 0, kind: input, shape index: {}]
  %s1 = inlined_call_operand.vmem [shape: f32[2,20,192], index: 1, kind: input, shape index: {}]
  %s2 = inlined_call_operand.vmem [shape: f32[20,20,192], index: 2, kind: input, shape index: {}]
  %s3 = inlined_call_operand.vmem [shape: f32[20,20,192], index: 3, kind: input, shape index: {}]
  %s4 = inlined_call_operand.vmem [shape: f32[2,20,192], index: 4, kind: output, shape index: {0}]
  %s5 = inlined_call_operand.vmem [shape: f32[2,20,192], index: 5, kind: output, shape index: {1}]
  %6 = xla_tuple %s4, %s5
  %s7 = sld [smem:[#allocation0]]
  $region34: #{fno3d_forward.11} parent=0
    _
  %s9 = ssub.s32 1, %s7
  %s10 = scalar_select 0, %s9, %s7
  // Predicated region
  $region2: #{fno3d_forward.11} parent=0 // pred_check
    _
  $region3: #{fno3d_forward.11} parent=0 // pred_check_branch
    %12 = sbr.rel (0) target = $region5
  $region4: #{fno3d_forward.11} parent=0 // pred_region
    _
  $region5: #{fno3d_forward.11} parent=0 // pred_fallthru
    _
  // Predicated region
  $region6: #{fno3d_forward.11} parent=0 // pred_check
    _
  $region7: #{fno3d_forward.11} parent=0 // pred_check_branch
    %14 = sbr.rel (0) target = $region9
  $region8: #{fno3d_forward.11} parent=0 // pred_region
    _
  $region9: #{fno3d_forward.11} parent=0 // pred_fallthru
    _
  // Predicated region
  $region10: #{fno3d_forward.11} parent=0 // pred_check
    _
  $region11: #{fno3d_forward.11} parent=0 // pred_check_branch
    %16 = sbr.rel (0) target = $region13
  $region12: #{fno3d_forward.11} parent=0 // pred_region
    _
  $region13: #{fno3d_forward.11} parent=0 // pred_fallthru
    _
  // Predicated region
  $region14: #{fno3d_forward.11} parent=0 // pred_check
    _
  $region15: #{fno3d_forward.11} parent=0 // pred_check_branch
    %18 = sbr.rel (0) target = $region17
  $region16: #{fno3d_forward.11} parent=0 // pred_region
    _
  $region17: #{fno3d_forward.11} parent=0 // pred_fallthru
    _
  %v19 = vld [vmem:[%s0] ss:$8 sm:$0x3]
  %v20 = vld [vmem:[%s1] ss:$8 sm:$0x3]
  %v21 = vld [vmem:[%s2] sm:$0xff]
  %v22 = vld [vmem:[%s2 + $0x8] sm:$0xff]
  %v23 = vld [vmem:[%s2 + $0x10] sm:$0xff]
  %v24 = vld [vmem:[%s2 + $0x18] sm:$0xff]
  %v25 = vld [vmem:[%s2 + $0x20] sm:$0xf]
  %v26 = vld [vmem:[%s2 + $0x28] sm:$0xf]
  %v27 = vld [vmem:[%s3] sm:$0xff]
  %v28 = vld [vmem:[%s3 + $0x8] sm:$0xff]
  %v29 = vld [vmem:[%s3 + $0x10] sm:$0xff]
  %v30 = vld [vmem:[%s3 + $0x18] sm:$0xff]
  %v31 = vld [vmem:[%s3 + $0x20] sm:$0xf]
  %v32 = vld [vmem:[%s3 + $0x28] sm:$0xf]
  %v34 = vlaneseq
  %v35 = vshrl.u32 %v34, 7
  %v36 = vsub.s32 0, %v35
  %v37 = vrot.slane %v19, %v36
  %v38 = vlaneseq
  %v39 = vshrl.u32 %v38, 7
  %v40 = vsub.s32 1, %v39
  %v41 = vrot.slane %v19, %v40
  %v44 = vmul.f32 %v37, %v21
  %v45 = vmul.f32 %v41, %v22
  %v46 = vmul.f32 %v37, %v23
  %v47 = vmul.f32 %v41, %v24
  %v48 = vmul.f32 %v37, %v25
  %v49 = vmul.f32 %v41, %v26
  %v50 = vadd.f32 %v44, 0.0
  %v51 = vadd.f32 %v45, 0.0
  %v52 = vadd.f32 %v46, 0.0
  %v53 = vadd.f32 %v47, 0.0
  %v54 = vadd.f32 %v48, 0.0
  %v55 = vadd.f32 %v49, 0.0
  %v57 = vlaneseq
  %v58 = vshrl.u32 %v57, 7
  %v59 = vsub.s32 0, %v58
  %v60 = vrot.slane %v20, %v59
  %v61 = vlaneseq
  %v62 = vshrl.u32 %v61, 7
  %v63 = vsub.s32 1, %v62
  %v64 = vrot.slane %v20, %v63
  %v67 = vmul.f32 %v60, %v27
  %v68 = vmul.f32 %v64, %v28
  %v69 = vmul.f32 %v60, %v29
  %v70 = vmul.f32 %v64, %v30
  %v71 = vmul.f32 %v60, %v31
  %v72 = vmul.f32 %v64, %v32
  %v73 = vsub.f32 %v50, %v67
  %v74 = vsub.f32 %v51, %v68
  %v75 = vsub.f32 %v52, %v69
  %v76 = vsub.f32 %v53, %v70
  %v77 = vsub.f32 %v54, %v71
  %v78 = vsub.f32 %v55, %v72
  %v79 = vmul.f32 %v37, %v27
  %v80 = vmul.f32 %v41, %v28
  %v81 = vmul.f32 %v37, %v29
  %v82 = vmul.f32 %v41, %v30
  %v83 = vmul.f32 %v37, %v31
  %v84 = vmul.f32 %v41, %v32
  %v85 = vadd.f32 %v79, 0.0
  %v86 = vadd.f32 %v80, 0.0
  %v87 = vadd.f32 %v81, 0.0
  %v88 = vadd.f32 %v82, 0.0
  %v89 = vadd.f32 %v83, 0.0
  %v90 = vadd.f32 %v84, 0.0
  %v91 = vmul.f32 %v60, %v21
  %v92 = vmul.f32 %v64, %v22
  %v93 = vmul.f32 %v60, %v23
  %v94 = vmul.f32 %v64, %v24
  %v95 = vmul.f32 %v60, %v25
  %v96 = vmul.f32 %v64, %v26
  %v97 = vadd.f32 %v85, %v91
  %v98 = vadd.f32 %v86, %v92
  %v99 = vadd.f32 %v87, %v93
  %v100 = vadd.f32 %v88, %v94
  %v101 = vadd.f32 %v89, %v95
  %v102 = vadd.f32 %v90, %v96
  %s103 = scalar_lea.vmem %s0, 1
  %v104 = vld [vmem:[%s103] ss:$8 sm:$0x3]
  %s105 = scalar_lea.vmem %s1, 1
  %v106 = vld [vmem:[%s105] ss:$8 sm:$0x3]
  %s107 = scalar_lea.vmem %s2, 48
  %v108 = vld [vmem:[%s107] sm:$0xff]
  %v109 = vld [vmem:[%s107 + $0x8] sm:$0xff]
  %v110 = vld [vmem:[%s107 + $0x10] sm:$0xff]
  %v111 = vld [vmem:[%s107 + $0x18] sm:$0xff]
  %v112 = vld [vmem:[%s107 + $0x20] sm:$0xf]
  %v113 = vld [vmem:[%s107 + $0x28] sm:$0xf]
  %s114 = scalar_lea.vmem %s3, 48
  %v115 = vld [vmem:[%s114] sm:$0xff]
  %v116 = vld [vmem:[%s114 + $0x8] sm:$0xff]
  %v117 = vld [vmem:[%s114 + $0x10] sm:$0xff]
  %v118 = vld [vmem:[%s114 + $0x18] sm:$0xff]
  %v119 = vld [vmem:[%s114 + $0x20] sm:$0xf]
  %v120 = vld [vmem:[%s114 + $0x28] sm:$0xf]
  %v122 = vlaneseq
  %v123 = vshrl.u32 %v122, 7
  %v124 = vsub.s32 0, %v123
  %v125 = vrot.slane %v104, %v124
  %v126 = vlaneseq
  %v127 = vshrl.u32 %v126, 7
  %v128 = vsub.s32 1, %v127
  %v129 = vrot.slane %v104, %v128
  %v132 = vmul.f32 %v125, %v108
  %v133 = vmul.f32 %v129, %v109
  %v134 = vmul.f32 %v125, %v110
  %v135 = vmul.f32 %v129, %v111
  %v136 = vmul.f32 %v125, %v112
  %v137 = vmul.f32 %v129, %v113
  %v138 = vadd.f32 %v73, %v132
  %v139 = vadd.f32 %v74, %v133
  %v140 = vadd.f32 %v75, %v134
  %v141 = vadd.f32 %v76, %v135
  %v142 = vadd.f32 %v77, %v136
  %v143 = vadd.f32 %v78, %v137
  %v145 = vlaneseq
  %v146 = vshrl.u32 %v145, 7
  %v147 = vsub.s32 0, %v146
  %v148 = vrot.slane %v106, %v147
  %v149 = vlaneseq
  %v150 = vshrl.u32 %v149, 7
  %v151 = vsub.s32 1, %v150
  %v152 = vrot.slane %v106, %v151
  %v155 = vmul.f32 %v148, %v115
  %v156 = vmul.f32 %v152, %v116
  %v157 = vmul.f32 %v148, %v117
  %v158 = vmul.f32 %v152, %v118
  %v159 = vmul.f32 %v148, %v119
  %v160 = vmul.f32 %v152, %v120
  %v161 = vsub.f32 %v138, %v155
  %v162 = vsub.f32 %v139, %v156
  %v163 = vsub.f32 %v140, %v157
  %v164 = vsub.f32 %v141, %v158
  %v165 = vsub.f32 %v142, %v159
  %v166 = vsub.f32 %v143, %v160
  %v167 = vmul.f32 %v125, %v115
  %v168 = vmul.f32 %v129, %v116
  %v169 = vmul.f32 %v125, %v117
  %v170 = vmul.f32 %v129, %v118
  %v171 = vmul.f32 %v125, %v119
  %v172 = vmul.f32 %v129, %v120
  %v173 = vadd.f32 %v97, %v167
  %v174 = vadd.f32 %v98, %v168
  %v175 = vadd.f32 %v99, %v169
  %v176 = vadd.f32 %v100, %v170
  %v177 = vadd.f32 %v101, %v171
  %v178 = vadd.f32 %v102, %v172
  %v179 = vmul.f32 %v148, %v108
  %v180 = vmul.f32 %v152, %v109
  %v181 = vmul.f32 %v148, %v110
  %v182 = vmul.f32 %v152, %v111
  %v183 = vmul.f32 %v148, %v112
  %v184 = vmul.f32 %v152, %v113
  %v185 = vadd.f32 %v173, %v179
  %v186 = vadd.f32 %v174, %v180
  %v187 = vadd.f32 %v175, %v181
  %v188 = vadd.f32 %v176, %v182
  %v189 = vadd.f32 %v177, %v183
  %v190 = vadd.f32 %v178, %v184
  %s191 = scalar_lea.vmem %s0, 2
  %v192 = vld [vmem:[%s191] ss:$8 sm:$0x3]
  %s193 = scalar_lea.vmem %s1, 2
  %v194 = vld [vmem:[%s193] ss:$8 sm:$0x3]
  %s195 = scalar_lea.vmem %s2, 96
  %v196 = vld [vmem:[%s195] sm:$0xff]
  %v197 = vld [vmem:[%s195 + $0x8] sm:$0xff]
  %v198 = vld [vmem:[%s195 + $0x10] sm:$0xff]
  %v199 = vld [vmem:[%s195 + $0x18] sm:$0xff]
  %v200 = vld [vmem:[%s195 + $0x20] sm:$0xf]
  %v201 = vld [vmem:[%s195 + $0x28] sm:$0xf]
  %s202 = scalar_lea.vmem %s3, 96
  %v203 = vld [vmem:[%s202] sm:$0xff]
  %v204 = vld [vmem:[%s202 + $0x8] sm:$0xff]
  %v205 = vld [vmem:[%s202 + $0x10] sm:$0xff]
  %v206 = vld [vmem:[%s202 + $0x18] sm:$0xff]
  %v207 = vld [vmem:[%s202 + $0x20] sm:$0xf]
  %v208 = vld [vmem:[%s202 + $0x28] sm:$0xf]
  %v210 = vlaneseq
  %v211 = vshrl.u32 %v210, 7
  %v212 = vsub.s32 0, %v211
  %v213 = vrot.slane %v192, %v212
  %v214 = vlaneseq
  %v215 = vshrl.u32 %v214, 7
  %v216 = vsub.s32 1, %v215
  %v217 = vrot.slane %v192, %v216
  %v220 = vmul.f32 %v213, %v196
  %v221 = vmul.f32 %v217, %v197
  %v222 = vmul.f32 %v213, %v198
  %v223 = vmul.f32 %v217, %v199
  %v224 = vmul.f32 %v213, %v200
  %v225 = vmul.f32 %v217, %v201
  %v226 = vadd.f32 %v161, %v220
  %v227 = vadd.f32 %v162, %v221
  %v228 = vadd.f32 %v163, %v222
  %v229 = vadd.f32 %v164, %v223
  %v230 = vadd.f32 %v165, %v224
  %v231 = vadd.f32 %v166, %v225
  %v233 = vlaneseq
  %v234 = vshrl.u32 %v233, 7
  %v235 = vsub.s32 0, %v234
  %v236 = vrot.slane %v194, %v235
  %v237 = vlaneseq
  %v238 = vshrl.u32 %v237, 7
  %v239 = vsub.s32 1, %v238
  %v240 = vrot.slane %v194, %v239
  %v243 = vmul.f32 %v236, %v203
  %v244 = vmul.f32 %v240, %v204
  %v245 = vmul.f32 %v236, %v205
  %v246 = vmul.f32 %v240, %v206
  %v247 = vmul.f32 %v236, %v207
  %v248 = vmul.f32 %v240, %v208
  %v249 = vsub.f32 %v226, %v243
  %v250 = vsub.f32 %v227, %v244
  %v251 = vsub.f32 %v228, %v245
  %v252 = vsub.f32 %v229, %v246
  %v253 = vsub.f32 %v230, %v247
  %v254 = vsub.f32 %v231, %v248
  %v255 = vmul.f32 %v213, %v203
  %v256 = vmul.f32 %v217, %v204
  %v257 = vmul.f32 %v213, %v205
  %v258 = vmul.f32 %v217, %v206
  %v259 = vmul.f32 %v213, %v207
  %v260 = vmul.f32 %v217, %v208
  %v261 = vadd.f32 %v185, %v255
  %v262 = vadd.f32 %v186, %v256
  %v263 = vadd.f32 %v187, %v257
  %v264 = vadd.f32 %v188, %v258
  %v265 = vadd.f32 %v189, %v259
  %v266 = vadd.f32 %v190, %v260
  %v267 = vmul.f32 %v236, %v196
  %v268 = vmul.f32 %v240, %v197
  %v269 = vmul.f32 %v236, %v198
  %v270 = vmul.f32 %v240, %v199
  %v271 = vmul.f32 %v236, %v200
  %v272 = vmul.f32 %v240, %v201
  %v273 = vadd.f32 %v261, %v267
  %v274 = vadd.f32 %v262, %v268
  %v275 = vadd.f32 %v263, %v269
  %v276 = vadd.f32 %v264, %v270
  %v277 = vadd.f32 %v265, %v271
  %v278 = vadd.f32 %v266, %v272
  %s279 = scalar_lea.vmem %s0, 3
  %v280 = vld [vmem:[%s279] ss:$8 sm:$0x3]
  %s281 = scalar_lea.vmem %s1, 3
  %v282 = vld [vmem:[%s281] ss:$8 sm:$0x3]
  %s283 = scalar_lea.vmem %s2, 144
  %v284 = vld [vmem:[%s283] sm:$0xff]
  %v285 = vld [vmem:[%s283 + $0x8] sm:$0xff]
  %v286 = vld [vmem:[%s283 + $0x10] sm:$0xff]
  %v287 = vld [vmem:[%s283 + $0x18] sm:$0xff]
  %v288 = vld [vmem:[%s283 + $0x20] sm:$0xf]
  %v289 = vld [vmem:[%s283 + $0x28] sm:$0xf]
  %s290 = scalar_lea.vmem %s3, 144
  %v291 = vld [vmem:[%s290] sm:$0xff]
  %v292 = vld [vmem:[%s290 + $0x8] sm:$0xff]
  %v293 = vld [vmem:[%s290 + $0x10] sm:$0xff]
  %v294 = vld [vmem:[%s290 + $0x18] sm:$0xff]
  %v295 = vld [vmem:[%s290 + $0x20] sm:$0xf]
  %v296 = vld [vmem:[%s290 + $0x28] sm:$0xf]
  %v298 = vlaneseq
  %v299 = vshrl.u32 %v298, 7
  %v300 = vsub.s32 0, %v299
  %v301 = vrot.slane %v280, %v300
  %v302 = vlaneseq
  %v303 = vshrl.u32 %v302, 7
  %v304 = vsub.s32 1, %v303
  %v305 = vrot.slane %v280, %v304
  %v308 = vmul.f32 %v301, %v284
  %v309 = vmul.f32 %v305, %v285
  %v310 = vmul.f32 %v301, %v286
  %v311 = vmul.f32 %v305, %v287
  %v312 = vmul.f32 %v301, %v288
  %v313 = vmul.f32 %v305, %v289
  %v314 = vadd.f32 %v249, %v308
  %v315 = vadd.f32 %v250, %v309
  %v316 = vadd.f32 %v251, %v310
  %v317 = vadd.f32 %v252, %v311
  %v318 = vadd.f32 %v253, %v312
  %v319 = vadd.f32 %v254, %v313
  %v321 = vlaneseq
  %v322 = vshrl.u32 %v321, 7
  %v323 = vsub.s32 0, %v322
  %v324 = vrot.slane %v282, %v323
  %v325 = vlaneseq
  %v326 = vshrl.u32 %v325, 7
  %v327 = vsub.s32 1, %v326
  %v328 = vrot.slane %v282, %v327
  %v331 = vmul.f32 %v324, %v291
  %v332 = vmul.f32 %v328, %v292
  %v333 = vmul.f32 %v324, %v293
  %v334 = vmul.f32 %v328, %v294
  %v335 = vmul.f32 %v324, %v295
  %v336 = vmul.f32 %v328, %v296
  %v337 = vsub.f32 %v314, %v331
  %v338 = vsub.f32 %v315, %v332
  %v339 = vsub.f32 %v316, %v333
  %v340 = vsub.f32 %v317, %v334
  %v341 = vsub.f32 %v318, %v335
  %v342 = vsub.f32 %v319, %v336
  %v343 = vmul.f32 %v301, %v291
  %v344 = vmul.f32 %v305, %v292
  %v345 = vmul.f32 %v301, %v293
  %v346 = vmul.f32 %v305, %v294
  %v347 = vmul.f32 %v301, %v295
  %v348 = vmul.f32 %v305, %v296
  %v349 = vadd.f32 %v273, %v343
  %v350 = vadd.f32 %v274, %v344
  %v351 = vadd.f32 %v275, %v345
  %v352 = vadd.f32 %v276, %v346
  %v353 = vadd.f32 %v277, %v347
  %v354 = vadd.f32 %v278, %v348
  %v355 = vmul.f32 %v324, %v284
  %v356 = vmul.f32 %v328, %v285
  %v357 = vmul.f32 %v324, %v286
  %v358 = vmul.f32 %v328, %v287
  %v359 = vmul.f32 %v324, %v288
  %v360 = vmul.f32 %v328, %v289
  %v361 = vadd.f32 %v349, %v355
  %v362 = vadd.f32 %v350, %v356
  %v363 = vadd.f32 %v351, %v357
  %v364 = vadd.f32 %v352, %v358
  %v365 = vadd.f32 %v353, %v359
  %v366 = vadd.f32 %v354, %v360
  %s367 = scalar_lea.vmem %s0, 4
  %v368 = vld [vmem:[%s367] ss:$8 sm:$0x3]
  %s369 = scalar_lea.vmem %s1, 4
  %v370 = vld [vmem:[%s369] ss:$8 sm:$0x3]
  %s371 = scalar_lea.vmem %s2, 192
  %v372 = vld [vmem:[%s371] sm:$0xff]
  %v373 = vld [vmem:[%s371 + $0x8] sm:$0xff]
  %v374 = vld [vmem:[%s371 + $0x10] sm:$0xff]
  %v375 = vld [vmem:[%s371 + $0x18] sm:$0xff]
  %v376 = vld [vmem:[%s371 + $0x20] sm:$0xf]
  %v377 = vld [vmem:[%s371 + $0x28] sm:$0xf]
  %s378 = scalar_lea.vmem %s3, 192
  %v379 = vld [vmem:[%s378] sm:$0xff]
  %v380 = vld [vmem:[%s378 + $0x8] sm:$0xff]
  %v381 = vld [vmem:[%s378 + $0x10] sm:$0xff]
  %v382 = vld [vmem:[%s378 + $0x18] sm:$0xff]
  %v383 = vld [vmem:[%s378 + $0x20] sm:$0xf]
  %v384 = vld [vmem:[%s378 + $0x28] sm:$0xf]
  %v386 = vlaneseq
  %v387 = vshrl.u32 %v386, 7
  %v388 = vsub.s32 0, %v387
  %v389 = vrot.slane %v368, %v388
  %v390 = vlaneseq
  %v391 = vshrl.u32 %v390, 7
  %v392 = vsub.s32 1, %v391
  %v393 = vrot.slane %v368, %v392
  %v396 = vmul.f32 %v389, %v372
  %v397 = vmul.f32 %v393, %v373
  %v398 = vmul.f32 %v389, %v374
  %v399 = vmul.f32 %v393, %v375
  %v400 = vmul.f32 %v389, %v376
  %v401 = vmul.f32 %v393, %v377
  %v402 = vadd.f32 %v337, %v396
  %v403 = vadd.f32 %v338, %v397
  %v404 = vadd.f32 %v339, %v398
  %v405 = vadd.f32 %v340, %v399
  %v406 = vadd.f32 %v341, %v400
  %v407 = vadd.f32 %v342, %v401
  %v409 = vlaneseq
  %v410 = vshrl.u32 %v409, 7
  %v411 = vsub.s32 0, %v410
  %v412 = vrot.slane %v370, %v411
  %v413 = vlaneseq
  %v414 = vshrl.u32 %v413, 7
  %v415 = vsub.s32 1, %v414
  %v416 = vrot.slane %v370, %v415
  %v419 = vmul.f32 %v412, %v379
  %v420 = vmul.f32 %v416, %v380
  %v421 = vmul.f32 %v412, %v381
  %v422 = vmul.f32 %v416, %v382
  %v423 = vmul.f32 %v412, %v383
  %v424 = vmul.f32 %v416, %v384
  %v425 = vsub.f32 %v402, %v419
  %v426 = vsub.f32 %v403, %v420
  %v427 = vsub.f32 %v404, %v421
  %v428 = vsub.f32 %v405, %v422
  %v429 = vsub.f32 %v406, %v423
  %v430 = vsub.f32 %v407, %v424
  %v431 = vmul.f32 %v389, %v379
  %v432 = vmul.f32 %v393, %v380
  %v433 = vmul.f32 %v389, %v381
  %v434 = vmul.f32 %v393, %v382
  %v435 = vmul.f32 %v389, %v383
  %v436 = vmul.f32 %v393, %v384
  %v437 = vadd.f32 %v361, %v431
  %v438 = vadd.f32 %v362, %v432
  %v439 = vadd.f32 %v363, %v433
  %v440 = vadd.f32 %v364, %v434
  %v441 = vadd.f32 %v365, %v435
  %v442 = vadd.f32 %v366, %v436
  %v443 = vmul.f32 %v412, %v372
  %v444 = vmul.f32 %v416, %v373
  %v445 = vmul.f32 %v412, %v374
  %v446 = vmul.f32 %v416, %v375
  %v447 = vmul.f32 %v412, %v376
  %v448 = vmul.f32 %v416, %v377
  %v449 = vadd.f32 %v437, %v443
  %v450 = vadd.f32 %v438, %v444
  %v451 = vadd.f32 %v439, %v445
  %v452 = vadd.f32 %v440, %v446
  %v453 = vadd.f32 %v441, %v447
  %v454 = vadd.f32 %v442, %v448
  %s455 = scalar_lea.vmem %s0, 5
  %v456 = vld [vmem:[%s455] ss:$8 sm:$0x3]
  %s457 = scalar_lea.vmem %s1, 5
  %v458 = vld [vmem:[%s457] ss:$8 sm:$0x3]
  %s459 = scalar_lea.vmem %s2, 240
  %v460 = vld [vmem:[%s459] sm:$0xff]
  %v461 = vld [vmem:[%s459 + $0x8] sm:$0xff]
  %v462 = vld [vmem:[%s459 + $0x10] sm:$0xff]
  %v463 = vld [vmem:[%s459 + $0x18] sm:$0xff]
  %v464 = vld [vmem:[%s459 + $0x20] sm:$0xf]
  %v465 = vld [vmem:[%s459 + $0x28] sm:$0xf]
  %s466 = scalar_lea.vmem %s3, 240
  %v467 = vld [vmem:[%s466] sm:$0xff]
  %v468 = vld [vmem:[%s466 + $0x8] sm:$0xff]
  %v469 = vld [vmem:[%s466 + $0x10] sm:$0xff]
  %v470 = vld [vmem:[%s466 + $0x18] sm:$0xff]
  %v471 = vld [vmem:[%s466 + $0x20] sm:$0xf]
  %v472 = vld [vmem:[%s466 + $0x28] sm:$0xf]
  %v474 = vlaneseq
  %v475 = vshrl.u32 %v474, 7
  %v476 = vsub.s32 0, %v475
  %v477 = vrot.slane %v456, %v476
  %v478 = vlaneseq
  %v479 = vshrl.u32 %v478, 7
  %v480 = vsub.s32 1, %v479
  %v481 = vrot.slane %v456, %v480
  %v484 = vmul.f32 %v477, %v460
  %v485 = vmul.f32 %v481, %v461
  %v486 = vmul.f32 %v477, %v462
  %v487 = vmul.f32 %v481, %v463
  %v488 = vmul.f32 %v477, %v464
  %v489 = vmul.f32 %v481, %v465
  %v490 = vadd.f32 %v425, %v484
  %v491 = vadd.f32 %v426, %v485
  %v492 = vadd.f32 %v427, %v486
  %v493 = vadd.f32 %v428, %v487
  %v494 = vadd.f32 %v429, %v488
  %v495 = vadd.f32 %v430, %v489
  %v497 = vlaneseq
  %v498 = vshrl.u32 %v497, 7
  %v499 = vsub.s32 0, %v498
  %v500 = vrot.slane %v458, %v499
  %v501 = vlaneseq
  %v502 = vshrl.u32 %v501, 7
  %v503 = vsub.s32 1, %v502
  %v504 = vrot.slane %v458, %v503
  %v507 = vmul.f32 %v500, %v467
  %v508 = vmul.f32 %v504, %v468
  %v509 = vmul.f32 %v500, %v469
  %v510 = vmul.f32 %v504, %v470
  %v511 = vmul.f32 %v500, %v471
  %v512 = vmul.f32 %v504, %v472
  %v513 = vsub.f32 %v490, %v507
  %v514 = vsub.f32 %v491, %v508
  %v515 = vsub.f32 %v492, %v509
  %v516 = vsub.f32 %v493, %v510
  %v517 = vsub.f32 %v494, %v511
  %v518 = vsub.f32 %v495, %v512
  %v519 = vmul.f32 %v477, %v467
  %v520 = vmul.f32 %v481, %v468
  %v521 = vmul.f32 %v477, %v469
  %v522 = vmul.f32 %v481, %v470
  %v523 = vmul.f32 %v477, %v471
  %v524 = vmul.f32 %v481, %v472
  %v525 = vadd.f32 %v449, %v519
  %v526 = vadd.f32 %v450, %v520
  %v527 = vadd.f32 %v451, %v521
  %v528 = vadd.f32 %v452, %v522
  %v529 = vadd.f32 %v453, %v523
  %v530 = vadd.f32 %v454, %v524
  %v531 = vmul.f32 %v500, %v460
  %v532 = vmul.f32 %v504, %v461
  %v533 = vmul.f32 %v500, %v462
  %v534 = vmul.f32 %v504, %v463
  %v535 = vmul.f32 %v500, %v464
  %v536 = vmul.f32 %v504, %v465
  %v537 = vadd.f32 %v525, %v531
  %v538 = vadd.f32 %v526, %v532
  %v539 = vadd.f32 %v527, %v533
  %v540 = vadd.f32 %v528, %v534
  %v541 = vadd.f32 %v529, %v535
  %v542 = vadd.f32 %v530, %v536
  %s543 = scalar_lea.vmem %s0, 6
  %v544 = vld [vmem:[%s543] ss:$8 sm:$0x3]
  %s545 = scalar_lea.vmem %s1, 6
  %v546 = vld [vmem:[%s545] ss:$8 sm:$0x3]
  %s547 = scalar_lea.vmem %s2, 288
  %v548 = vld [vmem:[%s547] sm:$0xff]
  %v549 = vld [vmem:[%s547 + $0x8] sm:$0xff]
  %v550 = vld [vmem:[%s547 + $0x10] sm:$0xff]
  %v551 = vld [vmem:[%s547 + $0x18] sm:$0xff]
  %v552 = vld [vmem:[%s547 + $0x20] sm:$0xf]
  %v553 = vld [vmem:[%s547 + $0x28] sm:$0xf]
  %s554 = scalar_lea.vmem %s3, 288
  %v555 = vld [vmem:[%s554] sm:$0xff]
  %v556 = vld [vmem:[%s554 + $0x8] sm:$0xff]
  %v557 = vld [vmem:[%s554 + $0x10] sm:$0xff]
  %v558 = vld [vmem:[%s554 + $0x18] sm:$0xff]
  %v559 = vld [vmem:[%s554 + $0x20] sm:$0xf]
  %v560 = vld [vmem:[%s554 + $0x28] sm:$0xf]
  %v562 = vlaneseq
  %v563 = vshrl.u32 %v562, 7
  %v564 = vsub.s32 0, %v563
  %v565 = vrot.slane %v544, %v564
  %v566 = vlaneseq
  %v567 = vshrl.u32 %v566, 7
  %v568 = vsub.s32 1, %v567
  %v569 = vrot.slane %v544, %v568
  %v572 = vmul.f32 %v565, %v548
  %v573 = vmul.f32 %v569, %v549
  %v574 = vmul.f32 %v565, %v550
  %v575 = vmul.f32 %v569, %v551
  %v576 = vmul.f32 %v565, %v552
  %v577 = vmul.f32 %v569, %v553
  %v578 = vadd.f32 %v513, %v572
  %v579 = vadd.f32 %v514, %v573
  %v580 = vadd.f32 %v515, %v574
  %v581 = vadd.f32 %v516, %v575
  %v582 = vadd.f32 %v517, %v576
  %v583 = vadd.f32 %v518, %v577
  %v585 = vlaneseq
  %v586 = vshrl.u32 %v585, 7
  %v587 = vsub.s32 0, %v586
  %v588 = vrot.slane %v546, %v587
  %v589 = vlaneseq
  %v590 = vshrl.u32 %v589, 7
  %v591 = vsub.s32 1, %v590
  %v592 = vrot.slane %v546, %v591
  %v595 = vmul.f32 %v588, %v555
  %v596 = vmul.f32 %v592, %v556
  %v597 = vmul.f32 %v588, %v557
  %v598 = vmul.f32 %v592, %v558
  %v599 = vmul.f32 %v588, %v559
  %v600 = vmul.f32 %v592, %v560
  %v601 = vsub.f32 %v578, %v595
  %v602 = vsub.f32 %v579, %v596
  %v603 = vsub.f32 %v580, %v597
  %v604 = vsub.f32 %v581, %v598
  %v605 = vsub.f32 %v582, %v599
  %v606 = vsub.f32 %v583, %v600
  %v607 = vmul.f32 %v565, %v555
  %v608 = vmul.f32 %v569, %v556
  %v609 = vmul.f32 %v565, %v557
  %v610 = vmul.f32 %v569, %v558
  %v611 = vmul.f32 %v565, %v559
  %v612 = vmul.f32 %v569, %v560
  %v613 = vadd.f32 %v537, %v607
  %v614 = vadd.f32 %v538, %v608
  %v615 = vadd.f32 %v539, %v609
  %v616 = vadd.f32 %v540, %v610
  %v617 = vadd.f32 %v541, %v611
  %v618 = vadd.f32 %v542, %v612
  %v619 = vmul.f32 %v588, %v548
  %v620 = vmul.f32 %v592, %v549
  %v621 = vmul.f32 %v588, %v550
  %v622 = vmul.f32 %v592, %v551
  %v623 = vmul.f32 %v588, %v552
  %v624 = vmul.f32 %v592, %v553
  %v625 = vadd.f32 %v613, %v619
  %v626 = vadd.f32 %v614, %v620
  %v627 = vadd.f32 %v615, %v621
  %v628 = vadd.f32 %v616, %v622
  %v629 = vadd.f32 %v617, %v623
  %v630 = vadd.f32 %v618, %v624
  %s631 = scalar_lea.vmem %s0, 7
  %v632 = vld [vmem:[%s631] ss:$8 sm:$0x3]
  %s633 = scalar_lea.vmem %s1, 7
  %v634 = vld [vmem:[%s633] ss:$8 sm:$0x3]
  %s635 = scalar_lea.vmem %s2, 336
  %v636 = vld [vmem:[%s635] sm:$0xff]
  %v637 = vld [vmem:[%s635 + $0x8] sm:$0xff]
  %v638 = vld [vmem:[%s635 + $0x10] sm:$0xff]
  %v639 = vld [vmem:[%s635 + $0x18] sm:$0xff]
  %v640 = vld [vmem:[%s635 + $0x20] sm:$0xf]
  %v641 = vld [vmem:[%s635 + $0x28] sm:$0xf]
  %s642 = scalar_lea.vmem %s3, 336
  %v643 = vld [vmem:[%s642] sm:$0xff]
  %v644 = vld [vmem:[%s642 + $0x8] sm:$0xff]
  %v645 = vld [vmem:[%s642 + $0x10] sm:$0xff]
  %v646 = vld [vmem:[%s642 + $0x18] sm:$0xff]
  %v647 = vld [vmem:[%s642 + $0x20] sm:$0xf]
  %v648 = vld [vmem:[%s642 + $0x28] sm:$0xf]
  %v650 = vlaneseq
  %v651 = vshrl.u32 %v650, 7
  %v652 = vsub.s32 0, %v651
  %v653 = vrot.slane %v632, %v652
  %v654 = vlaneseq
  %v655 = vshrl.u32 %v654, 7
  %v656 = vsub.s32 1, %v655
  %v657 = vrot.slane %v632, %v656
  %v660 = vmul.f32 %v653, %v636
  %v661 = vmul.f32 %v657, %v637
  %v662 = vmul.f32 %v653, %v638
  %v663 = vmul.f32 %v657, %v639
  %v664 = vmul.f32 %v653, %v640
  %v665 = vmul.f32 %v657, %v641
  %v666 = vadd.f32 %v601, %v660
  %v667 = vadd.f32 %v602, %v661
  %v668 = vadd.f32 %v603, %v662
  %v669 = vadd.f32 %v604, %v663
  %v670 = vadd.f32 %v605, %v664
  %v671 = vadd.f32 %v606, %v665
  %v673 = vlaneseq
  %v674 = vshrl.u32 %v673, 7
  %v675 = vsub.s32 0, %v674
  %v676 = vrot.slane %v634, %v675
  %v677 = vlaneseq
  %v678 = vshrl.u32 %v677, 7
  %v679 = vsub.s32 1, %v678
  %v680 = vrot.slane %v634, %v679
  %v683 = vmul.f32 %v676, %v643
  %v684 = vmul.f32 %v680, %v644
  %v685 = vmul.f32 %v676, %v645
  %v686 = vmul.f32 %v680, %v646
  %v687 = vmul.f32 %v676, %v647
  %v688 = vmul.f32 %v680, %v648
  %v689 = vsub.f32 %v666, %v683
  %v690 = vsub.f32 %v667, %v684
  %v691 = vsub.f32 %v668, %v685
  %v692 = vsub.f32 %v669, %v686
  %v693 = vsub.f32 %v670, %v687
  %v694 = vsub.f32 %v671, %v688
  %v695 = vmul.f32 %v653, %v643
  %v696 = vmul.f32 %v657, %v644
  %v697 = vmul.f32 %v653, %v645
  %v698 = vmul.f32 %v657, %v646
  %v699 = vmul.f32 %v653, %v647
  %v700 = vmul.f32 %v657, %v648
  %v701 = vadd.f32 %v625, %v695
  %v702 = vadd.f32 %v626, %v696
  %v703 = vadd.f32 %v627, %v697
  %v704 = vadd.f32 %v628, %v698
  %v705 = vadd.f32 %v629, %v699
  %v706 = vadd.f32 %v630, %v700
  %v707 = vmul.f32 %v676, %v636
  %v708 = vmul.f32 %v680, %v637
  %v709 = vmul.f32 %v676, %v638
  %v710 = vmul.f32 %v680, %v639
  %v711 = vmul.f32 %v676, %v640
  %v712 = vmul.f32 %v680, %v641
  %v713 = vadd.f32 %v701, %v707
  %v714 = vadd.f32 %v702, %v708
  %v715 = vadd.f32 %v703, %v709
  %v716 = vadd.f32 %v704, %v710
  %v717 = vadd.f32 %v705, %v711
  %v718 = vadd.f32 %v706, %v712
  %s719 = scalar_lea.vmem %s0, 16
  %v720 = vld [vmem:[%s719] ss:$8 sm:$0x3]
  %s721 = scalar_lea.vmem %s1, 16
  %v722 = vld [vmem:[%s721] ss:$8 sm:$0x3]
  %s723 = scalar_lea.vmem %s2, 384
  %v724 = vld [vmem:[%s723] sm:$0xff]
  %v725 = vld [vmem:[%s723 + $0x8] sm:$0xff]
  %v726 = vld [vmem:[%s723 + $0x10] sm:$0xff]
  %v727 = vld [vmem:[%s723 + $0x18] sm:$0xff]
  %v728 = vld [vmem:[%s723 + $0x20] sm:$0xf]
  %v729 = vld [vmem:[%s723 + $0x28] sm:$0xf]
  %s730 = scalar_lea.vmem %s3, 384
  %v731 = vld [vmem:[%s730] sm:$0xff]
  %v732 = vld [vmem:[%s730 + $0x8] sm:$0xff]
  %v733 = vld [vmem:[%s730 + $0x10] sm:$0xff]
  %v734 = vld [vmem:[%s730 + $0x18] sm:$0xff]
  %v735 = vld [vmem:[%s730 + $0x20] sm:$0xf]
  %v736 = vld [vmem:[%s730 + $0x28] sm:$0xf]
  %v738 = vlaneseq
  %v739 = vshrl.u32 %v738, 7
  %v740 = vsub.s32 0, %v739
  %v741 = vrot.slane %v720, %v740
  %v742 = vlaneseq
  %v743 = vshrl.u32 %v742, 7
  %v744 = vsub.s32 1, %v743
  %v745 = vrot.slane %v720, %v744
  %v748 = vmul.f32 %v741, %v724
  %v749 = vmul.f32 %v745, %v725
  %v750 = vmul.f32 %v741, %v726
  %v751 = vmul.f32 %v745, %v727
  %v752 = vmul.f32 %v741, %v728
  %v753 = vmul.f32 %v745, %v729
  %v754 = vadd.f32 %v689, %v748
  %v755 = vadd.f32 %v690, %v749
  %v756 = vadd.f32 %v691, %v750
  %v757 = vadd.f32 %v692, %v751
  %v758 = vadd.f32 %v693, %v752
  %v759 = vadd.f32 %v694, %v753
  %v761 = vlaneseq
  %v762 = vshrl.u32 %v761, 7
  %v763 = vsub.s32 0, %v762
  %v764 = vrot.slane %v722, %v763
  %v765 = vlaneseq
  %v766 = vshrl.u32 %v765, 7
  %v767 = vsub.s32 1, %v766
  %v768 = vrot.slane %v722, %v767
  %v771 = vmul.f32 %v764, %v731
  %v772 = vmul.f32 %v768, %v732
  %v773 = vmul.f32 %v764, %v733
  %v774 = vmul.f32 %v768, %v734
  %v775 = vmul.f32 %v764, %v735
  %v776 = vmul.f32 %v768, %v736
  %v777 = vsub.f32 %v754, %v771
  %v778 = vsub.f32 %v755, %v772
  %v779 = vsub.f32 %v756, %v773
  %v780 = vsub.f32 %v757, %v774
  %v781 = vsub.f32 %v758, %v775
  %v782 = vsub.f32 %v759, %v776
  %v783 = vmul.f32 %v741, %v731
  %v784 = vmul.f32 %v745, %v732
  %v785 = vmul.f32 %v741, %v733
  %v786 = vmul.f32 %v745, %v734
  %v787 = vmul.f32 %v741, %v735
  %v788 = vmul.f32 %v745, %v736
  %v789 = vadd.f32 %v713, %v783
  %v790 = vadd.f32 %v714, %v784
  %v791 = vadd.f32 %v715, %v785
  %v792 = vadd.f32 %v716, %v786
  %v793 = vadd.f32 %v717, %v787
  %v794 = vadd.f32 %v718, %v788
  %v795 = vmul.f32 %v764, %v724
  %v796 = vmul.f32 %v768, %v725
  %v797 = vmul.f32 %v764, %v726
  %v798 = vmul.f32 %v768, %v727
  %v799 = vmul.f32 %v764, %v728
  %v800 = vmul.f32 %v768, %v729
  %v801 = vadd.f32 %v789, %v795
  %v802 = vadd.f32 %v790, %v796
  %v803 = vadd.f32 %v791, %v797
  %v804 = vadd.f32 %v792, %v798
  %v805 = vadd.f32 %v793, %v799
  %v806 = vadd.f32 %v794, %v800
  %s807 = scalar_lea.vmem %s0, 17
  %v808 = vld [vmem:[%s807] ss:$8 sm:$0x3]
  %s809 = scalar_lea.vmem %s1, 17
  %v810 = vld [vmem:[%s809] ss:$8 sm:$0x3]
  %s811 = scalar_lea.vmem %s2, 432
  %v812 = vld [vmem:[%s811] sm:$0xff]
  %v813 = vld [vmem:[%s811 + $0x8] sm:$0xff]
  %v814 = vld [vmem:[%s811 + $0x10] sm:$0xff]
  %v815 = vld [vmem:[%s811 + $0x18] sm:$0xff]
  %v816 = vld [vmem:[%s811 + $0x20] sm:$0xf]
  %v817 = vld [vmem:[%s811 + $0x28] sm:$0xf]
  %s818 = scalar_lea.vmem %s3, 432
  %v819 = vld [vmem:[%s818] sm:$0xff]
  %v820 = vld [vmem:[%s818 + $0x8] sm:$0xff]
  %v821 = vld [vmem:[%s818 + $0x10] sm:$0xff]
  %v822 = vld [vmem:[%s818 + $0x18] sm:$0xff]
  %v823 = vld [vmem:[%s818 + $0x20] sm:$0xf]
  %v824 = vld [vmem:[%s818 + $0x28] sm:$0xf]
  %v826 = vlaneseq
  %v827 = vshrl.u32 %v826, 7
  %v828 = vsub.s32 0, %v827
  %v829 = vrot.slane %v808, %v828
  %v830 = vlaneseq
  %v831 = vshrl.u32 %v830, 7
  %v832 = vsub.s32 1, %v831
  %v833 = vrot.slane %v808, %v832
  %v836 = vmul.f32 %v829, %v812
  %v837 = vmul.f32 %v833, %v813
  %v838 = vmul.f32 %v829, %v814
  %v839 = vmul.f32 %v833, %v815
  %v840 = vmul.f32 %v829, %v816
  %v841 = vmul.f32 %v833, %v817
  %v842 = vadd.f32 %v777, %v836
  %v843 = vadd.f32 %v778, %v837
  %v844 = vadd.f32 %v779, %v838
  %v845 = vadd.f32 %v780, %v839
  %v846 = vadd.f32 %v781, %v840
  %v847 = vadd.f32 %v782, %v841
  %v849 = vlaneseq
  %v850 = vshrl.u32 %v849, 7
  %v851 = vsub.s32 0, %v850
  %v852 = vrot.slane %v810, %v851
  %v853 = vlaneseq
  %v854 = vshrl.u32 %v853, 7
  %v855 = vsub.s32 1, %v854
  %v856 = vrot.slane %v810, %v855
  %v859 = vmul.f32 %v852, %v819
  %v860 = vmul.f32 %v856, %v820
  %v861 = vmul.f32 %v852, %v821
  %v862 = vmul.f32 %v856, %v822
  %v863 = vmul.f32 %v852, %v823
  %v864 = vmul.f32 %v856, %v824
  %v865 = vsub.f32 %v842, %v859
  %v866 = vsub.f32 %v843, %v860
  %v867 = vsub.f32 %v844, %v861
  %v868 = vsub.f32 %v845, %v862
  %v869 = vsub.f32 %v846, %v863
  %v870 = vsub.f32 %v847, %v864
  %v871 = vmul.f32 %v829, %v819
  %v872 = vmul.f32 %v833, %v820
  %v873 = vmul.f32 %v829, %v821
  %v874 = vmul.f32 %v833, %v822
  %v875 = vmul.f32 %v829, %v823
  %v876 = vmul.f32 %v833, %v824
  %v877 = vadd.f32 %v801, %v871
  %v878 = vadd.f32 %v802, %v872
  %v879 = vadd.f32 %v803, %v873
  %v880 = vadd.f32 %v804, %v874
  %v881 = vadd.f32 %v805, %v875
  %v882 = vadd.f32 %v806, %v876
  %v883 = vmul.f32 %v852, %v812
  %v884 = vmul.f32 %v856, %v813
  %v885 = vmul.f32 %v852, %v814
  %v886 = vmul.f32 %v856, %v815
  %v887 = vmul.f32 %v852, %v816
  %v888 = vmul.f32 %v856, %v817
  %v889 = vadd.f32 %v877, %v883
  %v890 = vadd.f32 %v878, %v884
  %v891 = vadd.f32 %v879, %v885
  %v892 = vadd.f32 %v880, %v886
  %v893 = vadd.f32 %v881, %v887
  %v894 = vadd.f32 %v882, %v888
  %s895 = scalar_lea.vmem %s0, 18
  %v896 = vld [vmem:[%s895] ss:$8 sm:$0x3]
  %s897 = scalar_lea.vmem %s1, 18
  %v898 = vld [vmem:[%s897] ss:$8 sm:$0x3]
  %s899 = scalar_lea.vmem %s2, 480
  %v900 = vld [vmem:[%s899] sm:$0xff]
  %v901 = vld [vmem:[%s899 + $0x8] sm:$0xff]
  %v902 = vld [vmem:[%s899 + $0x10] sm:$0xff]
  %v903 = vld [vmem:[%s899 + $0x18] sm:$0xff]
  %v904 = vld [vmem:[%s899 + $0x20] sm:$0xf]
  %v905 = vld [vmem:[%s899 + $0x28] sm:$0xf]
  %s906 = scalar_lea.vmem %s3, 480
  %v907 = vld [vmem:[%s906] sm:$0xff]
  %v908 = vld [vmem:[%s906 + $0x8] sm:$0xff]
  %v909 = vld [vmem:[%s906 + $0x10] sm:$0xff]
  %v910 = vld [vmem:[%s906 + $0x18] sm:$0xff]
  %v911 = vld [vmem:[%s906 + $0x20] sm:$0xf]
  %v912 = vld [vmem:[%s906 + $0x28] sm:$0xf]
  %v914 = vlaneseq
  %v915 = vshrl.u32 %v914, 7
  %v916 = vsub.s32 0, %v915
  %v917 = vrot.slane %v896, %v916
  %v918 = vlaneseq
  %v919 = vshrl.u32 %v918, 7
  %v920 = vsub.s32 1, %v919
  %v921 = vrot.slane %v896, %v920
  %v924 = vmul.f32 %v917, %v900
  %v925 = vmul.f32 %v921, %v901
  %v926 = vmul.f32 %v917, %v902
  %v927 = vmul.f32 %v921, %v903
  %v928 = vmul.f32 %v917, %v904
  %v929 = vmul.f32 %v921, %v905
  %v930 = vadd.f32 %v865, %v924
  %v931 = vadd.f32 %v866, %v925
  %v932 = vadd.f32 %v867, %v926
  %v933 = vadd.f32 %v868, %v927
  %v934 = vadd.f32 %v869, %v928
  %v935 = vadd.f32 %v870, %v929
  %v937 = vlaneseq
  %v938 = vshrl.u32 %v937, 7
  %v939 = vsub.s32 0, %v938
  %v940 = vrot.slane %v898, %v939
  %v941 = vlaneseq
  %v942 = vshrl.u32 %v941, 7
  %v943 = vsub.s32 1, %v942
  %v944 = vrot.slane %v898, %v943
  %v947 = vmul.f32 %v940, %v907
  %v948 = vmul.f32 %v944, %v908
  %v949 = vmul.f32 %v940, %v909
  %v950 = vmul.f32 %v944, %v910
  %v951 = vmul.f32 %v940, %v911
  %v952 = vmul.f32 %v944, %v912
  %v953 = vsub.f32 %v930, %v947
  %v954 = vsub.f32 %v931, %v948
  %v955 = vsub.f32 %v932, %v949
  %v956 = vsub.f32 %v933, %v950
  %v957 = vsub.f32 %v934, %v951
  %v958 = vsub.f32 %v935, %v952
  %v959 = vmul.f32 %v917, %v907
  %v960 = vmul.f32 %v921, %v908
  %v961 = vmul.f32 %v917, %v909
  %v962 = vmul.f32 %v921, %v910
  %v963 = vmul.f32 %v917, %v911
  %v964 = vmul.f32 %v921, %v912
  %v965 = vadd.f32 %v889, %v959
  %v966 = vadd.f32 %v890, %v960
  %v967 = vadd.f32 %v891, %v961
  %v968 = vadd.f32 %v892, %v962
  %v969 = vadd.f32 %v893, %v963
  %v970 = vadd.f32 %v894, %v964
  %v971 = vmul.f32 %v940, %v900
  %v972 = vmul.f32 %v944, %v901
  %v973 = vmul.f32 %v940, %v902
  %v974 = vmul.f32 %v944, %v903
  %v975 = vmul.f32 %v940, %v904
  %v976 = vmul.f32 %v944, %v905
  %v977 = vadd.f32 %v965, %v971
  %v978 = vadd.f32 %v966, %v972
  %v979 = vadd.f32 %v967, %v973
  %v980 = vadd.f32 %v968, %v974
  %v981 = vadd.f32 %v969, %v975
  %v982 = vadd.f32 %v970, %v976
  %s983 = scalar_lea.vmem %s0, 19
  %v984 = vld [vmem:[%s983] ss:$8 sm:$0x3]
  %s985 = scalar_lea.vmem %s1, 19
  %v986 = vld [vmem:[%s985] ss:$8 sm:$0x3]
  %s987 = scalar_lea.vmem %s2, 528
  %v988 = vld [vmem:[%s987] sm:$0xff]
  %v989 = vld [vmem:[%s987 + $0x8] sm:$0xff]
  %v990 = vld [vmem:[%s987 + $0x10] sm:$0xff]
  %v991 = vld [vmem:[%s987 + $0x18] sm:$0xff]
  %v992 = vld [vmem:[%s987 + $0x20] sm:$0xf]
  %v993 = vld [vmem:[%s987 + $0x28] sm:$0xf]
  %s994 = scalar_lea.vmem %s3, 528
  %v995 = vld [vmem:[%s994] sm:$0xff]
  %v996 = vld [vmem:[%s994 + $0x8] sm:$0xff]
  %v997 = vld [vmem:[%s994 + $0x10] sm:$0xff]
  %v998 = vld [vmem:[%s994 + $0x18] sm:$0xff]
  %v999 = vld [vmem:[%s994 + $0x20] sm:$0xf]
  %v1000 = vld [vmem:[%s994 + $0x28] sm:$0xf]
  %v1002 = vlaneseq
  %v1003 = vshrl.u32 %v1002, 7
  %v1004 = vsub.s32 0, %v1003
  %v1005 = vrot.slane %v984, %v1004
  %v1006 = vlaneseq
  %v1007 = vshrl.u32 %v1006, 7
  %v1008 = vsub.s32 1, %v1007
  %v1009 = vrot.slane %v984, %v1008
  %v1012 = vmul.f32 %v1005, %v988
  %v1013 = vmul.f32 %v1009, %v989
  %v1014 = vmul.f32 %v1005, %v990
  %v1015 = vmul.f32 %v1009, %v991
  %v1016 = vmul.f32 %v1005, %v992
  %v1017 = vmul.f32 %v1009, %v993
  %v1018 = vadd.f32 %v953, %v1012
  %v1019 = vadd.f32 %v954, %v1013
  %v1020 = vadd.f32 %v955, %v1014
  %v1021 = vadd.f32 %v956, %v1015
  %v1022 = vadd.f32 %v957, %v1016
  %v1023 = vadd.f32 %v958, %v1017
  %v1025 = vlaneseq
  %v1026 = vshrl.u32 %v1025, 7
  %v1027 = vsub.s32 0, %v1026
  %v1028 = vrot.slane %v986, %v1027
  %v1029 = vlaneseq
  %v1030 = vshrl.u32 %v1029, 7
  %v1031 = vsub.s32 1, %v1030
  %v1032 = vrot.slane %v986, %v1031
  %v1035 = vmul.f32 %v1028, %v995
  %v1036 = vmul.f32 %v1032, %v996
  %v1037 = vmul.f32 %v1028, %v997
  %v1038 = vmul.f32 %v1032, %v998
  %v1039 = vmul.f32 %v1028, %v999
  %v1040 = vmul.f32 %v1032, %v1000
  %v1041 = vsub.f32 %v1018, %v1035
  %v1042 = vsub.f32 %v1019, %v1036
  %v1043 = vsub.f32 %v1020, %v1037
  %v1044 = vsub.f32 %v1021, %v1038
  %v1045 = vsub.f32 %v1022, %v1039
  %v1046 = vsub.f32 %v1023, %v1040
  %v1047 = vmul.f32 %v1005, %v995
  %v1048 = vmul.f32 %v1009, %v996
  %v1049 = vmul.f32 %v1005, %v997
  %v1050 = vmul.f32 %v1009, %v998
  %v1051 = vmul.f32 %v1005, %v999
  %v1052 = vmul.f32 %v1009, %v1000
  %v1053 = vadd.f32 %v977, %v1047
  %v1054 = vadd.f32 %v978, %v1048
  %v1055 = vadd.f32 %v979, %v1049
  %v1056 = vadd.f32 %v980, %v1050
  %v1057 = vadd.f32 %v981, %v1051
  %v1058 = vadd.f32 %v982, %v1052
  %v1059 = vmul.f32 %v1028, %v988
  %v1060 = vmul.f32 %v1032, %v989
  %v1061 = vmul.f32 %v1028, %v990
  %v1062 = vmul.f32 %v1032, %v991
  %v1063 = vmul.f32 %v1028, %v992
  %v1064 = vmul.f32 %v1032, %v993
  %v1065 = vadd.f32 %v1053, %v1059
  %v1066 = vadd.f32 %v1054, %v1060
  %v1067 = vadd.f32 %v1055, %v1061
  %v1068 = vadd.f32 %v1056, %v1062
  %v1069 = vadd.f32 %v1057, %v1063
  %v1070 = vadd.f32 %v1058, %v1064
  %s1071 = scalar_lea.vmem %s0, 20
  %v1072 = vld [vmem:[%s1071] ss:$8 sm:$0x3]
  %s1073 = scalar_lea.vmem %s1, 20
  %v1074 = vld [vmem:[%s1073] ss:$8 sm:$0x3]
  %s1075 = scalar_lea.vmem %s2, 576
  %v1076 = vld [vmem:[%s1075] sm:$0xff]
  %v1077 = vld [vmem:[%s1075 + $0x8] sm:$0xff]
  %v1078 = vld [vmem:[%s1075 + $0x10] sm:$0xff]
  %v1079 = vld [vmem:[%s1075 + $0x18] sm:$0xff]
  %v1080 = vld [vmem:[%s1075 + $0x20] sm:$0xf]
  %v1081 = vld [vmem:[%s1075 + $0x28] sm:$0xf]
  %s1082 = scalar_lea.vmem %s3, 576
  %v1083 = vld [vmem:[%s1082] sm:$0xff]
  %v1084 = vld [vmem:[%s1082 + $0x8] sm:$0xff]
  %v1085 = vld [vmem:[%s1082 + $0x10] sm:$0xff]
  %v1086 = vld [vmem:[%s1082 + $0x18] sm:$0xff]
  %v1087 = vld [vmem:[%s1082 + $0x20] sm:$0xf]
  %v1088 = vld [vmem:[%s1082 + $0x28] sm:$0xf]
  %v1090 = vlaneseq
  %v1091 = vshrl.u32 %v1090, 7
  %v1092 = vsub.s32 0, %v1091
  %v1093 = vrot.slane %v1072, %v1092
  %v1094 = vlaneseq
  %v1095 = vshrl.u32 %v1094, 7
  %v1096 = vsub.s32 1, %v1095
  %v1097 = vrot.slane %v1072, %v1096
  %v1100 = vmul.f32 %v1093, %v1076
  %v1101 = vmul.f32 %v1097, %v1077
  %v1102 = vmul.f32 %v1093, %v1078
  %v1103 = vmul.f32 %v1097, %v1079
  %v1104 = vmul.f32 %v1093, %v1080
  %v1105 = vmul.f32 %v1097, %v1081
  %v1106 = vadd.f32 %v1041, %v1100
  %v1107 = vadd.f32 %v1042, %v1101
  %v1108 = vadd.f32 %v1043, %v1102
  %v1109 = vadd.f32 %v1044, %v1103
  %v1110 = vadd.f32 %v1045, %v1104
  %v1111 = vadd.f32 %v1046, %v1105
  %v1113 = vlaneseq
  %v1114 = vshrl.u32 %v1113, 7
  %v1115 = vsub.s32 0, %v1114
  %v1116 = vrot.slane %v1074, %v1115
  %v1117 = vlaneseq
  %v1118 = vshrl.u32 %v1117, 7
  %v1119 = vsub.s32 1, %v1118
  %v1120 = vrot.slane %v1074, %v1119
  %v1123 = vmul.f32 %v1116, %v1083
  %v1124 = vmul.f32 %v1120, %v1084
  %v1125 = vmul.f32 %v1116, %v1085
  %v1126 = vmul.f32 %v1120, %v1086
  %v1127 = vmul.f32 %v1116, %v1087
  %v1128 = vmul.f32 %v1120, %v1088
  %v1129 = vsub.f32 %v1106, %v1123
  %v1130 = vsub.f32 %v1107, %v1124
  %v1131 = vsub.f32 %v1108, %v1125
  %v1132 = vsub.f32 %v1109, %v1126
  %v1133 = vsub.f32 %v1110, %v1127
  %v1134 = vsub.f32 %v1111, %v1128
  %v1135 = vmul.f32 %v1093, %v1083
  %v1136 = vmul.f32 %v1097, %v1084
  %v1137 = vmul.f32 %v1093, %v1085
  %v1138 = vmul.f32 %v1097, %v1086
  %v1139 = vmul.f32 %v1093, %v1087
  %v1140 = vmul.f32 %v1097, %v1088
  %v1141 = vadd.f32 %v1065, %v1135
  %v1142 = vadd.f32 %v1066, %v1136
  %v1143 = vadd.f32 %v1067, %v1137
  %v1144 = vadd.f32 %v1068, %v1138
  %v1145 = vadd.f32 %v1069, %v1139
  %v1146 = vadd.f32 %v1070, %v1140
  %v1147 = vmul.f32 %v1116, %v1076
  %v1148 = vmul.f32 %v1120, %v1077
  %v1149 = vmul.f32 %v1116, %v1078
  %v1150 = vmul.f32 %v1120, %v1079
  %v1151 = vmul.f32 %v1116, %v1080
  %v1152 = vmul.f32 %v1120, %v1081
  %v1153 = vadd.f32 %v1141, %v1147
  %v1154 = vadd.f32 %v1142, %v1148
  %v1155 = vadd.f32 %v1143, %v1149
  %v1156 = vadd.f32 %v1144, %v1150
  %v1157 = vadd.f32 %v1145, %v1151
  %v1158 = vadd.f32 %v1146, %v1152
  %s1159 = scalar_lea.vmem %s0, 21
  %v1160 = vld [vmem:[%s1159] ss:$8 sm:$0x3]
  %s1161 = scalar_lea.vmem %s1, 21
  %v1162 = vld [vmem:[%s1161] ss:$8 sm:$0x3]
  %s1163 = scalar_lea.vmem %s2, 624
  %v1164 = vld [vmem:[%s1163] sm:$0xff]
  %v1165 = vld [vmem:[%s1163 + $0x8] sm:$0xff]
  %v1166 = vld [vmem:[%s1163 + $0x10] sm:$0xff]
  %v1167 = vld [vmem:[%s1163 + $0x18] sm:$0xff]
  %v1168 = vld [vmem:[%s1163 + $0x20] sm:$0xf]
  %v1169 = vld [vmem:[%s1163 + $0x28] sm:$0xf]
  %s1170 = scalar_lea.vmem %s3, 624
  %v1171 = vld [vmem:[%s1170] sm:$0xff]
  %v1172 = vld [vmem:[%s1170 + $0x8] sm:$0xff]
  %v1173 = vld [vmem:[%s1170 + $0x10] sm:$0xff]
  %v1174 = vld [vmem:[%s1170 + $0x18] sm:$0xff]
  %v1175 = vld [vmem:[%s1170 + $0x20] sm:$0xf]
  %v1176 = vld [vmem:[%s1170 + $0x28] sm:$0xf]
  %v1178 = vlaneseq
  %v1179 = vshrl.u32 %v1178, 7
  %v1180 = vsub.s32 0, %v1179
  %v1181 = vrot.slane %v1160, %v1180
  %v1182 = vlaneseq
  %v1183 = vshrl.u32 %v1182, 7
  %v1184 = vsub.s32 1, %v1183
  %v1185 = vrot.slane %v1160, %v1184
  %v1188 = vmul.f32 %v1181, %v1164
  %v1189 = vmul.f32 %v1185, %v1165
  %v1190 = vmul.f32 %v1181, %v1166
  %v1191 = vmul.f32 %v1185, %v1167
  %v1192 = vmul.f32 %v1181, %v1168
  %v1193 = vmul.f32 %v1185, %v1169
  %v1194 = vadd.f32 %v1129, %v1188
  %v1195 = vadd.f32 %v1130, %v1189
  %v1196 = vadd.f32 %v1131, %v1190
  %v1197 = vadd.f32 %v1132, %v1191
  %v1198 = vadd.f32 %v1133, %v1192
  %v1199 = vadd.f32 %v1134, %v1193
  %v1201 = vlaneseq
  %v1202 = vshrl.u32 %v1201, 7
  %v1203 = vsub.s32 0, %v1202
  %v1204 = vrot.slane %v1162, %v1203
  %v1205 = vlaneseq
  %v1206 = vshrl.u32 %v1205, 7
  %v1207 = vsub.s32 1, %v1206
  %v1208 = vrot.slane %v1162, %v1207
  %v1211 = vmul.f32 %v1204, %v1171
  %v1212 = vmul.f32 %v1208, %v1172
  %v1213 = vmul.f32 %v1204, %v1173
  %v1214 = vmul.f32 %v1208, %v1174
  %v1215 = vmul.f32 %v1204, %v1175
  %v1216 = vmul.f32 %v1208, %v1176
  %v1217 = vsub.f32 %v1194, %v1211
  %v1218 = vsub.f32 %v1195, %v1212
  %v1219 = vsub.f32 %v1196, %v1213
  %v1220 = vsub.f32 %v1197, %v1214
  %v1221 = vsub.f32 %v1198, %v1215
  %v1222 = vsub.f32 %v1199, %v1216
  %v1223 = vmul.f32 %v1181, %v1171
  %v1224 = vmul.f32 %v1185, %v1172
  %v1225 = vmul.f32 %v1181, %v1173
  %v1226 = vmul.f32 %v1185, %v1174
  %v1227 = vmul.f32 %v1181, %v1175
  %v1228 = vmul.f32 %v1185, %v1176
  %v1229 = vadd.f32 %v1153, %v1223
  %v1230 = vadd.f32 %v1154, %v1224
  %v1231 = vadd.f32 %v1155, %v1225
  %v1232 = vadd.f32 %v1156, %v1226
  %v1233 = vadd.f32 %v1157, %v1227
  %v1234 = vadd.f32 %v1158, %v1228
  %v1235 = vmul.f32 %v1204, %v1164
  %v1236 = vmul.f32 %v1208, %v1165
  %v1237 = vmul.f32 %v1204, %v1166
  %v1238 = vmul.f32 %v1208, %v1167
  %v1239 = vmul.f32 %v1204, %v1168
  %v1240 = vmul.f32 %v1208, %v1169
  %v1241 = vadd.f32 %v1229, %v1235
  %v1242 = vadd.f32 %v1230, %v1236
  %v1243 = vadd.f32 %v1231, %v1237
  %v1244 = vadd.f32 %v1232, %v1238
  %v1245 = vadd.f32 %v1233, %v1239
  %v1246 = vadd.f32 %v1234, %v1240
  %s1247 = scalar_lea.vmem %s0, 22
  %v1248 = vld [vmem:[%s1247] ss:$8 sm:$0x3]
  %s1249 = scalar_lea.vmem %s1, 22
  %v1250 = vld [vmem:[%s1249] ss:$8 sm:$0x3]
  %s1251 = scalar_lea.vmem %s2, 672
  %v1252 = vld [vmem:[%s1251] sm:$0xff]
  %v1253 = vld [vmem:[%s1251 + $0x8] sm:$0xff]
  %v1254 = vld [vmem:[%s1251 + $0x10] sm:$0xff]
  %v1255 = vld [vmem:[%s1251 + $0x18] sm:$0xff]
  %v1256 = vld [vmem:[%s1251 + $0x20] sm:$0xf]
  %v1257 = vld [vmem:[%s1251 + $0x28] sm:$0xf]
  %s1258 = scalar_lea.vmem %s3, 672
  %v1259 = vld [vmem:[%s1258] sm:$0xff]
  %v1260 = vld [vmem:[%s1258 + $0x8] sm:$0xff]
  %v1261 = vld [vmem:[%s1258 + $0x10] sm:$0xff]
  %v1262 = vld [vmem:[%s1258 + $0x18] sm:$0xff]
  %v1263 = vld [vmem:[%s1258 + $0x20] sm:$0xf]
  %v1264 = vld [vmem:[%s1258 + $0x28] sm:$0xf]
  %v1266 = vlaneseq
  %v1267 = vshrl.u32 %v1266, 7
  %v1268 = vsub.s32 0, %v1267
  %v1269 = vrot.slane %v1248, %v1268
  %v1270 = vlaneseq
  %v1271 = vshrl.u32 %v1270, 7
  %v1272 = vsub.s32 1, %v1271
  %v1273 = vrot.slane %v1248, %v1272
  %v1276 = vmul.f32 %v1269, %v1252
  %v1277 = vmul.f32 %v1273, %v1253
  %v1278 = vmul.f32 %v1269, %v1254
  %v1279 = vmul.f32 %v1273, %v1255
  %v1280 = vmul.f32 %v1269, %v1256
  %v1281 = vmul.f32 %v1273, %v1257
  %v1282 = vadd.f32 %v1217, %v1276
  %v1283 = vadd.f32 %v1218, %v1277
  %v1284 = vadd.f32 %v1219, %v1278
  %v1285 = vadd.f32 %v1220, %v1279
  %v1286 = vadd.f32 %v1221, %v1280
  %v1287 = vadd.f32 %v1222, %v1281
  %v1289 = vlaneseq
  %v1290 = vshrl.u32 %v1289, 7
  %v1291 = vsub.s32 0, %v1290
  %v1292 = vrot.slane %v1250, %v1291
  %v1293 = vlaneseq
  %v1294 = vshrl.u32 %v1293, 7
  %v1295 = vsub.s32 1, %v1294
  %v1296 = vrot.slane %v1250, %v1295
  %v1299 = vmul.f32 %v1292, %v1259
  %v1300 = vmul.f32 %v1296, %v1260
  %v1301 = vmul.f32 %v1292, %v1261
  %v1302 = vmul.f32 %v1296, %v1262
  %v1303 = vmul.f32 %v1292, %v1263
  %v1304 = vmul.f32 %v1296, %v1264
  %v1305 = vsub.f32 %v1282, %v1299
  %v1306 = vsub.f32 %v1283, %v1300
  %v1307 = vsub.f32 %v1284, %v1301
  %v1308 = vsub.f32 %v1285, %v1302
  %v1309 = vsub.f32 %v1286, %v1303
  %v1310 = vsub.f32 %v1287, %v1304
  %v1311 = vmul.f32 %v1269, %v1259
  %v1312 = vmul.f32 %v1273, %v1260
  %v1313 = vmul.f32 %v1269, %v1261
  %v1314 = vmul.f32 %v1273, %v1262
  %v1315 = vmul.f32 %v1269, %v1263
  %v1316 = vmul.f32 %v1273, %v1264
  %v1317 = vadd.f32 %v1241, %v1311
  %v1318 = vadd.f32 %v1242, %v1312
  %v1319 = vadd.f32 %v1243, %v1313
  %v1320 = vadd.f32 %v1244, %v1314
  %v1321 = vadd.f32 %v1245, %v1315
  %v1322 = vadd.f32 %v1246, %v1316
  %v1323 = vmul.f32 %v1292, %v1252
  %v1324 = vmul.f32 %v1296, %v1253
  %v1325 = vmul.f32 %v1292, %v1254
  %v1326 = vmul.f32 %v1296, %v1255
  %v1327 = vmul.f32 %v1292, %v1256
  %v1328 = vmul.f32 %v1296, %v1257
  %v1329 = vadd.f32 %v1317, %v1323
  %v1330 = vadd.f32 %v1318, %v1324
  %v1331 = vadd.f32 %v1319, %v1325
  %v1332 = vadd.f32 %v1320, %v1326
  %v1333 = vadd.f32 %v1321, %v1327
  %v1334 = vadd.f32 %v1322, %v1328
  %s1335 = scalar_lea.vmem %s0, 23
  %v1336 = vld [vmem:[%s1335] ss:$8 sm:$0x3]
  %s1337 = scalar_lea.vmem %s1, 23
  %v1338 = vld [vmem:[%s1337] ss:$8 sm:$0x3]
  %s1339 = scalar_lea.vmem %s2, 720
  %v1340 = vld [vmem:[%s1339] sm:$0xff]
  %v1341 = vld [vmem:[%s1339 + $0x8] sm:$0xff]
  %v1342 = vld [vmem:[%s1339 + $0x10] sm:$0xff]
  %v1343 = vld [vmem:[%s1339 + $0x18] sm:$0xff]
  %v1344 = vld [vmem:[%s1339 + $0x20] sm:$0xf]
  %v1345 = vld [vmem:[%s1339 + $0x28] sm:$0xf]
  %s1346 = scalar_lea.vmem %s3, 720
  %v1347 = vld [vmem:[%s1346] sm:$0xff]
  %v1348 = vld [vmem:[%s1346 + $0x8] sm:$0xff]
  %v1349 = vld [vmem:[%s1346 + $0x10] sm:$0xff]
  %v1350 = vld [vmem:[%s1346 + $0x18] sm:$0xff]
  %v1351 = vld [vmem:[%s1346 + $0x20] sm:$0xf]
  %v1352 = vld [vmem:[%s1346 + $0x28] sm:$0xf]
  %v1354 = vlaneseq
  %v1355 = vshrl.u32 %v1354, 7
  %v1356 = vsub.s32 0, %v1355
  %v1357 = vrot.slane %v1336, %v1356
  %v1358 = vlaneseq
  %v1359 = vshrl.u32 %v1358, 7
  %v1360 = vsub.s32 1, %v1359
  %v1361 = vrot.slane %v1336, %v1360
  %v1364 = vmul.f32 %v1357, %v1340
  %v1365 = vmul.f32 %v1361, %v1341
  %v1366 = vmul.f32 %v1357, %v1342
  %v1367 = vmul.f32 %v1361, %v1343
  %v1368 = vmul.f32 %v1357, %v1344
  %v1369 = vmul.f32 %v1361, %v1345
  %v1370 = vadd.f32 %v1305, %v1364
  %v1371 = vadd.f32 %v1306, %v1365
  %v1372 = vadd.f32 %v1307, %v1366
  %v1373 = vadd.f32 %v1308, %v1367
  %v1374 = vadd.f32 %v1309, %v1368
  %v1375 = vadd.f32 %v1310, %v1369
  %v1377 = vlaneseq
  %v1378 = vshrl.u32 %v1377, 7
  %v1379 = vsub.s32 0, %v1378
  %v1380 = vrot.slane %v1338, %v1379
  %v1381 = vlaneseq
  %v1382 = vshrl.u32 %v1381, 7
  %v1383 = vsub.s32 1, %v1382
  %v1384 = vrot.slane %v1338, %v1383
  %v1387 = vmul.f32 %v1380, %v1347
  %v1388 = vmul.f32 %v1384, %v1348
  %v1389 = vmul.f32 %v1380, %v1349
  %v1390 = vmul.f32 %v1384, %v1350
  %v1391 = vmul.f32 %v1380, %v1351
  %v1392 = vmul.f32 %v1384, %v1352
  %v1393 = vsub.f32 %v1370, %v1387
  %v1394 = vsub.f32 %v1371, %v1388
  %v1395 = vsub.f32 %v1372, %v1389
  %v1396 = vsub.f32 %v1373, %v1390
  %v1397 = vsub.f32 %v1374, %v1391
  %v1398 = vsub.f32 %v1375, %v1392
  %v1399 = vmul.f32 %v1357, %v1347
  %v1400 = vmul.f32 %v1361, %v1348
  %v1401 = vmul.f32 %v1357, %v1349
  %v1402 = vmul.f32 %v1361, %v1350
  %v1403 = vmul.f32 %v1357, %v1351
  %v1404 = vmul.f32 %v1361, %v1352
  %v1405 = vadd.f32 %v1329, %v1399
  %v1406 = vadd.f32 %v1330, %v1400
  %v1407 = vadd.f32 %v1331, %v1401
  %v1408 = vadd.f32 %v1332, %v1402
  %v1409 = vadd.f32 %v1333, %v1403
  %v1410 = vadd.f32 %v1334, %v1404
  %v1411 = vmul.f32 %v1380, %v1340
  %v1412 = vmul.f32 %v1384, %v1341
  %v1413 = vmul.f32 %v1380, %v1342
  %v1414 = vmul.f32 %v1384, %v1343
  %v1415 = vmul.f32 %v1380, %v1344
  %v1416 = vmul.f32 %v1384, %v1345
  %v1417 = vadd.f32 %v1405, %v1411
  %v1418 = vadd.f32 %v1406, %v1412
  %v1419 = vadd.f32 %v1407, %v1413
  %v1420 = vadd.f32 %v1408, %v1414
  %v1421 = vadd.f32 %v1409, %v1415
  %v1422 = vadd.f32 %v1410, %v1416
  %s1423 = scalar_lea.vmem %s0, 32
  %v1424 = vld [vmem:[%s1423] ss:$8 sm:$0x3]
  %s1425 = scalar_lea.vmem %s1, 32
  %v1426 = vld [vmem:[%s1425] ss:$8 sm:$0x3]
  %s1427 = scalar_lea.vmem %s2, 768
  %v1428 = vld [vmem:[%s1427] sm:$0xff]
  %v1429 = vld [vmem:[%s1427 + $0x8] sm:$0xff]
  %v1430 = vld [vmem:[%s1427 + $0x10] sm:$0xff]
  %v1431 = vld [vmem:[%s1427 + $0x18] sm:$0xff]
  %v1432 = vld [vmem:[%s1427 + $0x20] sm:$0xf]
  %v1433 = vld [vmem:[%s1427 + $0x28] sm:$0xf]
  %s1434 = scalar_lea.vmem %s3, 768
  %v1435 = vld [vmem:[%s1434] sm:$0xff]
  %v1436 = vld [vmem:[%s1434 + $0x8] sm:$0xff]
  %v1437 = vld [vmem:[%s1434 + $0x10] sm:$0xff]
  %v1438 = vld [vmem:[%s1434 + $0x18] sm:$0xff]
  %v1439 = vld [vmem:[%s1434 + $0x20] sm:$0xf]
  %v1440 = vld [vmem:[%s1434 + $0x28] sm:$0xf]
  %v1442 = vlaneseq
  %v1443 = vshrl.u32 %v1442, 7
  %v1444 = vsub.s32 0, %v1443
  %v1445 = vrot.slane %v1424, %v1444
  %v1446 = vlaneseq
  %v1447 = vshrl.u32 %v1446, 7
  %v1448 = vsub.s32 1, %v1447
  %v1449 = vrot.slane %v1424, %v1448
  %v1452 = vmul.f32 %v1445, %v1428
  %v1453 = vmul.f32 %v1449, %v1429
  %v1454 = vmul.f32 %v1445, %v1430
  %v1455 = vmul.f32 %v1449, %v1431
  %v1456 = vmul.f32 %v1445, %v1432
  %v1457 = vmul.f32 %v1449, %v1433
  %v1458 = vadd.f32 %v1393, %v1452
  %v1459 = vadd.f32 %v1394, %v1453
  %v1460 = vadd.f32 %v1395, %v1454
  %v1461 = vadd.f32 %v1396, %v1455
  %v1462 = vadd.f32 %v1397, %v1456
  %v1463 = vadd.f32 %v1398, %v1457
  %v1465 = vlaneseq
  %v1466 = vshrl.u32 %v1465, 7
  %v1467 = vsub.s32 0, %v1466
  %v1468 = vrot.slane %v1426, %v1467
  %v1469 = vlaneseq
  %v1470 = vshrl.u32 %v1469, 7
  %v1471 = vsub.s32 1, %v1470
  %v1472 = vrot.slane %v1426, %v1471
  %v1475 = vmul.f32 %v1468, %v1435
  %v1476 = vmul.f32 %v1472, %v1436
  %v1477 = vmul.f32 %v1468, %v1437
  %v1478 = vmul.f32 %v1472, %v1438
  %v1479 = vmul.f32 %v1468, %v1439
  %v1480 = vmul.f32 %v1472, %v1440
  %v1481 = vsub.f32 %v1458, %v1475
  %v1482 = vsub.f32 %v1459, %v1476
  %v1483 = vsub.f32 %v1460, %v1477
  %v1484 = vsub.f32 %v1461, %v1478
  %v1485 = vsub.f32 %v1462, %v1479
  %v1486 = vsub.f32 %v1463, %v1480
  %v1487 = vmul.f32 %v1445, %v1435
  %v1488 = vmul.f32 %v1449, %v1436
  %v1489 = vmul.f32 %v1445, %v1437
  %v1490 = vmul.f32 %v1449, %v1438
  %v1491 = vmul.f32 %v1445, %v1439
  %v1492 = vmul.f32 %v1449, %v1440
  %v1493 = vadd.f32 %v1417, %v1487
  %v1494 = vadd.f32 %v1418, %v1488
  %v1495 = vadd.f32 %v1419, %v1489
  %v1496 = vadd.f32 %v1420, %v1490
  %v1497 = vadd.f32 %v1421, %v1491
  %v1498 = vadd.f32 %v1422, %v1492
  %v1499 = vmul.f32 %v1468, %v1428
  %v1500 = vmul.f32 %v1472, %v1429
  %v1501 = vmul.f32 %v1468, %v1430
  %v1502 = vmul.f32 %v1472, %v1431
  %v1503 = vmul.f32 %v1468, %v1432
  %v1504 = vmul.f32 %v1472, %v1433
  %v1505 = vadd.f32 %v1493, %v1499
  %v1506 = vadd.f32 %v1494, %v1500
  %v1507 = vadd.f32 %v1495, %v1501
  %v1508 = vadd.f32 %v1496, %v1502
  %v1509 = vadd.f32 %v1497, %v1503
  %v1510 = vadd.f32 %v1498, %v1504
  %s1511 = scalar_lea.vmem %s0, 33
  %v1512 = vld [vmem:[%s1511] ss:$8 sm:$0x3]
  %s1513 = scalar_lea.vmem %s1, 33
  %v1514 = vld [vmem:[%s1513] ss:$8 sm:$0x3]
  %s1515 = scalar_lea.vmem %s2, 816
  %v1516 = vld [vmem:[%s1515] sm:$0xff]
  %v1517 = vld [vmem:[%s1515 + $0x8] sm:$0xff]
  %v1518 = vld [vmem:[%s1515 + $0x10] sm:$0xff]
  %v1519 = vld [vmem:[%s1515 + $0x18] sm:$0xff]
  %v1520 = vld [vmem:[%s1515 + $0x20] sm:$0xf]
  %v1521 = vld [vmem:[%s1515 + $0x28] sm:$0xf]
  %s1522 = scalar_lea.vmem %s3, 816
  %v1523 = vld [vmem:[%s1522] sm:$0xff]
  %v1524 = vld [vmem:[%s1522 + $0x8] sm:$0xff]
  %v1525 = vld [vmem:[%s1522 + $0x10] sm:$0xff]
  %v1526 = vld [vmem:[%s1522 + $0x18] sm:$0xff]
  %v1527 = vld [vmem:[%s1522 + $0x20] sm:$0xf]
  %v1528 = vld [vmem:[%s1522 + $0x28] sm:$0xf]
  %v1530 = vlaneseq
  %v1531 = vshrl.u32 %v1530, 7
  %v1532 = vsub.s32 0, %v1531
  %v1533 = vrot.slane %v1512, %v1532
  %v1534 = vlaneseq
  %v1535 = vshrl.u32 %v1534, 7
  %v1536 = vsub.s32 1, %v1535
  %v1537 = vrot.slane %v1512, %v1536
  %v1540 = vmul.f32 %v1533, %v1516
  %v1541 = vmul.f32 %v1537, %v1517
  %v1542 = vmul.f32 %v1533, %v1518
  %v1543 = vmul.f32 %v1537, %v1519
  %v1544 = vmul.f32 %v1533, %v1520
  %v1545 = vmul.f32 %v1537, %v1521
  %v1546 = vadd.f32 %v1481, %v1540
  %v1547 = vadd.f32 %v1482, %v1541
  %v1548 = vadd.f32 %v1483, %v1542
  %v1549 = vadd.f32 %v1484, %v1543
  %v1550 = vadd.f32 %v1485, %v1544
  %v1551 = vadd.f32 %v1486, %v1545
  %v1553 = vlaneseq
  %v1554 = vshrl.u32 %v1553, 7
  %v1555 = vsub.s32 0, %v1554
  %v1556 = vrot.slane %v1514, %v1555
  %v1557 = vlaneseq
  %v1558 = vshrl.u32 %v1557, 7
  %v1559 = vsub.s32 1, %v1558
  %v1560 = vrot.slane %v1514, %v1559
  %v1563 = vmul.f32 %v1556, %v1523
  %v1564 = vmul.f32 %v1560, %v1524
  %v1565 = vmul.f32 %v1556, %v1525
  %v1566 = vmul.f32 %v1560, %v1526
  %v1567 = vmul.f32 %v1556, %v1527
  %v1568 = vmul.f32 %v1560, %v1528
  %v1569 = vsub.f32 %v1546, %v1563
  %v1570 = vsub.f32 %v1547, %v1564
  %v1571 = vsub.f32 %v1548, %v1565
  %v1572 = vsub.f32 %v1549, %v1566
  %v1573 = vsub.f32 %v1550, %v1567
  %v1574 = vsub.f32 %v1551, %v1568
  %v1575 = vmul.f32 %v1533, %v1523
  %v1576 = vmul.f32 %v1537, %v1524
  %v1577 = vmul.f32 %v1533, %v1525
  %v1578 = vmul.f32 %v1537, %v1526
  %v1579 = vmul.f32 %v1533, %v1527
  %v1580 = vmul.f32 %v1537, %v1528
  %v1581 = vadd.f32 %v1505, %v1575
  %v1582 = vadd.f32 %v1506, %v1576
  %v1583 = vadd.f32 %v1507, %v1577
  %v1584 = vadd.f32 %v1508, %v1578
  %v1585 = vadd.f32 %v1509, %v1579
  %v1586 = vadd.f32 %v1510, %v1580
  %v1587 = vmul.f32 %v1556, %v1516
  %v1588 = vmul.f32 %v1560, %v1517
  %v1589 = vmul.f32 %v1556, %v1518
  %v1590 = vmul.f32 %v1560, %v1519
  %v1591 = vmul.f32 %v1556, %v1520
  %v1592 = vmul.f32 %v1560, %v1521
  %v1593 = vadd.f32 %v1581, %v1587
  %v1594 = vadd.f32 %v1582, %v1588
  %v1595 = vadd.f32 %v1583, %v1589
  %v1596 = vadd.f32 %v1584, %v1590
  %v1597 = vadd.f32 %v1585, %v1591
  %v1598 = vadd.f32 %v1586, %v1592
  %s1599 = scalar_lea.vmem %s0, 34
  %v1600 = vld [vmem:[%s1599] ss:$8 sm:$0x3]
  %s1601 = scalar_lea.vmem %s1, 34
  %v1602 = vld [vmem:[%s1601] ss:$8 sm:$0x3]
  %s1603 = scalar_lea.vmem %s2, 864
  %v1604 = vld [vmem:[%s1603] sm:$0xff]
  %v1605 = vld [vmem:[%s1603 + $0x8] sm:$0xff]
  %v1606 = vld [vmem:[%s1603 + $0x10] sm:$0xff]
  %v1607 = vld [vmem:[%s1603 + $0x18] sm:$0xff]
  %v1608 = vld [vmem:[%s1603 + $0x20] sm:$0xf]
  %v1609 = vld [vmem:[%s1603 + $0x28] sm:$0xf]
  %s1610 = scalar_lea.vmem %s3, 864
  %v1611 = vld [vmem:[%s1610] sm:$0xff]
  %v1612 = vld [vmem:[%s1610 + $0x8] sm:$0xff]
  %v1613 = vld [vmem:[%s1610 + $0x10] sm:$0xff]
  %v1614 = vld [vmem:[%s1610 + $0x18] sm:$0xff]
  %v1615 = vld [vmem:[%s1610 + $0x20] sm:$0xf]
  %v1616 = vld [vmem:[%s1610 + $0x28] sm:$0xf]
  %v1618 = vlaneseq
  %v1619 = vshrl.u32 %v1618, 7
  %v1620 = vsub.s32 0, %v1619
  %v1621 = vrot.slane %v1600, %v1620
  %v1622 = vlaneseq
  %v1623 = vshrl.u32 %v1622, 7
  %v1624 = vsub.s32 1, %v1623
  %v1625 = vrot.slane %v1600, %v1624
  %v1628 = vmul.f32 %v1621, %v1604
  %v1629 = vmul.f32 %v1625, %v1605
  %v1630 = vmul.f32 %v1621, %v1606
  %v1631 = vmul.f32 %v1625, %v1607
  %v1632 = vmul.f32 %v1621, %v1608
  %v1633 = vmul.f32 %v1625, %v1609
  %v1634 = vadd.f32 %v1569, %v1628
  %v1635 = vadd.f32 %v1570, %v1629
  %v1636 = vadd.f32 %v1571, %v1630
  %v1637 = vadd.f32 %v1572, %v1631
  %v1638 = vadd.f32 %v1573, %v1632
  %v1639 = vadd.f32 %v1574, %v1633
  %v1641 = vlaneseq
  %v1642 = vshrl.u32 %v1641, 7
  %v1643 = vsub.s32 0, %v1642
  %v1644 = vrot.slane %v1602, %v1643
  %v1645 = vlaneseq
  %v1646 = vshrl.u32 %v1645, 7
  %v1647 = vsub.s32 1, %v1646
  %v1648 = vrot.slane %v1602, %v1647
  %v1651 = vmul.f32 %v1644, %v1611
  %v1652 = vmul.f32 %v1648, %v1612
  %v1653 = vmul.f32 %v1644, %v1613
  %v1654 = vmul.f32 %v1648, %v1614
  %v1655 = vmul.f32 %v1644, %v1615
  %v1656 = vmul.f32 %v1648, %v1616
  %v1657 = vsub.f32 %v1634, %v1651
  %v1658 = vsub.f32 %v1635, %v1652
  %v1659 = vsub.f32 %v1636, %v1653
  %v1660 = vsub.f32 %v1637, %v1654
  %v1661 = vsub.f32 %v1638, %v1655
  %v1662 = vsub.f32 %v1639, %v1656
  %v1663 = vmul.f32 %v1621, %v1611
  %v1664 = vmul.f32 %v1625, %v1612
  %v1665 = vmul.f32 %v1621, %v1613
  %v1666 = vmul.f32 %v1625, %v1614
  %v1667 = vmul.f32 %v1621, %v1615
  %v1668 = vmul.f32 %v1625, %v1616
  %v1669 = vadd.f32 %v1593, %v1663
  %v1670 = vadd.f32 %v1594, %v1664
  %v1671 = vadd.f32 %v1595, %v1665
  %v1672 = vadd.f32 %v1596, %v1666
  %v1673 = vadd.f32 %v1597, %v1667
  %v1674 = vadd.f32 %v1598, %v1668
  %v1675 = vmul.f32 %v1644, %v1604
  %v1676 = vmul.f32 %v1648, %v1605
  %v1677 = vmul.f32 %v1644, %v1606
  %v1678 = vmul.f32 %v1648, %v1607
  %v1679 = vmul.f32 %v1644, %v1608
  %v1680 = vmul.f32 %v1648, %v1609
  %v1681 = vadd.f32 %v1669, %v1675
  %v1682 = vadd.f32 %v1670, %v1676
  %v1683 = vadd.f32 %v1671, %v1677
  %v1684 = vadd.f32 %v1672, %v1678
  %v1685 = vadd.f32 %v1673, %v1679
  %v1686 = vadd.f32 %v1674, %v1680
  %s1687 = scalar_lea.vmem %s0, 35
  %v1688 = vld [vmem:[%s1687] ss:$8 sm:$0x3]
  %s1689 = scalar_lea.vmem %s1, 35
  %v1690 = vld [vmem:[%s1689] ss:$8 sm:$0x3]
  %s1691 = scalar_lea.vmem %s2, 912
  %v1692 = vld [vmem:[%s1691] sm:$0xff]
  %v1693 = vld [vmem:[%s1691 + $0x8] sm:$0xff]
  %v1694 = vld [vmem:[%s1691 + $0x10] sm:$0xff]
  %v1695 = vld [vmem:[%s1691 + $0x18] sm:$0xff]
  %v1696 = vld [vmem:[%s1691 + $0x20] sm:$0xf]
  %v1697 = vld [vmem:[%s1691 + $0x28] sm:$0xf]
  %s1698 = scalar_lea.vmem %s3, 912
  %v1699 = vld [vmem:[%s1698] sm:$0xff]
  %v1700 = vld [vmem:[%s1698 + $0x8] sm:$0xff]
  %v1701 = vld [vmem:[%s1698 + $0x10] sm:$0xff]
  %v1702 = vld [vmem:[%s1698 + $0x18] sm:$0xff]
  %v1703 = vld [vmem:[%s1698 + $0x20] sm:$0xf]
  %v1704 = vld [vmem:[%s1698 + $0x28] sm:$0xf]
  %v1706 = vlaneseq
  %v1707 = vshrl.u32 %v1706, 7
  %v1708 = vsub.s32 0, %v1707
  %v1709 = vrot.slane %v1688, %v1708
  %v1710 = vlaneseq
  %v1711 = vshrl.u32 %v1710, 7
  %v1712 = vsub.s32 1, %v1711
  %v1713 = vrot.slane %v1688, %v1712
  %v1716 = vmul.f32 %v1709, %v1692
  %v1717 = vmul.f32 %v1713, %v1693
  %v1718 = vmul.f32 %v1709, %v1694
  %v1719 = vmul.f32 %v1713, %v1695
  %v1720 = vmul.f32 %v1709, %v1696
  %v1721 = vmul.f32 %v1713, %v1697
  %v1722 = vadd.f32 %v1657, %v1716
  %v1723 = vadd.f32 %v1658, %v1717
  %v1724 = vadd.f32 %v1659, %v1718
  %v1725 = vadd.f32 %v1660, %v1719
  %v1726 = vadd.f32 %v1661, %v1720
  %v1727 = vadd.f32 %v1662, %v1721
  %v1729 = vlaneseq
  %v1730 = vshrl.u32 %v1729, 7
  %v1731 = vsub.s32 0, %v1730
  %v1732 = vrot.slane %v1690, %v1731
  %v1733 = vlaneseq
  %v1734 = vshrl.u32 %v1733, 7
  %v1735 = vsub.s32 1, %v1734
  %v1736 = vrot.slane %v1690, %v1735
  %v1739 = vmul.f32 %v1732, %v1699
  %v1740 = vmul.f32 %v1736, %v1700
  %v1741 = vmul.f32 %v1732, %v1701
  %v1742 = vmul.f32 %v1736, %v1702
  %v1743 = vmul.f32 %v1732, %v1703
  %v1744 = vmul.f32 %v1736, %v1704
  %v1745 = vsub.f32 %v1722, %v1739
  %v1746 = vsub.f32 %v1723, %v1740
  %v1747 = vsub.f32 %v1724, %v1741
  %v1748 = vsub.f32 %v1725, %v1742
  %v1749 = vsub.f32 %v1726, %v1743
  %v1750 = vsub.f32 %v1727, %v1744
  %v1751 = vmul.f32 %v1709, %v1699
  %v1752 = vmul.f32 %v1713, %v1700
  %v1753 = vmul.f32 %v1709, %v1701
  %v1754 = vmul.f32 %v1713, %v1702
  %v1755 = vmul.f32 %v1709, %v1703
  %v1756 = vmul.f32 %v1713, %v1704
  %v1757 = vadd.f32 %v1681, %v1751
  %v1758 = vadd.f32 %v1682, %v1752
  %v1759 = vadd.f32 %v1683, %v1753
  %v1760 = vadd.f32 %v1684, %v1754
  %v1761 = vadd.f32 %v1685, %v1755
  %v1762 = vadd.f32 %v1686, %v1756
  %v1763 = vmul.f32 %v1732, %v1692
  %v1764 = vmul.f32 %v1736, %v1693
  %v1765 = vmul.f32 %v1732, %v1694
  %v1766 = vmul.f32 %v1736, %v1695
  %v1767 = vmul.f32 %v1732, %v1696
  %v1768 = vmul.f32 %v1736, %v1697
  %v1769 = vadd.f32 %v1757, %v1763
  %v1770 = vadd.f32 %v1758, %v1764
  %v1771 = vadd.f32 %v1759, %v1765
  %v1772 = vadd.f32 %v1760, %v1766
  %v1773 = vadd.f32 %v1761, %v1767
  %v1774 = vadd.f32 %v1762, %v1768
  %1775 = vst [vmem:[%s4] sm:$0xff] %v1745
  %vm1776 = vcmask 523264
  %1777 = vst.msk [vmem:[%s4 + $0x8] sm:$0xff] %vm1776, %v1746
  %1778 = vst [vmem:[%s4 + $0x10] sm:$0xff] %v1747
  %1779 = vst.msk [vmem:[%s4 + $0x18] sm:$0xff] %vm1776, %v1748
  %1780 = vst [vmem:[%s4 + $0x20] sm:$0xf] %v1749
  %vm1781 = vcmask 519168
  %1782 = vst.msk [vmem:[%s4 + $0x28] sm:$0xf] %vm1781, %v1750
  %1783 = vst [vmem:[%s5] sm:$0xff] %v1769
  %1784 = vst.msk [vmem:[%s5 + $0x8] sm:$0xff] %vm1776, %v1770
  %1785 = vst [vmem:[%s5 + $0x10] sm:$0xff] %v1771
  %1786 = vst.msk [vmem:[%s5 + $0x18] sm:$0xff] %vm1776, %v1772
  %1787 = vst [vmem:[%s5 + $0x20] sm:$0xf] %v1773
  %1788 = vst.msk [vmem:[%s5 + $0x28] sm:$0xf] %vm1781, %v1774
  %s1789 = scalar_lea.vmem %s0, 48
  %v1790 = vld [vmem:[%s1789] ss:$8 sm:$0x3]
  %s1791 = scalar_lea.vmem %s1, 48
  %v1792 = vld [vmem:[%s1791] ss:$8 sm:$0x3]
  %v1793 = vld [vmem:[%s2] sm:$0xff]
  %v1794 = vld [vmem:[%s2 + $0x8] sm:$0xff]
  %v1795 = vld [vmem:[%s2 + $0x10] sm:$0xff]
  %v1796 = vld [vmem:[%s2 + $0x18] sm:$0xff]
  %v1797 = vld [vmem:[%s2 + $0x20] sm:$0xf]
  %v1798 = vld [vmem:[%s2 + $0x28] sm:$0xf]
  %v1799 = vld [vmem:[%s3] sm:$0xff]
  %v1800 = vld [vmem:[%s3 + $0x8] sm:$0xff]
  %v1801 = vld [vmem:[%s3 + $0x10] sm:$0xff]
  %v1802 = vld [vmem:[%s3 + $0x18] sm:$0xff]
  %v1803 = vld [vmem:[%s3 + $0x20] sm:$0xf]
  %v1804 = vld [vmem:[%s3 + $0x28] sm:$0xf]
  %v1806 = vlaneseq
  %v1807 = vshrl.u32 %v1806, 7
  %v1808 = vsub.s32 0, %v1807
  %v1809 = vrot.slane %v1790, %v1808
  %v1810 = vlaneseq
  %v1811 = vshrl.u32 %v1810, 7
  %v1812 = vsub.s32 1, %v1811
  %v1813 = vrot.slane %v1790, %v1812
  %v1816 = vmul.f32 %v1809, %v1793
  %v1817 = vmul.f32 %v1813, %v1794
  %v1818 = vmul.f32 %v1809, %v1795
  %v1819 = vmul.f32 %v1813, %v1796
  %v1820 = vmul.f32 %v1809, %v1797
  %v1821 = vmul.f32 %v1813, %v1798
  %v1822 = vadd.f32 %v1816, 0.0
  %v1823 = vadd.f32 %v1817, 0.0
  %v1824 = vadd.f32 %v1818, 0.0
  %v1825 = vadd.f32 %v1819, 0.0
  %v1826 = vadd.f32 %v1820, 0.0
  %v1827 = vadd.f32 %v1821, 0.0
  %v1829 = vlaneseq
  %v1830 = vshrl.u32 %v1829, 7
  %v1831 = vsub.s32 0, %v1830
  %v1832 = vrot.slane %v1792, %v1831
  %v1833 = vlaneseq
  %v1834 = vshrl.u32 %v1833, 7
  %v1835 = vsub.s32 1, %v1834
  %v1836 = vrot.slane %v1792, %v1835
  %v1839 = vmul.f32 %v1832, %v1799
  %v1840 = vmul.f32 %v1836, %v1800
  %v1841 = vmul.f32 %v1832, %v1801
  %v1842 = vmul.f32 %v1836, %v1802
  %v1843 = vmul.f32 %v1832, %v1803
  %v1844 = vmul.f32 %v1836, %v1804
  %v1845 = vsub.f32 %v1822, %v1839
  %v1846 = vsub.f32 %v1823, %v1840
  %v1847 = vsub.f32 %v1824, %v1841
  %v1848 = vsub.f32 %v1825, %v1842
  %v1849 = vsub.f32 %v1826, %v1843
  %v1850 = vsub.f32 %v1827, %v1844
  %v1851 = vmul.f32 %v1809, %v1799
  %v1852 = vmul.f32 %v1813, %v1800
  %v1853 = vmul.f32 %v1809, %v1801
  %v1854 = vmul.f32 %v1813, %v1802
  %v1855 = vmul.f32 %v1809, %v1803
  %v1856 = vmul.f32 %v1813, %v1804
  %v1857 = vadd.f32 %v1851, 0.0
  %v1858 = vadd.f32 %v1852, 0.0
  %v1859 = vadd.f32 %v1853, 0.0
  %v1860 = vadd.f32 %v1854, 0.0
  %v1861 = vadd.f32 %v1855, 0.0
  %v1862 = vadd.f32 %v1856, 0.0
  %v1863 = vmul.f32 %v1832, %v1793
  %v1864 = vmul.f32 %v1836, %v1794
  %v1865 = vmul.f32 %v1832, %v1795
  %v1866 = vmul.f32 %v1836, %v1796
  %v1867 = vmul.f32 %v1832, %v1797
  %v1868 = vmul.f32 %v1836, %v1798
  %v1869 = vadd.f32 %v1857, %v1863
  %v1870 = vadd.f32 %v1858, %v1864
  %v1871 = vadd.f32 %v1859, %v1865
  %v1872 = vadd.f32 %v1860, %v1866
  %v1873 = vadd.f32 %v1861, %v1867
  %v1874 = vadd.f32 %v1862, %v1868
  %s1875 = scalar_lea.vmem %s1789, 1
  %v1876 = vld [vmem:[%s1875] ss:$8 sm:$0x3]
  %s1877 = scalar_lea.vmem %s1791, 1
  %v1878 = vld [vmem:[%s1877] ss:$8 sm:$0x3]
  %v1879 = vld [vmem:[%s107] sm:$0xff]
  %v1880 = vld [vmem:[%s107 + $0x8] sm:$0xff]
  %v1881 = vld [vmem:[%s107 + $0x10] sm:$0xff]
  %v1882 = vld [vmem:[%s107 + $0x18] sm:$0xff]
  %v1883 = vld [vmem:[%s107 + $0x20] sm:$0xf]
  %v1884 = vld [vmem:[%s107 + $0x28] sm:$0xf]
  %v1885 = vld [vmem:[%s114] sm:$0xff]
  %v1886 = vld [vmem:[%s114 + $0x8] sm:$0xff]
  %v1887 = vld [vmem:[%s114 + $0x10] sm:$0xff]
  %v1888 = vld [vmem:[%s114 + $0x18] sm:$0xff]
  %v1889 = vld [vmem:[%s114 + $0x20] sm:$0xf]
  %v1890 = vld [vmem:[%s114 + $0x28] sm:$0xf]
  %v1892 = vlaneseq
  %v1893 = vshrl.u32 %v1892, 7
  %v1894 = vsub.s32 0, %v1893
  %v1895 = vrot.slane %v1876, %v1894
  %v1896 = vlaneseq
  %v1897 = vshrl.u32 %v1896, 7
  %v1898 = vsub.s32 1, %v1897
  %v1899 = vrot.slane %v1876, %v1898
  %v1902 = vmul.f32 %v1895, %v1879
  %v1903 = vmul.f32 %v1899, %v1880
  %v1904 = vmul.f32 %v1895, %v1881
  %v1905 = vmul.f32 %v1899, %v1882
  %v1906 = vmul.f32 %v1895, %v1883
  %v1907 = vmul.f32 %v1899, %v1884
  %v1908 = vadd.f32 %v1845, %v1902
  %v1909 = vadd.f32 %v1846, %v1903
  %v1910 = vadd.f32 %v1847, %v1904
  %v1911 = vadd.f32 %v1848, %v1905
  %v1912 = vadd.f32 %v1849, %v1906
  %v1913 = vadd.f32 %v1850, %v1907
  %v1915 = vlaneseq
  %v1916 = vshrl.u32 %v1915, 7
  %v1917 = vsub.s32 0, %v1916
  %v1918 = vrot.slane %v1878, %v1917
  %v1919 = vlaneseq
  %v1920 = vshrl.u32 %v1919, 7
  %v1921 = vsub.s32 1, %v1920
  %v1922 = vrot.slane %v1878, %v1921
  %v1925 = vmul.f32 %v1918, %v1885
  %v1926 = vmul.f32 %v1922, %v1886
  %v1927 = vmul.f32 %v1918, %v1887
  %v1928 = vmul.f32 %v1922, %v1888
  %v1929 = vmul.f32 %v1918, %v1889
  %v1930 = vmul.f32 %v1922, %v1890
  %v1931 = vsub.f32 %v1908, %v1925
  %v1932 = vsub.f32 %v1909, %v1926
  %v1933 = vsub.f32 %v1910, %v1927
  %v1934 = vsub.f32 %v1911, %v1928
  %v1935 = vsub.f32 %v1912, %v1929
  %v1936 = vsub.f32 %v1913, %v1930
  %v1937 = vmul.f32 %v1895, %v1885
  %v1938 = vmul.f32 %v1899, %v1886
  %v1939 = vmul.f32 %v1895, %v1887
  %v1940 = vmul.f32 %v1899, %v1888
  %v1941 = vmul.f32 %v1895, %v1889
  %v1942 = vmul.f32 %v1899, %v1890
  %v1943 = vadd.f32 %v1869, %v1937
  %v1944 = vadd.f32 %v1870, %v1938
  %v1945 = vadd.f32 %v1871, %v1939
  %v1946 = vadd.f32 %v1872, %v1940
  %v1947 = vadd.f32 %v1873, %v1941
  %v1948 = vadd.f32 %v1874, %v1942
  %v1949 = vmul.f32 %v1918, %v1879
  %v1950 = vmul.f32 %v1922, %v1880
  %v1951 = vmul.f32 %v1918, %v1881
  %v1952 = vmul.f32 %v1922, %v1882
  %v1953 = vmul.f32 %v1918, %v1883
  %v1954 = vmul.f32 %v1922, %v1884
  %v1955 = vadd.f32 %v1943, %v1949
  %v1956 = vadd.f32 %v1944, %v1950
  %v1957 = vadd.f32 %v1945, %v1951
  %v1958 = vadd.f32 %v1946, %v1952
  %v1959 = vadd.f32 %v1947, %v1953
  %v1960 = vadd.f32 %v1948, %v1954
  %s1961 = scalar_lea.vmem %s1789, 2
  %v1962 = vld [vmem:[%s1961] ss:$8 sm:$0x3]
  %s1963 = scalar_lea.vmem %s1791, 2
  %v1964 = vld [vmem:[%s1963] ss:$8 sm:$0x3]
  %v1965 = vld [vmem:[%s195] sm:$0xff]
  %v1966 = vld [vmem:[%s195 + $0x8] sm:$0xff]
  %v1967 = vld [vmem:[%s195 + $0x10] sm:$0xff]
  %v1968 = vld [vmem:[%s195 + $0x18] sm:$0xff]
  %v1969 = vld [vmem:[%s195 + $0x20] sm:$0xf]
  %v1970 = vld [vmem:[%s195 + $0x28] sm:$0xf]
  %v1971 = vld [vmem:[%s202] sm:$0xff]
  %v1972 = vld [vmem:[%s202 + $0x8] sm:$0xff]
  %v1973 = vld [vmem:[%s202 + $0x10] sm:$0xff]
  %v1974 = vld [vmem:[%s202 + $0x18] sm:$0xff]
  %v1975 = vld [vmem:[%s202 + $0x20] sm:$0xf]
  %v1976 = vld [vmem:[%s202 + $0x28] sm:$0xf]
  %v1978 = vlaneseq
  %v1979 = vshrl.u32 %v1978, 7
  %v1980 = vsub.s32 0, %v1979
  %v1981 = vrot.slane %v1962, %v1980
  %v1982 = vlaneseq
  %v1983 = vshrl.u32 %v1982, 7
  %v1984 = vsub.s32 1, %v1983
  %v1985 = vrot.slane %v1962, %v1984
  %v1988 = vmul.f32 %v1981, %v1965
  %v1989 = vmul.f32 %v1985, %v1966
  %v1990 = vmul.f32 %v1981, %v1967
  %v1991 = vmul.f32 %v1985, %v1968
  %v1992 = vmul.f32 %v1981, %v1969
  %v1993 = vmul.f32 %v1985, %v1970
  %v1994 = vadd.f32 %v1931, %v1988
  %v1995 = vadd.f32 %v1932, %v1989
  %v1996 = vadd.f32 %v1933, %v1990
  %v1997 = vadd.f32 %v1934, %v1991
  %v1998 = vadd.f32 %v1935, %v1992
  %v1999 = vadd.f32 %v1936, %v1993
  %v2001 = vlaneseq
  %v2002 = vshrl.u32 %v2001, 7
  %v2003 = vsub.s32 0, %v2002
  %v2004 = vrot.slane %v1964, %v2003
  %v2005 = vlaneseq
  %v2006 = vshrl.u32 %v2005, 7
  %v2007 = vsub.s32 1, %v2006
  %v2008 = vrot.slane %v1964, %v2007
  %v2011 = vmul.f32 %v2004, %v1971
  %v2012 = vmul.f32 %v2008, %v1972
  %v2013 = vmul.f32 %v2004, %v1973
  %v2014 = vmul.f32 %v2008, %v1974
  %v2015 = vmul.f32 %v2004, %v1975
  %v2016 = vmul.f32 %v2008, %v1976
  %v2017 = vsub.f32 %v1994, %v2011
  %v2018 = vsub.f32 %v1995, %v2012
  %v2019 = vsub.f32 %v1996, %v2013
  %v2020 = vsub.f32 %v1997, %v2014
  %v2021 = vsub.f32 %v1998, %v2015
  %v2022 = vsub.f32 %v1999, %v2016
  %v2023 = vmul.f32 %v1981, %v1971
  %v2024 = vmul.f32 %v1985, %v1972
  %v2025 = vmul.f32 %v1981, %v1973
  %v2026 = vmul.f32 %v1985, %v1974
  %v2027 = vmul.f32 %v1981, %v1975
  %v2028 = vmul.f32 %v1985, %v1976
  %v2029 = vadd.f32 %v1955, %v2023
  %v2030 = vadd.f32 %v1956, %v2024
  %v2031 = vadd.f32 %v1957, %v2025
  %v2032 = vadd.f32 %v1958, %v2026
  %v2033 = vadd.f32 %v1959, %v2027
  %v2034 = vadd.f32 %v1960, %v2028
  %v2035 = vmul.f32 %v2004, %v1965
  %v2036 = vmul.f32 %v2008, %v1966
  %v2037 = vmul.f32 %v2004, %v1967
  %v2038 = vmul.f32 %v2008, %v1968
  %v2039 = vmul.f32 %v2004, %v1969
  %v2040 = vmul.f32 %v2008, %v1970
  %v2041 = vadd.f32 %v2029, %v2035
  %v2042 = vadd.f32 %v2030, %v2036
  %v2043 = vadd.f32 %v2031, %v2037
  %v2044 = vadd.f32 %v2032, %v2038
  %v2045 = vadd.f32 %v2033, %v2039
  %v2046 = vadd.f32 %v2034, %v2040
  %s2047 = scalar_lea.vmem %s1789, 3
  %v2048 = vld [vmem:[%s2047] ss:$8 sm:$0x3]
  %s2049 = scalar_lea.vmem %s1791, 3
  %v2050 = vld [vmem:[%s2049] ss:$8 sm:$0x3]
  %v2051 = vld [vmem:[%s283] sm:$0xff]
  %v2052 = vld [vmem:[%s283 + $0x8] sm:$0xff]
  %v2053 = vld [vmem:[%s283 + $0x10] sm:$0xff]
  %v2054 = vld [vmem:[%s283 + $0x18] sm:$0xff]
  %v2055 = vld [vmem:[%s283 + $0x20] sm:$0xf]
  %v2056 = vld [vmem:[%s283 + $0x28] sm:$0xf]
  %v2057 = vld [vmem:[%s290] sm:$0xff]
  %v2058 = vld [vmem:[%s290 + $0x8] sm:$0xff]
  %v2059 = vld [vmem:[%s290 + $0x10] sm:$0xff]
  %v2060 = vld [vmem:[%s290 + $0x18] sm:$0xff]
  %v2061 = vld [vmem:[%s290 + $0x20] sm:$0xf]
  %v2062 = vld [vmem:[%s290 + $0x28] sm:$0xf]
  %v2064 = vlaneseq
  %v2065 = vshrl.u32 %v2064, 7
  %v2066 = vsub.s32 0, %v2065
  %v2067 = vrot.slane %v2048, %v2066
  %v2068 = vlaneseq
  %v2069 = vshrl.u32 %v2068, 7
  %v2070 = vsub.s32 1, %v2069
  %v2071 = vrot.slane %v2048, %v2070
  %v2074 = vmul.f32 %v2067, %v2051
  %v2075 = vmul.f32 %v2071, %v2052
  %v2076 = vmul.f32 %v2067, %v2053
  %v2077 = vmul.f32 %v2071, %v2054
  %v2078 = vmul.f32 %v2067, %v2055
  %v2079 = vmul.f32 %v2071, %v2056
  %v2080 = vadd.f32 %v2017, %v2074
  %v2081 = vadd.f32 %v2018, %v2075
  %v2082 = vadd.f32 %v2019, %v2076
  %v2083 = vadd.f32 %v2020, %v2077
  %v2084 = vadd.f32 %v2021, %v2078
  %v2085 = vadd.f32 %v2022, %v2079
  %v2087 = vlaneseq
  %v2088 = vshrl.u32 %v2087, 7
  %v2089 = vsub.s32 0, %v2088
  %v2090 = vrot.slane %v2050, %v2089
  %v2091 = vlaneseq
  %v2092 = vshrl.u32 %v2091, 7
  %v2093 = vsub.s32 1, %v2092
  %v2094 = vrot.slane %v2050, %v2093
  %v2097 = vmul.f32 %v2090, %v2057
  %v2098 = vmul.f32 %v2094, %v2058
  %v2099 = vmul.f32 %v2090, %v2059
  %v2100 = vmul.f32 %v2094, %v2060
  %v2101 = vmul.f32 %v2090, %v2061
  %v2102 = vmul.f32 %v2094, %v2062
  %v2103 = vsub.f32 %v2080, %v2097
  %v2104 = vsub.f32 %v2081, %v2098
  %v2105 = vsub.f32 %v2082, %v2099
  %v2106 = vsub.f32 %v2083, %v2100
  %v2107 = vsub.f32 %v2084, %v2101
  %v2108 = vsub.f32 %v2085, %v2102
  %v2109 = vmul.f32 %v2067, %v2057
  %v2110 = vmul.f32 %v2071, %v2058
  %v2111 = vmul.f32 %v2067, %v2059
  %v2112 = vmul.f32 %v2071, %v2060
  %v2113 = vmul.f32 %v2067, %v2061
  %v2114 = vmul.f32 %v2071, %v2062
  %v2115 = vadd.f32 %v2041, %v2109
  %v2116 = vadd.f32 %v2042, %v2110
  %v2117 = vadd.f32 %v2043, %v2111
  %v2118 = vadd.f32 %v2044, %v2112
  %v2119 = vadd.f32 %v2045, %v2113
  %v2120 = vadd.f32 %v2046, %v2114
  %v2121 = vmul.f32 %v2090, %v2051
  %v2122 = vmul.f32 %v2094, %v2052
  %v2123 = vmul.f32 %v2090, %v2053
  %v2124 = vmul.f32 %v2094, %v2054
  %v2125 = vmul.f32 %v2090, %v2055
  %v2126 = vmul.f32 %v2094, %v2056
  %v2127 = vadd.f32 %v2115, %v2121
  %v2128 = vadd.f32 %v2116, %v2122
  %v2129 = vadd.f32 %v2117, %v2123
  %v2130 = vadd.f32 %v2118, %v2124
  %v2131 = vadd.f32 %v2119, %v2125
  %v2132 = vadd.f32 %v2120, %v2126
  %s2133 = scalar_lea.vmem %s1789, 4
  %v2134 = vld [vmem:[%s2133] ss:$8 sm:$0x3]
  %s2135 = scalar_lea.vmem %s1791, 4
  %v2136 = vld [vmem:[%s2135] ss:$8 sm:$0x3]
  %v2137 = vld [vmem:[%s371] sm:$0xff]
  %v2138 = vld [vmem:[%s371 + $0x8] sm:$0xff]
  %v2139 = vld [vmem:[%s371 + $0x10] sm:$0xff]
  %v2140 = vld [vmem:[%s371 + $0x18] sm:$0xff]
  %v2141 = vld [vmem:[%s371 + $0x20] sm:$0xf]
  %v2142 = vld [vmem:[%s371 + $0x28] sm:$0xf]
  %v2143 = vld [vmem:[%s378] sm:$0xff]
  %v2144 = vld [vmem:[%s378 + $0x8] sm:$0xff]
  %v2145 = vld [vmem:[%s378 + $0x10] sm:$0xff]
  %v2146 = vld [vmem:[%s378 + $0x18] sm:$0xff]
  %v2147 = vld [vmem:[%s378 + $0x20] sm:$0xf]
  %v2148 = vld [vmem:[%s378 + $0x28] sm:$0xf]
  %v2150 = vlaneseq
  %v2151 = vshrl.u32 %v2150, 7
  %v2152 = vsub.s32 0, %v2151
  %v2153 = vrot.slane %v2134, %v2152
  %v2154 = vlaneseq
  %v2155 = vshrl.u32 %v2154, 7
  %v2156 = vsub.s32 1, %v2155
  %v2157 = vrot.slane %v2134, %v2156
  %v2160 = vmul.f32 %v2153, %v2137
  %v2161 = vmul.f32 %v2157, %v2138
  %v2162 = vmul.f32 %v2153, %v2139
  %v2163 = vmul.f32 %v2157, %v2140
  %v2164 = vmul.f32 %v2153, %v2141
  %v2165 = vmul.f32 %v2157, %v2142
  %v2166 = vadd.f32 %v2103, %v2160
  %v2167 = vadd.f32 %v2104, %v2161
  %v2168 = vadd.f32 %v2105, %v2162
  %v2169 = vadd.f32 %v2106, %v2163
  %v2170 = vadd.f32 %v2107, %v2164
  %v2171 = vadd.f32 %v2108, %v2165
  %v2173 = vlaneseq
  %v2174 = vshrl.u32 %v2173, 7
  %v2175 = vsub.s32 0, %v2174
  %v2176 = vrot.slane %v2136, %v2175
  %v2177 = vlaneseq
  %v2178 = vshrl.u32 %v2177, 7
  %v2179 = vsub.s32 1, %v2178
  %v2180 = vrot.slane %v2136, %v2179
  %v2183 = vmul.f32 %v2176, %v2143
  %v2184 = vmul.f32 %v2180, %v2144
  %v2185 = vmul.f32 %v2176, %v2145
  %v2186 = vmul.f32 %v2180, %v2146
  %v2187 = vmul.f32 %v2176, %v2147
  %v2188 = vmul.f32 %v2180, %v2148
  %v2189 = vsub.f32 %v2166, %v2183
  %v2190 = vsub.f32 %v2167, %v2184
  %v2191 = vsub.f32 %v2168, %v2185
  %v2192 = vsub.f32 %v2169, %v2186
  %v2193 = vsub.f32 %v2170, %v2187
  %v2194 = vsub.f32 %v2171, %v2188
  %v2195 = vmul.f32 %v2153, %v2143
  %v2196 = vmul.f32 %v2157, %v2144
  %v2197 = vmul.f32 %v2153, %v2145
  %v2198 = vmul.f32 %v2157, %v2146
  %v2199 = vmul.f32 %v2153, %v2147
  %v2200 = vmul.f32 %v2157, %v2148
  %v2201 = vadd.f32 %v2127, %v2195
  %v2202 = vadd.f32 %v2128, %v2196
  %v2203 = vadd.f32 %v2129, %v2197
  %v2204 = vadd.f32 %v2130, %v2198
  %v2205 = vadd.f32 %v2131, %v2199
  %v2206 = vadd.f32 %v2132, %v2200
  %v2207 = vmul.f32 %v2176, %v2137
  %v2208 = vmul.f32 %v2180, %v2138
  %v2209 = vmul.f32 %v2176, %v2139
  %v2210 = vmul.f32 %v2180, %v2140
  %v2211 = vmul.f32 %v2176, %v2141
  %v2212 = vmul.f32 %v2180, %v2142
  %v2213 = vadd.f32 %v2201, %v2207
  %v2214 = vadd.f32 %v2202, %v2208
  %v2215 = vadd.f32 %v2203, %v2209
  %v2216 = vadd.f32 %v2204, %v2210
  %v2217 = vadd.f32 %v2205, %v2211
  %v2218 = vadd.f32 %v2206, %v2212
  %s2219 = scalar_lea.vmem %s1789, 5
  %v2220 = vld [vmem:[%s2219] ss:$8 sm:$0x3]
  %s2221 = scalar_lea.vmem %s1791, 5
  %v2222 = vld [vmem:[%s2221] ss:$8 sm:$0x3]
  %v2223 = vld [vmem:[%s459] sm:$0xff]
  %v2224 = vld [vmem:[%s459 + $0x8] sm:$0xff]
  %v2225 = vld [vmem:[%s459 + $0x10] sm:$0xff]
  %v2226 = vld [vmem:[%s459 + $0x18] sm:$0xff]
  %v2227 = vld [vmem:[%s459 + $0x20] sm:$0xf]
  %v2228 = vld [vmem:[%s459 + $0x28] sm:$0xf]
  %v2229 = vld [vmem:[%s466] sm:$0xff]
  %v2230 = vld [vmem:[%s466 + $0x8] sm:$0xff]
  %v2231 = vld [vmem:[%s466 + $0x10] sm:$0xff]
  %v2232 = vld [vmem:[%s466 + $0x18] sm:$0xff]
  %v2233 = vld [vmem:[%s466 + $0x20] sm:$0xf]
  %v2234 = vld [vmem:[%s466 + $0x28] sm:$0xf]
  %v2236 = vlaneseq
  %v2237 = vshrl.u32 %v2236, 7
  %v2238 = vsub.s32 0, %v2237
  %v2239 = vrot.slane %v2220, %v2238
  %v2240 = vlaneseq
  %v2241 = vshrl.u32 %v2240, 7
  %v2242 = vsub.s32 1, %v2241
  %v2243 = vrot.slane %v2220, %v2242
  %v2246 = vmul.f32 %v2239, %v2223
  %v2247 = vmul.f32 %v2243, %v2224
  %v2248 = vmul.f32 %v2239, %v2225
  %v2249 = vmul.f32 %v2243, %v2226
  %v2250 = vmul.f32 %v2239, %v2227
  %v2251 = vmul.f32 %v2243, %v2228
  %v2252 = vadd.f32 %v2189, %v2246
  %v2253 = vadd.f32 %v2190, %v2247
  %v2254 = vadd.f32 %v2191, %v2248
  %v2255 = vadd.f32 %v2192, %v2249
  %v2256 = vadd.f32 %v2193, %v2250
  %v2257 = vadd.f32 %v2194, %v2251
  %v2259 = vlaneseq
  %v2260 = vshrl.u32 %v2259, 7
  %v2261 = vsub.s32 0, %v2260
  %v2262 = vrot.slane %v2222, %v2261
  %v2263 = vlaneseq
  %v2264 = vshrl.u32 %v2263, 7
  %v2265 = vsub.s32 1, %v2264
  %v2266 = vrot.slane %v2222, %v2265
  %v2269 = vmul.f32 %v2262, %v2229
  %v2270 = vmul.f32 %v2266, %v2230
  %v2271 = vmul.f32 %v2262, %v2231
  %v2272 = vmul.f32 %v2266, %v2232
  %v2273 = vmul.f32 %v2262, %v2233
  %v2274 = vmul.f32 %v2266, %v2234
  %v2275 = vsub.f32 %v2252, %v2269
  %v2276 = vsub.f32 %v2253, %v2270
  %v2277 = vsub.f32 %v2254, %v2271
  %v2278 = vsub.f32 %v2255, %v2272
  %v2279 = vsub.f32 %v2256, %v2273
  %v2280 = vsub.f32 %v2257, %v2274
  %v2281 = vmul.f32 %v2239, %v2229
  %v2282 = vmul.f32 %v2243, %v2230
  %v2283 = vmul.f32 %v2239, %v2231
  %v2284 = vmul.f32 %v2243, %v2232
  %v2285 = vmul.f32 %v2239, %v2233
  %v2286 = vmul.f32 %v2243, %v2234
  %v2287 = vadd.f32 %v2213, %v2281
  %v2288 = vadd.f32 %v2214, %v2282
  %v2289 = vadd.f32 %v2215, %v2283
  %v2290 = vadd.f32 %v2216, %v2284
  %v2291 = vadd.f32 %v2217, %v2285
  %v2292 = vadd.f32 %v2218, %v2286
  %v2293 = vmul.f32 %v2262, %v2223
  %v2294 = vmul.f32 %v2266, %v2224
  %v2295 = vmul.f32 %v2262, %v2225
  %v2296 = vmul.f32 %v2266, %v2226
  %v2297 = vmul.f32 %v2262, %v2227
  %v2298 = vmul.f32 %v2266, %v2228
  %v2299 = vadd.f32 %v2287, %v2293
  %v2300 = vadd.f32 %v2288, %v2294
  %v2301 = vadd.f32 %v2289, %v2295
  %v2302 = vadd.f32 %v2290, %v2296
  %v2303 = vadd.f32 %v2291, %v2297
  %v2304 = vadd.f32 %v2292, %v2298
  %s2305 = scalar_lea.vmem %s1789, 6
  %v2306 = vld [vmem:[%s2305] ss:$8 sm:$0x3]
  %s2307 = scalar_lea.vmem %s1791, 6
  %v2308 = vld [vmem:[%s2307] ss:$8 sm:$0x3]
  %v2309 = vld [vmem:[%s547] sm:$0xff]
  %v2310 = vld [vmem:[%s547 + $0x8] sm:$0xff]
  %v2311 = vld [vmem:[%s547 + $0x10] sm:$0xff]
  %v2312 = vld [vmem:[%s547 + $0x18] sm:$0xff]
  %v2313 = vld [vmem:[%s547 + $0x20] sm:$0xf]
  %v2314 = vld [vmem:[%s547 + $0x28] sm:$0xf]
  %v2315 = vld [vmem:[%s554] sm:$0xff]
  %v2316 = vld [vmem:[%s554 + $0x8] sm:$0xff]
  %v2317 = vld [vmem:[%s554 + $0x10] sm:$0xff]
  %v2318 = vld [vmem:[%s554 + $0x18] sm:$0xff]
  %v2319 = vld [vmem:[%s554 + $0x20] sm:$0xf]
  %v2320 = vld [vmem:[%s554 + $0x28] sm:$0xf]
  %v2322 = vlaneseq
  %v2323 = vshrl.u32 %v2322, 7
  %v2324 = vsub.s32 0, %v2323
  %v2325 = vrot.slane %v2306, %v2324
  %v2326 = vlaneseq
  %v2327 = vshrl.u32 %v2326, 7
  %v2328 = vsub.s32 1, %v2327
  %v2329 = vrot.slane %v2306, %v2328
  %v2332 = vmul.f32 %v2325, %v2309
  %v2333 = vmul.f32 %v2329, %v2310
  %v2334 = vmul.f32 %v2325, %v2311
  %v2335 = vmul.f32 %v2329, %v2312
  %v2336 = vmul.f32 %v2325, %v2313
  %v2337 = vmul.f32 %v2329, %v2314
  %v2338 = vadd.f32 %v2275, %v2332
  %v2339 = vadd.f32 %v2276, %v2333
  %v2340 = vadd.f32 %v2277, %v2334
  %v2341 = vadd.f32 %v2278, %v2335
  %v2342 = vadd.f32 %v2279, %v2336
  %v2343 = vadd.f32 %v2280, %v2337
  %v2345 = vlaneseq
  %v2346 = vshrl.u32 %v2345, 7
  %v2347 = vsub.s32 0, %v2346
  %v2348 = vrot.slane %v2308, %v2347
  %v2349 = vlaneseq
  %v2350 = vshrl.u32 %v2349, 7
  %v2351 = vsub.s32 1, %v2350
  %v2352 = vrot.slane %v2308, %v2351
  %v2355 = vmul.f32 %v2348, %v2315
  %v2356 = vmul.f32 %v2352, %v2316
  %v2357 = vmul.f32 %v2348, %v2317
  %v2358 = vmul.f32 %v2352, %v2318
  %v2359 = vmul.f32 %v2348, %v2319
  %v2360 = vmul.f32 %v2352, %v2320
  %v2361 = vsub.f32 %v2338, %v2355
  %v2362 = vsub.f32 %v2339, %v2356
  %v2363 = vsub.f32 %v2340, %v2357
  %v2364 = vsub.f32 %v2341, %v2358
  %v2365 = vsub.f32 %v2342, %v2359
  %v2366 = vsub.f32 %v2343, %v2360
  %v2367 = vmul.f32 %v2325, %v2315
  %v2368 = vmul.f32 %v2329, %v2316
  %v2369 = vmul.f32 %v2325, %v2317
  %v2370 = vmul.f32 %v2329, %v2318
  %v2371 = vmul.f32 %v2325, %v2319
  %v2372 = vmul.f32 %v2329, %v2320
  %v2373 = vadd.f32 %v2299, %v2367
  %v2374 = vadd.f32 %v2300, %v2368
  %v2375 = vadd.f32 %v2301, %v2369
  %v2376 = vadd.f32 %v2302, %v2370
  %v2377 = vadd.f32 %v2303, %v2371
  %v2378 = vadd.f32 %v2304, %v2372
  %v2379 = vmul.f32 %v2348, %v2309
  %v2380 = vmul.f32 %v2352, %v2310
  %v2381 = vmul.f32 %v2348, %v2311
  %v2382 = vmul.f32 %v2352, %v2312
  %v2383 = vmul.f32 %v2348, %v2313
  %v2384 = vmul.f32 %v2352, %v2314
  %v2385 = vadd.f32 %v2373, %v2379
  %v2386 = vadd.f32 %v2374, %v2380
  %v2387 = vadd.f32 %v2375, %v2381
  %v2388 = vadd.f32 %v2376, %v2382
  %v2389 = vadd.f32 %v2377, %v2383
  %v2390 = vadd.f32 %v2378, %v2384
  %s2391 = scalar_lea.vmem %s1789, 7
  %v2392 = vld [vmem:[%s2391] ss:$8 sm:$0x3]
  %s2393 = scalar_lea.vmem %s1791, 7
  %v2394 = vld [vmem:[%s2393] ss:$8 sm:$0x3]
  %v2395 = vld [vmem:[%s635] sm:$0xff]
  %v2396 = vld [vmem:[%s635 + $0x8] sm:$0xff]
  %v2397 = vld [vmem:[%s635 + $0x10] sm:$0xff]
  %v2398 = vld [vmem:[%s635 + $0x18] sm:$0xff]
  %v2399 = vld [vmem:[%s635 + $0x20] sm:$0xf]
  %v2400 = vld [vmem:[%s635 + $0x28] sm:$0xf]
  %v2401 = vld [vmem:[%s642] sm:$0xff]
  %v2402 = vld [vmem:[%s642 + $0x8] sm:$0xff]
  %v2403 = vld [vmem:[%s642 + $0x10] sm:$0xff]
  %v2404 = vld [vmem:[%s642 + $0x18] sm:$0xff]
  %v2405 = vld [vmem:[%s642 + $0x20] sm:$0xf]
  %v2406 = vld [vmem:[%s642 + $0x28] sm:$0xf]
  %v2408 = vlaneseq
  %v2409 = vshrl.u32 %v2408, 7
  %v2410 = vsub.s32 0, %v2409
  %v2411 = vrot.slane %v2392, %v2410
  %v2412 = vlaneseq
  %v2413 = vshrl.u32 %v2412, 7
  %v2414 = vsub.s32 1, %v2413
  %v2415 = vrot.slane %v2392, %v2414
  %v2418 = vmul.f32 %v2411, %v2395
  %v2419 = vmul.f32 %v2415, %v2396
  %v2420 = vmul.f32 %v2411, %v2397
  %v2421 = vmul.f32 %v2415, %v2398
  %v2422 = vmul.f32 %v2411, %v2399
  %v2423 = vmul.f32 %v2415, %v2400
  %v2424 = vadd.f32 %v2361, %v2418
  %v2425 = vadd.f32 %v2362, %v2419
  %v2426 = vadd.f32 %v2363, %v2420
  %v2427 = vadd.f32 %v2364, %v2421
  %v2428 = vadd.f32 %v2365, %v2422
  %v2429 = vadd.f32 %v2366, %v2423
  %v2431 = vlaneseq
  %v2432 = vshrl.u32 %v2431, 7
  %v2433 = vsub.s32 0, %v2432
  %v2434 = vrot.slane %v2394, %v2433
  %v2435 = vlaneseq
  %v2436 = vshrl.u32 %v2435, 7
  %v2437 = vsub.s32 1, %v2436
  %v2438 = vrot.slane %v2394, %v2437
  %v2441 = vmul.f32 %v2434, %v2401
  %v2442 = vmul.f32 %v2438, %v2402
  %v2443 = vmul.f32 %v2434, %v2403
  %v2444 = vmul.f32 %v2438, %v2404
  %v2445 = vmul.f32 %v2434, %v2405
  %v2446 = vmul.f32 %v2438, %v2406
  %v2447 = vsub.f32 %v2424, %v2441
  %v2448 = vsub.f32 %v2425, %v2442
  %v2449 = vsub.f32 %v2426, %v2443
  %v2450 = vsub.f32 %v2427, %v2444
  %v2451 = vsub.f32 %v2428, %v2445
  %v2452 = vsub.f32 %v2429, %v2446
  %v2453 = vmul.f32 %v2411, %v2401
  %v2454 = vmul.f32 %v2415, %v2402
  %v2455 = vmul.f32 %v2411, %v2403
  %v2456 = vmul.f32 %v2415, %v2404
  %v2457 = vmul.f32 %v2411, %v2405
  %v2458 = vmul.f32 %v2415, %v2406
  %v2459 = vadd.f32 %v2385, %v2453
  %v2460 = vadd.f32 %v2386, %v2454
  %v2461 = vadd.f32 %v2387, %v2455
  %v2462 = vadd.f32 %v2388, %v2456
  %v2463 = vadd.f32 %v2389, %v2457
  %v2464 = vadd.f32 %v2390, %v2458
  %v2465 = vmul.f32 %v2434, %v2395
  %v2466 = vmul.f32 %v2438, %v2396
  %v2467 = vmul.f32 %v2434, %v2397
  %v2468 = vmul.f32 %v2438, %v2398
  %v2469 = vmul.f32 %v2434, %v2399
  %v2470 = vmul.f32 %v2438, %v2400
  %v2471 = vadd.f32 %v2459, %v2465
  %v2472 = vadd.f32 %v2460, %v2466
  %v2473 = vadd.f32 %v2461, %v2467
  %v2474 = vadd.f32 %v2462, %v2468
  %v2475 = vadd.f32 %v2463, %v2469
  %v2476 = vadd.f32 %v2464, %v2470
  %s2477 = scalar_lea.vmem %s1789, 16
  %v2478 = vld [vmem:[%s2477] ss:$8 sm:$0x3]
  %s2479 = scalar_lea.vmem %s1791, 16
  %v2480 = vld [vmem:[%s2479] ss:$8 sm:$0x3]
  %v2481 = vld [vmem:[%s723] sm:$0xff]
  %v2482 = vld [vmem:[%s723 + $0x8] sm:$0xff]
  %v2483 = vld [vmem:[%s723 + $0x10] sm:$0xff]
  %v2484 = vld [vmem:[%s723 + $0x18] sm:$0xff]
  %v2485 = vld [vmem:[%s723 + $0x20] sm:$0xf]
  %v2486 = vld [vmem:[%s723 + $0x28] sm:$0xf]
  %v2487 = vld [vmem:[%s730] sm:$0xff]
  %v2488 = vld [vmem:[%s730 + $0x8] sm:$0xff]
  %v2489 = vld [vmem:[%s730 + $0x10] sm:$0xff]
  %v2490 = vld [vmem:[%s730 + $0x18] sm:$0xff]
  %v2491 = vld [vmem:[%s730 + $0x20] sm:$0xf]
  %v2492 = vld [vmem:[%s730 + $0x28] sm:$0xf]
  %v2494 = vlaneseq
  %v2495 = vshrl.u32 %v2494, 7
  %v2496 = vsub.s32 0, %v2495
  %v2497 = vrot.slane %v2478, %v2496
  %v2498 = vlaneseq
  %v2499 = vshrl.u32 %v2498, 7
  %v2500 = vsub.s32 1, %v2499
  %v2501 = vrot.slane %v2478, %v2500
  %v2504 = vmul.f32 %v2497, %v2481
  %v2505 = vmul.f32 %v2501, %v2482
  %v2506 = vmul.f32 %v2497, %v2483
  %v2507 = vmul.f32 %v2501, %v2484
  %v2508 = vmul.f32 %v2497, %v2485
  %v2509 = vmul.f32 %v2501, %v2486
  %v2510 = vadd.f32 %v2447, %v2504
  %v2511 = vadd.f32 %v2448, %v2505
  %v2512 = vadd.f32 %v2449, %v2506
  %v2513 = vadd.f32 %v2450, %v2507
  %v2514 = vadd.f32 %v2451, %v2508
  %v2515 = vadd.f32 %v2452, %v2509
  %v2517 = vlaneseq
  %v2518 = vshrl.u32 %v2517, 7
  %v2519 = vsub.s32 0, %v2518
  %v2520 = vrot.slane %v2480, %v2519
  %v2521 = vlaneseq
  %v2522 = vshrl.u32 %v2521, 7
  %v2523 = vsub.s32 1, %v2522
  %v2524 = vrot.slane %v2480, %v2523
  %v2527 = vmul.f32 %v2520, %v2487
  %v2528 = vmul.f32 %v2524, %v2488
  %v2529 = vmul.f32 %v2520, %v2489
  %v2530 = vmul.f32 %v2524, %v2490
  %v2531 = vmul.f32 %v2520, %v2491
  %v2532 = vmul.f32 %v2524, %v2492
  %v2533 = vsub.f32 %v2510, %v2527
  %v2534 = vsub.f32 %v2511, %v2528
  %v2535 = vsub.f32 %v2512, %v2529
  %v2536 = vsub.f32 %v2513, %v2530
  %v2537 = vsub.f32 %v2514, %v2531
  %v2538 = vsub.f32 %v2515, %v2532
  %v2539 = vmul.f32 %v2497, %v2487
  %v2540 = vmul.f32 %v2501, %v2488
  %v2541 = vmul.f32 %v2497, %v2489
  %v2542 = vmul.f32 %v2501, %v2490
  %v2543 = vmul.f32 %v2497, %v2491
  %v2544 = vmul.f32 %v2501, %v2492
  %v2545 = vadd.f32 %v2471, %v2539
  %v2546 = vadd.f32 %v2472, %v2540
  %v2547 = vadd.f32 %v2473, %v2541
  %v2548 = vadd.f32 %v2474, %v2542
  %v2549 = vadd.f32 %v2475, %v2543
  %v2550 = vadd.f32 %v2476, %v2544
  %v2551 = vmul.f32 %v2520, %v2481
  %v2552 = vmul.f32 %v2524, %v2482
  %v2553 = vmul.f32 %v2520, %v2483
  %v2554 = vmul.f32 %v2524, %v2484
  %v2555 = vmul.f32 %v2520, %v2485
  %v2556 = vmul.f32 %v2524, %v2486
  %v2557 = vadd.f32 %v2545, %v2551
  %v2558 = vadd.f32 %v2546, %v2552
  %v2559 = vadd.f32 %v2547, %v2553
  %v2560 = vadd.f32 %v2548, %v2554
  %v2561 = vadd.f32 %v2549, %v2555
  %v2562 = vadd.f32 %v2550, %v2556
  %s2563 = scalar_lea.vmem %s1789, 17
  %v2564 = vld [vmem:[%s2563] ss:$8 sm:$0x3]
  %s2565 = scalar_lea.vmem %s1791, 17
  %v2566 = vld [vmem:[%s2565] ss:$8 sm:$0x3]
  %v2567 = vld [vmem:[%s811] sm:$0xff]
  %v2568 = vld [vmem:[%s811 + $0x8] sm:$0xff]
  %v2569 = vld [vmem:[%s811 + $0x10] sm:$0xff]
  %v2570 = vld [vmem:[%s811 + $0x18] sm:$0xff]
  %v2571 = vld [vmem:[%s811 + $0x20] sm:$0xf]
  %v2572 = vld [vmem:[%s811 + $0x28] sm:$0xf]
  %v2573 = vld [vmem:[%s818] sm:$0xff]
  %v2574 = vld [vmem:[%s818 + $0x8] sm:$0xff]
  %v2575 = vld [vmem:[%s818 + $0x10] sm:$0xff]
  %v2576 = vld [vmem:[%s818 + $0x18] sm:$0xff]
  %v2577 = vld [vmem:[%s818 + $0x20] sm:$0xf]
  %v2578 = vld [vmem:[%s818 + $0x28] sm:$0xf]
  %v2580 = vlaneseq
  %v2581 = vshrl.u32 %v2580, 7
  %v2582 = vsub.s32 0, %v2581
  %v2583 = vrot.slane %v2564, %v2582
  %v2584 = vlaneseq
  %v2585 = vshrl.u32 %v2584, 7
  %v2586 = vsub.s32 1, %v2585
  %v2587 = vrot.slane %v2564, %v2586
  %v2590 = vmul.f32 %v2583, %v2567
  %v2591 = vmul.f32 %v2587, %v2568
  %v2592 = vmul.f32 %v2583, %v2569
  %v2593 = vmul.f32 %v2587, %v2570
  %v2594 = vmul.f32 %v2583, %v2571
  %v2595 = vmul.f32 %v2587, %v2572
  %v2596 = vadd.f32 %v2533, %v2590
  %v2597 = vadd.f32 %v2534, %v2591
  %v2598 = vadd.f32 %v2535, %v2592
  %v2599 = vadd.f32 %v2536, %v2593
  %v2600 = vadd.f32 %v2537, %v2594
  %v2601 = vadd.f32 %v2538, %v2595
  %v2603 = vlaneseq
  %v2604 = vshrl.u32 %v2603, 7
  %v2605 = vsub.s32 0, %v2604
  %v2606 = vrot.slane %v2566, %v2605
  %v2607 = vlaneseq
  %v2608 = vshrl.u32 %v2607, 7
  %v2609 = vsub.s32 1, %v2608
  %v2610 = vrot.slane %v2566, %v2609
  %v2613 = vmul.f32 %v2606, %v2573
  %v2614 = vmul.f32 %v2610, %v2574
  %v2615 = vmul.f32 %v2606, %v2575
  %v2616 = vmul.f32 %v2610, %v2576
  %v2617 = vmul.f32 %v2606, %v2577
  %v2618 = vmul.f32 %v2610, %v2578
  %v2619 = vsub.f32 %v2596, %v2613
  %v2620 = vsub.f32 %v2597, %v2614
  %v2621 = vsub.f32 %v2598, %v2615
  %v2622 = vsub.f32 %v2599, %v2616
  %v2623 = vsub.f32 %v2600, %v2617
  %v2624 = vsub.f32 %v2601, %v2618
  %v2625 = vmul.f32 %v2583, %v2573
  %v2626 = vmul.f32 %v2587, %v2574
  %v2627 = vmul.f32 %v2583, %v2575
  %v2628 = vmul.f32 %v2587, %v2576
  %v2629 = vmul.f32 %v2583, %v2577
  %v2630 = vmul.f32 %v2587, %v2578
  %v2631 = vadd.f32 %v2557, %v2625
  %v2632 = vadd.f32 %v2558, %v2626
  %v2633 = vadd.f32 %v2559, %v2627
  %v2634 = vadd.f32 %v2560, %v2628
  %v2635 = vadd.f32 %v2561, %v2629
  %v2636 = vadd.f32 %v2562, %v2630
  %v2637 = vmul.f32 %v2606, %v2567
  %v2638 = vmul.f32 %v2610, %v2568
  %v2639 = vmul.f32 %v2606, %v2569
  %v2640 = vmul.f32 %v2610, %v2570
  %v2641 = vmul.f32 %v2606, %v2571
  %v2642 = vmul.f32 %v2610, %v2572
  %v2643 = vadd.f32 %v2631, %v2637
  %v2644 = vadd.f32 %v2632, %v2638
  %v2645 = vadd.f32 %v2633, %v2639
  %v2646 = vadd.f32 %v2634, %v2640
  %v2647 = vadd.f32 %v2635, %v2641
  %v2648 = vadd.f32 %v2636, %v2642
  %s2649 = scalar_lea.vmem %s1789, 18
  %v2650 = vld [vmem:[%s2649] ss:$8 sm:$0x3]
  %s2651 = scalar_lea.vmem %s1791, 18
  %v2652 = vld [vmem:[%s2651] ss:$8 sm:$0x3]
  %v2653 = vld [vmem:[%s899] sm:$0xff]
  %v2654 = vld [vmem:[%s899 + $0x8] sm:$0xff]
  %v2655 = vld [vmem:[%s899 + $0x10] sm:$0xff]
  %v2656 = vld [vmem:[%s899 + $0x18] sm:$0xff]
  %v2657 = vld [vmem:[%s899 + $0x20] sm:$0xf]
  %v2658 = vld [vmem:[%s899 + $0x28] sm:$0xf]
  %v2659 = vld [vmem:[%s906] sm:$0xff]
  %v2660 = vld [vmem:[%s906 + $0x8] sm:$0xff]
  %v2661 = vld [vmem:[%s906 + $0x10] sm:$0xff]
  %v2662 = vld [vmem:[%s906 + $0x18] sm:$0xff]
  %v2663 = vld [vmem:[%s906 + $0x20] sm:$0xf]
  %v2664 = vld [vmem:[%s906 + $0x28] sm:$0xf]
  %v2666 = vlaneseq
  %v2667 = vshrl.u32 %v2666, 7
  %v2668 = vsub.s32 0, %v2667
  %v2669 = vrot.slane %v2650, %v2668
  %v2670 = vlaneseq
  %v2671 = vshrl.u32 %v2670, 7
  %v2672 = vsub.s32 1, %v2671
  %v2673 = vrot.slane %v2650, %v2672
  %v2676 = vmul.f32 %v2669, %v2653
  %v2677 = vmul.f32 %v2673, %v2654
  %v2678 = vmul.f32 %v2669, %v2655
  %v2679 = vmul.f32 %v2673, %v2656
  %v2680 = vmul.f32 %v2669, %v2657
  %v2681 = vmul.f32 %v2673, %v2658
  %v2682 = vadd.f32 %v2619, %v2676
  %v2683 = vadd.f32 %v2620, %v2677
  %v2684 = vadd.f32 %v2621, %v2678
  %v2685 = vadd.f32 %v2622, %v2679
  %v2686 = vadd.f32 %v2623, %v2680
  %v2687 = vadd.f32 %v2624, %v2681
  %v2689 = vlaneseq
  %v2690 = vshrl.u32 %v2689, 7
  %v2691 = vsub.s32 0, %v2690
  %v2692 = vrot.slane %v2652, %v2691
  %v2693 = vlaneseq
  %v2694 = vshrl.u32 %v2693, 7
  %v2695 = vsub.s32 1, %v2694
  %v2696 = vrot.slane %v2652, %v2695
  %v2699 = vmul.f32 %v2692, %v2659
  %v2700 = vmul.f32 %v2696, %v2660
  %v2701 = vmul.f32 %v2692, %v2661
  %v2702 = vmul.f32 %v2696, %v2662
  %v2703 = vmul.f32 %v2692, %v2663
  %v2704 = vmul.f32 %v2696, %v2664
  %v2705 = vsub.f32 %v2682, %v2699
  %v2706 = vsub.f32 %v2683, %v2700
  %v2707 = vsub.f32 %v2684, %v2701
  %v2708 = vsub.f32 %v2685, %v2702
  %v2709 = vsub.f32 %v2686, %v2703
  %v2710 = vsub.f32 %v2687, %v2704
  %v2711 = vmul.f32 %v2669, %v2659
  %v2712 = vmul.f32 %v2673, %v2660
  %v2713 = vmul.f32 %v2669, %v2661
  %v2714 = vmul.f32 %v2673, %v2662
  %v2715 = vmul.f32 %v2669, %v2663
  %v2716 = vmul.f32 %v2673, %v2664
  %v2717 = vadd.f32 %v2643, %v2711
  %v2718 = vadd.f32 %v2644, %v2712
  %v2719 = vadd.f32 %v2645, %v2713
  %v2720 = vadd.f32 %v2646, %v2714
  %v2721 = vadd.f32 %v2647, %v2715
  %v2722 = vadd.f32 %v2648, %v2716
  %v2723 = vmul.f32 %v2692, %v2653
  %v2724 = vmul.f32 %v2696, %v2654
  %v2725 = vmul.f32 %v2692, %v2655
  %v2726 = vmul.f32 %v2696, %v2656
  %v2727 = vmul.f32 %v2692, %v2657
  %v2728 = vmul.f32 %v2696, %v2658
  %v2729 = vadd.f32 %v2717, %v2723
  %v2730 = vadd.f32 %v2718, %v2724
  %v2731 = vadd.f32 %v2719, %v2725
  %v2732 = vadd.f32 %v2720, %v2726
  %v2733 = vadd.f32 %v2721, %v2727
  %v2734 = vadd.f32 %v2722, %v2728
  %s2735 = scalar_lea.vmem %s1789, 19
  %v2736 = vld [vmem:[%s2735] ss:$8 sm:$0x3]
  %s2737 = scalar_lea.vmem %s1791, 19
  %v2738 = vld [vmem:[%s2737] ss:$8 sm:$0x3]
  %v2739 = vld [vmem:[%s987] sm:$0xff]
  %v2740 = vld [vmem:[%s987 + $0x8] sm:$0xff]
  %v2741 = vld [vmem:[%s987 + $0x10] sm:$0xff]
  %v2742 = vld [vmem:[%s987 + $0x18] sm:$0xff]
  %v2743 = vld [vmem:[%s987 + $0x20] sm:$0xf]
  %v2744 = vld [vmem:[%s987 + $0x28] sm:$0xf]
  %v2745 = vld [vmem:[%s994] sm:$0xff]
  %v2746 = vld [vmem:[%s994 + $0x8] sm:$0xff]
  %v2747 = vld [vmem:[%s994 + $0x10] sm:$0xff]
  %v2748 = vld [vmem:[%s994 + $0x18] sm:$0xff]
  %v2749 = vld [vmem:[%s994 + $0x20] sm:$0xf]
  %v2750 = vld [vmem:[%s994 + $0x28] sm:$0xf]
  %v2752 = vlaneseq
  %v2753 = vshrl.u32 %v2752, 7
  %v2754 = vsub.s32 0, %v2753
  %v2755 = vrot.slane %v2736, %v2754
  %v2756 = vlaneseq
  %v2757 = vshrl.u32 %v2756, 7
  %v2758 = vsub.s32 1, %v2757
  %v2759 = vrot.slane %v2736, %v2758
  %v2762 = vmul.f32 %v2755, %v2739
  %v2763 = vmul.f32 %v2759, %v2740
  %v2764 = vmul.f32 %v2755, %v2741
  %v2765 = vmul.f32 %v2759, %v2742
  %v2766 = vmul.f32 %v2755, %v2743
  %v2767 = vmul.f32 %v2759, %v2744
  %v2768 = vadd.f32 %v2705, %v2762
  %v2769 = vadd.f32 %v2706, %v2763
  %v2770 = vadd.f32 %v2707, %v2764
  %v2771 = vadd.f32 %v2708, %v2765
  %v2772 = vadd.f32 %v2709, %v2766
  %v2773 = vadd.f32 %v2710, %v2767
  %v2775 = vlaneseq
  %v2776 = vshrl.u32 %v2775, 7
  %v2777 = vsub.s32 0, %v2776
  %v2778 = vrot.slane %v2738, %v2777
  %v2779 = vlaneseq
  %v2780 = vshrl.u32 %v2779, 7
  %v2781 = vsub.s32 1, %v2780
  %v2782 = vrot.slane %v2738, %v2781
  %v2785 = vmul.f32 %v2778, %v2745
  %v2786 = vmul.f32 %v2782, %v2746
  %v2787 = vmul.f32 %v2778, %v2747
  %v2788 = vmul.f32 %v2782, %v2748
  %v2789 = vmul.f32 %v2778, %v2749
  %v2790 = vmul.f32 %v2782, %v2750
  %v2791 = vsub.f32 %v2768, %v2785
  %v2792 = vsub.f32 %v2769, %v2786
  %v2793 = vsub.f32 %v2770, %v2787
  %v2794 = vsub.f32 %v2771, %v2788
  %v2795 = vsub.f32 %v2772, %v2789
  %v2796 = vsub.f32 %v2773, %v2790
  %v2797 = vmul.f32 %v2755, %v2745
  %v2798 = vmul.f32 %v2759, %v2746
  %v2799 = vmul.f32 %v2755, %v2747
  %v2800 = vmul.f32 %v2759, %v2748
  %v2801 = vmul.f32 %v2755, %v2749
  %v2802 = vmul.f32 %v2759, %v2750
  %v2803 = vadd.f32 %v2729, %v2797
  %v2804 = vadd.f32 %v2730, %v2798
  %v2805 = vadd.f32 %v2731, %v2799
  %v2806 = vadd.f32 %v2732, %v2800
  %v2807 = vadd.f32 %v2733, %v2801
  %v2808 = vadd.f32 %v2734, %v2802
  %v2809 = vmul.f32 %v2778, %v2739
  %v2810 = vmul.f32 %v2782, %v2740
  %v2811 = vmul.f32 %v2778, %v2741
  %v2812 = vmul.f32 %v2782, %v2742
  %v2813 = vmul.f32 %v2778, %v2743
  %v2814 = vmul.f32 %v2782, %v2744
  %v2815 = vadd.f32 %v2803, %v2809
  %v2816 = vadd.f32 %v2804, %v2810
  %v2817 = vadd.f32 %v2805, %v2811
  %v2818 = vadd.f32 %v2806, %v2812
  %v2819 = vadd.f32 %v2807, %v2813
  %v2820 = vadd.f32 %v2808, %v2814
  %s2821 = scalar_lea.vmem %s1789, 20
  %v2822 = vld [vmem:[%s2821] ss:$8 sm:$0x3]
  %s2823 = scalar_lea.vmem %s1791, 20
  %v2824 = vld [vmem:[%s2823] ss:$8 sm:$0x3]
  %v2825 = vld [vmem:[%s1075] sm:$0xff]
  %v2826 = vld [vmem:[%s1075 + $0x8] sm:$0xff]
  %v2827 = vld [vmem:[%s1075 + $0x10] sm:$0xff]
  %v2828 = vld [vmem:[%s1075 + $0x18] sm:$0xff]
  %v2829 = vld [vmem:[%s1075 + $0x20] sm:$0xf]
  %v2830 = vld [vmem:[%s1075 + $0x28] sm:$0xf]
  %v2831 = vld [vmem:[%s1082] sm:$0xff]
  %v2832 = vld [vmem:[%s1082 + $0x8] sm:$0xff]
  %v2833 = vld [vmem:[%s1082 + $0x10] sm:$0xff]
  %v2834 = vld [vmem:[%s1082 + $0x18] sm:$0xff]
  %v2835 = vld [vmem:[%s1082 + $0x20] sm:$0xf]
  %v2836 = vld [vmem:[%s1082 + $0x28] sm:$0xf]
  %v2838 = vlaneseq
  %v2839 = vshrl.u32 %v2838, 7
  %v2840 = vsub.s32 0, %v2839
  %v2841 = vrot.slane %v2822, %v2840
  %v2842 = vlaneseq
  %v2843 = vshrl.u32 %v2842, 7
  %v2844 = vsub.s32 1, %v2843
  %v2845 = vrot.slane %v2822, %v2844
  %v2848 = vmul.f32 %v2841, %v2825
  %v2849 = vmul.f32 %v2845, %v2826
  %v2850 = vmul.f32 %v2841, %v2827
  %v2851 = vmul.f32 %v2845, %v2828
  %v2852 = vmul.f32 %v2841, %v2829
  %v2853 = vmul.f32 %v2845, %v2830
  %v2854 = vadd.f32 %v2791, %v2848
  %v2855 = vadd.f32 %v2792, %v2849
  %v2856 = vadd.f32 %v2793, %v2850
  %v2857 = vadd.f32 %v2794, %v2851
  %v2858 = vadd.f32 %v2795, %v2852
  %v2859 = vadd.f32 %v2796, %v2853
  %v2861 = vlaneseq
  %v2862 = vshrl.u32 %v2861, 7
  %v2863 = vsub.s32 0, %v2862
  %v2864 = vrot.slane %v2824, %v2863
  %v2865 = vlaneseq
  %v2866 = vshrl.u32 %v2865, 7
  %v2867 = vsub.s32 1, %v2866
  %v2868 = vrot.slane %v2824, %v2867
  %v2871 = vmul.f32 %v2864, %v2831
  %v2872 = vmul.f32 %v2868, %v2832
  %v2873 = vmul.f32 %v2864, %v2833
  %v2874 = vmul.f32 %v2868, %v2834
  %v2875 = vmul.f32 %v2864, %v2835
  %v2876 = vmul.f32 %v2868, %v2836
  %v2877 = vsub.f32 %v2854, %v2871
  %v2878 = vsub.f32 %v2855, %v2872
  %v2879 = vsub.f32 %v2856, %v2873
  %v2880 = vsub.f32 %v2857, %v2874
  %v2881 = vsub.f32 %v2858, %v2875
  %v2882 = vsub.f32 %v2859, %v2876
  %v2883 = vmul.f32 %v2841, %v2831
  %v2884 = vmul.f32 %v2845, %v2832
  %v2885 = vmul.f32 %v2841, %v2833
  %v2886 = vmul.f32 %v2845, %v2834
  %v2887 = vmul.f32 %v2841, %v2835
  %v2888 = vmul.f32 %v2845, %v2836
  %v2889 = vadd.f32 %v2815, %v2883
  %v2890 = vadd.f32 %v2816, %v2884
  %v2891 = vadd.f32 %v2817, %v2885
  %v2892 = vadd.f32 %v2818, %v2886
  %v2893 = vadd.f32 %v2819, %v2887
  %v2894 = vadd.f32 %v2820, %v2888
  %v2895 = vmul.f32 %v2864, %v2825
  %v2896 = vmul.f32 %v2868, %v2826
  %v2897 = vmul.f32 %v2864, %v2827
  %v2898 = vmul.f32 %v2868, %v2828
  %v2899 = vmul.f32 %v2864, %v2829
  %v2900 = vmul.f32 %v2868, %v2830
  %v2901 = vadd.f32 %v2889, %v2895
  %v2902 = vadd.f32 %v2890, %v2896
  %v2903 = vadd.f32 %v2891, %v2897
  %v2904 = vadd.f32 %v2892, %v2898
  %v2905 = vadd.f32 %v2893, %v2899
  %v2906 = vadd.f32 %v2894, %v2900
  %s2907 = scalar_lea.vmem %s1789, 21
  %v2908 = vld [vmem:[%s2907] ss:$8 sm:$0x3]
  %s2909 = scalar_lea.vmem %s1791, 21
  %v2910 = vld [vmem:[%s2909] ss:$8 sm:$0x3]
  %v2911 = vld [vmem:[%s1163] sm:$0xff]
  %v2912 = vld [vmem:[%s1163 + $0x8] sm:$0xff]
  %v2913 = vld [vmem:[%s1163 + $0x10] sm:$0xff]
  %v2914 = vld [vmem:[%s1163 + $0x18] sm:$0xff]
  %v2915 = vld [vmem:[%s1163 + $0x20] sm:$0xf]
  %v2916 = vld [vmem:[%s1163 + $0x28] sm:$0xf]
  %v2917 = vld [vmem:[%s1170] sm:$0xff]
  %v2918 = vld [vmem:[%s1170 + $0x8] sm:$0xff]
  %v2919 = vld [vmem:[%s1170 + $0x10] sm:$0xff]
  %v2920 = vld [vmem:[%s1170 + $0x18] sm:$0xff]
  %v2921 = vld [vmem:[%s1170 + $0x20] sm:$0xf]
  %v2922 = vld [vmem:[%s1170 + $0x28] sm:$0xf]
  %v2924 = vlaneseq
  %v2925 = vshrl.u32 %v2924, 7
  %v2926 = vsub.s32 0, %v2925
  %v2927 = vrot.slane %v2908, %v2926
  %v2928 = vlaneseq
  %v2929 = vshrl.u32 %v2928, 7
  %v2930 = vsub.s32 1, %v2929
  %v2931 = vrot.slane %v2908, %v2930
  %v2934 = vmul.f32 %v2927, %v2911
  %v2935 = vmul.f32 %v2931, %v2912
  %v2936 = vmul.f32 %v2927, %v2913
  %v2937 = vmul.f32 %v2931, %v2914
  %v2938 = vmul.f32 %v2927, %v2915
  %v2939 = vmul.f32 %v2931, %v2916
  %v2940 = vadd.f32 %v2877, %v2934
  %v2941 = vadd.f32 %v2878, %v2935
  %v2942 = vadd.f32 %v2879, %v2936
  %v2943 = vadd.f32 %v2880, %v2937
  %v2944 = vadd.f32 %v2881, %v2938
  %v2945 = vadd.f32 %v2882, %v2939
  %v2947 = vlaneseq
  %v2948 = vshrl.u32 %v2947, 7
  %v2949 = vsub.s32 0, %v2948
  %v2950 = vrot.slane %v2910, %v2949
  %v2951 = vlaneseq
  %v2952 = vshrl.u32 %v2951, 7
  %v2953 = vsub.s32 1, %v2952
  %v2954 = vrot.slane %v2910, %v2953
  %v2957 = vmul.f32 %v2950, %v2917
  %v2958 = vmul.f32 %v2954, %v2918
  %v2959 = vmul.f32 %v2950, %v2919
  %v2960 = vmul.f32 %v2954, %v2920
  %v2961 = vmul.f32 %v2950, %v2921
  %v2962 = vmul.f32 %v2954, %v2922
  %v2963 = vsub.f32 %v2940, %v2957
  %v2964 = vsub.f32 %v2941, %v2958
  %v2965 = vsub.f32 %v2942, %v2959
  %v2966 = vsub.f32 %v2943, %v2960
  %v2967 = vsub.f32 %v2944, %v2961
  %v2968 = vsub.f32 %v2945, %v2962
  %v2969 = vmul.f32 %v2927, %v2917
  %v2970 = vmul.f32 %v2931, %v2918
  %v2971 = vmul.f32 %v2927, %v2919
  %v2972 = vmul.f32 %v2931, %v2920
  %v2973 = vmul.f32 %v2927, %v2921
  %v2974 = vmul.f32 %v2931, %v2922
  %v2975 = vadd.f32 %v2901, %v2969
  %v2976 = vadd.f32 %v2902, %v2970
  %v2977 = vadd.f32 %v2903, %v2971
  %v2978 = vadd.f32 %v2904, %v2972
  %v2979 = vadd.f32 %v2905, %v2973
  %v2980 = vadd.f32 %v2906, %v2974
  %v2981 = vmul.f32 %v2950, %v2911
  %v2982 = vmul.f32 %v2954, %v2912
  %v2983 = vmul.f32 %v2950, %v2913
  %v2984 = vmul.f32 %v2954, %v2914
  %v2985 = vmul.f32 %v2950, %v2915
  %v2986 = vmul.f32 %v2954, %v2916
  %v2987 = vadd.f32 %v2975, %v2981
  %v2988 = vadd.f32 %v2976, %v2982
  %v2989 = vadd.f32 %v2977, %v2983
  %v2990 = vadd.f32 %v2978, %v2984
  %v2991 = vadd.f32 %v2979, %v2985
  %v2992 = vadd.f32 %v2980, %v2986
  %s2993 = scalar_lea.vmem %s1789, 22
  %v2994 = vld [vmem:[%s2993] ss:$8 sm:$0x3]
  %s2995 = scalar_lea.vmem %s1791, 22
  %v2996 = vld [vmem:[%s2995] ss:$8 sm:$0x3]
  %v2997 = vld [vmem:[%s1251] sm:$0xff]
  %v2998 = vld [vmem:[%s1251 + $0x8] sm:$0xff]
  %v2999 = vld [vmem:[%s1251 + $0x10] sm:$0xff]
  %v3000 = vld [vmem:[%s1251 + $0x18] sm:$0xff]
  %v3001 = vld [vmem:[%s1251 + $0x20] sm:$0xf]
  %v3002 = vld [vmem:[%s1251 + $0x28] sm:$0xf]
  %v3003 = vld [vmem:[%s1258] sm:$0xff]
  %v3004 = vld [vmem:[%s1258 + $0x8] sm:$0xff]
  %v3005 = vld [vmem:[%s1258 + $0x10] sm:$0xff]
  %v3006 = vld [vmem:[%s1258 + $0x18] sm:$0xff]
  %v3007 = vld [vmem:[%s1258 + $0x20] sm:$0xf]
  %v3008 = vld [vmem:[%s1258 + $0x28] sm:$0xf]
  %v3010 = vlaneseq
  %v3011 = vshrl.u32 %v3010, 7
  %v3012 = vsub.s32 0, %v3011
  %v3013 = vrot.slane %v2994, %v3012
  %v3014 = vlaneseq
  %v3015 = vshrl.u32 %v3014, 7
  %v3016 = vsub.s32 1, %v3015
  %v3017 = vrot.slane %v2994, %v3016
  %v3020 = vmul.f32 %v3013, %v2997
  %v3021 = vmul.f32 %v3017, %v2998
  %v3022 = vmul.f32 %v3013, %v2999
  %v3023 = vmul.f32 %v3017, %v3000
  %v3024 = vmul.f32 %v3013, %v3001
  %v3025 = vmul.f32 %v3017, %v3002
  %v3026 = vadd.f32 %v2963, %v3020
  %v3027 = vadd.f32 %v2964, %v3021
  %v3028 = vadd.f32 %v2965, %v3022
  %v3029 = vadd.f32 %v2966, %v3023
  %v3030 = vadd.f32 %v2967, %v3024
  %v3031 = vadd.f32 %v2968, %v3025
  %v3033 = vlaneseq
  %v3034 = vshrl.u32 %v3033, 7
  %v3035 = vsub.s32 0, %v3034
  %v3036 = vrot.slane %v2996, %v3035
  %v3037 = vlaneseq
  %v3038 = vshrl.u32 %v3037, 7
  %v3039 = vsub.s32 1, %v3038
  %v3040 = vrot.slane %v2996, %v3039
  %v3043 = vmul.f32 %v3036, %v3003
  %v3044 = vmul.f32 %v3040, %v3004
  %v3045 = vmul.f32 %v3036, %v3005
  %v3046 = vmul.f32 %v3040, %v3006
  %v3047 = vmul.f32 %v3036, %v3007
  %v3048 = vmul.f32 %v3040, %v3008
  %v3049 = vsub.f32 %v3026, %v3043
  %v3050 = vsub.f32 %v3027, %v3044
  %v3051 = vsub.f32 %v3028, %v3045
  %v3052 = vsub.f32 %v3029, %v3046
  %v3053 = vsub.f32 %v3030, %v3047
  %v3054 = vsub.f32 %v3031, %v3048
  %v3055 = vmul.f32 %v3013, %v3003
  %v3056 = vmul.f32 %v3017, %v3004
  %v3057 = vmul.f32 %v3013, %v3005
  %v3058 = vmul.f32 %v3017, %v3006
  %v3059 = vmul.f32 %v3013, %v3007
  %v3060 = vmul.f32 %v3017, %v3008
  %v3061 = vadd.f32 %v2987, %v3055
  %v3062 = vadd.f32 %v2988, %v3056
  %v3063 = vadd.f32 %v2989, %v3057
  %v3064 = vadd.f32 %v2990, %v3058
  %v3065 = vadd.f32 %v2991, %v3059
  %v3066 = vadd.f32 %v2992, %v3060
  %v3067 = vmul.f32 %v3036, %v2997
  %v3068 = vmul.f32 %v3040, %v2998
  %v3069 = vmul.f32 %v3036, %v2999
  %v3070 = vmul.f32 %v3040, %v3000
  %v3071 = vmul.f32 %v3036, %v3001
  %v3072 = vmul.f32 %v3040, %v3002
  %v3073 = vadd.f32 %v3061, %v3067
  %v3074 = vadd.f32 %v3062, %v3068
  %v3075 = vadd.f32 %v3063, %v3069
  %v3076 = vadd.f32 %v3064, %v3070
  %v3077 = vadd.f32 %v3065, %v3071
  %v3078 = vadd.f32 %v3066, %v3072
  %s3079 = scalar_lea.vmem %s1789, 23
  %v3080 = vld [vmem:[%s3079] ss:$8 sm:$0x3]
  %s3081 = scalar_lea.vmem %s1791, 23
  %v3082 = vld [vmem:[%s3081] ss:$8 sm:$0x3]
  %v3083 = vld [vmem:[%s1339] sm:$0xff]
  %v3084 = vld [vmem:[%s1339 + $0x8] sm:$0xff]
  %v3085 = vld [vmem:[%s1339 + $0x10] sm:$0xff]
  %v3086 = vld [vmem:[%s1339 + $0x18] sm:$0xff]
  %v3087 = vld [vmem:[%s1339 + $0x20] sm:$0xf]
  %v3088 = vld [vmem:[%s1339 + $0x28] sm:$0xf]
  %v3089 = vld [vmem:[%s1346] sm:$0xff]
  %v3090 = vld [vmem:[%s1346 + $0x8] sm:$0xff]
  %v3091 = vld [vmem:[%s1346 + $0x10] sm:$0xff]
  %v3092 = vld [vmem:[%s1346 + $0x18] sm:$0xff]
  %v3093 = vld [vmem:[%s1346 + $0x20] sm:$0xf]
  %v3094 = vld [vmem:[%s1346 + $0x28] sm:$0xf]
  %v3096 = vlaneseq
  %v3097 = vshrl.u32 %v3096, 7
  %v3098 = vsub.s32 0, %v3097
  %v3099 = vrot.slane %v3080, %v3098
  %v3100 = vlaneseq
  %v3101 = vshrl.u32 %v3100, 7
  %v3102 = vsub.s32 1, %v3101
  %v3103 = vrot.slane %v3080, %v3102
  %v3106 = vmul.f32 %v3099, %v3083
  %v3107 = vmul.f32 %v3103, %v3084
  %v3108 = vmul.f32 %v3099, %v3085
  %v3109 = vmul.f32 %v3103, %v3086
  %v3110 = vmul.f32 %v3099, %v3087
  %v3111 = vmul.f32 %v3103, %v3088
  %v3112 = vadd.f32 %v3049, %v3106
  %v3113 = vadd.f32 %v3050, %v3107
  %v3114 = vadd.f32 %v3051, %v3108
  %v3115 = vadd.f32 %v3052, %v3109
  %v3116 = vadd.f32 %v3053, %v3110
  %v3117 = vadd.f32 %v3054, %v3111
  %v3119 = vlaneseq
  %v3120 = vshrl.u32 %v3119, 7
  %v3121 = vsub.s32 0, %v3120
  %v3122 = vrot.slane %v3082, %v3121
  %v3123 = vlaneseq
  %v3124 = vshrl.u32 %v3123, 7
  %v3125 = vsub.s32 1, %v3124
  %v3126 = vrot.slane %v3082, %v3125
  %v3129 = vmul.f32 %v3122, %v3089
  %v3130 = vmul.f32 %v3126, %v3090
  %v3131 = vmul.f32 %v3122, %v3091
  %v3132 = vmul.f32 %v3126, %v3092
  %v3133 = vmul.f32 %v3122, %v3093
  %v3134 = vmul.f32 %v3126, %v3094
  %v3135 = vsub.f32 %v3112, %v3129
  %v3136 = vsub.f32 %v3113, %v3130
  %v3137 = vsub.f32 %v3114, %v3131
  %v3138 = vsub.f32 %v3115, %v3132
  %v3139 = vsub.f32 %v3116, %v3133
  %v3140 = vsub.f32 %v3117, %v3134
  %v3141 = vmul.f32 %v3099, %v3089
  %v3142 = vmul.f32 %v3103, %v3090
  %v3143 = vmul.f32 %v3099, %v3091
  %v3144 = vmul.f32 %v3103, %v3092
  %v3145 = vmul.f32 %v3099, %v3093
  %v3146 = vmul.f32 %v3103, %v3094
  %v3147 = vadd.f32 %v3073, %v3141
  %v3148 = vadd.f32 %v3074, %v3142
  %v3149 = vadd.f32 %v3075, %v3143
  %v3150 = vadd.f32 %v3076, %v3144
  %v3151 = vadd.f32 %v3077, %v3145
  %v3152 = vadd.f32 %v3078, %v3146
  %v3153 = vmul.f32 %v3122, %v3083
  %v3154 = vmul.f32 %v3126, %v3084
  %v3155 = vmul.f32 %v3122, %v3085
  %v3156 = vmul.f32 %v3126, %v3086
  %v3157 = vmul.f32 %v3122, %v3087
  %v3158 = vmul.f32 %v3126, %v3088
  %v3159 = vadd.f32 %v3147, %v3153
  %v3160 = vadd.f32 %v3148, %v3154
  %v3161 = vadd.f32 %v3149, %v3155
  %v3162 = vadd.f32 %v3150, %v3156
  %v3163 = vadd.f32 %v3151, %v3157
  %v3164 = vadd.f32 %v3152, %v3158
  %s3165 = scalar_lea.vmem %s1789, 32
  %v3166 = vld [vmem:[%s3165] ss:$8 sm:$0x3]
  %s3167 = scalar_lea.vmem %s1791, 32
  %v3168 = vld [vmem:[%s3167] ss:$8 sm:$0x3]
  %v3169 = vld [vmem:[%s1427] sm:$0xff]
  %v3170 = vld [vmem:[%s1427 + $0x8] sm:$0xff]
  %v3171 = vld [vmem:[%s1427 + $0x10] sm:$0xff]
  %v3172 = vld [vmem:[%s1427 + $0x18] sm:$0xff]
  %v3173 = vld [vmem:[%s1427 + $0x20] sm:$0xf]
  %v3174 = vld [vmem:[%s1427 + $0x28] sm:$0xf]
  %v3175 = vld [vmem:[%s1434] sm:$0xff]
  %v3176 = vld [vmem:[%s1434 + $0x8] sm:$0xff]
  %v3177 = vld [vmem:[%s1434 + $0x10] sm:$0xff]
  %v3178 = vld [vmem:[%s1434 + $0x18] sm:$0xff]
  %v3179 = vld [vmem:[%s1434 + $0x20] sm:$0xf]
  %v3180 = vld [vmem:[%s1434 + $0x28] sm:$0xf]
  %v3182 = vlaneseq
  %v3183 = vshrl.u32 %v3182, 7
  %v3184 = vsub.s32 0, %v3183
  %v3185 = vrot.slane %v3166, %v3184
  %v3186 = vlaneseq
  %v3187 = vshrl.u32 %v3186, 7
  %v3188 = vsub.s32 1, %v3187
  %v3189 = vrot.slane %v3166, %v3188
  %v3192 = vmul.f32 %v3185, %v3169
  %v3193 = vmul.f32 %v3189, %v3170
  %v3194 = vmul.f32 %v3185, %v3171
  %v3195 = vmul.f32 %v3189, %v3172
  %v3196 = vmul.f32 %v3185, %v3173
  %v3197 = vmul.f32 %v3189, %v3174
  %v3198 = vadd.f32 %v3135, %v3192
  %v3199 = vadd.f32 %v3136, %v3193
  %v3200 = vadd.f32 %v3137, %v3194
  %v3201 = vadd.f32 %v3138, %v3195
  %v3202 = vadd.f32 %v3139, %v3196
  %v3203 = vadd.f32 %v3140, %v3197
  %v3205 = vlaneseq
  %v3206 = vshrl.u32 %v3205, 7
  %v3207 = vsub.s32 0, %v3206
  %v3208 = vrot.slane %v3168, %v3207
  %v3209 = vlaneseq
  %v3210 = vshrl.u32 %v3209, 7
  %v3211 = vsub.s32 1, %v3210
  %v3212 = vrot.slane %v3168, %v3211
  %v3215 = vmul.f32 %v3208, %v3175
  %v3216 = vmul.f32 %v3212, %v3176
  %v3217 = vmul.f32 %v3208, %v3177
  %v3218 = vmul.f32 %v3212, %v3178
  %v3219 = vmul.f32 %v3208, %v3179
  %v3220 = vmul.f32 %v3212, %v3180
  %v3221 = vsub.f32 %v3198, %v3215
  %v3222 = vsub.f32 %v3199, %v3216
  %v3223 = vsub.f32 %v3200, %v3217
  %v3224 = vsub.f32 %v3201, %v3218
  %v3225 = vsub.f32 %v3202, %v3219
  %v3226 = vsub.f32 %v3203, %v3220
  %v3227 = vmul.f32 %v3185, %v3175
  %v3228 = vmul.f32 %v3189, %v3176
  %v3229 = vmul.f32 %v3185, %v3177
  %v3230 = vmul.f32 %v3189, %v3178
  %v3231 = vmul.f32 %v3185, %v3179
  %v3232 = vmul.f32 %v3189, %v3180
  %v3233 = vadd.f32 %v3159, %v3227
  %v3234 = vadd.f32 %v3160, %v3228
  %v3235 = vadd.f32 %v3161, %v3229
  %v3236 = vadd.f32 %v3162, %v3230
  %v3237 = vadd.f32 %v3163, %v3231
  %v3238 = vadd.f32 %v3164, %v3232
  %v3239 = vmul.f32 %v3208, %v3169
  %v3240 = vmul.f32 %v3212, %v3170
  %v3241 = vmul.f32 %v3208, %v3171
  %v3242 = vmul.f32 %v3212, %v3172
  %v3243 = vmul.f32 %v3208, %v3173
  %v3244 = vmul.f32 %v3212, %v3174
  %v3245 = vadd.f32 %v3233, %v3239
  %v3246 = vadd.f32 %v3234, %v3240
  %v3247 = vadd.f32 %v3235, %v3241
  %v3248 = vadd.f32 %v3236, %v3242
  %v3249 = vadd.f32 %v3237, %v3243
  %v3250 = vadd.f32 %v3238, %v3244
  %s3251 = scalar_lea.vmem %s1789, 33
  %v3252 = vld [vmem:[%s3251] ss:$8 sm:$0x3]
  %s3253 = scalar_lea.vmem %s1791, 33
  %v3254 = vld [vmem:[%s3253] ss:$8 sm:$0x3]
  %v3255 = vld [vmem:[%s1515] sm:$0xff]
  %v3256 = vld [vmem:[%s1515 + $0x8] sm:$0xff]
  %v3257 = vld [vmem:[%s1515 + $0x10] sm:$0xff]
  %v3258 = vld [vmem:[%s1515 + $0x18] sm:$0xff]
  %v3259 = vld [vmem:[%s1515 + $0x20] sm:$0xf]
  %v3260 = vld [vmem:[%s1515 + $0x28] sm:$0xf]
  %v3261 = vld [vmem:[%s1522] sm:$0xff]
  %v3262 = vld [vmem:[%s1522 + $0x8] sm:$0xff]
  %v3263 = vld [vmem:[%s1522 + $0x10] sm:$0xff]
  %v3264 = vld [vmem:[%s1522 + $0x18] sm:$0xff]
  %v3265 = vld [vmem:[%s1522 + $0x20] sm:$0xf]
  %v3266 = vld [vmem:[%s1522 + $0x28] sm:$0xf]
  %v3268 = vlaneseq
  %v3269 = vshrl.u32 %v3268, 7
  %v3270 = vsub.s32 0, %v3269
  %v3271 = vrot.slane %v3252, %v3270
  %v3272 = vlaneseq
  %v3273 = vshrl.u32 %v3272, 7
  %v3274 = vsub.s32 1, %v3273
  %v3275 = vrot.slane %v3252, %v3274
  %v3278 = vmul.f32 %v3271, %v3255
  %v3279 = vmul.f32 %v3275, %v3256
  %v3280 = vmul.f32 %v3271, %v3257
  %v3281 = vmul.f32 %v3275, %v3258
  %v3282 = vmul.f32 %v3271, %v3259
  %v3283 = vmul.f32 %v3275, %v3260
  %v3284 = vadd.f32 %v3221, %v3278
  %v3285 = vadd.f32 %v3222, %v3279
  %v3286 = vadd.f32 %v3223, %v3280
  %v3287 = vadd.f32 %v3224, %v3281
  %v3288 = vadd.f32 %v3225, %v3282
  %v3289 = vadd.f32 %v3226, %v3283
  %v3291 = vlaneseq
  %v3292 = vshrl.u32 %v3291, 7
  %v3293 = vsub.s32 0, %v3292
  %v3294 = vrot.slane %v3254, %v3293
  %v3295 = vlaneseq
  %v3296 = vshrl.u32 %v3295, 7
  %v3297 = vsub.s32 1, %v3296
  %v3298 = vrot.slane %v3254, %v3297
  %v3301 = vmul.f32 %v3294, %v3261
  %v3302 = vmul.f32 %v3298, %v3262
  %v3303 = vmul.f32 %v3294, %v3263
  %v3304 = vmul.f32 %v3298, %v3264
  %v3305 = vmul.f32 %v3294, %v3265
  %v3306 = vmul.f32 %v3298, %v3266
  %v3307 = vsub.f32 %v3284, %v3301
  %v3308 = vsub.f32 %v3285, %v3302
  %v3309 = vsub.f32 %v3286, %v3303
  %v3310 = vsub.f32 %v3287, %v3304
  %v3311 = vsub.f32 %v3288, %v3305
  %v3312 = vsub.f32 %v3289, %v3306
  %v3313 = vmul.f32 %v3271, %v3261
  %v3314 = vmul.f32 %v3275, %v3262
  %v3315 = vmul.f32 %v3271, %v3263
  %v3316 = vmul.f32 %v3275, %v3264
  %v3317 = vmul.f32 %v3271, %v3265
  %v3318 = vmul.f32 %v3275, %v3266
  %v3319 = vadd.f32 %v3245, %v3313
  %v3320 = vadd.f32 %v3246, %v3314
  %v3321 = vadd.f32 %v3247, %v3315
  %v3322 = vadd.f32 %v3248, %v3316
  %v3323 = vadd.f32 %v3249, %v3317
  %v3324 = vadd.f32 %v3250, %v3318
  %v3325 = vmul.f32 %v3294, %v3255
  %v3326 = vmul.f32 %v3298, %v3256
  %v3327 = vmul.f32 %v3294, %v3257
  %v3328 = vmul.f32 %v3298, %v3258
  %v3329 = vmul.f32 %v3294, %v3259
  %v3330 = vmul.f32 %v3298, %v3260
  %v3331 = vadd.f32 %v3319, %v3325
  %v3332 = vadd.f32 %v3320, %v3326
  %v3333 = vadd.f32 %v3321, %v3327
  %v3334 = vadd.f32 %v3322, %v3328
  %v3335 = vadd.f32 %v3323, %v3329
  %v3336 = vadd.f32 %v3324, %v3330
  %s3337 = scalar_lea.vmem %s1789, 34
  %v3338 = vld [vmem:[%s3337] ss:$8 sm:$0x3]
  %s3339 = scalar_lea.vmem %s1791, 34
  %v3340 = vld [vmem:[%s3339] ss:$8 sm:$0x3]
  %v3341 = vld [vmem:[%s1603] sm:$0xff]
  %v3342 = vld [vmem:[%s1603 + $0x8] sm:$0xff]
  %v3343 = vld [vmem:[%s1603 + $0x10] sm:$0xff]
  %v3344 = vld [vmem:[%s1603 + $0x18] sm:$0xff]
  %v3345 = vld [vmem:[%s1603 + $0x20] sm:$0xf]
  %v3346 = vld [vmem:[%s1603 + $0x28] sm:$0xf]
  %v3347 = vld [vmem:[%s1610] sm:$0xff]
  %v3348 = vld [vmem:[%s1610 + $0x8] sm:$0xff]
  %v3349 = vld [vmem:[%s1610 + $0x10] sm:$0xff]
  %v3350 = vld [vmem:[%s1610 + $0x18] sm:$0xff]
  %v3351 = vld [vmem:[%s1610 + $0x20] sm:$0xf]
  %v3352 = vld [vmem:[%s1610 + $0x28] sm:$0xf]
  %v3354 = vlaneseq
  %v3355 = vshrl.u32 %v3354, 7
  %v3356 = vsub.s32 0, %v3355
  %v3357 = vrot.slane %v3338, %v3356
  %v3358 = vlaneseq
  %v3359 = vshrl.u32 %v3358, 7
  %v3360 = vsub.s32 1, %v3359
  %v3361 = vrot.slane %v3338, %v3360
  %v3364 = vmul.f32 %v3357, %v3341
  %v3365 = vmul.f32 %v3361, %v3342
  %v3366 = vmul.f32 %v3357, %v3343
  %v3367 = vmul.f32 %v3361, %v3344
  %v3368 = vmul.f32 %v3357, %v3345
  %v3369 = vmul.f32 %v3361, %v3346
  %v3370 = vadd.f32 %v3307, %v3364
  %v3371 = vadd.f32 %v3308, %v3365
  %v3372 = vadd.f32 %v3309, %v3366
  %v3373 = vadd.f32 %v3310, %v3367
  %v3374 = vadd.f32 %v3311, %v3368
  %v3375 = vadd.f32 %v3312, %v3369
  %v3377 = vlaneseq
  %v3378 = vshrl.u32 %v3377, 7
  %v3379 = vsub.s32 0, %v3378
  %v3380 = vrot.slane %v3340, %v3379
  %v3381 = vlaneseq
  %v3382 = vshrl.u32 %v3381, 7
  %v3383 = vsub.s32 1, %v3382
  %v3384 = vrot.slane %v3340, %v3383
  %v3387 = vmul.f32 %v3380, %v3347
  %v3388 = vmul.f32 %v3384, %v3348
  %v3389 = vmul.f32 %v3380, %v3349
  %v3390 = vmul.f32 %v3384, %v3350
  %v3391 = vmul.f32 %v3380, %v3351
  %v3392 = vmul.f32 %v3384, %v3352
  %v3393 = vsub.f32 %v3370, %v3387
  %v3394 = vsub.f32 %v3371, %v3388
  %v3395 = vsub.f32 %v3372, %v3389
  %v3396 = vsub.f32 %v3373, %v3390
  %v3397 = vsub.f32 %v3374, %v3391
  %v3398 = vsub.f32 %v3375, %v3392
  %v3399 = vmul.f32 %v3357, %v3347
  %v3400 = vmul.f32 %v3361, %v3348
  %v3401 = vmul.f32 %v3357, %v3349
  %v3402 = vmul.f32 %v3361, %v3350
  %v3403 = vmul.f32 %v3357, %v3351
  %v3404 = vmul.f32 %v3361, %v3352
  %v3405 = vadd.f32 %v3331, %v3399
  %v3406 = vadd.f32 %v3332, %v3400
  %v3407 = vadd.f32 %v3333, %v3401
  %v3408 = vadd.f32 %v3334, %v3402
  %v3409 = vadd.f32 %v3335, %v3403
  %v3410 = vadd.f32 %v3336, %v3404
  %v3411 = vmul.f32 %v3380, %v3341
  %v3412 = vmul.f32 %v3384, %v3342
  %v3413 = vmul.f32 %v3380, %v3343
  %v3414 = vmul.f32 %v3384, %v3344
  %v3415 = vmul.f32 %v3380, %v3345
  %v3416 = vmul.f32 %v3384, %v3346
  %v3417 = vadd.f32 %v3405, %v3411
  %v3418 = vadd.f32 %v3406, %v3412
  %v3419 = vadd.f32 %v3407, %v3413
  %v3420 = vadd.f32 %v3408, %v3414
  %v3421 = vadd.f32 %v3409, %v3415
  %v3422 = vadd.f32 %v3410, %v3416
  %s3423 = scalar_lea.vmem %s1789, 35
  %v3424 = vld [vmem:[%s3423] ss:$8 sm:$0x3]
  %s3425 = scalar_lea.vmem %s1791, 35
  %v3426 = vld [vmem:[%s3425] ss:$8 sm:$0x3]
  %v3427 = vld [vmem:[%s1691] sm:$0xff]
  %v3428 = vld [vmem:[%s1691 + $0x8] sm:$0xff]
  %v3429 = vld [vmem:[%s1691 + $0x10] sm:$0xff]
  %v3430 = vld [vmem:[%s1691 + $0x18] sm:$0xff]
  %v3431 = vld [vmem:[%s1691 + $0x20] sm:$0xf]
  %v3432 = vld [vmem:[%s1691 + $0x28] sm:$0xf]
  %v3433 = vld [vmem:[%s1698] sm:$0xff]
  %v3434 = vld [vmem:[%s1698 + $0x8] sm:$0xff]
  %v3435 = vld [vmem:[%s1698 + $0x10] sm:$0xff]
  %v3436 = vld [vmem:[%s1698 + $0x18] sm:$0xff]
  %v3437 = vld [vmem:[%s1698 + $0x20] sm:$0xf]
  %v3438 = vld [vmem:[%s1698 + $0x28] sm:$0xf]
  %v3440 = vlaneseq
  %v3441 = vshrl.u32 %v3440, 7
  %v3442 = vsub.s32 0, %v3441
  %v3443 = vrot.slane %v3424, %v3442
  %v3444 = vlaneseq
  %v3445 = vshrl.u32 %v3444, 7
  %v3446 = vsub.s32 1, %v3445
  %v3447 = vrot.slane %v3424, %v3446
  %v3450 = vmul.f32 %v3443, %v3427
  %v3451 = vmul.f32 %v3447, %v3428
  %v3452 = vmul.f32 %v3443, %v3429
  %v3453 = vmul.f32 %v3447, %v3430
  %v3454 = vmul.f32 %v3443, %v3431
  %v3455 = vmul.f32 %v3447, %v3432
  %v3456 = vadd.f32 %v3393, %v3450
  %v3457 = vadd.f32 %v3394, %v3451
  %v3458 = vadd.f32 %v3395, %v3452
  %v3459 = vadd.f32 %v3396, %v3453
  %v3460 = vadd.f32 %v3397, %v3454
  %v3461 = vadd.f32 %v3398, %v3455
  %v3463 = vlaneseq
  %v3464 = vshrl.u32 %v3463, 7
  %v3465 = vsub.s32 0, %v3464
  %v3466 = vrot.slane %v3426, %v3465
  %v3467 = vlaneseq
  %v3468 = vshrl.u32 %v3467, 7
  %v3469 = vsub.s32 1, %v3468
  %v3470 = vrot.slane %v3426, %v3469
  %v3473 = vmul.f32 %v3466, %v3433
  %v3474 = vmul.f32 %v3470, %v3434
  %v3475 = vmul.f32 %v3466, %v3435
  %v3476 = vmul.f32 %v3470, %v3436
  %v3477 = vmul.f32 %v3466, %v3437
  %v3478 = vmul.f32 %v3470, %v3438
  %v3479 = vsub.f32 %v3456, %v3473
  %v3480 = vsub.f32 %v3457, %v3474
  %v3481 = vsub.f32 %v3458, %v3475
  %v3482 = vsub.f32 %v3459, %v3476
  %v3483 = vsub.f32 %v3460, %v3477
  %v3484 = vsub.f32 %v3461, %v3478
  %v3485 = vmul.f32 %v3443, %v3433
  %v3486 = vmul.f32 %v3447, %v3434
  %v3487 = vmul.f32 %v3443, %v3435
  %v3488 = vmul.f32 %v3447, %v3436
  %v3489 = vmul.f32 %v3443, %v3437
  %v3490 = vmul.f32 %v3447, %v3438
  %v3491 = vadd.f32 %v3417, %v3485
  %v3492 = vadd.f32 %v3418, %v3486
  %v3493 = vadd.f32 %v3419, %v3487
  %v3494 = vadd.f32 %v3420, %v3488
  %v3495 = vadd.f32 %v3421, %v3489
  %v3496 = vadd.f32 %v3422, %v3490
  %v3497 = vmul.f32 %v3466, %v3427
  %v3498 = vmul.f32 %v3470, %v3428
  %v3499 = vmul.f32 %v3466, %v3429
  %v3500 = vmul.f32 %v3470, %v3430
  %v3501 = vmul.f32 %v3466, %v3431
  %v3502 = vmul.f32 %v3470, %v3432
  %v3503 = vadd.f32 %v3491, %v3497
  %v3504 = vadd.f32 %v3492, %v3498
  %v3505 = vadd.f32 %v3493, %v3499
  %v3506 = vadd.f32 %v3494, %v3500
  %v3507 = vadd.f32 %v3495, %v3501
  %v3508 = vadd.f32 %v3496, %v3502
  %s3509 = scalar_lea.vmem %s4, 48
  %3510 = vst [vmem:[%s3509] sm:$0xff] %v3479
  %3511 = vst.msk [vmem:[%s3509 + $0x8] sm:$0xff] %vm1776, %v3480
  %3512 = vst [vmem:[%s3509 + $0x10] sm:$0xff] %v3481
  %3513 = vst.msk [vmem:[%s3509 + $0x18] sm:$0xff] %vm1776, %v3482
  %3514 = vst [vmem:[%s3509 + $0x20] sm:$0xf] %v3483
  %3515 = vst.msk [vmem:[%s3509 + $0x28] sm:$0xf] %vm1781, %v3484
  %s3516 = scalar_lea.vmem %s5, 48
  %3517 = vst [vmem:[%s3516] sm:$0xff] %v3503
  %3518 = vst.msk [vmem:[%s3516 + $0x8] sm:$0xff] %vm1776, %v3504
  %3519 = vst [vmem:[%s3516 + $0x10] sm:$0xff] %v3505
  %3520 = vst.msk [vmem:[%s3516 + $0x18] sm:$0xff] %vm1776, %v3506
  %3521 = vst [vmem:[%s3516 + $0x20] sm:$0xf] %v3507
  %3522 = vst.msk [vmem:[%s3516 + $0x28] sm:$0xf] %vm1781, %v3508
  // Predicated region
  $region18: #{fno3d_forward.11} parent=0 // pred_check
    _
  $region19: #{fno3d_forward.11} parent=0 // pred_check_branch
    %3524 = sbr.rel (0) target = $region21
  $region20: #{fno3d_forward.11} parent=0 // pred_region
    _
  $region21: #{fno3d_forward.11} parent=0 // pred_fallthru
    _
  // Predicated region
  $region22: #{fno3d_forward.11} parent=0 // pred_check
    _
  $region23: #{fno3d_forward.11} parent=0 // pred_check_branch
    %3526 = sbr.rel (0) target = $region25
  $region24: #{fno3d_forward.11} parent=0 // pred_region
    _
  $region25: #{fno3d_forward.11} parent=0 // pred_fallthru
    _
  // Predicated region
  $region26: #{fno3d_forward.11} parent=0 // pred_check
    _
  $region27: #{fno3d_forward.11} parent=0 // pred_check_branch
    %3528 = sbr.rel (0) target = $region29
  $region28: #{fno3d_forward.11} parent=0 // pred_region
    _
  $region29: #{fno3d_forward.11} parent=0 // pred_fallthru
    _
  // Predicated region
  $region30: #{fno3d_forward.11} parent=0 // pred_check
    _
  $region31: #{fno3d_forward.11} parent=0 // pred_check_branch
    %3530 = sbr.rel (0) target = $region33
  $region32: #{fno3d_forward.11} parent=0 // pred_region
    _
  $region33: #{fno3d_forward.11} parent=0 // pred_fallthru
    _

// kernel: reverse.8
$region0: #{reverse.8}
  #allocation0 [shape = 's32[1]{0}', space=sflag, size = 0x4, scoped, tag = 'scoped memory for reverse.8']
  %s0 = inlined_call_operand.vmem [shape: f32[2,20,8,8,3], index: 0, kind: input, shape index: {}]
  %s1 = inlined_call_operand.vmem [shape: f32[2,20,8,8,3], index: 1, kind: output, shape index: {}]
  %s2 = scalar_lea.vmem %s0, 128
  %v3 = vld [vmem:[%s2] sm:$0xff]
  %4 = vst [vmem:[%s1] sm:$0xff] %v3
  %s5 = scalar_lea.vmem %s0, 320
  %v6 = vld [vmem:[%s5] sm:$0xff]
  %s7 = scalar_lea.vmem %s1, 192
  %8 = vst [vmem:[%s7] sm:$0xff] %v6
  %s9 = scalar_lea.vmem %s0, 64
  %v10 = vld [vmem:[%s9] sm:$0xff]
  %s11 = scalar_lea.vmem %s1, 64
  %12 = vst [vmem:[%s11] sm:$0xff] %v10
  %s13 = scalar_lea.vmem %s0, 256
  %v14 = vld [vmem:[%s13] sm:$0xff]
  %s15 = scalar_lea.vmem %s1, 256
  %16 = vst [vmem:[%s15] sm:$0xff] %v14
  %v17 = vld [vmem:[%s0] sm:$0xff]
  %s18 = scalar_lea.vmem %s1, 128
  %19 = vst [vmem:[%s18] sm:$0xff] %v17
  %s20 = scalar_lea.vmem %s0, 192
  %v21 = vld [vmem:[%s20] sm:$0xff]
  %s22 = scalar_lea.vmem %s1, 320
  %23 = vst [vmem:[%s22] sm:$0xff] %v21
  %s24 = scalar_lea.vmem %s0, 136
  %v25 = vld [vmem:[%s24] sm:$0xff]
  %s26 = scalar_lea.vmem %s1, 8
  %27 = vst [vmem:[%s26] sm:$0xff] %v25
  %s28 = scalar_lea.vmem %s0, 328
  %v29 = vld [vmem:[%s28] sm:$0xff]
  %s30 = scalar_lea.vmem %s1, 200
  %31 = vst [vmem:[%s30] sm:$0xff] %v29
  %s32 = scalar_lea.vmem %s0, 72
  %v33 = vld [vmem:[%s32] sm:$0xff]
  %s34 = scalar_lea.vmem %s1, 72
  %35 = vst [vmem:[%s34] sm:$0xff] %v33
  %s36 = scalar_lea.vmem %s0, 264
  %v37 = vld [vmem:[%s36] sm:$0xff]
  %s38 = scalar_lea.vmem %s1, 264
  %39 = vst [vmem:[%s38] sm:$0xff] %v37
  %s40 = scalar_lea.vmem %s0, 8
  %v41 = vld [vmem:[%s40] sm:$0xff]
  %s42 = scalar_lea.vmem %s1, 136
  %43 = vst [vmem:[%s42] sm:$0xff] %v41
  %s44 = scalar_lea.vmem %s0, 200
  %v45 = vld [vmem:[%s44] sm:$0xff]
  %s46 = scalar_lea.vmem %s1, 328
  %47 = vst [vmem:[%s46] sm:$0xff] %v45
  %s48 = scalar_lea.vmem %s0, 144
  %v49 = vld [vmem:[%s48] sm:$0xff]
  %s50 = scalar_lea.vmem %s1, 16
  %51 = vst [vmem:[%s50] sm:$0xff] %v49
  %s52 = scalar_lea.vmem %s0, 336
  %v53 = vld [vmem:[%s52] sm:$0xff]
  %s54 = scalar_lea.vmem %s1, 208
  %55 = vst [vmem:[%s54] sm:$0xff] %v53
  %s56 = scalar_lea.vmem %s0, 80
  %v57 = vld [vmem:[%s56] sm:$0xff]
  %s58 = scalar_lea.vmem %s1, 80
  %59 = vst [vmem:[%s58] sm:$0xff] %v57
  %s60 = scalar_lea.vmem %s0, 272
  %v61 = vld [vmem:[%s60] sm:$0xff]
  %s62 = scalar_lea.vmem %s1, 272
  %63 = vst [vmem:[%s62] sm:$0xff] %v61
  %s64 = scalar_lea.vmem %s0, 16
  %v65 = vld [vmem:[%s64] sm:$0xff]
  %s66 = scalar_lea.vmem %s1, 144
  %67 = vst [vmem:[%s66] sm:$0xff] %v65
  %s68 = scalar_lea.vmem %s0, 208
  %v69 = vld [vmem:[%s68] sm:$0xff]
  %s70 = scalar_lea.vmem %s1, 336
  %71 = vst [vmem:[%s70] sm:$0xff] %v69
  %s72 = scalar_lea.vmem %s0, 152
  %v73 = vld [vmem:[%s72] sm:$0xff]
  %s74 = scalar_lea.vmem %s1, 24
  %75 = vst [vmem:[%s74] sm:$0xff] %v73
  %s76 = scalar_lea.vmem %s0, 344
  %v77 = vld [vmem:[%s76] sm:$0xff]
  %s78 = scalar_lea.vmem %s1, 216
  %79 = vst [vmem:[%s78] sm:$0xff] %v77
  %s80 = scalar_lea.vmem %s0, 88
  %v81 = vld [vmem:[%s80] sm:$0xff]
  %s82 = scalar_lea.vmem %s1, 88
  %83 = vst [vmem:[%s82] sm:$0xff] %v81
  %s84 = scalar_lea.vmem %s0, 280
  %v85 = vld [vmem:[%s84] sm:$0xff]
  %s86 = scalar_lea.vmem %s1, 280
  %87 = vst [vmem:[%s86] sm:$0xff] %v85
  %s88 = scalar_lea.vmem %s0, 24
  %v89 = vld [vmem:[%s88] sm:$0xff]
  %s90 = scalar_lea.vmem %s1, 152
  %91 = vst [vmem:[%s90] sm:$0xff] %v89
  %s92 = scalar_lea.vmem %s0, 216
  %v93 = vld [vmem:[%s92] sm:$0xff]
  %s94 = scalar_lea.vmem %s1, 344
  %95 = vst [vmem:[%s94] sm:$0xff] %v93
  %s96 = scalar_lea.vmem %s0, 160
  %v97 = vld [vmem:[%s96] sm:$0xff]
  %s98 = scalar_lea.vmem %s1, 32
  %99 = vst [vmem:[%s98] sm:$0xff] %v97
  %s100 = scalar_lea.vmem %s0, 352
  %v101 = vld [vmem:[%s100] sm:$0xff]
  %s102 = scalar_lea.vmem %s1, 224
  %103 = vst [vmem:[%s102] sm:$0xff] %v101
  %s104 = scalar_lea.vmem %s0, 96
  %v105 = vld [vmem:[%s104] sm:$0xff]
  %s106 = scalar_lea.vmem %s1, 96
  %107 = vst [vmem:[%s106] sm:$0xff] %v105
  %s108 = scalar_lea.vmem %s0, 288
  %v109 = vld [vmem:[%s108] sm:$0xff]
  %s110 = scalar_lea.vmem %s1, 288
  %111 = vst [vmem:[%s110] sm:$0xff] %v109
  %s112 = scalar_lea.vmem %s0, 32
  %v113 = vld [vmem:[%s112] sm:$0xff]
  %s114 = scalar_lea.vmem %s1, 160
  %115 = vst [vmem:[%s114] sm:$0xff] %v113
  %s116 = scalar_lea.vmem %s0, 224
  %v117 = vld [vmem:[%s116] sm:$0xff]
  %s118 = scalar_lea.vmem %s1, 352
  %119 = vst [vmem:[%s118] sm:$0xff] %v117
  %s120 = scalar_lea.vmem %s0, 168
  %v121 = vld [vmem:[%s120] sm:$0xff]
  %s122 = scalar_lea.vmem %s1, 40
  %123 = vst [vmem:[%s122] sm:$0xff] %v121
  %s124 = scalar_lea.vmem %s0, 360
  %v125 = vld [vmem:[%s124] sm:$0xff]
  %s126 = scalar_lea.vmem %s1, 232
  %127 = vst [vmem:[%s126] sm:$0xff] %v125
  %s128 = scalar_lea.vmem %s0, 104
  %v129 = vld [vmem:[%s128] sm:$0xff]
  %s130 = scalar_lea.vmem %s1, 104
  %131 = vst [vmem:[%s130] sm:$0xff] %v129
  %s132 = scalar_lea.vmem %s0, 296
  %v133 = vld [vmem:[%s132] sm:$0xff]
  %s134 = scalar_lea.vmem %s1, 296
  %135 = vst [vmem:[%s134] sm:$0xff] %v133
  %s136 = scalar_lea.vmem %s0, 40
  %v137 = vld [vmem:[%s136] sm:$0xff]
  %s138 = scalar_lea.vmem %s1, 168
  %139 = vst [vmem:[%s138] sm:$0xff] %v137
  %s140 = scalar_lea.vmem %s0, 232
  %v141 = vld [vmem:[%s140] sm:$0xff]
  %s142 = scalar_lea.vmem %s1, 360
  %143 = vst [vmem:[%s142] sm:$0xff] %v141
  %s144 = scalar_lea.vmem %s0, 176
  %v145 = vld [vmem:[%s144] sm:$0xff]
  %s146 = scalar_lea.vmem %s1, 48
  %147 = vst [vmem:[%s146] sm:$0xff] %v145
  %s148 = scalar_lea.vmem %s0, 368
  %v149 = vld [vmem:[%s148] sm:$0xff]
  %s150 = scalar_lea.vmem %s1, 240
  %151 = vst [vmem:[%s150] sm:$0xff] %v149
  %s152 = scalar_lea.vmem %s0, 112
  %v153 = vld [vmem:[%s152] sm:$0xff]
  %s154 = scalar_lea.vmem %s1, 112
  %155 = vst [vmem:[%s154] sm:$0xff] %v153
  %s156 = scalar_lea.vmem %s0, 304
  %v157 = vld [vmem:[%s156] sm:$0xff]
  %s158 = scalar_lea.vmem %s1, 304
  %159 = vst [vmem:[%s158] sm:$0xff] %v157
  %s160 = scalar_lea.vmem %s0, 48
  %v161 = vld [vmem:[%s160] sm:$0xff]
  %s162 = scalar_lea.vmem %s1, 176
  %163 = vst [vmem:[%s162] sm:$0xff] %v161
  %s164 = scalar_lea.vmem %s0, 240
  %v165 = vld [vmem:[%s164] sm:$0xff]
  %s166 = scalar_lea.vmem %s1, 368
  %167 = vst [vmem:[%s166] sm:$0xff] %v165
  %s168 = scalar_lea.vmem %s0, 184
  %v169 = vld [vmem:[%s168] sm:$0xff]
  %s170 = scalar_lea.vmem %s1, 56
  %171 = vst [vmem:[%s170] sm:$0xff] %v169
  %s172 = scalar_lea.vmem %s0, 376
  %v173 = vld [vmem:[%s172] sm:$0xff]
  %s174 = scalar_lea.vmem %s1, 248
  %175 = vst [vmem:[%s174] sm:$0xff] %v173
  %s176 = scalar_lea.vmem %s0, 120
  %v177 = vld [vmem:[%s176] sm:$0xff]
  %s178 = scalar_lea.vmem %s1, 120
  %179 = vst [vmem:[%s178] sm:$0xff] %v177
  %s180 = scalar_lea.vmem %s0, 312
  %v181 = vld [vmem:[%s180] sm:$0xff]
  %s182 = scalar_lea.vmem %s1, 312
  %183 = vst [vmem:[%s182] sm:$0xff] %v181
  %s184 = scalar_lea.vmem %s0, 56
  %v185 = vld [vmem:[%s184] sm:$0xff]
  %s186 = scalar_lea.vmem %s1, 184
  %187 = vst [vmem:[%s186] sm:$0xff] %v185
  %s188 = scalar_lea.vmem %s0, 248
  %v189 = vld [vmem:[%s188] sm:$0xff]
  %s190 = scalar_lea.vmem %s1, 376
  %191 = vst [vmem:[%s190] sm:$0xff] %v189

// kernel: fno3d_forward.12
$region0: #{fno3d_forward.12}
  #allocation0 [shape = 'u32[]', space=smem, size = 0x4, offset = 0x4, fixed_abs, tag = 'smem constant byte address 0x4 - core index']
  #allocation1 [shape = 'u32[144,128]{1,0:T(1,128)}', space=vmem, size = 0x12000, scoped, tag = 'internal scratch']
  %s0 = inlined_call_operand.vmem [shape: f32[2,20,512], index: 0, kind: input, shape index: {}]
  %s1 = inlined_call_operand.vmem [shape: f32[20,20], index: 1, kind: input, shape index: {}]
  %s2 = inlined_call_operand.vmem [shape: f32[20,1], index: 2, kind: input, shape index: {}]
  %s3 = inlined_call_operand.vmem [shape: f32[2,20,512], index: 3, kind: input, shape index: {}]
  %s4 = inlined_call_operand.vmem [shape: f32[2,20,512], index: 4, kind: output, shape index: {}]
  %s5 = sld [smem:[#allocation0]]
  $region49: #{fno3d_forward.12} parent=0
    _
  %s7 = ssub.s32 1, %s5
  %s8 = scalar_select 0, %s7, %s5
  loop: start=0, step=1, limit=4
  $region2: #{fno3d_forward.12} parent=0 // loop_pre_header
    _
  $region3: #{fno3d_forward.12} parent=0 // loop_header
    %s10 = sphi 0, %s14
    %p11 = scmp.ge.s32.totalorder %s10, 4
    %s17 = sphi 0, %s29
    %s18 = sphi 0, %s25
    %s19 = sphi 0, %s17
    %s20 = sphi 0, %s18
    %s21 = sphi 0, %s19
    %s22 = sphi 0, %s20
    %s34 = sphi 0, %s36
    %s37 = sphi 0, %s34
    %s38 = sphi 0, %s37
    %s54 = sphi 0, %s38
    %s58 = sphi 0, %s58
    %s60 = sphi 0, %s58
    %s61 = sphi 0, %s60
    %s75 = sphi 0, %s61
    %s79 = sphi 0, %s79
    %s81 = sphi 0, %s79
    %s82 = sphi 0, %s81
    %s96 = sphi 0, %s82
    %s104 = sphi 0, %s106
    %s107 = sphi 0, %s104
    %s108 = sphi 0, %s107
    %s124 = sphi 0, %s108
    %s132 = sphi 0, %s134
    %s135 = sphi 0, %s132
    %s136 = sphi 0, %s135
    %s152 = sphi 0, %s136
  $region4: #{fno3d_forward.12} parent=0 // loop_header_branch
    %13 = sbr.rel (%p11) target = $region8
  $region5: #{fno3d_forward.12} parent=0 // loop_body
    %s15 = ssub.s32 %s10, 1
    %s16 = ssub.s32 %s10, 2
    %s23 = sadd.s32 1, %s18
    %p24 = scmp.ge.s32.totalorder %s23, 1
    %s25 = scalar_select %p24, 0, %s23
    %s26 = sadd.s32 1, %s17
    %s27 = scalar_select %p24, %s26, %s17
    %p28 = scmp.ge.s32.totalorder %s27, 2
    %s29 = scalar_select %p28, 0, %s27
    %s30 = ssub.s32 %s17, %s29
    %s31 = ssub.s32 %s18, %s25
    %s32 = sor.u32 %s30, %s31
    %p33 = scmp.eq.s32.totalorder %s32, 0
    %s35 = sadd.s32 %s34, 1
    %s36 = scalar_select %p33, %s34, %s35
    %p39 = pneg %p33
    %p40 = scmp.eq.s32.totalorder %s10, 1
    %p41 = por %p39, %p40
    %p42 = scmp.ne.s32.totalorder %s34, %s37
    %p43 = scmp.eq.s32.totalorder %s10, 0
    %p44 = por %p42, %p43
    %p45 = scmp.ne.s32.totalorder %s34, %s37
    %p46 = scmp.eq.s32.totalorder %s15, 1
    %p47 = por %p45, %p46
    %p48 = scmp.ne.s32.totalorder %s37, %s38
    %p49 = scmp.eq.s32.totalorder %s15, 0
    %p50 = por %p48, %p49
    %p51 = scmp.ne.s32.totalorder %s37, %s38
    %p52 = scmp.eq.s32.totalorder %s16, 1
    %p53 = por %p51, %p52
    %p55 = scmp.ne.s32.totalorder %s38, %s54
    %p56 = scmp.eq.s32.totalorder %s16, 0
    %p57 = por %p55, %p56
    %s59 = sadd.s32 %s58, 1
    %p62 = scmp.eq.s32.totalorder %s10, 1
    %p63 = scmp.ne.s32.totalorder %s58, %s60
    %p64 = scmp.eq.s32.totalorder %s10, 0
    %p65 = por %p63, %p64
    %p66 = scmp.ne.s32.totalorder %s58, %s60
    %p67 = scmp.eq.s32.totalorder %s15, 1
    %p68 = por %p66, %p67
    %p69 = scmp.ne.s32.totalorder %s60, %s61
    %p70 = scmp.eq.s32.totalorder %s15, 0
    %p71 = por %p69, %p70
    %p72 = scmp.ne.s32.totalorder %s60, %s61
    %p73 = scmp.eq.s32.totalorder %s16, 1
    %p74 = por %p72, %p73
    %p76 = scmp.ne.s32.totalorder %s61, %s75
    %p77 = scmp.eq.s32.totalorder %s16, 0
    %p78 = por %p76, %p77
    %s80 = sadd.s32 %s79, 1
    %p83 = scmp.eq.s32.totalorder %s10, 1
    %p84 = scmp.ne.s32.totalorder %s79, %s81
    %p85 = scmp.eq.s32.totalorder %s10, 0
    %p86 = por %p84, %p85
    %p87 = scmp.ne.s32.totalorder %s79, %s81
    %p88 = scmp.eq.s32.totalorder %s15, 1
    %p89 = por %p87, %p88
    %p90 = scmp.ne.s32.totalorder %s81, %s82
    %p91 = scmp.eq.s32.totalorder %s15, 0
    %p92 = por %p90, %p91
    %p93 = scmp.ne.s32.totalorder %s81, %s82
    %p94 = scmp.eq.s32.totalorder %s16, 1
    %p95 = por %p93, %p94
    %p97 = scmp.ne.s32.totalorder %s82, %s96
    %p98 = scmp.eq.s32.totalorder %s16, 0
    %p99 = por %p97, %p98
    %s100 = ssub.s32 %s17, %s29
    %s101 = ssub.s32 %s18, %s25
    %s102 = sor.u32 %s100, %s101
    %p103 = scmp.eq.s32.totalorder %s102, 0
    %s105 = sadd.s32 %s104, 1
    %s106 = scalar_select %p103, %s104, %s105
    %p109 = pneg %p103
    %p110 = scmp.eq.s32.totalorder %s10, 1
    %p111 = por %p109, %p110
    %p112 = scmp.ne.s32.totalorder %s104, %s107
    %p113 = scmp.eq.s32.totalorder %s10, 0
    %p114 = por %p112, %p113
    %p115 = scmp.ne.s32.totalorder %s104, %s107
    %p116 = scmp.eq.s32.totalorder %s15, 1
    %p117 = por %p115, %p116
    %p118 = scmp.ne.s32.totalorder %s107, %s108
    %p119 = scmp.eq.s32.totalorder %s15, 0
    %p120 = por %p118, %p119
    %p121 = scmp.ne.s32.totalorder %s107, %s108
    %p122 = scmp.eq.s32.totalorder %s16, 1
    %p123 = por %p121, %p122
    %p125 = scmp.ne.s32.totalorder %s108, %s124
    %p126 = scmp.eq.s32.totalorder %s16, 0
    %p127 = por %p125, %p126
    %s128 = ssub.s32 %s17, %s29
    %s129 = ssub.s32 %s18, %s25
    %s130 = sor.u32 %s128, %s129
    %p131 = scmp.eq.s32.totalorder %s130, 0
    %s133 = sadd.s32 %s132, 1
    %s134 = scalar_select %p131, %s132, %s133
    %p137 = pneg %p131
    %p138 = scmp.eq.s32.totalorder %s10, 1
    %p139 = por %p137, %p138
    %p140 = scmp.ne.s32.totalorder %s132, %s135
    %p141 = scmp.eq.s32.totalorder %s10, 0
    %p142 = por %p140, %p141
    %p143 = scmp.ne.s32.totalorder %s132, %s135
    %p144 = scmp.eq.s32.totalorder %s15, 1
    %p145 = por %p143, %p144
    %p146 = scmp.ne.s32.totalorder %s135, %s136
    %p147 = scmp.eq.s32.totalorder %s15, 0
    %p148 = por %p146, %p147
    %p149 = scmp.ne.s32.totalorder %s135, %s136
    %p150 = scmp.eq.s32.totalorder %s16, 1
    %p151 = por %p149, %p150
    %p153 = scmp.ne.s32.totalorder %s136, %s152
    %p154 = scmp.eq.s32.totalorder %s16, 0
    %p155 = por %p153, %p154
    %p156 = scmp.le.s32.totalorder 1, %s10
    %p157 = scmp.lt.s32.totalorder %s10, 3
    %p158 = pnand %p156, %p157
    %p159 = pneg %p158
    // Predicated region
    $region9: #{fno3d_forward.12} parent=5 // pred_check
      _
    $region10: #{fno3d_forward.12} parent=5 // pred_check_branch
      %161 = sbr.rel (%p158) target = $region12
    $region11: #{fno3d_forward.12} parent=5 // pred_region
      %s162 = ssub.s32 %s10, 1
      // Predicated region
      $region13: #{fno3d_forward.12} parent=11 // pred_check
        %p163 = pneg %p71
      $region14: #{fno3d_forward.12} parent=11 // pred_check_branch
        %165 = sbr.rel (%p163) target = $region16
      $region15: #{fno3d_forward.12} parent=11 // pred_region
        _
      $region16: #{fno3d_forward.12} parent=11 // pred_fallthru
        _
      // Predicated region
      $region17: #{fno3d_forward.12} parent=11 // pred_check
        %p166 = pneg %p92
      $region18: #{fno3d_forward.12} parent=11 // pred_check_branch
        %168 = sbr.rel (%p166) target = $region20
      $region19: #{fno3d_forward.12} parent=11 // pred_region
        _
      $region20: #{fno3d_forward.12} parent=11 // pred_fallthru
        _
    $region12: #{fno3d_forward.12} parent=5 // pred_fallthru
      _
    %p169 = scmp.lt.s32.totalorder %s10, 2
    // Predicated region
    $region21: #{fno3d_forward.12} parent=5 // pred_check
      %p170 = pneg %p169
    $region22: #{fno3d_forward.12} parent=5 // pred_check_branch
      %172 = sbr.rel (%p170) target = $region24
    $region23: #{fno3d_forward.12} parent=5 // pred_region
      // Predicated region
      $region25: #{fno3d_forward.12} parent=23 // pred_check
        %p173 = pneg %p44
      $region26: #{fno3d_forward.12} parent=23 // pred_check_branch
        %175 = sbr.rel (%p173) target = $region28
      $region27: #{fno3d_forward.12} parent=23 // pred_region
        %s176 = smul.u32 4, %s18
        %p177 = scmp.lt.s32.totalorder %s17, 1
        %s178 = scalar_select %p177, %s17, 1
        %p179 = scmp.lt.s32.totalorder %s176, 3
        %s180 = scalar_select %p179, %s176, 3
        %s181 = smul.addr %s178, 12
        %s182 = sadd.s32 %s180, %s181
        %s183 = smul.addr %s182, 8
        %s184 = scalar_lea.vmem %s0, %s183
        %s185 = smul.u32 4, %s18
      $region28: #{fno3d_forward.12} parent=23 // pred_fallthru
        _
      // Predicated region
      $region29: #{fno3d_forward.12} parent=23 // pred_check
        %p186 = pneg %p114
      $region30: #{fno3d_forward.12} parent=23 // pred_check_branch
        %188 = sbr.rel (%p186) target = $region32
      $region31: #{fno3d_forward.12} parent=23 // pred_region
        %s189 = smul.u32 4, %s18
        %p190 = scmp.lt.s32.totalorder %s17, 1
        %s191 = scalar_select %p190, %s17, 1
        %p192 = scmp.lt.s32.totalorder %s189, 3
        %s193 = scalar_select %p192, %s189, 3
        %s194 = smul.addr %s191, 12
        %s195 = sadd.s32 %s193, %s194
        %s196 = smul.addr %s195, 8
        %s197 = scalar_lea.vmem %s3, %s196
        %s198 = smul.u32 4, %s18
      $region32: #{fno3d_forward.12} parent=23 // pred_fallthru
        _
    $region24: #{fno3d_forward.12} parent=5 // pred_fallthru
      _
    %p199 = scmp.le.s32.totalorder 1, %s10
    %p200 = scmp.lt.s32.totalorder %s10, 3
    %p201 = pnand %p199, %p200
    %p202 = pneg %p201
    // Predicated region
    $region33: #{fno3d_forward.12} parent=5 // pred_check
      _
    $region34: #{fno3d_forward.12} parent=5 // pred_check_branch
      %204 = sbr.rel (%p201) target = $region36
    $region35: #{fno3d_forward.12} parent=5 // pred_region
      %s205 = ssub.s32 %s10, 1
      %s206 = smul.u32 4, %s20
      %p207 = scmp.lt.s32.totalorder %s19, 1
      %s208 = scalar_select %p207, %s19, 1
      %p209 = scmp.lt.s32.totalorder %s206, 3
      %s210 = scalar_select %p209, %s206, 3
      %s211 = smul.addr %s208, 12
      %s212 = sadd.s32 %s210, %s211
      %s213 = smul.addr %s212, 8
      %s214 = scalar_lea.vmem %s0, %s213
      %p215 = pneg %p50
      %p216 = pneg %p47
      %p217 = pneg %p71
      %p218 = pneg %p68
      %p219 = pneg %p92
      %p220 = pneg %p89
      %s221 = smul.u32 4, %s20
      %p222 = scmp.lt.s32.totalorder %s19, 1
      %s223 = scalar_select %p222, %s19, 1
      %p224 = scmp.lt.s32.totalorder %s221, 3
      %s225 = scalar_select %p224, %s221, 3
      %s226 = smul.addr %s223, 12
      %s227 = sadd.s32 %s225, %s226
      %s228 = smul.addr %s227, 8
      %s229 = scalar_lea.vmem %s3, %s228
      %p230 = pneg %p120
      %p231 = pneg %p117
      %p232 = pneg %p148
      %p233 = pneg %p145
      %s234 = smul.u32 4, %s20
      %p235 = scmp.lt.s32.totalorder %s19, 1
      %s236 = scalar_select %p235, %s19, 1
      %p237 = scmp.lt.s32.totalorder %s234, 3
      %s238 = scalar_select %p237, %s234, 3
      %s239 = smul.addr %s236, 12
      %s240 = sadd.s32 %s238, %s239
      %s241 = smul.addr %s240, 8
      %s242 = scalar_lea.vmem %s4, %s241
      %s243 = smul.u32 4, %s20
      %p244 = scmp.lt.s32.totalorder %s19, 1
      %s245 = scalar_select %p244, %s19, 1
      %p246 = scmp.lt.s32.totalorder %s243, 3
      %s247 = scalar_select %p246, %s243, 3
      %s248 = smul.addr %s245, 12
      %s249 = sadd.s32 %s247, %s248
      %s250 = smul.addr %s249, 8
      %s251 = scalar_lea.vmem %s0, %s250
      %s252 = smul.u32 4, %s20
      %s253 = smul.u32 4, %s20
      %p254 = scmp.lt.s32.totalorder %s19, 1
      %s255 = scalar_select %p254, %s19, 1
      %p256 = scmp.lt.s32.totalorder %s253, 3
      %s257 = scalar_select %p256, %s253, 3
      %s258 = smul.addr %s255, 12
      %s259 = sadd.s32 %s257, %s258
      %s260 = smul.addr %s259, 8
      %s261 = scalar_lea.vmem %s3, %s260
      %s262 = smul.u32 4, %s20
      %s263 = smul.u32 4, %s20
      %p264 = scmp.lt.s32.totalorder %s19, 1
      %s265 = scalar_select %p264, %s19, 1
      %p266 = scmp.lt.s32.totalorder %s263, 3
      %s267 = scalar_select %p266, %s263, 3
      %s268 = smul.addr %s265, 12
      %s269 = sadd.s32 %s267, %s268
      %s270 = smul.addr %s269, 8
      %s271 = scalar_lea.vmem %s4, %s270
      %s272 = smul.u32 4, %s20
      %v273 = vld [vmem:[%s1] sm:$0xff]
      %v274 = vld [vmem:[%s1 + $0x8] sm:$0xff]
      %v275 = vld [vmem:[%s1 + $0x10] sm:$0xf]
      %v276 = vld [vmem:[%s251] sm:$0xff]
      %v277 = vld [vmem:[%s251 + $0x8] sm:$0xff]
      %v278 = vld [vmem:[%s251 + $0x10] sm:$0xff]
      %v279 = vld [vmem:[%s251 + $0x18] sm:$0xff]
      %v280 = vld [vmem:[%s251 + $0x20] sm:$0xff]
      %v281 = vld [vmem:[%s251 + $0x28] sm:$0xff]
      %v282 = vld [vmem:[%s251 + $0x30] sm:$0xff]
      %v283 = vld [vmem:[%s251 + $0x38] sm:$0xff]
      %v284 = vld [vmem:[%s251 + $0x40] sm:$0xf]
      %v285 = vld [vmem:[%s251 + $0x48] sm:$0xf]
      %v286 = vld [vmem:[%s251 + $0x50] sm:$0xf]
      %v287 = vld [vmem:[%s251 + $0x58] sm:$0xf]
      %v288 = vld [vmem:[%s2] sm:$0xff]
      %v289 = vld [vmem:[%s2 + $0x8] sm:$0xff]
      %v290 = vld [vmem:[%s2 + $0x10] sm:$0xf]
      %292 = vset.pattern.permute.xlu0 0
      %293 = vperm.xlu0 %292, %v288
      %v294 = vpop.permute.xlu0 %293
      %297 = vset.pattern.permute.xlu0 0
      %298 = vperm.xlu0 %297, %v289
      %v299 = vpop.permute.xlu0 %298
      %302 = vset.pattern.permute.xlu0 0
      %303 = vperm.xlu0 %302, %v290
      %v304 = vpop.permute.xlu0 %303
      %vm306 = vcmask 162816
      %v308 = vsel %vm306, %v273, 0
      %v311 = vsel %vm306, %v274, 0
      %v314 = vsel %vm306, %v275, 0
      %vm316 = vcmask 1043456
      %v318 = vsel %vm316, %v284, 0
      %v321 = vsel %vm316, %v285, 0
      %v324 = vsel %vm316, %v286, 0
      %v327 = vsel %vm316, %v287, 0
      %329 = vmatprep.subr.mxu0 %v277
      %330 = vmatpush1.msra.mxu0 %v276
      %331 = vmatprep.subr.mxu0 %v281
      %332 = vmatpush1.msra.mxu0 %v280
      %333 = vmatprep.subr.mxu0 %v321
      %334 = vmatpush1.msra.mxu0 %v318
      %335 = vmatprep.subr.mxu0 0.0
      %336 = vmatpush1.msra.mxu0 0.0
      %337 = vmatprep.subr.mxu0 0.0
      %338 = vmatpush1.msra.mxu0 0.0
      %339 = vmatprep.subr.mxu0 0.0
      %340 = vmatpush1.msra.mxu0 0.0
      %341 = vmatprep.subr.mxu0 0.0
      %342 = vmatpush1.msra.mxu0 0.0
      %343 = vmatprep.subr.mxu0 0.0
      %344 = vmatpush1.msra.mxu0 0.0
      %345 = vmatprep.subr.mxu0 0.0
      %346 = vmatpush1.msra.mxu0 0.0
      %347 = vmatprep.subr.mxu0 0.0
      %348 = vmatpush1.msra.mxu0 0.0
      %349 = vmatprep.subr.mxu0 0.0
      %350 = vmatpush1.msra.mxu0 0.0
      %351 = vmatprep.subr.mxu0 0.0
      %352 = vmatpush1.msra.mxu0 0.0
      %353 = vmatprep.subr.mxu0 0.0
      %354 = vmatpush1.msra.mxu0 0.0
      %355 = vmatprep.subr.mxu0 0.0
      %356 = vmatpush1.msra.mxu0 0.0
      %357 = vmatprep.subr.mxu0 0.0
      %358 = vmatpush1.msra.mxu0 0.0
      %359 = vmatprep.subr.mxu0 0.0
      %360 = vmatpush1.msra.mxu0 0.0
      %361 = vmatprep.subr.mxu0 0.0
      %362 = vmatpush1.msra.mxu0 0.0
      %363 = vmatprep.subr.mxu0 0.0
      %364 = vmatpush1.msra.mxu0 0.0
      %365 = vmatprep.subr.mxu0 0.0
      %366 = vmatpush1.msra.mxu0 0.0
      %367 = vmatprep.subr.mxu0 0.0
      %368 = vmatpush1.msra.mxu0 0.0
      %369 = vmatprep.subr.mxu0 0.0
      %370 = vmatpush1.msra.mxu0 0.0
      %371 = vmatprep.subr.mxu0 0.0
      %372 = vmatpush1.msra.mxu0 0.0
      %373 = vmatprep.subr.mxu0 0.0
      %374 = vmatpush1.msra.mxu0 0.0
      %375 = vmatprep.subr.mxu0 0.0
      %376 = vmatpush1.msra.mxu0 0.0
      %377 = vmatprep.subr.mxu0 0.0
      %378 = vmatpush1.msra.mxu0 0.0
      %379 = vmatprep.subr.mxu0 0.0
      %380 = vmatpush1.msra.mxu0 0.0
      %381 = vmatprep.subr.mxu0 0.0
      %382 = vmatpush1.msra.mxu0 0.0
      %383 = vmatprep.subr.mxu0 0.0
      %384 = vmatpush1.msra.mxu0 0.0
      %385 = vmatprep.subr.mxu0 0.0
      %386 = vmatpush1.msra.mxu0 0.0
      %387 = vmatprep.subr.mxu0 0.0
      %388 = vmatpush1.msra.mxu0 0.0
      %389 = vmatprep.subr.mxu0 0.0
      %390 = vmatpush1.msra.mxu0 0.0
      %391 = vmatprep.subr.mxu0 0.0
      %392 = vmatpush1.msra.mxu0 0.0
      %393 = vmatprep.mubr.f32.mxu0 0.0
      %394 = vmatmul.mubr.f32.gmra.mrb[0].mxu0 %v308
      %v395 = vpop.f32.mrb[0].mxu0
      %v396 = vadd.f32 %v294, %v395
      %v397 = vpop.f32.mrb[0].mxu0
      %v398 = vadd.f32 %v294, %v397
      %399 = vmatprep.mubr.f32.mxu0 0.0
      %400 = vmatmul.mubr.f32.gmra.mrb[0].mxu0 %v311
      %v401 = vpop.f32.mrb[0].mxu0
      %v402 = vadd.f32 %v299, %v401
      %v403 = vpop.f32.mrb[0].mxu0
      %v404 = vadd.f32 %v299, %v403
      %405 = vmatprep.mubr.f32.mxu0 0.0
      %406 = vmatmul.mubr.f32.gmra.mrb[0].mxu0 %v314
      %v407 = vpop.f32.mrb[0].mxu0
      %v408 = vadd.f32 %v304, %v407
      %v409 = vpop.f32.mrb[0].mxu0
      %v410 = vadd.f32 %v304, %v409
      %411 = vdwg.mxu0
      %412 = vmatprep.subr.mxu0 %v279
      %413 = vmatpush1.msra.mxu0 %v278
      %414 = vmatprep.subr.mxu0 %v283
      %415 = vmatpush1.msra.mxu0 %v282
      %416 = vmatprep.subr.mxu0 %v327
      %417 = vmatpush1.msra.mxu0 %v324
      %418 = vmatprep.subr.mxu0 0.0
      %419 = vmatpush1.msra.mxu0 0.0
      %420 = vmatprep.subr.mxu0 0.0
      %421 = vmatpush1.msra.mxu0 0.0
      %422 = vmatprep.subr.mxu0 0.0
      %423 = vmatpush1.msra.mxu0 0.0
      %424 = vmatprep.subr.mxu0 0.0
      %425 = vmatpush1.msra.mxu0 0.0
      %426 = vmatprep.subr.mxu0 0.0
      %427 = vmatpush1.msra.mxu0 0.0
      %428 = vmatprep.subr.mxu0 0.0
      %429 = vmatpush1.msra.mxu0 0.0
      %430 = vmatprep.subr.mxu0 0.0
      %431 = vmatpush1.msra.mxu0 0.0
      %432 = vmatprep.subr.mxu0 0.0
      %433 = vmatpush1.msra.mxu0 0.0
      %434 = vmatprep.subr.mxu0 0.0
      %435 = vmatpush1.msra.mxu0 0.0
      %436 = vmatprep.subr.mxu0 0.0
      %437 = vmatpush1.msra.mxu0 0.0
      %438 = vmatprep.subr.mxu0 0.0
      %439 = vmatpush1.msra.mxu0 0.0
      %440 = vmatprep.subr.mxu0 0.0
      %441 = vmatpush1.msra.mxu0 0.0
      %442 = vmatprep.subr.mxu0 0.0
      %443 = vmatpush1.msra.mxu0 0.0
      %444 = vmatprep.subr.mxu0 0.0
      %445 = vmatpush1.msra.mxu0 0.0
      %446 = vmatprep.subr.mxu0 0.0
      %447 = vmatpush1.msra.mxu0 0.0
      %448 = vmatprep.subr.mxu0 0.0
      %449 = vmatpush1.msra.mxu0 0.0
      %450 = vmatprep.subr.mxu0 0.0
      %451 = vmatpush1.msra.mxu0 0.0
      %452 = vmatprep.subr.mxu0 0.0
      %453 = vmatpush1.msra.mxu0 0.0
      %454 = vmatprep.subr.mxu0 0.0
      %455 = vmatpush1.msra.mxu0 0.0
      %456 = vmatprep.subr.mxu0 0.0
      %457 = vmatpush1.msra.mxu0 0.0
      %458 = vmatprep.subr.mxu0 0.0
      %459 = vmatpush1.msra.mxu0 0.0
      %460 = vmatprep.subr.mxu0 0.0
      %461 = vmatpush1.msra.mxu0 0.0
      %462 = vmatprep.subr.mxu0 0.0
      %463 = vmatpush1.msra.mxu0 0.0
      %464 = vmatprep.subr.mxu0 0.0
      %465 = vmatpush1.msra.mxu0 0.0
      %466 = vmatprep.subr.mxu0 0.0
      %467 = vmatpush1.msra.mxu0 0.0
      %468 = vmatprep.subr.mxu0 0.0
      %469 = vmatpush1.msra.mxu0 0.0
      %470 = vmatprep.subr.mxu0 0.0
      %471 = vmatpush1.msra.mxu0 0.0
      %472 = vmatprep.subr.mxu0 0.0
      %473 = vmatpush1.msra.mxu0 0.0
      %474 = vmatprep.subr.mxu0 0.0
      %475 = vmatpush1.msra.mxu0 0.0
      %476 = vmatprep.mubr.f32.mxu0 0.0
      %477 = vmatmul.mubr.f32.gmra.mrb[0].mxu0 %v308
      %v478 = vpop.f32.mrb[0].mxu0
      %v479 = vadd.f32 %v294, %v478
      %v480 = vpop.f32.mrb[0].mxu0
      %v481 = vadd.f32 %v294, %v480
      %482 = vmatprep.mubr.f32.mxu0 0.0
      %483 = vmatmul.mubr.f32.gmra.mrb[0].mxu0 %v311
      %v484 = vpop.f32.mrb[0].mxu0
      %v485 = vadd.f32 %v299, %v484
      %v486 = vpop.f32.mrb[0].mxu0
      %v487 = vadd.f32 %v299, %v486
      %488 = vmatprep.mubr.f32.mxu0 0.0
      %489 = vmatmul.mubr.f32.gmra.mrb[0].mxu0 %v314
      %v490 = vpop.f32.mrb[0].mxu0
      %v491 = vadd.f32 %v304, %v490
      %v492 = vpop.f32.mrb[0].mxu0
      %v493 = vadd.f32 %v304, %v492
      %494 = vdwg.mxu0
      %v495 = vld [vmem:[%s261] sm:$0xff]
      %v496 = vld [vmem:[%s261 + $0x8] sm:$0xff]
      %v497 = vld [vmem:[%s261 + $0x10] sm:$0xff]
      %v498 = vld [vmem:[%s261 + $0x18] sm:$0xff]
      %v499 = vld [vmem:[%s261 + $0x20] sm:$0xff]
      %v500 = vld [vmem:[%s261 + $0x28] sm:$0xff]
      %v501 = vld [vmem:[%s261 + $0x30] sm:$0xff]
      %v502 = vld [vmem:[%s261 + $0x38] sm:$0xff]
      %v503 = vld [vmem:[%s261 + $0x40] sm:$0xf]
      %v504 = vld [vmem:[%s261 + $0x48] sm:$0xf]
      %v505 = vld [vmem:[%s261 + $0x50] sm:$0xf]
      %v506 = vld [vmem:[%s261 + $0x58] sm:$0xf]
      %v507 = vadd.f32 %v396, %v495
      %v508 = vadd.f32 %v398, %v496
      %v509 = vadd.f32 %v479, %v497
      %v510 = vadd.f32 %v481, %v498
      %v511 = vadd.f32 %v402, %v499
      %v512 = vadd.f32 %v404, %v500
      %v513 = vadd.f32 %v485, %v501
      %v514 = vadd.f32 %v487, %v502
      %v515 = vadd.f32 %v408, %v503
      %v516 = vadd.f32 %v410, %v504
      %v517 = vadd.f32 %v491, %v505
      %v518 = vadd.f32 %v493, %v506
      %v519 = vmax.f32 %v507, 0.0
      %v520 = vmax.f32 %v508, 0.0
      %v521 = vmax.f32 %v509, 0.0
      %v522 = vmax.f32 %v510, 0.0
      %v523 = vmax.f32 %v511, 0.0
      %v524 = vmax.f32 %v512, 0.0
      %v525 = vmax.f32 %v513, 0.0
      %v526 = vmax.f32 %v514, 0.0
      %v527 = vmax.f32 %v515, 0.0
      %v528 = vmax.f32 %v516, 0.0
      %v529 = vmax.f32 %v517, 0.0
      %v530 = vmax.f32 %v518, 0.0
      %531 = vst [vmem:[%s271] sm:$0xff] %v519
      %532 = vst [vmem:[%s271 + $0x8] sm:$0xff] %v520
      %533 = vst [vmem:[%s271 + $0x10] sm:$0xff] %v521
      %534 = vst [vmem:[%s271 + $0x18] sm:$0xff] %v522
      %535 = vst [vmem:[%s271 + $0x20] sm:$0xff] %v523
      %536 = vst [vmem:[%s271 + $0x28] sm:$0xff] %v524
      %537 = vst [vmem:[%s271 + $0x30] sm:$0xff] %v525
      %538 = vst [vmem:[%s271 + $0x38] sm:$0xff] %v526
      %539 = vst [vmem:[%s271 + $0x40] sm:$0xf] %v527
      %540 = vst [vmem:[%s271 + $0x48] sm:$0xf] %v528
      %541 = vst [vmem:[%s271 + $0x50] sm:$0xf] %v529
      %542 = vst [vmem:[%s271 + $0x58] sm:$0xf] %v530
      %s543 = smul.u32 4, %s20
      %p544 = scmp.lt.s32.totalorder %s19, 1
      %s545 = scalar_select %p544, %s19, 1
      %p546 = scmp.lt.s32.totalorder %s543, 3
      %s547 = scalar_select %p546, %s543, 3
      %s548 = smul.addr %s545, 12
      %s549 = sadd.s32 %s547, %s548
      %s550 = smul.addr %s549, 8
      %s551 = scalar_lea.vmem %s4, %s550
      // Predicated region
      $region37: #{fno3d_forward.12} parent=35 // pred_check
        %p552 = pneg %p145
      $region38: #{fno3d_forward.12} parent=35 // pred_check_branch
        %554 = sbr.rel (%p552) target = $region40
      $region39: #{fno3d_forward.12} parent=35 // pred_region
        %s555 = smul.u32 4, %s20
      $region40: #{fno3d_forward.12} parent=35 // pred_fallthru
        _
    $region36: #{fno3d_forward.12} parent=5 // pred_fallthru
      _
    %p556 = scmp.le.s32.totalorder 2, %s10
    // Predicated region
    $region41: #{fno3d_forward.12} parent=5 // pred_check
      %p557 = pneg %p556
    $region42: #{fno3d_forward.12} parent=5 // pred_check_branch
      %559 = sbr.rel (%p557) target = $region44
    $region43: #{fno3d_forward.12} parent=5 // pred_region
      %s560 = ssub.s32 %s10, 2
      // Predicated region
      $region45: #{fno3d_forward.12} parent=43 // pred_check
        %p561 = pneg %p151
      $region46: #{fno3d_forward.12} parent=43 // pred_check_branch
        %563 = sbr.rel (%p561) target = $region48
      $region47: #{fno3d_forward.12} parent=43 // pred_region
        %s564 = smul.u32 4, %s22
        %p565 = scmp.lt.s32.totalorder %s21, 1
        %s566 = scalar_select %p565, %s21, 1
        %p567 = scmp.lt.s32.totalorder %s564, 3
        %s568 = scalar_select %p567, %s564, 3
        %s569 = smul.addr %s566, 12
        %s570 = sadd.s32 %s568, %s569
        %s571 = smul.addr %s570, 8
        %s572 = scalar_lea.vmem %s4, %s571
      $region48: #{fno3d_forward.12} parent=43 // pred_fallthru
        _
    $region44: #{fno3d_forward.12} parent=5 // pred_fallthru
      _
  $region6: #{fno3d_forward.12} parent=0 // loop_footer
    %s14 = sadd.s32 1, %s10
  $region7: #{fno3d_forward.12} parent=0 // loop_footer_branch
    %9 = sbr.rel target = $region3
  $region8: #{fno3d_forward.12} parent=0 // loop_exit
    _

// kernel: fno3d_forward.18
$region0: #{fno3d_forward.18}
  #allocation0 [shape = 'u32[]', space=smem, size = 0x4, offset = 0x4, fixed_abs, tag = 'smem constant byte address 0x4 - core index']
  #allocation1 [shape = 'u32[144,128]{1,0:T(1,128)}', space=vmem, size = 0x12000, scoped, tag = 'internal scratch']
  %s0 = inlined_call_operand.vmem [shape: f32[2,20,512], index: 0, kind: input, shape index: {}]
  %s1 = inlined_call_operand.vmem [shape: f32[20,20], index: 1, kind: input, shape index: {}]
  %s2 = inlined_call_operand.vmem [shape: f32[20,1], index: 2, kind: input, shape index: {}]
  %s3 = inlined_call_operand.vmem [shape: f32[2,20,512], index: 3, kind: input, shape index: {}]
  %s4 = inlined_call_operand.vmem [shape: bf16[2,20,512], index: 4, kind: output, shape index: {}]
  %s5 = sld [smem:[#allocation0]]
  $region49: #{fno3d_forward.18} parent=0
    _
  %s7 = ssub.s32 1, %s5
  %s8 = scalar_select 0, %s7, %s5
  loop: start=0, step=1, limit=4
  $region2: #{fno3d_forward.18} parent=0 // loop_pre_header
    _
  $region3: #{fno3d_forward.18} parent=0 // loop_header
    %s10 = sphi 0, %s14
    %p11 = scmp.ge.s32.totalorder %s10, 4
    %s17 = sphi 0, %s29
    %s18 = sphi 0, %s25
    %s19 = sphi 0, %s17
    %s20 = sphi 0, %s18
    %s21 = sphi 0, %s19
    %s22 = sphi 0, %s20
    %s34 = sphi 0, %s36
    %s37 = sphi 0, %s34
    %s38 = sphi 0, %s37
    %s54 = sphi 0, %s38
    %s58 = sphi 0, %s58
    %s60 = sphi 0, %s58
    %s61 = sphi 0, %s60
    %s75 = sphi 0, %s61
    %s79 = sphi 0, %s79
    %s81 = sphi 0, %s79
    %s82 = sphi 0, %s81
    %s96 = sphi 0, %s82
    %s104 = sphi 0, %s106
    %s107 = sphi 0, %s104
    %s108 = sphi 0, %s107
    %s124 = sphi 0, %s108
    %s132 = sphi 0, %s134
    %s135 = sphi 0, %s132
    %s136 = sphi 0, %s135
    %s152 = sphi 0, %s136
  $region4: #{fno3d_forward.18} parent=0 // loop_header_branch
    %13 = sbr.rel (%p11) target = $region8
  $region5: #{fno3d_forward.18} parent=0 // loop_body
    %s15 = ssub.s32 %s10, 1
    %s16 = ssub.s32 %s10, 2
    %s23 = sadd.s32 1, %s18
    %p24 = scmp.ge.s32.totalorder %s23, 1
    %s25 = scalar_select %p24, 0, %s23
    %s26 = sadd.s32 1, %s17
    %s27 = scalar_select %p24, %s26, %s17
    %p28 = scmp.ge.s32.totalorder %s27, 2
    %s29 = scalar_select %p28, 0, %s27
    %s30 = ssub.s32 %s17, %s29
    %s31 = ssub.s32 %s18, %s25
    %s32 = sor.u32 %s30, %s31
    %p33 = scmp.eq.s32.totalorder %s32, 0
    %s35 = sadd.s32 %s34, 1
    %s36 = scalar_select %p33, %s34, %s35
    %p39 = pneg %p33
    %p40 = scmp.eq.s32.totalorder %s10, 1
    %p41 = por %p39, %p40
    %p42 = scmp.ne.s32.totalorder %s34, %s37
    %p43 = scmp.eq.s32.totalorder %s10, 0
    %p44 = por %p42, %p43
    %p45 = scmp.ne.s32.totalorder %s34, %s37
    %p46 = scmp.eq.s32.totalorder %s15, 1
    %p47 = por %p45, %p46
    %p48 = scmp.ne.s32.totalorder %s37, %s38
    %p49 = scmp.eq.s32.totalorder %s15, 0
    %p50 = por %p48, %p49
    %p51 = scmp.ne.s32.totalorder %s37, %s38
    %p52 = scmp.eq.s32.totalorder %s16, 1
    %p53 = por %p51, %p52
    %p55 = scmp.ne.s32.totalorder %s38, %s54
    %p56 = scmp.eq.s32.totalorder %s16, 0
    %p57 = por %p55, %p56
    %s59 = sadd.s32 %s58, 1
    %p62 = scmp.eq.s32.totalorder %s10, 1
    %p63 = scmp.ne.s32.totalorder %s58, %s60
    %p64 = scmp.eq.s32.totalorder %s10, 0
    %p65 = por %p63, %p64
    %p66 = scmp.ne.s32.totalorder %s58, %s60
    %p67 = scmp.eq.s32.totalorder %s15, 1
    %p68 = por %p66, %p67
    %p69 = scmp.ne.s32.totalorder %s60, %s61
    %p70 = scmp.eq.s32.totalorder %s15, 0
    %p71 = por %p69, %p70
    %p72 = scmp.ne.s32.totalorder %s60, %s61
    %p73 = scmp.eq.s32.totalorder %s16, 1
    %p74 = por %p72, %p73
    %p76 = scmp.ne.s32.totalorder %s61, %s75
    %p77 = scmp.eq.s32.totalorder %s16, 0
    %p78 = por %p76, %p77
    %s80 = sadd.s32 %s79, 1
    %p83 = scmp.eq.s32.totalorder %s10, 1
    %p84 = scmp.ne.s32.totalorder %s79, %s81
    %p85 = scmp.eq.s32.totalorder %s10, 0
    %p86 = por %p84, %p85
    %p87 = scmp.ne.s32.totalorder %s79, %s81
    %p88 = scmp.eq.s32.totalorder %s15, 1
    %p89 = por %p87, %p88
    %p90 = scmp.ne.s32.totalorder %s81, %s82
    %p91 = scmp.eq.s32.totalorder %s15, 0
    %p92 = por %p90, %p91
    %p93 = scmp.ne.s32.totalorder %s81, %s82
    %p94 = scmp.eq.s32.totalorder %s16, 1
    %p95 = por %p93, %p94
    %p97 = scmp.ne.s32.totalorder %s82, %s96
    %p98 = scmp.eq.s32.totalorder %s16, 0
    %p99 = por %p97, %p98
    %s100 = ssub.s32 %s17, %s29
    %s101 = ssub.s32 %s18, %s25
    %s102 = sor.u32 %s100, %s101
    %p103 = scmp.eq.s32.totalorder %s102, 0
    %s105 = sadd.s32 %s104, 1
    %s106 = scalar_select %p103, %s104, %s105
    %p109 = pneg %p103
    %p110 = scmp.eq.s32.totalorder %s10, 1
    %p111 = por %p109, %p110
    %p112 = scmp.ne.s32.totalorder %s104, %s107
    %p113 = scmp.eq.s32.totalorder %s10, 0
    %p114 = por %p112, %p113
    %p115 = scmp.ne.s32.totalorder %s104, %s107
    %p116 = scmp.eq.s32.totalorder %s15, 1
    %p117 = por %p115, %p116
    %p118 = scmp.ne.s32.totalorder %s107, %s108
    %p119 = scmp.eq.s32.totalorder %s15, 0
    %p120 = por %p118, %p119
    %p121 = scmp.ne.s32.totalorder %s107, %s108
    %p122 = scmp.eq.s32.totalorder %s16, 1
    %p123 = por %p121, %p122
    %p125 = scmp.ne.s32.totalorder %s108, %s124
    %p126 = scmp.eq.s32.totalorder %s16, 0
    %p127 = por %p125, %p126
    %s128 = ssub.s32 %s17, %s29
    %s129 = ssub.s32 %s18, %s25
    %s130 = sor.u32 %s128, %s129
    %p131 = scmp.eq.s32.totalorder %s130, 0
    %s133 = sadd.s32 %s132, 1
    %s134 = scalar_select %p131, %s132, %s133
    %p137 = pneg %p131
    %p138 = scmp.eq.s32.totalorder %s10, 1
    %p139 = por %p137, %p138
    %p140 = scmp.ne.s32.totalorder %s132, %s135
    %p141 = scmp.eq.s32.totalorder %s10, 0
    %p142 = por %p140, %p141
    %p143 = scmp.ne.s32.totalorder %s132, %s135
    %p144 = scmp.eq.s32.totalorder %s15, 1
    %p145 = por %p143, %p144
    %p146 = scmp.ne.s32.totalorder %s135, %s136
    %p147 = scmp.eq.s32.totalorder %s15, 0
    %p148 = por %p146, %p147
    %p149 = scmp.ne.s32.totalorder %s135, %s136
    %p150 = scmp.eq.s32.totalorder %s16, 1
    %p151 = por %p149, %p150
    %p153 = scmp.ne.s32.totalorder %s136, %s152
    %p154 = scmp.eq.s32.totalorder %s16, 0
    %p155 = por %p153, %p154
    %p156 = scmp.le.s32.totalorder 1, %s10
    %p157 = scmp.lt.s32.totalorder %s10, 3
    %p158 = pnand %p156, %p157
    %p159 = pneg %p158
    // Predicated region
    $region9: #{fno3d_forward.18} parent=5 // pred_check
      _
    $region10: #{fno3d_forward.18} parent=5 // pred_check_branch
      %161 = sbr.rel (%p158) target = $region12
    $region11: #{fno3d_forward.18} parent=5 // pred_region
      %s162 = ssub.s32 %s10, 1
      // Predicated region
      $region13: #{fno3d_forward.18} parent=11 // pred_check
        %p163 = pneg %p71
      $region14: #{fno3d_forward.18} parent=11 // pred_check_branch
        %165 = sbr.rel (%p163) target = $region16
      $region15: #{fno3d_forward.18} parent=11 // pred_region
        _
      $region16: #{fno3d_forward.18} parent=11 // pred_fallthru
        _
      // Predicated region
      $region17: #{fno3d_forward.18} parent=11 // pred_check
        %p166 = pneg %p92
      $region18: #{fno3d_forward.18} parent=11 // pred_check_branch
        %168 = sbr.rel (%p166) target = $region20
      $region19: #{fno3d_forward.18} parent=11 // pred_region
        _
      $region20: #{fno3d_forward.18} parent=11 // pred_fallthru
        _
    $region12: #{fno3d_forward.18} parent=5 // pred_fallthru
      _
    %p169 = scmp.lt.s32.totalorder %s10, 2
    // Predicated region
    $region21: #{fno3d_forward.18} parent=5 // pred_check
      %p170 = pneg %p169
    $region22: #{fno3d_forward.18} parent=5 // pred_check_branch
      %172 = sbr.rel (%p170) target = $region24
    $region23: #{fno3d_forward.18} parent=5 // pred_region
      // Predicated region
      $region25: #{fno3d_forward.18} parent=23 // pred_check
        %p173 = pneg %p44
      $region26: #{fno3d_forward.18} parent=23 // pred_check_branch
        %175 = sbr.rel (%p173) target = $region28
      $region27: #{fno3d_forward.18} parent=23 // pred_region
        %s176 = smul.u32 4, %s18
        %p177 = scmp.lt.s32.totalorder %s17, 1
        %s178 = scalar_select %p177, %s17, 1
        %p179 = scmp.lt.s32.totalorder %s176, 3
        %s180 = scalar_select %p179, %s176, 3
        %s181 = smul.addr %s178, 12
        %s182 = sadd.s32 %s180, %s181
        %s183 = smul.addr %s182, 8
        %s184 = scalar_lea.vmem %s0, %s183
        %s185 = smul.u32 4, %s18
      $region28: #{fno3d_forward.18} parent=23 // pred_fallthru
        _
      // Predicated region
      $region29: #{fno3d_forward.18} parent=23 // pred_check
        %p186 = pneg %p114
      $region30: #{fno3d_forward.18} parent=23 // pred_check_branch
        %188 = sbr.rel (%p186) target = $region32
      $region31: #{fno3d_forward.18} parent=23 // pred_region
        %s189 = smul.u32 4, %s18
        %p190 = scmp.lt.s32.totalorder %s17, 1
        %s191 = scalar_select %p190, %s17, 1
        %p192 = scmp.lt.s32.totalorder %s189, 3
        %s193 = scalar_select %p192, %s189, 3
        %s194 = smul.addr %s191, 12
        %s195 = sadd.s32 %s193, %s194
        %s196 = smul.addr %s195, 8
        %s197 = scalar_lea.vmem %s3, %s196
        %s198 = smul.u32 4, %s18
      $region32: #{fno3d_forward.18} parent=23 // pred_fallthru
        _
    $region24: #{fno3d_forward.18} parent=5 // pred_fallthru
      _
    %p199 = scmp.le.s32.totalorder 1, %s10
    %p200 = scmp.lt.s32.totalorder %s10, 3
    %p201 = pnand %p199, %p200
    %p202 = pneg %p201
    // Predicated region
    $region33: #{fno3d_forward.18} parent=5 // pred_check
      _
    $region34: #{fno3d_forward.18} parent=5 // pred_check_branch
      %204 = sbr.rel (%p201) target = $region36
    $region35: #{fno3d_forward.18} parent=5 // pred_region
      %s205 = ssub.s32 %s10, 1
      %s206 = smul.u32 4, %s20
      %p207 = scmp.lt.s32.totalorder %s19, 1
      %s208 = scalar_select %p207, %s19, 1
      %p209 = scmp.lt.s32.totalorder %s206, 3
      %s210 = scalar_select %p209, %s206, 3
      %s211 = smul.addr %s208, 12
      %s212 = sadd.s32 %s210, %s211
      %s213 = smul.addr %s212, 8
      %s214 = scalar_lea.vmem %s0, %s213
      %p215 = pneg %p50
      %p216 = pneg %p47
      %p217 = pneg %p71
      %p218 = pneg %p68
      %p219 = pneg %p92
      %p220 = pneg %p89
      %s221 = smul.u32 4, %s20
      %p222 = scmp.lt.s32.totalorder %s19, 1
      %s223 = scalar_select %p222, %s19, 1
      %p224 = scmp.lt.s32.totalorder %s221, 3
      %s225 = scalar_select %p224, %s221, 3
      %s226 = smul.addr %s223, 12
      %s227 = sadd.s32 %s225, %s226
      %s228 = smul.addr %s227, 8
      %s229 = scalar_lea.vmem %s3, %s228
      %p230 = pneg %p120
      %p231 = pneg %p117
      %p232 = pneg %p148
      %p233 = pneg %p145
      %s234 = smul.u32 4, %s20
      %p235 = scmp.lt.s32.totalorder %s19, 1
      %s236 = scalar_select %p235, %s19, 1
      %p237 = scmp.lt.s32.totalorder %s234, 3
      %s238 = scalar_select %p237, %s234, 3
      %s239 = smul.addr %s236, 12
      %s240 = sadd.s32 %s238, %s239
      %s241 = smul.addr %s240, 4
      %s242 = scalar_lea.vmem %s4, %s241
      %s243 = smul.u32 4, %s20
      %p244 = scmp.lt.s32.totalorder %s19, 1
      %s245 = scalar_select %p244, %s19, 1
      %p246 = scmp.lt.s32.totalorder %s243, 3
      %s247 = scalar_select %p246, %s243, 3
      %s248 = smul.addr %s245, 12
      %s249 = sadd.s32 %s247, %s248
      %s250 = smul.addr %s249, 8
      %s251 = scalar_lea.vmem %s0, %s250
      %s252 = smul.u32 4, %s20
      %s253 = smul.u32 4, %s20
      %p254 = scmp.lt.s32.totalorder %s19, 1
      %s255 = scalar_select %p254, %s19, 1
      %p256 = scmp.lt.s32.totalorder %s253, 3
      %s257 = scalar_select %p256, %s253, 3
      %s258 = smul.addr %s255, 12
      %s259 = sadd.s32 %s257, %s258
      %s260 = smul.addr %s259, 8
      %s261 = scalar_lea.vmem %s3, %s260
      %s262 = smul.u32 4, %s20
      %s263 = smul.u32 4, %s20
      %p264 = scmp.lt.s32.totalorder %s19, 1
      %s265 = scalar_select %p264, %s19, 1
      %p266 = scmp.lt.s32.totalorder %s263, 3
      %s267 = scalar_select %p266, %s263, 3
      %s268 = smul.addr %s265, 12
      %s269 = sadd.s32 %s267, %s268
      %s270 = smul.addr %s269, 4
      %s271 = scalar_lea.vmem %s4, %s270
      %s272 = smul.u32 4, %s20
      %v273 = vld [vmem:[%s1] sm:$0xff]
      %v274 = vld [vmem:[%s1 + $0x8] sm:$0xff]
      %v275 = vld [vmem:[%s1 + $0x10] sm:$0xf]
      %v276 = vld [vmem:[%s251] sm:$0xff]
      %v277 = vld [vmem:[%s251 + $0x8] sm:$0xff]
      %v278 = vld [vmem:[%s251 + $0x10] sm:$0xff]
      %v279 = vld [vmem:[%s251 + $0x18] sm:$0xff]
      %v280 = vld [vmem:[%s251 + $0x20] sm:$0xff]
      %v281 = vld [vmem:[%s251 + $0x28] sm:$0xff]
      %v282 = vld [vmem:[%s251 + $0x30] sm:$0xff]
      %v283 = vld [vmem:[%s251 + $0x38] sm:$0xff]
      %v284 = vld [vmem:[%s251 + $0x40] sm:$0xf]
      %v285 = vld [vmem:[%s251 + $0x48] sm:$0xf]
      %v286 = vld [vmem:[%s251 + $0x50] sm:$0xf]
      %v287 = vld [vmem:[%s251 + $0x58] sm:$0xf]
      %v288 = vld [vmem:[%s2] sm:$0xff]
      %v289 = vld [vmem:[%s2 + $0x8] sm:$0xff]
      %v290 = vld [vmem:[%s2 + $0x10] sm:$0xf]
      %292 = vset.pattern.permute.xlu0 0
      %293 = vperm.xlu0 %292, %v288
      %v294 = vpop.permute.xlu0 %293
      %297 = vset.pattern.permute.xlu0 0
      %298 = vperm.xlu0 %297, %v289
      %v299 = vpop.permute.xlu0 %298
      %302 = vset.pattern.permute.xlu0 0
      %303 = vperm.xlu0 %302, %v290
      %v304 = vpop.permute.xlu0 %303
      %vm306 = vcmask 162816
      %v308 = vsel %vm306, %v273, 0
      %v311 = vsel %vm306, %v274, 0
      %v314 = vsel %vm306, %v275, 0
      %vm316 = vcmask 1043456
      %v318 = vsel %vm316, %v284, 0
      %v321 = vsel %vm316, %v285, 0
      %v324 = vsel %vm316, %v286, 0
      %v327 = vsel %vm316, %v287, 0
      %329 = vmatprep.subr.mxu0 %v277
      %330 = vmatpush1.msra.mxu0 %v276
      %331 = vmatprep.subr.mxu0 %v281
      %332 = vmatpush1.msra.mxu0 %v280
      %333 = vmatprep.subr.mxu0 %v321
      %334 = vmatpush1.msra.mxu0 %v318
      %335 = vmatprep.subr.mxu0 0.0
      %336 = vmatpush1.msra.mxu0 0.0
      %337 = vmatprep.subr.mxu0 0.0
      %338 = vmatpush1.msra.mxu0 0.0
      %339 = vmatprep.subr.mxu0 0.0
      %340 = vmatpush1.msra.mxu0 0.0
      %341 = vmatprep.subr.mxu0 0.0
      %342 = vmatpush1.msra.mxu0 0.0
      %343 = vmatprep.subr.mxu0 0.0
      %344 = vmatpush1.msra.mxu0 0.0
      %345 = vmatprep.subr.mxu0 0.0
      %346 = vmatpush1.msra.mxu0 0.0
      %347 = vmatprep.subr.mxu0 0.0
      %348 = vmatpush1.msra.mxu0 0.0
      %349 = vmatprep.subr.mxu0 0.0
      %350 = vmatpush1.msra.mxu0 0.0
      %351 = vmatprep.subr.mxu0 0.0
      %352 = vmatpush1.msra.mxu0 0.0
      %353 = vmatprep.subr.mxu0 0.0
      %354 = vmatpush1.msra.mxu0 0.0
      %355 = vmatprep.subr.mxu0 0.0
      %356 = vmatpush1.msra.mxu0 0.0
      %357 = vmatprep.subr.mxu0 0.0
      %358 = vmatpush1.msra.mxu0 0.0
      %359 = vmatprep.subr.mxu0 0.0
      %360 = vmatpush1.msra.mxu0 0.0
      %361 = vmatprep.subr.mxu0 0.0
      %362 = vmatpush1.msra.mxu0 0.0
      %363 = vmatprep.subr.mxu0 0.0
      %364 = vmatpush1.msra.mxu0 0.0
      %365 = vmatprep.subr.mxu0 0.0
      %366 = vmatpush1.msra.mxu0 0.0
      %367 = vmatprep.subr.mxu0 0.0
      %368 = vmatpush1.msra.mxu0 0.0
      %369 = vmatprep.subr.mxu0 0.0
      %370 = vmatpush1.msra.mxu0 0.0
      %371 = vmatprep.subr.mxu0 0.0
      %372 = vmatpush1.msra.mxu0 0.0
      %373 = vmatprep.subr.mxu0 0.0
      %374 = vmatpush1.msra.mxu0 0.0
      %375 = vmatprep.subr.mxu0 0.0
      %376 = vmatpush1.msra.mxu0 0.0
      %377 = vmatprep.subr.mxu0 0.0
      %378 = vmatpush1.msra.mxu0 0.0
      %379 = vmatprep.subr.mxu0 0.0
      %380 = vmatpush1.msra.mxu0 0.0
      %381 = vmatprep.subr.mxu0 0.0
      %382 = vmatpush1.msra.mxu0 0.0
      %383 = vmatprep.subr.mxu0 0.0
      %384 = vmatpush1.msra.mxu0 0.0
      %385 = vmatprep.subr.mxu0 0.0
      %386 = vmatpush1.msra.mxu0 0.0
      %387 = vmatprep.subr.mxu0 0.0
      %388 = vmatpush1.msra.mxu0 0.0
      %389 = vmatprep.subr.mxu0 0.0
      %390 = vmatpush1.msra.mxu0 0.0
      %391 = vmatprep.subr.mxu0 0.0
      %392 = vmatpush1.msra.mxu0 0.0
      %393 = vmatprep.mubr.f32.mxu0 0.0
      %394 = vmatmul.mubr.f32.gmra.mrb[0].mxu0 %v308
      %v395 = vpop.f32.mrb[0].mxu0
      %v396 = vadd.f32 %v294, %v395
      %v397 = vpop.f32.mrb[0].mxu0
      %v398 = vadd.f32 %v294, %v397
      %399 = vmatprep.mubr.f32.mxu0 0.0
      %400 = vmatmul.mubr.f32.gmra.mrb[0].mxu0 %v311
      %v401 = vpop.f32.mrb[0].mxu0
      %v402 = vadd.f32 %v299, %v401
      %v403 = vpop.f32.mrb[0].mxu0
      %v404 = vadd.f32 %v299, %v403
      %405 = vmatprep.mubr.f32.mxu0 0.0
      %406 = vmatmul.mubr.f32.gmra.mrb[0].mxu0 %v314
      %v407 = vpop.f32.mrb[0].mxu0
      %v408 = vadd.f32 %v304, %v407
      %v409 = vpop.f32.mrb[0].mxu0
      %v410 = vadd.f32 %v304, %v409
      %411 = vdwg.mxu0
      %412 = vmatprep.subr.mxu0 %v279
      %413 = vmatpush1.msra.mxu0 %v278
      %414 = vmatprep.subr.mxu0 %v283
      %415 = vmatpush1.msra.mxu0 %v282
      %416 = vmatprep.subr.mxu0 %v327
      %417 = vmatpush1.msra.mxu0 %v324
      %418 = vmatprep.subr.mxu0 0.0
      %419 = vmatpush1.msra.mxu0 0.0
      %420 = vmatprep.subr.mxu0 0.0
      %421 = vmatpush1.msra.mxu0 0.0
      %422 = vmatprep.subr.mxu0 0.0
      %423 = vmatpush1.msra.mxu0 0.0
      %424 = vmatprep.subr.mxu0 0.0
      %425 = vmatpush1.msra.mxu0 0.0
      %426 = vmatprep.subr.mxu0 0.0
      %427 = vmatpush1.msra.mxu0 0.0
      %428 = vmatprep.subr.mxu0 0.0
      %429 = vmatpush1.msra.mxu0 0.0
      %430 = vmatprep.subr.mxu0 0.0
      %431 = vmatpush1.msra.mxu0 0.0
      %432 = vmatprep.subr.mxu0 0.0
      %433 = vmatpush1.msra.mxu0 0.0
      %434 = vmatprep.subr.mxu0 0.0
      %435 = vmatpush1.msra.mxu0 0.0
      %436 = vmatprep.subr.mxu0 0.0
      %437 = vmatpush1.msra.mxu0 0.0
      %438 = vmatprep.subr.mxu0 0.0
      %439 = vmatpush1.msra.mxu0 0.0
      %440 = vmatprep.subr.mxu0 0.0
      %441 = vmatpush1.msra.mxu0 0.0
      %442 = vmatprep.subr.mxu0 0.0
      %443 = vmatpush1.msra.mxu0 0.0
      %444 = vmatprep.subr.mxu0 0.0
      %445 = vmatpush1.msra.mxu0 0.0
      %446 = vmatprep.subr.mxu0 0.0
      %447 = vmatpush1.msra.mxu0 0.0
      %448 = vmatprep.subr.mxu0 0.0
      %449 = vmatpush1.msra.mxu0 0.0
      %450 = vmatprep.subr.mxu0 0.0
      %451 = vmatpush1.msra.mxu0 0.0
      %452 = vmatprep.subr.mxu0 0.0
      %453 = vmatpush1.msra.mxu0 0.0
      %454 = vmatprep.subr.mxu0 0.0
      %455 = vmatpush1.msra.mxu0 0.0
      %456 = vmatprep.subr.mxu0 0.0
      %457 = vmatpush1.msra.mxu0 0.0
      %458 = vmatprep.subr.mxu0 0.0
      %459 = vmatpush1.msra.mxu0 0.0
      %460 = vmatprep.subr.mxu0 0.0
      %461 = vmatpush1.msra.mxu0 0.0
      %462 = vmatprep.subr.mxu0 0.0
      %463 = vmatpush1.msra.mxu0 0.0
      %464 = vmatprep.subr.mxu0 0.0
      %465 = vmatpush1.msra.mxu0 0.0
      %466 = vmatprep.subr.mxu0 0.0
      %467 = vmatpush1.msra.mxu0 0.0
      %468 = vmatprep.subr.mxu0 0.0
      %469 = vmatpush1.msra.mxu0 0.0
      %470 = vmatprep.subr.mxu0 0.0
      %471 = vmatpush1.msra.mxu0 0.0
      %472 = vmatprep.subr.mxu0 0.0
      %473 = vmatpush1.msra.mxu0 0.0
      %474 = vmatprep.subr.mxu0 0.0
      %475 = vmatpush1.msra.mxu0 0.0
      %476 = vmatprep.mubr.f32.mxu0 0.0
      %477 = vmatmul.mubr.f32.gmra.mrb[0].mxu0 %v308
      %v478 = vpop.f32.mrb[0].mxu0
      %v479 = vadd.f32 %v294, %v478
      %v480 = vpop.f32.mrb[0].mxu0
      %v481 = vadd.f32 %v294, %v480
      %482 = vmatprep.mubr.f32.mxu0 0.0
      %483 = vmatmul.mubr.f32.gmra.mrb[0].mxu0 %v311
      %v484 = vpop.f32.mrb[0].mxu0
      %v485 = vadd.f32 %v299, %v484
      %v486 = vpop.f32.mrb[0].mxu0
      %v487 = vadd.f32 %v299, %v486
      %488 = vmatprep.mubr.f32.mxu0 0.0
      %489 = vmatmul.mubr.f32.gmra.mrb[0].mxu0 %v314
      %v490 = vpop.f32.mrb[0].mxu0
      %v491 = vadd.f32 %v304, %v490
      %v492 = vpop.f32.mrb[0].mxu0
      %v493 = vadd.f32 %v304, %v492
      %494 = vdwg.mxu0
      %v495 = vld [vmem:[%s261] sm:$0xff]
      %v496 = vld [vmem:[%s261 + $0x8] sm:$0xff]
      %v497 = vld [vmem:[%s261 + $0x10] sm:$0xff]
      %v498 = vld [vmem:[%s261 + $0x18] sm:$0xff]
      %v499 = vld [vmem:[%s261 + $0x20] sm:$0xff]
      %v500 = vld [vmem:[%s261 + $0x28] sm:$0xff]
      %v501 = vld [vmem:[%s261 + $0x30] sm:$0xff]
      %v502 = vld [vmem:[%s261 + $0x38] sm:$0xff]
      %v503 = vld [vmem:[%s261 + $0x40] sm:$0xf]
      %v504 = vld [vmem:[%s261 + $0x48] sm:$0xf]
      %v505 = vld [vmem:[%s261 + $0x50] sm:$0xf]
      %v506 = vld [vmem:[%s261 + $0x58] sm:$0xf]
      %v507 = vadd.f32 %v396, %v495
      %v508 = vadd.f32 %v398, %v496
      %v509 = vadd.f32 %v479, %v497
      %v510 = vadd.f32 %v481, %v498
      %v511 = vadd.f32 %v402, %v499
      %v512 = vadd.f32 %v404, %v500
      %v513 = vadd.f32 %v485, %v501
      %v514 = vadd.f32 %v487, %v502
      %v515 = vadd.f32 %v408, %v503
      %v516 = vadd.f32 %v410, %v504
      %v517 = vadd.f32 %v491, %v505
      %v518 = vadd.f32 %v493, %v506
      %v519 = vpack.c.bf16 %v511, %v507
      %v520 = vpack.c.bf16 %v512, %v508
      %v521 = vpack.c.bf16 %v513, %v509
      %v522 = vpack.c.bf16 %v514, %v510
      %v523 = vpack.c.bf16 %v515, %v515
      %v524 = vpack.c.bf16 %v516, %v516
      %v525 = vpack.c.bf16 %v517, %v517
      %v526 = vpack.c.bf16 %v518, %v518
      %v535 = vunpack.c.l.b16 %v519
      %v536 = vunpack.c.l.b16 %v520
      %v537 = vunpack.c.l.b16 %v521
      %v538 = vunpack.c.l.b16 %v522
      %v539 = vunpack.c.h.b16 %v519
      %v540 = vunpack.c.h.b16 %v520
      %v541 = vunpack.c.h.b16 %v521
      %v542 = vunpack.c.h.b16 %v522
      %v543 = vunpack.c.l.b16 %v523
      %v544 = vunpack.c.l.b16 %v524
      %v545 = vunpack.c.l.b16 %v525
      %v546 = vunpack.c.l.b16 %v526
      %v547 = vpack.c.b16 %v536, %v535
      %v548 = vpack.c.b16 %v538, %v537
      %v549 = vpack.c.b16 %v540, %v539
      %v550 = vpack.c.b16 %v542, %v541
      %v551 = vpack.c.b16 %v544, %v543
      %v552 = vpack.c.b16 %v546, %v545
      %559 = vst [vmem:[%s271] sm:$0xff] %v547
      %560 = vst [vmem:[%s271 + $0x8] sm:$0xff] %v548
      %561 = vst [vmem:[%s271 + $0x10] sm:$0xff] %v549
      %562 = vst [vmem:[%s271 + $0x18] sm:$0xff] %v550
      %563 = vst [vmem:[%s271 + $0x20] sm:$0x33] %v551
      %564 = vst [vmem:[%s271 + $0x28] sm:$0x33] %v552
      %s565 = smul.u32 4, %s20
      %p566 = scmp.lt.s32.totalorder %s19, 1
      %s567 = scalar_select %p566, %s19, 1
      %p568 = scmp.lt.s32.totalorder %s565, 3
      %s569 = scalar_select %p568, %s565, 3
      %s570 = smul.addr %s567, 12
      %s571 = sadd.s32 %s569, %s570
      %s572 = smul.addr %s571, 4
      %s573 = scalar_lea.vmem %s4, %s572
      // Predicated region
      $region37: #{fno3d_forward.18} parent=35 // pred_check
        %p574 = pneg %p145
      $region38: #{fno3d_forward.18} parent=35 // pred_check_branch
        %576 = sbr.rel (%p574) target = $region40
      $region39: #{fno3d_forward.18} parent=35 // pred_region
        %s577 = smul.u32 4, %s20
      $region40: #{fno3d_forward.18} parent=35 // pred_fallthru
        _
    $region36: #{fno3d_forward.18} parent=5 // pred_fallthru
      _
    %p578 = scmp.le.s32.totalorder 2, %s10
    // Predicated region
    $region41: #{fno3d_forward.18} parent=5 // pred_check
      %p579 = pneg %p578
    $region42: #{fno3d_forward.18} parent=5 // pred_check_branch
      %581 = sbr.rel (%p579) target = $region44
    $region43: #{fno3d_forward.18} parent=5 // pred_region
      %s582 = ssub.s32 %s10, 2
      // Predicated region
      $region45: #{fno3d_forward.18} parent=43 // pred_check
        %p583 = pneg %p151
      $region46: #{fno3d_forward.18} parent=43 // pred_check_branch
        %585 = sbr.rel (%p583) target = $region48
      $region47: #{fno3d_forward.18} parent=43 // pred_region
        %s586 = smul.u32 4, %s22
        %p587 = scmp.lt.s32.totalorder %s21, 1
        %s588 = scalar_select %p587, %s21, 1
        %p589 = scmp.lt.s32.totalorder %s586, 3
        %s590 = scalar_select %p589, %s586, 3
        %s591 = smul.addr %s588, 12
        %s592 = sadd.s32 %s590, %s591
        %s593 = smul.addr %s592, 4
        %s594 = scalar_lea.vmem %s4, %s593
      $region48: #{fno3d_forward.18} parent=43 // pred_fallthru
        _
    $region44: #{fno3d_forward.18} parent=5 // pred_fallthru
      _
  $region6: #{fno3d_forward.18} parent=0 // loop_footer
    %s14 = sadd.s32 1, %s10
  $region7: #{fno3d_forward.18} parent=0 // loop_footer_branch
    %9 = sbr.rel target = $region3
  $region8: #{fno3d_forward.18} parent=0 // loop_exit
    _

// kernel: fno3d_forward.19
$region0: #{fno3d_forward.19}
  #allocation0 [shape = 'u32[]', space=smem, size = 0x4, offset = 0x4, fixed_abs, tag = 'smem constant byte address 0x4 - core index']
  #allocation1 [shape = 'u32[144,128]{1,0:T(1,128)}', space=vmem, size = 0x12000, scoped, tag = 'internal scratch']
  #allocation2 [shape = 'f32[1,1]{1,0:T(1,128)S(1)}', space=vmem, size = 0x200, scoped, tag = 'scoped memory for fno3d_forward.19']
  %s0 = inlined_call_operand.vmem [shape: bf16[2,20,512], index: 0, kind: input, shape index: {}]
  %s1 = inlined_call_operand.vmem [shape: bf16[128,20], index: 1, kind: input, shape index: {}]
  %s2 = inlined_call_operand.vmem [shape: f32[128,1], index: 2, kind: input, shape index: {}]
  %s3 = inlined_call_operand.vmem [shape: bf16[1,128], index: 3, kind: input, shape index: {}]
  %s4 = inlined_call_operand.<no memory space> [shape: f32[1,1], index: 4, kind: input, shape index: {}]
  %s5 = inlined_call_operand.vmem [shape: f32[2,1,512], index: 5, kind: output, shape index: {}]
  %s6 = sld [smem:[#allocation0]]
  $region53: #{fno3d_forward.19} parent=0
    _
  %s8 = ssub.s32 1, %s6
  %s9 = scalar_select 0, %s8, %s6
  %v10 = vstv %s4
  %11 = vst [vmem:[#allocation2] sm:$0x1] %v10
  loop: start=0, step=1, limit=4
  $region2: #{fno3d_forward.19} parent=0 // loop_pre_header
    _
  $region3: #{fno3d_forward.19} parent=0 // loop_header
    %s13 = sphi 0, %s17
    %p14 = scmp.ge.s32.totalorder %s13, 4
    %s20 = sphi 0, %s32
    %s21 = sphi 0, %s28
    %s22 = sphi 0, %s20
    %s23 = sphi 0, %s21
    %s24 = sphi 0, %s22
    %s25 = sphi 0, %s23
    %s37 = sphi 0, %s39
    %s40 = sphi 0, %s37
    %s41 = sphi 0, %s40
    %s57 = sphi 0, %s41
    %s61 = sphi 0, %s61
    %s63 = sphi 0, %s61
    %s64 = sphi 0, %s63
    %s78 = sphi 0, %s64
    %s82 = sphi 0, %s82
    %s84 = sphi 0, %s82
    %s85 = sphi 0, %s84
    %s99 = sphi 0, %s85
    %s103 = sphi 0, %s103
    %s105 = sphi 0, %s103
    %s106 = sphi 0, %s105
    %s120 = sphi 0, %s106
    %s124 = sphi 0, %s124
    %s126 = sphi 0, %s124
    %s127 = sphi 0, %s126
    %s141 = sphi 0, %s127
    %s149 = sphi 0, %s151
    %s152 = sphi 0, %s149
    %s153 = sphi 0, %s152
    %s169 = sphi 0, %s153
  $region4: #{fno3d_forward.19} parent=0 // loop_header_branch
    %16 = sbr.rel (%p14) target = $region8
  $region5: #{fno3d_forward.19} parent=0 // loop_body
    %s18 = ssub.s32 %s13, 1
    %s19 = ssub.s32 %s13, 2
    %s26 = sadd.s32 1, %s21
    %p27 = scmp.ge.s32.totalorder %s26, 1
    %s28 = scalar_select %p27, 0, %s26
    %s29 = sadd.s32 1, %s20
    %s30 = scalar_select %p27, %s29, %s20
    %p31 = scmp.ge.s32.totalorder %s30, 2
    %s32 = scalar_select %p31, 0, %s30
    %s33 = ssub.s32 %s20, %s32
    %s34 = ssub.s32 %s21, %s28
    %s35 = sor.u32 %s33, %s34
    %p36 = scmp.eq.s32.totalorder %s35, 0
    %s38 = sadd.s32 %s37, 1
    %s39 = scalar_select %p36, %s37, %s38
    %p42 = pneg %p36
    %p43 = scmp.eq.s32.totalorder %s13, 1
    %p44 = por %p42, %p43
    %p45 = scmp.ne.s32.totalorder %s37, %s40
    %p46 = scmp.eq.s32.totalorder %s13, 0
    %p47 = por %p45, %p46
    %p48 = scmp.ne.s32.totalorder %s37, %s40
    %p49 = scmp.eq.s32.totalorder %s18, 1
    %p50 = por %p48, %p49
    %p51 = scmp.ne.s32.totalorder %s40, %s41
    %p52 = scmp.eq.s32.totalorder %s18, 0
    %p53 = por %p51, %p52
    %p54 = scmp.ne.s32.totalorder %s40, %s41
    %p55 = scmp.eq.s32.totalorder %s19, 1
    %p56 = por %p54, %p55
    %p58 = scmp.ne.s32.totalorder %s41, %s57
    %p59 = scmp.eq.s32.totalorder %s19, 0
    %p60 = por %p58, %p59
    %s62 = sadd.s32 %s61, 1
    %p65 = scmp.eq.s32.totalorder %s13, 1
    %p66 = scmp.ne.s32.totalorder %s61, %s63
    %p67 = scmp.eq.s32.totalorder %s13, 0
    %p68 = por %p66, %p67
    %p69 = scmp.ne.s32.totalorder %s61, %s63
    %p70 = scmp.eq.s32.totalorder %s18, 1
    %p71 = por %p69, %p70
    %p72 = scmp.ne.s32.totalorder %s63, %s64
    %p73 = scmp.eq.s32.totalorder %s18, 0
    %p74 = por %p72, %p73
    %p75 = scmp.ne.s32.totalorder %s63, %s64
    %p76 = scmp.eq.s32.totalorder %s19, 1
    %p77 = por %p75, %p76
    %p79 = scmp.ne.s32.totalorder %s64, %s78
    %p80 = scmp.eq.s32.totalorder %s19, 0
    %p81 = por %p79, %p80
    %s83 = sadd.s32 %s82, 1
    %p86 = scmp.eq.s32.totalorder %s13, 1
    %p87 = scmp.ne.s32.totalorder %s82, %s84
    %p88 = scmp.eq.s32.totalorder %s13, 0
    %p89 = por %p87, %p88
    %p90 = scmp.ne.s32.totalorder %s82, %s84
    %p91 = scmp.eq.s32.totalorder %s18, 1
    %p92 = por %p90, %p91
    %p93 = scmp.ne.s32.totalorder %s84, %s85
    %p94 = scmp.eq.s32.totalorder %s18, 0
    %p95 = por %p93, %p94
    %p96 = scmp.ne.s32.totalorder %s84, %s85
    %p97 = scmp.eq.s32.totalorder %s19, 1
    %p98 = por %p96, %p97
    %p100 = scmp.ne.s32.totalorder %s85, %s99
    %p101 = scmp.eq.s32.totalorder %s19, 0
    %p102 = por %p100, %p101
    %s104 = sadd.s32 %s103, 1
    %p107 = scmp.eq.s32.totalorder %s13, 1
    %p108 = scmp.ne.s32.totalorder %s103, %s105
    %p109 = scmp.eq.s32.totalorder %s13, 0
    %p110 = por %p108, %p109
    %p111 = scmp.ne.s32.totalorder %s103, %s105
    %p112 = scmp.eq.s32.totalorder %s18, 1
    %p113 = por %p111, %p112
    %p114 = scmp.ne.s32.totalorder %s105, %s106
    %p115 = scmp.eq.s32.totalorder %s18, 0
    %p116 = por %p114, %p115
    %p117 = scmp.ne.s32.totalorder %s105, %s106
    %p118 = scmp.eq.s32.totalorder %s19, 1
    %p119 = por %p117, %p118
    %p121 = scmp.ne.s32.totalorder %s106, %s120
    %p122 = scmp.eq.s32.totalorder %s19, 0
    %p123 = por %p121, %p122
    %s125 = sadd.s32 %s124, 1
    %p128 = scmp.eq.s32.totalorder %s13, 1
    %p129 = scmp.ne.s32.totalorder %s124, %s126
    %p130 = scmp.eq.s32.totalorder %s13, 0
    %p131 = por %p129, %p130
    %p132 = scmp.ne.s32.totalorder %s124, %s126
    %p133 = scmp.eq.s32.totalorder %s18, 1
    %p134 = por %p132, %p133
    %p135 = scmp.ne.s32.totalorder %s126, %s127
    %p136 = scmp.eq.s32.totalorder %s18, 0
    %p137 = por %p135, %p136
    %p138 = scmp.ne.s32.totalorder %s126, %s127
    %p139 = scmp.eq.s32.totalorder %s19, 1
    %p140 = por %p138, %p139
    %p142 = scmp.ne.s32.totalorder %s127, %s141
    %p143 = scmp.eq.s32.totalorder %s19, 0
    %p144 = por %p142, %p143
    %s145 = ssub.s32 %s20, %s32
    %s146 = ssub.s32 %s21, %s28
    %s147 = sor.u32 %s145, %s146
    %p148 = scmp.eq.s32.totalorder %s147, 0
    %s150 = sadd.s32 %s149, 1
    %s151 = scalar_select %p148, %s149, %s150
    %p154 = pneg %p148
    %p155 = scmp.eq.s32.totalorder %s13, 1
    %p156 = por %p154, %p155
    %p157 = scmp.ne.s32.totalorder %s149, %s152
    %p158 = scmp.eq.s32.totalorder %s13, 0
    %p159 = por %p157, %p158
    %p160 = scmp.ne.s32.totalorder %s149, %s152
    %p161 = scmp.eq.s32.totalorder %s18, 1
    %p162 = por %p160, %p161
    %p163 = scmp.ne.s32.totalorder %s152, %s153
    %p164 = scmp.eq.s32.totalorder %s18, 0
    %p165 = por %p163, %p164
    %p166 = scmp.ne.s32.totalorder %s152, %s153
    %p167 = scmp.eq.s32.totalorder %s19, 1
    %p168 = por %p166, %p167
    %p170 = scmp.ne.s32.totalorder %s153, %s169
    %p171 = scmp.eq.s32.totalorder %s19, 0
    %p172 = por %p170, %p171
    %p173 = scmp.le.s32.totalorder 1, %s13
    %p174 = scmp.lt.s32.totalorder %s13, 3
    %p175 = pnand %p173, %p174
    %p176 = pneg %p175
    // Predicated region
    $region9: #{fno3d_forward.19} parent=5 // pred_check
      _
    $region10: #{fno3d_forward.19} parent=5 // pred_check_branch
      %178 = sbr.rel (%p175) target = $region12
    $region11: #{fno3d_forward.19} parent=5 // pred_region
      %s179 = ssub.s32 %s13, 1
      // Predicated region
      $region13: #{fno3d_forward.19} parent=11 // pred_check
        %p180 = pneg %p74
      $region14: #{fno3d_forward.19} parent=11 // pred_check_branch
        %182 = sbr.rel (%p180) target = $region16
      $region15: #{fno3d_forward.19} parent=11 // pred_region
        _
      $region16: #{fno3d_forward.19} parent=11 // pred_fallthru
        _
      // Predicated region
      $region17: #{fno3d_forward.19} parent=11 // pred_check
        %p183 = pneg %p95
      $region18: #{fno3d_forward.19} parent=11 // pred_check_branch
        %185 = sbr.rel (%p183) target = $region20
      $region19: #{fno3d_forward.19} parent=11 // pred_region
        _
      $region20: #{fno3d_forward.19} parent=11 // pred_fallthru
        _
      // Predicated region
      $region21: #{fno3d_forward.19} parent=11 // pred_check
        %p186 = pneg %p116
      $region22: #{fno3d_forward.19} parent=11 // pred_check_branch
        %188 = sbr.rel (%p186) target = $region24
      $region23: #{fno3d_forward.19} parent=11 // pred_region
        _
      $region24: #{fno3d_forward.19} parent=11 // pred_fallthru
        _
      // Predicated region
      $region25: #{fno3d_forward.19} parent=11 // pred_check
        %p189 = pneg %p137
      $region26: #{fno3d_forward.19} parent=11 // pred_check_branch
        %191 = sbr.rel (%p189) target = $region28
      $region27: #{fno3d_forward.19} parent=11 // pred_region
        _
      $region28: #{fno3d_forward.19} parent=11 // pred_fallthru
        _
    $region12: #{fno3d_forward.19} parent=5 // pred_fallthru
      _
    %p192 = scmp.lt.s32.totalorder %s13, 2
    // Predicated region
    $region29: #{fno3d_forward.19} parent=5 // pred_check
      %p193 = pneg %p192
    $region30: #{fno3d_forward.19} parent=5 // pred_check_branch
      %195 = sbr.rel (%p193) target = $region32
    $region31: #{fno3d_forward.19} parent=5 // pred_region
      // Predicated region
      $region33: #{fno3d_forward.19} parent=31 // pred_check
        %p196 = pneg %p47
      $region34: #{fno3d_forward.19} parent=31 // pred_check_branch
        %198 = sbr.rel (%p196) target = $region36
      $region35: #{fno3d_forward.19} parent=31 // pred_region
        %s199 = smul.u32 4, %s21
        %p200 = scmp.lt.s32.totalorder %s20, 1
        %s201 = scalar_select %p200, %s20, 1
        %p202 = scmp.lt.s32.totalorder %s199, 3
        %s203 = scalar_select %p202, %s199, 3
        %s204 = smul.addr %s201, 12
        %s205 = sadd.s32 %s203, %s204
        %s206 = smul.addr %s205, 4
        %s207 = scalar_lea.vmem %s0, %s206
        %s208 = smul.u32 4, %s21
      $region36: #{fno3d_forward.19} parent=31 // pred_fallthru
        _
    $region32: #{fno3d_forward.19} parent=5 // pred_fallthru
      _
    %p209 = scmp.le.s32.totalorder 1, %s13
    %p210 = scmp.lt.s32.totalorder %s13, 3
    %p211 = pnand %p209, %p210
    %p212 = pneg %p211
    // Predicated region
    $region37: #{fno3d_forward.19} parent=5 // pred_check
      _
    $region38: #{fno3d_forward.19} parent=5 // pred_check_branch
      %214 = sbr.rel (%p211) target = $region40
    $region39: #{fno3d_forward.19} parent=5 // pred_region
      %s215 = ssub.s32 %s13, 1
      %s216 = smul.u32 4, %s23
      %p217 = scmp.lt.s32.totalorder %s22, 1
      %s218 = scalar_select %p217, %s22, 1
      %p219 = scmp.lt.s32.totalorder %s216, 3
      %s220 = scalar_select %p219, %s216, 3
      %s221 = smul.addr %s218, 12
      %s222 = sadd.s32 %s220, %s221
      %s223 = smul.addr %s222, 4
      %s224 = scalar_lea.vmem %s0, %s223
      %p225 = pneg %p53
      %p226 = pneg %p50
      %p227 = pneg %p74
      %p228 = pneg %p71
      %p229 = pneg %p95
      %p230 = pneg %p92
      %p231 = pneg %p116
      %p232 = pneg %p113
      %p233 = pneg %p137
      %p234 = pneg %p134
      %p235 = pneg %p165
      %p236 = pneg %p162
      %s237 = smul.u32 4, %s23
      %p238 = scmp.lt.s32.totalorder %s22, 1
      %s239 = scalar_select %p238, %s22, 1
      %p240 = scmp.lt.s32.totalorder %s237, 3
      %s241 = scalar_select %p240, %s237, 3
      %s242 = smul.addr %s239, 4
      %s243 = sadd.s32 %s241, %s242
      %s244 = scalar_lea.vmem %s5, %s243
      %s245 = smul.u32 4, %s23
      %p246 = scmp.lt.s32.totalorder %s22, 1
      %s247 = scalar_select %p246, %s22, 1
      %p248 = scmp.lt.s32.totalorder %s245, 3
      %s249 = scalar_select %p248, %s245, 3
      %s250 = smul.addr %s247, 12
      %s251 = sadd.s32 %s249, %s250
      %s252 = smul.addr %s251, 4
      %s253 = scalar_lea.vmem %s0, %s252
      %s254 = smul.u32 4, %s23
      %s255 = smul.u32 4, %s23
      %p256 = scmp.lt.s32.totalorder %s22, 1
      %s257 = scalar_select %p256, %s22, 1
      %p258 = scmp.lt.s32.totalorder %s255, 3
      %s259 = scalar_select %p258, %s255, 3
      %s260 = smul.addr %s257, 4
      %s261 = sadd.s32 %s259, %s260
      %s262 = scalar_lea.vmem %s5, %s261
      %s263 = smul.u32 4, %s23
      %v265 = vld [vmem:[%s1] sm:$0xf]
      %v266 = vld [vmem:[%s1 + $0x4] sm:$0xf]
      %v267 = vld [vmem:[%s1 + $0x8] sm:$0xf]
      %v268 = vld [vmem:[%s1 + $0xc] sm:$0xf]
      %v269 = vld [vmem:[%s1 + $0x10] sm:$0xf]
      %v270 = vld [vmem:[%s1 + $0x14] sm:$0xf]
      %v271 = vld [vmem:[%s1 + $0x18] sm:$0xf]
      %v272 = vld [vmem:[%s1 + $0x1c] sm:$0xf]
      %v273 = vld [vmem:[%s1 + $0x20] sm:$0xf]
      %v274 = vld [vmem:[%s1 + $0x24] sm:$0xf]
      %v275 = vld [vmem:[%s1 + $0x28] sm:$0xf]
      %v276 = vld [vmem:[%s1 + $0x2c] sm:$0xf]
      %v277 = vld [vmem:[%s1 + $0x30] sm:$0xf]
      %v278 = vld [vmem:[%s1 + $0x34] sm:$0xf]
      %v279 = vld [vmem:[%s1 + $0x38] sm:$0xf]
      %v280 = vld [vmem:[%s1 + $0x3c] sm:$0xf]
      %v281 = vld [vmem:[%s253] sm:$0xff]
      %v282 = vld [vmem:[%s253 + $0x8] sm:$0xff]
      %v283 = vld [vmem:[%s253 + $0x10] sm:$0xff]
      %v284 = vld [vmem:[%s253 + $0x18] sm:$0xff]
      %v285 = vld [vmem:[%s253 + $0x20] sm:$0x33]
      %v286 = vld [vmem:[%s253 + $0x28] sm:$0x33]
      %v287 = vld [vmem:[%s2] sm:$0xff]
      %v288 = vld [vmem:[%s2 + $0x8] sm:$0xff]
      %v289 = vld [vmem:[%s2 + $0x10] sm:$0xff]
      %v290 = vld [vmem:[%s2 + $0x18] sm:$0xff]
      %v291 = vld [vmem:[%s2 + $0x20] sm:$0xff]
      %v292 = vld [vmem:[%s2 + $0x28] sm:$0xff]
      %v293 = vld [vmem:[%s2 + $0x30] sm:$0xff]
      %v294 = vld [vmem:[%s2 + $0x38] sm:$0xff]
      %v295 = vld [vmem:[%s2 + $0x40] sm:$0xff]
      %v296 = vld [vmem:[%s2 + $0x48] sm:$0xff]
      %v297 = vld [vmem:[%s2 + $0x50] sm:$0xff]
      %v298 = vld [vmem:[%s2 + $0x58] sm:$0xff]
      %v299 = vld [vmem:[%s2 + $0x60] sm:$0xff]
      %v300 = vld [vmem:[%s2 + $0x68] sm:$0xff]
      %v301 = vld [vmem:[%s2 + $0x70] sm:$0xff]
      %v302 = vld [vmem:[%s2 + $0x78] sm:$0xff]
      %304 = vset.pattern.permute.xlu0 0
      %305 = vperm.xlu0 %304, %v287
      %v306 = vpop.permute.xlu0 %305
      %309 = vset.pattern.permute.xlu0 0
      %310 = vperm.xlu0 %309, %v288
      %v311 = vpop.permute.xlu0 %310
      %314 = vset.pattern.permute.xlu0 0
      %315 = vperm.xlu0 %314, %v289
      %v316 = vpop.permute.xlu0 %315
      %319 = vset.pattern.permute.xlu0 0
      %320 = vperm.xlu0 %319, %v290
      %v321 = vpop.permute.xlu0 %320
      %324 = vset.pattern.permute.xlu0 0
      %325 = vperm.xlu0 %324, %v291
      %v326 = vpop.permute.xlu0 %325
      %329 = vset.pattern.permute.xlu0 0
      %330 = vperm.xlu0 %329, %v292
      %v331 = vpop.permute.xlu0 %330
      %334 = vset.pattern.permute.xlu0 0
      %335 = vperm.xlu0 %334, %v293
      %v336 = vpop.permute.xlu0 %335
      %339 = vset.pattern.permute.xlu0 0
      %340 = vperm.xlu0 %339, %v294
      %v341 = vpop.permute.xlu0 %340
      %344 = vset.pattern.permute.xlu0 0
      %345 = vperm.xlu0 %344, %v295
      %v346 = vpop.permute.xlu0 %345
      %349 = vset.pattern.permute.xlu0 0
      %350 = vperm.xlu0 %349, %v296
      %v351 = vpop.permute.xlu0 %350
      %354 = vset.pattern.permute.xlu0 0
      %355 = vperm.xlu0 %354, %v297
      %v356 = vpop.permute.xlu0 %355
      %359 = vset.pattern.permute.xlu0 0
      %360 = vperm.xlu0 %359, %v298
      %v361 = vpop.permute.xlu0 %360
      %364 = vset.pattern.permute.xlu0 0
      %365 = vperm.xlu0 %364, %v299
      %v366 = vpop.permute.xlu0 %365
      %369 = vset.pattern.permute.xlu0 0
      %370 = vperm.xlu0 %369, %v300
      %v371 = vpop.permute.xlu0 %370
      %374 = vset.pattern.permute.xlu0 0
      %375 = vperm.xlu0 %374, %v301
      %v376 = vpop.permute.xlu0 %375
      %379 = vset.pattern.permute.xlu0 0
      %380 = vperm.xlu0 %379, %v302
      %v381 = vpop.permute.xlu0 %380
      %v399 = vunpack.c.l.b16 %v265
      %v400 = vunpack.c.l.b16 %v266
      %v401 = vunpack.c.l.b16 %v267
      %v402 = vunpack.c.l.b16 %v268
      %v403 = vunpack.c.l.b16 %v269
      %v404 = vunpack.c.l.b16 %v270
      %v405 = vunpack.c.l.b16 %v271
      %v406 = vunpack.c.l.b16 %v272
      %v407 = vunpack.c.l.b16 %v273
      %v408 = vunpack.c.l.b16 %v274
      %v409 = vunpack.c.l.b16 %v275
      %v410 = vunpack.c.l.b16 %v276
      %v411 = vunpack.c.l.b16 %v277
      %v412 = vunpack.c.l.b16 %v278
      %v413 = vunpack.c.l.b16 %v279
      %v414 = vunpack.c.l.b16 %v280
      %v415 = vpack.c.b16 %v400, %v399
      %v416 = vpack.c.b16 %v402, %v401
      %v417 = vpack.c.b16 %v404, %v403
      %v418 = vpack.c.b16 %v406, %v405
      %v419 = vpack.c.b16 %v408, %v407
      %v420 = vpack.c.b16 %v410, %v409
      %v421 = vpack.c.b16 %v412, %v411
      %v422 = vpack.c.b16 %v414, %v413
      %v429 = vunpack.c.l.b16 %v281
      %v430 = vunpack.c.h.b16 %v281
      %v431 = vunpack.c.l.b16 %v282
      %v432 = vunpack.c.h.b16 %v282
      %v433 = vunpack.c.l.b16 %v283
      %v434 = vunpack.c.h.b16 %v283
      %v435 = vunpack.c.l.b16 %v284
      %v436 = vunpack.c.h.b16 %v284
      %v437 = vunpack.c.l.b16 %v285
      %v438 = vunpack.c.h.b16 %v285
      %v439 = vunpack.c.l.b16 %v286
      %v440 = vunpack.c.h.b16 %v286
      %v441 = vpack.c.b16 %v433, %v429
      %v442 = vpack.c.b16 %v434, %v430
      %v443 = vpack.c.b16 %v435, %v431
      %v444 = vpack.c.b16 %v436, %v432
      %v445 = vpack.c.b16 %v437, %v437
      %v446 = vpack.c.b16 %v438, %v438
      %v447 = vpack.c.b16 %v439, %v439
      %v448 = vpack.c.b16 %v440, %v440
      %vm453 = vcmask 162816
      %v455 = vsel %vm453, %v415, 0
      %v458 = vsel %vm453, %v416, 0
      %v461 = vsel %vm453, %v417, 0
      %v464 = vsel %vm453, %v418, 0
      %v467 = vsel %vm453, %v419, 0
      %v470 = vsel %vm453, %v420, 0
      %v473 = vsel %vm453, %v421, 0
      %v476 = vsel %vm453, %v422, 0
      %vm478 = vcmask 1041408
      %v480 = vsel %vm478, %v445, 0
      %v483 = vsel %vm478, %v446, 0
      %v486 = vsel %vm478, %v447, 0
      %v489 = vsel %vm478, %v448, 0
      %491 = vmatprep.subr.bf16.mxu0 %v442
      %492 = vmatpush1.bf16.msra.mxu0 %v441
      %493 = vmatprep.subr.bf16.mxu0 %v483
      %494 = vmatpush1.bf16.msra.mxu0 %v480
      %495 = vmatprep.subr.bf16.mxu0 0
      %496 = vmatpush1.bf16.msra.mxu0 0
      %497 = vmatprep.subr.bf16.mxu0 0
      %498 = vmatpush1.bf16.msra.mxu0 0
      %499 = vmatprep.subr.bf16.mxu0 0
      %500 = vmatpush1.bf16.msra.mxu0 0
      %501 = vmatprep.subr.bf16.mxu0 0
      %502 = vmatpush1.bf16.msra.mxu0 0
      %503 = vmatprep.subr.bf16.mxu0 0
      %504 = vmatpush1.bf16.msra.mxu0 0
      %505 = vmatprep.subr.bf16.mxu0 0
      %506 = vmatpush1.bf16.msra.mxu0 0
      %507 = vmatprep.subr.bf16.mxu0 0
      %508 = vmatpush1.bf16.msra.mxu0 0
      %509 = vmatprep.subr.bf16.mxu0 0
      %510 = vmatpush1.bf16.msra.mxu0 0
      %511 = vmatprep.subr.bf16.mxu0 0
      %512 = vmatpush1.bf16.msra.mxu0 0
      %513 = vmatprep.subr.bf16.mxu0 0
      %514 = vmatpush1.bf16.msra.mxu0 0
      %515 = vmatprep.subr.bf16.mxu0 0
      %516 = vmatpush1.bf16.msra.mxu0 0
      %517 = vmatprep.subr.bf16.mxu0 0
      %518 = vmatpush1.bf16.msra.mxu0 0
      %519 = vmatprep.subr.bf16.mxu0 0
      %520 = vmatpush1.bf16.msra.mxu0 0
      %521 = vmatprep.subr.bf16.mxu0 0
      %522 = vmatpush1.bf16.msra.mxu0 0
      %523 = vmatprep.mubr.bf16.mxu0 0
      %524 = vmatmul.mubr.bf16.gmra.mrb[0].mxu0 %v455
      %v525 = vpop.f32.mrb[0].mxu0
      %v526 = vadd.f32 %v306, %v525
      %v527 = vpop.f32.mrb[0].mxu0
      %v528 = vadd.f32 %v306, %v527
      %v529 = vpop.f32.mrb[0].mxu0
      %v530 = vadd.f32 %v311, %v529
      %v531 = vpop.f32.mrb[0].mxu0
      %v532 = vadd.f32 %v311, %v531
      %533 = vmatprep.mubr.bf16.mxu0 0
      %534 = vmatmul.mubr.bf16.gmra.mrb[0].mxu0 %v458
      %v535 = vpop.f32.mrb[0].mxu0
      %v536 = vadd.f32 %v316, %v535
      %v537 = vpop.f32.mrb[0].mxu0
      %v538 = vadd.f32 %v316, %v537
      %v539 = vpop.f32.mrb[0].mxu0
      %v540 = vadd.f32 %v321, %v539
      %v541 = vpop.f32.mrb[0].mxu0
      %v542 = vadd.f32 %v321, %v541
      %543 = vmatprep.mubr.bf16.mxu0 0
      %544 = vmatmul.mubr.bf16.gmra.mrb[0].mxu0 %v461
      %v545 = vpop.f32.mrb[0].mxu0
      %v546 = vadd.f32 %v326, %v545
      %v547 = vpop.f32.mrb[0].mxu0
      %v548 = vadd.f32 %v326, %v547
      %v549 = vpop.f32.mrb[0].mxu0
      %v550 = vadd.f32 %v331, %v549
      %v551 = vpop.f32.mrb[0].mxu0
      %v552 = vadd.f32 %v331, %v551
      %553 = vmatprep.mubr.bf16.mxu0 0
      %554 = vmatmul.mubr.bf16.gmra.mrb[0].mxu0 %v464
      %v555 = vpop.f32.mrb[0].mxu0
      %v556 = vadd.f32 %v336, %v555
      %v557 = vpop.f32.mrb[0].mxu0
      %v558 = vadd.f32 %v336, %v557
      %v559 = vpop.f32.mrb[0].mxu0
      %v560 = vadd.f32 %v341, %v559
      %v561 = vpop.f32.mrb[0].mxu0
      %v562 = vadd.f32 %v341, %v561
      %563 = vmatprep.mubr.bf16.mxu0 0
      %564 = vmatmul.mubr.bf16.gmra.mrb[0].mxu0 %v467
      %v565 = vpop.f32.mrb[0].mxu0
      %v566 = vadd.f32 %v346, %v565
      %v567 = vpop.f32.mrb[0].mxu0
      %v568 = vadd.f32 %v346, %v567
      %v569 = vpop.f32.mrb[0].mxu0
      %v570 = vadd.f32 %v351, %v569
      %v571 = vpop.f32.mrb[0].mxu0
      %v572 = vadd.f32 %v351, %v571
      %573 = vmatprep.mubr.bf16.mxu0 0
      %574 = vmatmul.mubr.bf16.gmra.mrb[0].mxu0 %v470
      %v575 = vpop.f32.mrb[0].mxu0
      %v576 = vadd.f32 %v356, %v575
      %v577 = vpop.f32.mrb[0].mxu0
      %v578 = vadd.f32 %v356, %v577
      %v579 = vpop.f32.mrb[0].mxu0
      %v580 = vadd.f32 %v361, %v579
      %v581 = vpop.f32.mrb[0].mxu0
      %v582 = vadd.f32 %v361, %v581
      %583 = vmatprep.mubr.bf16.mxu0 0
      %584 = vmatmul.mubr.bf16.gmra.mrb[0].mxu0 %v473
      %v585 = vpop.f32.mrb[0].mxu0
      %v586 = vadd.f32 %v366, %v585
      %v587 = vpop.f32.mrb[0].mxu0
      %v588 = vadd.f32 %v366, %v587
      %v589 = vpop.f32.mrb[0].mxu0
      %v590 = vadd.f32 %v371, %v589
      %v591 = vpop.f32.mrb[0].mxu0
      %v592 = vadd.f32 %v371, %v591
      %593 = vmatprep.mubr.bf16.mxu0 0
      %594 = vmatmul.mubr.bf16.gmra.mrb[0].mxu0 %v476
      %v595 = vpop.f32.mrb[0].mxu0
      %v596 = vadd.f32 %v376, %v595
      %v597 = vpop.f32.mrb[0].mxu0
      %v598 = vadd.f32 %v376, %v597
      %v599 = vpop.f32.mrb[0].mxu0
      %v600 = vadd.f32 %v381, %v599
      %v601 = vpop.f32.mrb[0].mxu0
      %v602 = vadd.f32 %v381, %v601
      %603 = vdwg.mxu0
      %604 = vmatprep.subr.bf16.mxu0 %v444
      %605 = vmatpush1.bf16.msra.mxu0 %v443
      %606 = vmatprep.subr.bf16.mxu0 %v489
      %607 = vmatpush1.bf16.msra.mxu0 %v486
      %608 = vmatprep.subr.bf16.mxu0 0
      %609 = vmatpush1.bf16.msra.mxu0 0
      %610 = vmatprep.subr.bf16.mxu0 0
      %611 = vmatpush1.bf16.msra.mxu0 0
      %612 = vmatprep.subr.bf16.mxu0 0
      %613 = vmatpush1.bf16.msra.mxu0 0
      %614 = vmatprep.subr.bf16.mxu0 0
      %615 = vmatpush1.bf16.msra.mxu0 0
      %616 = vmatprep.subr.bf16.mxu0 0
      %617 = vmatpush1.bf16.msra.mxu0 0
      %618 = vmatprep.subr.bf16.mxu0 0
      %619 = vmatpush1.bf16.msra.mxu0 0
      %620 = vmatprep.subr.bf16.mxu0 0
      %621 = vmatpush1.bf16.msra.mxu0 0
      %622 = vmatprep.subr.bf16.mxu0 0
      %623 = vmatpush1.bf16.msra.mxu0 0
      %624 = vmatprep.subr.bf16.mxu0 0
      %625 = vmatpush1.bf16.msra.mxu0 0
      %626 = vmatprep.subr.bf16.mxu0 0
      %627 = vmatpush1.bf16.msra.mxu0 0
      %628 = vmatprep.subr.bf16.mxu0 0
      %629 = vmatpush1.bf16.msra.mxu0 0
      %630 = vmatprep.subr.bf16.mxu0 0
      %631 = vmatpush1.bf16.msra.mxu0 0
      %632 = vmatprep.subr.bf16.mxu0 0
      %633 = vmatpush1.bf16.msra.mxu0 0
      %634 = vmatprep.subr.bf16.mxu0 0
      %635 = vmatpush1.bf16.msra.mxu0 0
      %636 = vmatprep.mubr.bf16.mxu0 0
      %637 = vmatmul.mubr.bf16.gmra.mrb[0].mxu0 %v455
      %v638 = vpop.f32.mrb[0].mxu0
      %v639 = vadd.f32 %v306, %v638
      %v640 = vpop.f32.mrb[0].mxu0
      %v641 = vadd.f32 %v306, %v640
      %v642 = vpop.f32.mrb[0].mxu0
      %v643 = vadd.f32 %v311, %v642
      %v644 = vpop.f32.mrb[0].mxu0
      %v645 = vadd.f32 %v311, %v644
      %646 = vmatprep.mubr.bf16.mxu0 0
      %647 = vmatmul.mubr.bf16.gmra.mrb[0].mxu0 %v458
      %v648 = vpop.f32.mrb[0].mxu0
      %v649 = vadd.f32 %v316, %v648
      %v650 = vpop.f32.mrb[0].mxu0
      %v651 = vadd.f32 %v316, %v650
      %v652 = vpop.f32.mrb[0].mxu0
      %v653 = vadd.f32 %v321, %v652
      %v654 = vpop.f32.mrb[0].mxu0
      %v655 = vadd.f32 %v321, %v654
      %656 = vmatprep.mubr.bf16.mxu0 0
      %657 = vmatmul.mubr.bf16.gmra.mrb[0].mxu0 %v461
      %v658 = vpop.f32.mrb[0].mxu0
      %v659 = vadd.f32 %v326, %v658
      %v660 = vpop.f32.mrb[0].mxu0
      %v661 = vadd.f32 %v326, %v660
      %v662 = vpop.f32.mrb[0].mxu0
      %v663 = vadd.f32 %v331, %v662
      %v664 = vpop.f32.mrb[0].mxu0
      %v665 = vadd.f32 %v331, %v664
      %666 = vmatprep.mubr.bf16.mxu0 0
      %667 = vmatmul.mubr.bf16.gmra.mrb[0].mxu0 %v464
      %v668 = vpop.f32.mrb[0].mxu0
      %v669 = vadd.f32 %v336, %v668
      %v670 = vpop.f32.mrb[0].mxu0
      %v671 = vadd.f32 %v336, %v670
      %v672 = vpop.f32.mrb[0].mxu0
      %v673 = vadd.f32 %v341, %v672
      %v674 = vpop.f32.mrb[0].mxu0
      %v675 = vadd.f32 %v341, %v674
      %676 = vmatprep.mubr.bf16.mxu0 0
      %677 = vmatmul.mubr.bf16.gmra.mrb[0].mxu0 %v467
      %v678 = vpop.f32.mrb[0].mxu0
      %v679 = vadd.f32 %v346, %v678
      %v680 = vpop.f32.mrb[0].mxu0
      %v681 = vadd.f32 %v346, %v680
      %v682 = vpop.f32.mrb[0].mxu0
      %v683 = vadd.f32 %v351, %v682
      %v684 = vpop.f32.mrb[0].mxu0
      %v685 = vadd.f32 %v351, %v684
      %686 = vmatprep.mubr.bf16.mxu0 0
      %687 = vmatmul.mubr.bf16.gmra.mrb[0].mxu0 %v470
      %v688 = vpop.f32.mrb[0].mxu0
      %v689 = vadd.f32 %v356, %v688
      %v690 = vpop.f32.mrb[0].mxu0
      %v691 = vadd.f32 %v356, %v690
      %v692 = vpop.f32.mrb[0].mxu0
      %v693 = vadd.f32 %v361, %v692
      %v694 = vpop.f32.mrb[0].mxu0
      %v695 = vadd.f32 %v361, %v694
      %696 = vmatprep.mubr.bf16.mxu0 0
      %697 = vmatmul.mubr.bf16.gmra.mrb[0].mxu0 %v473
      %v698 = vpop.f32.mrb[0].mxu0
      %v699 = vadd.f32 %v366, %v698
      %v700 = vpop.f32.mrb[0].mxu0
      %v701 = vadd.f32 %v366, %v700
      %v702 = vpop.f32.mrb[0].mxu0
      %v703 = vadd.f32 %v371, %v702
      %v704 = vpop.f32.mrb[0].mxu0
      %v705 = vadd.f32 %v371, %v704
      %706 = vmatprep.mubr.bf16.mxu0 0
      %707 = vmatmul.mubr.bf16.gmra.mrb[0].mxu0 %v476
      %v708 = vpop.f32.mrb[0].mxu0
      %v709 = vadd.f32 %v376, %v708
      %v710 = vpop.f32.mrb[0].mxu0
      %v711 = vadd.f32 %v376, %v710
      %v712 = vpop.f32.mrb[0].mxu0
      %v713 = vadd.f32 %v381, %v712
      %v714 = vpop.f32.mrb[0].mxu0
      %v715 = vadd.f32 %v381, %v714
      %716 = vdwg.mxu0
      %v717 = vmax.f32 %v526, 0.0
      %v718 = vmax.f32 %v528, 0.0
      %v719 = vmax.f32 %v639, 0.0
      %v720 = vmax.f32 %v641, 0.0
      %v721 = vmax.f32 %v530, 0.0
      %v722 = vmax.f32 %v532, 0.0
      %v723 = vmax.f32 %v643, 0.0
      %v724 = vmax.f32 %v645, 0.0
      %v725 = vmax.f32 %v536, 0.0
      %v726 = vmax.f32 %v538, 0.0
      %v727 = vmax.f32 %v649, 0.0
      %v728 = vmax.f32 %v651, 0.0
      %v729 = vmax.f32 %v540, 0.0
      %v730 = vmax.f32 %v542, 0.0
      %v731 = vmax.f32 %v653, 0.0
      %v732 = vmax.f32 %v655, 0.0
      %v733 = vmax.f32 %v546, 0.0
      %v734 = vmax.f32 %v548, 0.0
      %v735 = vmax.f32 %v659, 0.0
      %v736 = vmax.f32 %v661, 0.0
      %v737 = vmax.f32 %v550, 0.0
      %v738 = vmax.f32 %v552, 0.0
      %v739 = vmax.f32 %v663, 0.0
      %v740 = vmax.f32 %v665, 0.0
      %v741 = vmax.f32 %v556, 0.0
      %v742 = vmax.f32 %v558, 0.0
      %v743 = vmax.f32 %v669, 0.0
      %v744 = vmax.f32 %v671, 0.0
      %v745 = vmax.f32 %v560, 0.0
      %v746 = vmax.f32 %v562, 0.0
      %v747 = vmax.f32 %v673, 0.0
      %v748 = vmax.f32 %v675, 0.0
      %v749 = vmax.f32 %v566, 0.0
      %v750 = vmax.f32 %v568, 0.0
      %v751 = vmax.f32 %v679, 0.0
      %v752 = vmax.f32 %v681, 0.0
      %v753 = vmax.f32 %v570, 0.0
      %v754 = vmax.f32 %v572, 0.0
      %v755 = vmax.f32 %v683, 0.0
      %v756 = vmax.f32 %v685, 0.0
      %v757 = vmax.f32 %v576, 0.0
      %v758 = vmax.f32 %v578, 0.0
      %v759 = vmax.f32 %v689, 0.0
      %v760 = vmax.f32 %v691, 0.0
      %v761 = vmax.f32 %v580, 0.0
      %v762 = vmax.f32 %v582, 0.0
      %v763 = vmax.f32 %v693, 0.0
      %v764 = vmax.f32 %v695, 0.0
      %v765 = vmax.f32 %v586, 0.0
      %v766 = vmax.f32 %v588, 0.0
      %v767 = vmax.f32 %v699, 0.0
      %v768 = vmax.f32 %v701, 0.0
      %v769 = vmax.f32 %v590, 0.0
      %v770 = vmax.f32 %v592, 0.0
      %v771 = vmax.f32 %v703, 0.0
      %v772 = vmax.f32 %v705, 0.0
      %v773 = vmax.f32 %v596, 0.0
      %v774 = vmax.f32 %v598, 0.0
      %v775 = vmax.f32 %v709, 0.0
      %v776 = vmax.f32 %v711, 0.0
      %v777 = vmax.f32 %v600, 0.0
      %v778 = vmax.f32 %v602, 0.0
      %v779 = vmax.f32 %v713, 0.0
      %v780 = vmax.f32 %v715, 0.0
      %v781 = vpack.c.bf16 %v721, %v717
      %v782 = vpack.c.bf16 %v722, %v718
      %v783 = vpack.c.bf16 %v723, %v719
      %v784 = vpack.c.bf16 %v724, %v720
      %v785 = vpack.c.bf16 %v729, %v725
      %v786 = vpack.c.bf16 %v730, %v726
      %v787 = vpack.c.bf16 %v731, %v727
      %v788 = vpack.c.bf16 %v732, %v728
      %v789 = vpack.c.bf16 %v737, %v733
      %v790 = vpack.c.bf16 %v738, %v734
      %v791 = vpack.c.bf16 %v739, %v735
      %v792 = vpack.c.bf16 %v740, %v736
      %v793 = vpack.c.bf16 %v745, %v741
      %v794 = vpack.c.bf16 %v746, %v742
      %v795 = vpack.c.bf16 %v747, %v743
      %v796 = vpack.c.bf16 %v748, %v744
      %v797 = vpack.c.bf16 %v753, %v749
      %v798 = vpack.c.bf16 %v754, %v750
      %v799 = vpack.c.bf16 %v755, %v751
      %v800 = vpack.c.bf16 %v756, %v752
      %v801 = vpack.c.bf16 %v761, %v757
      %v802 = vpack.c.bf16 %v762, %v758
      %v803 = vpack.c.bf16 %v763, %v759
      %v804 = vpack.c.bf16 %v764, %v760
      %v805 = vpack.c.bf16 %v769, %v765
      %v806 = vpack.c.bf16 %v770, %v766
      %v807 = vpack.c.bf16 %v771, %v767
      %v808 = vpack.c.bf16 %v772, %v768
      %v809 = vpack.c.bf16 %v777, %v773
      %v810 = vpack.c.bf16 %v778, %v774
      %v811 = vpack.c.bf16 %v779, %v775
      %v812 = vpack.c.bf16 %v780, %v776
      %v813 = vld [vmem:[%s3] sm:$0x1]
      %v814 = vld [vmem:[#allocation2] sm:$0x1]
      %816 = vset.pattern.permute.xlu0 0
      %817 = vperm.xlu0 %816, %v814
      %v818 = vpop.permute.xlu0 %817
      %v820 = vlaneseq
      %v821 = vshrl.u32 %v820, 7
      %v822 = vsub.s32 0, %v821
      %v823 = vrot.slane %v818, %v822
      %824 = vmatprep.subr.bf16.mxu0 %v782
      %825 = vmatpush1.bf16.msra.mxu0 %v781
      %826 = vmatprep.subr.bf16.mxu0 %v786
      %827 = vmatpush1.bf16.msra.mxu0 %v785
      %828 = vmatprep.subr.bf16.mxu0 %v790
      %829 = vmatpush1.bf16.msra.mxu0 %v789
      %830 = vmatprep.subr.bf16.mxu0 %v794
      %831 = vmatpush1.bf16.msra.mxu0 %v793
      %832 = vmatprep.subr.bf16.mxu0 %v798
      %833 = vmatpush1.bf16.msra.mxu0 %v797
      %834 = vmatprep.subr.bf16.mxu0 %v802
      %835 = vmatpush1.bf16.msra.mxu0 %v801
      %836 = vmatprep.subr.bf16.mxu0 %v806
      %837 = vmatpush1.bf16.msra.mxu0 %v805
      %838 = vmatprep.subr.bf16.mxu0 %v810
      %839 = vmatpush1.bf16.msra.mxu0 %v809
      %840 = vmatprep.subr.bf16.mxu0 0
      %841 = vmatpush1.bf16.msra.mxu0 0
      %842 = vmatprep.subr.bf16.mxu0 0
      %843 = vmatpush1.bf16.msra.mxu0 0
      %844 = vmatprep.subr.bf16.mxu0 0
      %845 = vmatpush1.bf16.msra.mxu0 0
      %846 = vmatprep.subr.bf16.mxu0 0
      %847 = vmatpush1.bf16.msra.mxu0 0
      %848 = vmatprep.subr.bf16.mxu0 0
      %849 = vmatpush1.bf16.msra.mxu0 0
      %850 = vmatprep.subr.bf16.mxu0 0
      %851 = vmatpush1.bf16.msra.mxu0 0
      %852 = vmatprep.subr.bf16.mxu0 0
      %853 = vmatpush1.bf16.msra.mxu0 0
      %854 = vmatprep.subr.bf16.mxu0 0
      %855 = vmatpush1.bf16.msra.mxu0 0
      %856 = vmatprep.mubr.bf16.mxu0 0
      %857 = vmatmul.mubr.bf16.gmra.mrb[0].mxu0 %v813
      %v858 = vpop.f32.mrb[0].mxu0
      %v859 = vadd.f32 %v823, %v858
      %v860 = vpop.f32.mrb[0].mxu0
      %v861 = vadd.f32 %v823, %v860
      %v862 = vpop.f32.mrb[0].mxu0
      %v863 = vpop.f32.mrb[0].mxu0
      %864 = vdwg.mxu0
      %865 = vmatprep.subr.bf16.mxu0 %v784
      %866 = vmatpush1.bf16.msra.mxu0 %v783
      %867 = vmatprep.subr.bf16.mxu0 %v788
      %868 = vmatpush1.bf16.msra.mxu0 %v787
      %869 = vmatprep.subr.bf16.mxu0 %v792
      %870 = vmatpush1.bf16.msra.mxu0 %v791
      %871 = vmatprep.subr.bf16.mxu0 %v796
      %872 = vmatpush1.bf16.msra.mxu0 %v795
      %873 = vmatprep.subr.bf16.mxu0 %v800
      %874 = vmatpush1.bf16.msra.mxu0 %v799
      %875 = vmatprep.subr.bf16.mxu0 %v804
      %876 = vmatpush1.bf16.msra.mxu0 %v803
      %877 = vmatprep.subr.bf16.mxu0 %v808
      %878 = vmatpush1.bf16.msra.mxu0 %v807
      %879 = vmatprep.subr.bf16.mxu0 %v812
      %880 = vmatpush1.bf16.msra.mxu0 %v811
      %881 = vmatprep.subr.bf16.mxu0 0
      %882 = vmatpush1.bf16.msra.mxu0 0
      %883 = vmatprep.subr.bf16.mxu0 0
      %884 = vmatpush1.bf16.msra.mxu0 0
      %885 = vmatprep.subr.bf16.mxu0 0
      %886 = vmatpush1.bf16.msra.mxu0 0
      %887 = vmatprep.subr.bf16.mxu0 0
      %888 = vmatpush1.bf16.msra.mxu0 0
      %889 = vmatprep.subr.bf16.mxu0 0
      %890 = vmatpush1.bf16.msra.mxu0 0
      %891 = vmatprep.subr.bf16.mxu0 0
      %892 = vmatpush1.bf16.msra.mxu0 0
      %893 = vmatprep.subr.bf16.mxu0 0
      %894 = vmatpush1.bf16.msra.mxu0 0
      %895 = vmatprep.subr.bf16.mxu0 0
      %896 = vmatpush1.bf16.msra.mxu0 0
      %897 = vmatprep.mubr.bf16.mxu0 0
      %898 = vmatmul.mubr.bf16.gmra.mrb[0].mxu0 %v813
      %v899 = vpop.f32.mrb[0].mxu0
      %v900 = vadd.f32 %v823, %v899
      %v901 = vpop.f32.mrb[0].mxu0
      %v902 = vadd.f32 %v823, %v901
      %v903 = vpop.f32.mrb[0].mxu0
      %v904 = vpop.f32.mrb[0].mxu0
      %905 = vdwg.mxu0
      %v910 = vcombine.low %v859, %v861
      %v911 = vcombine.low %v900, %v902
      %v913 = vunpack.c.l.s4 1966171168
      %v914 = vunpack.c.0.s8 %v913
      %v915 = vlaneseq
      %v916 = vshrl.u32 %v915, 7
      %v917 = vsub.s32 %v914, %v916
      %v918 = vrot.slane %v910, %v917
      %v920 = vunpack.c.l.s4 1966171168
      %v921 = vunpack.c.0.s8 %v920
      %v922 = vlaneseq
      %v923 = vshrl.u32 %v922, 7
      %v924 = vsub.s32 %v921, %v923
      %v925 = vrot.slane %v911, %v924
      %v926 = vcombine.low %v918, %v925
      %v928 = vunpack.c.l.s4 1966171168
      %v929 = vunpack.c.0.s8 %v928
      %v930 = vlaneseq
      %v931 = vshrl.u32 %v930, 7
      %v932 = vsub.s32 %v929, %v931
      %v933 = vrot.slane %v926, %v932
      %v935 = vlaneseq
      %vm936 = vcmp.ge.s32.totalorder %v935, 0
      %vm937 = vcmp.lt.s32.totalorder %v935, 512
      %vm938 = vmand %vm936, %vm937
      %939 = vst.msk [vmem:[%s262] sm:$0xf] %vm938, %v933
      %s940 = smul.u32 4, %s23
      %p941 = scmp.lt.s32.totalorder %s22, 1
      %s942 = scalar_select %p941, %s22, 1
      %p943 = scmp.lt.s32.totalorder %s940, 3
      %s944 = scalar_select %p943, %s940, 3
      %s945 = smul.addr %s942, 4
      %s946 = sadd.s32 %s944, %s945
      %s947 = scalar_lea.vmem %s5, %s946
      // Predicated region
      $region41: #{fno3d_forward.19} parent=39 // pred_check
        %p948 = pneg %p162
      $region42: #{fno3d_forward.19} parent=39 // pred_check_branch
        %950 = sbr.rel (%p948) target = $region44
      $region43: #{fno3d_forward.19} parent=39 // pred_region
        %s951 = smul.u32 4, %s23
      $region44: #{fno3d_forward.19} parent=39 // pred_fallthru
        _
    $region40: #{fno3d_forward.19} parent=5 // pred_fallthru
      _
    %p952 = scmp.le.s32.totalorder 2, %s13
    // Predicated region
    $region45: #{fno3d_forward.19} parent=5 // pred_check
      %p953 = pneg %p952
    $region46: #{fno3d_forward.19} parent=5 // pred_check_branch
      %955 = sbr.rel (%p953) target = $region48
    $region47: #{fno3d_forward.19} parent=5 // pred_region
      %s956 = ssub.s32 %s13, 2
      // Predicated region
      $region49: #{fno3d_forward.19} parent=47 // pred_check
        %p957 = pneg %p168
      $region50: #{fno3d_forward.19} parent=47 // pred_check_branch
        %959 = sbr.rel (%p957) target = $region52
      $region51: #{fno3d_forward.19} parent=47 // pred_region
        %s960 = smul.u32 4, %s25
        %p961 = scmp.lt.s32.totalorder %s24, 1
        %s962 = scalar_select %p961, %s24, 1
        %p963 = scmp.lt.s32.totalorder %s960, 3
        %s964 = scalar_select %p963, %s960, 3
        %s965 = smul.addr %s962, 4
        %s966 = sadd.s32 %s964, %s965
        %s967 = scalar_lea.vmem %s5, %s966
      $region52: #{fno3d_forward.19} parent=47 // pred_fallthru
        _
    $region48: #{fno3d_forward.19} parent=5 // pred_fallthru
      _
  $region6: #{fno3d_forward.19} parent=0 // loop_footer
    %s17 = sadd.s32 1, %s13
  $region7: #{fno3d_forward.19} parent=0 // loop_footer_branch
    %12 = sbr.rel target = $region3
  $region8: #{fno3d_forward.19} parent=0 // loop_exit
    _

</llo_original>
